<compile_context>
chip_gen: v6e
topology: v6e:2x2x1
jax: 0.10.0
libtpu: 0.0.40
codegen_flags: <defaults>
</compile_context>

<pallas_src>
import math
from functools import partial

import jax
import jax.numpy as jnp
from jax.experimental import pallas as pl
from jax.experimental.pallas import tpu as pltpu

LN_EPS = 1e-5   # nn.LayerNorm default eps inside nn.TransformerEncoderLayer


def _layer_norm(z, gamma, beta):
    mu = jnp.mean(z, axis=-1, keepdims=True)
    zc = z - mu
    var = jnp.mean(zc * zc, axis=-1, keepdims=True)
    return zc * jax.lax.rsqrt(var + LN_EPS) * gamma + beta


# ------------------------------ fused kernel --------------------------------

def generator_fused_kernel(
    # per-block activations (blocked over the grid)
    inp_ref,
    # VMEM-resident constants / weights (constant index_map)
    mask_ref, posb_ref, w_in_ref,
    wq_ref, bq_ref, wk_ref, bk_ref, wv_ref, bv_ref,
    wo_ref, bo_ref, g1_ref, be1_ref,
    w1_ref, b1_ref, w2_ref, b2_ref, g2_ref, be2_ref,
    wfc_ref, bfc_ref,
    out_ref,
    *, n_layers, n_head,
):
    f32, bf16 = jnp.float32, jnp.bfloat16
    Dh = wq_ref.shape[-1]
    scale = 1.0 / math.sqrt(Dh)

    x = inp_ref[...]                      # (BL, 16) bf16: [one-hot | noise | 0]
    mask = mask_ref[...]                  # (BL, BL) additive block-diagonal mask

    # dimension_fc on the whole block + (tiled pos-embedding + fc bias)
    h = jnp.dot(x, w_in_ref[...], preferred_element_type=f32) + posb_ref[...]

    for l in range(n_layers):                         # statically unrolled
        # ---------- multi-head self-attention (block-diagonal over sequences) --
        hb = h.astype(bf16)
        res = h + bo_ref[l]                           # residual + out_proj bias
        for hd in range(n_head):                      # per-head (E, Dh) slabs
            qh = jnp.dot(hb, wq_ref[l, hd], preferred_element_type=f32) + bq_ref[l, hd]
            kh = jnp.dot(hb, wk_ref[l, hd], preferred_element_type=f32) + bk_ref[l, hd]
            vh = jnp.dot(hb, wv_ref[l, hd], preferred_element_type=f32) + bv_ref[l, hd]
            s = jax.lax.dot_general(                  # qh @ kh.T -> (BL, BL)
                qh.astype(bf16), kh.astype(bf16),
                (((1,), (1,)), ((), ())),
                preferred_element_type=f32) * scale + mask
            s = s - jnp.max(s, axis=-1, keepdims=True)
            p = jnp.exp(s)
            p = p / jnp.sum(p, axis=-1, keepdims=True)      # exact softmax
            oh = jnp.dot(p.astype(bf16), vh.astype(bf16),
                         preferred_element_type=f32)        # (BL, Dh)
            # out_proj folded per head: concat(heads) @ Wo == sum_h oh @ Wo[h]
            res = res + jnp.dot(oh.astype(bf16), wo_ref[l, hd],
                                preferred_element_type=f32)
        h = _layer_norm(res, g1_ref[l], be1_ref[l])         # norm1

        # ---------- position-wise feed-forward ----------
        hb = h.astype(bf16)
        ff = jnp.maximum(
            jnp.dot(hb, w1_ref[l], preferred_element_type=f32) + b1_ref[l], 0.0)
        h = h + jnp.dot(ff.astype(bf16), w2_ref[l],
                        preferred_element_type=f32) + b2_ref[l]
        h = _layer_norm(h, g2_ref[l], be2_ref[l])            # norm2

    # ---------- final fc + softplus ----------
    y = jnp.dot(h.astype(bf16), wfc_ref[...], preferred_element_type=f32) + bfc_ref[...]
    out_ref[...] = jnp.maximum(y, 0.0) + jnp.log(1.0 + jnp.exp(-jnp.abs(y)))


# -------------------------------- wrapper ------------------------------------

def generator_read_transformer(x_onehot, noise, params, *, n_head, n_layers,
                               b_blk=16):
    """Full GeneratorReadTransformer forward as one fused pallas_call.

    b_blk sequences are processed per grid step (b_blk*L rows per MXU dot).
    b_blk=16 -> 128-row blocks (v5e MXU edge); use 32 on v6e/v7x for the 256
    edge when N is large enough to keep >=2 grid steps.
    """
    f32, bf16 = jnp.float32, jnp.bfloat16
    N, L, Ein = x_onehot.shape
    E = params["w_fc"].shape[0]
    Dh = E // n_head
    IN_PAD = 16                                   # one-hot(8) + noise(1), 0-padded

    n_blocks = pl.cdiv(N, b_blk)
    N_pad = n_blocks * b_blk
    BL = b_blk * L

    # ---- pack inputs: one lane-padded slab, batch padded to a b_blk multiple
    inp = jnp.concatenate(
        [x_onehot, noise, jnp.zeros((N, L, IN_PAD - Ein - 1), f32)], axis=-1)
    if N_pad != N:
        inp = jnp.concatenate(
            [inp, jnp.zeros((N_pad - N, L, IN_PAD), f32)], axis=0)
    inp = inp.reshape(N_pad * L, IN_PAD).astype(bf16)

    # ---- block-diagonal additive attention mask: rows of different sequences
    #      within one block must not attend to each other.
    seq_id = jnp.arange(BL, dtype=jnp.int32) // L
    mask = jnp.where(seq_id[:, None] == seq_id[None, :], 0.0, -1e30).astype(f32)

    # ---- repack weights into kernel layout (bf16 matmul operands, f32 biases)
    # dimension_fc: [x | r | 0] @ W_in  ==  x @ Wx + r * wr
    w_in = jnp.zeros((IN_PAD, E), f32)
    w_in = w_in.at[:Ein, :].set(params["w_dim_x"])
    w_in = w_in.at[Ein, :].set(params["w_dim_r"][0])
    w_in = w_in.astype(bf16)
    # positional embedding tiled over the block + dimension_fc bias folded in.
    posb = (jnp.tile(params["pos_emb"][:L], (b_blk, 1)) + params["b_dim"]).astype(f32)

    # per-head Q/K/V weight slabs (avoids lane-slicing the qkv activation)
    w_qkv, b_qkv = params["w_qkv"], params["b_qkv"]

    def head_w(o):
        return (w_qkv[:, :, o:o + E].reshape(n_layers, E, n_head, Dh)
                .transpose(0, 2, 1, 3).astype(bf16))          # (Lyr, H, E, Dh)

    def head_b(o):
        return b_qkv[:, 0, o:o + E].reshape(n_layers, n_head, 1, Dh).astype(f32)

    wq, wk, wv = head_w(0), head_w(E), head_w(2 * E)
    bq, bk, bv = head_b(0), head_b(E), head_b(2 * E)

    weights = [
        mask, posb, w_in,
        wq, bq, wk, bk, wv, bv,
        params["w_out"].astype(bf16), params["b_out"],
        params["ln1_g"], params["ln1_b"],
        params["w1"].astype(bf16), params["b1"],
        params["w2"].astype(bf16), params["b2"],
        params["ln2_g"], params["ln2_b"],
        params["w_fc"].astype(bf16), params["b_fc"],
    ]

    def resident(a):
        # Whole array in VMEM, same block every grid step (weights stay put).
        idx = (0,) * a.ndim
        return pl.BlockSpec(a.shape, lambda n, _i=idx: _i)

    kernel = partial(generator_fused_kernel, n_layers=n_layers, n_head=n_head)

    out = pl.pallas_call(
        kernel,
        out_shape=jax.ShapeDtypeStruct((N_pad * L, E), f32),
        grid=(n_blocks,),                               # b_blk sequences / step
        in_specs=[pl.BlockSpec((BL, IN_PAD), lambda n: (n, 0))]
                 + [resident(a) for a in weights],
        out_specs=pl.BlockSpec((BL, E), lambda n: (n, 0)),
        compiler_params=pltpu.CompilerParams(
            dimension_semantics=("parallel",),          # megacore / v7x 2-TC split
        ),
    )(inp, *weights)

    return out.reshape(N_pad, L, E)[:N]


# ------------------------------ parameters -----------------------------------

def make_params(key, *, d_model, n_head, dim_ff, n_layers, pos_vocab, seq_len):
    E, F, Dh = d_model, dim_ff, d_model // n_head
    f32 = jnp.float32
    ks = iter(jax.random.split(key, 24))

    def nrm(shape, scale=0.3):
        return (scale * jax.random.normal(next(ks), shape)).astype(f32)

    return {
        # oligo_pos_embedding: Embedding(pos_vocab, E); positions are arange(L),
        # so only the first L rows are ever used -> pass exactly that slice.
        "pos_emb": nrm((pos_vocab, E))[:seq_len],
        # dimension_fc: Linear(9 -> E), stored transposed and split into the
        # 8 one-hot input columns and the single noise column.
        "w_dim_x": nrm((E, E)),
        "w_dim_r": nrm((1, E)),
        "b_dim":   nrm((1, E)),
        # per encoder layer (stacked on a leading layer axis, transposed to the
        # kernel's  x @ W  convention):
        "w_qkv": nrm((n_layers, E, 3 * E)),          # in_proj_weight.T
        "b_qkv": nrm((n_layers, 1, 3 * E)),          # in_proj_bias
        "w_out": nrm((n_layers, n_head, Dh, E)),     # out_proj.weight.T, per head
        "b_out": nrm((n_layers, 1, E)),
        "ln1_g": 1.0 + nrm((n_layers, 1, E), 0.1),
        "ln1_b": nrm((n_layers, 1, E), 0.1),
        "w1": nrm((n_layers, E, F)),                 # linear1.weight.T
        "b1": nrm((n_layers, 1, F)),
        "w2": nrm((n_layers, F, E)),                 # linear2.weight.T
        "b2": nrm((n_layers, 1, E)),
        "ln2_g": 1.0 + nrm((n_layers, 1, E), 0.1),
        "ln2_b": nrm((n_layers, 1, E), 0.1),
        # final fc: Linear(E -> E), transposed.
        "w_fc": nrm((E, E)),
        "b_fc": nrm((1, E)),
    }


# ---------------------------- pure-JAX reference -----------------------------

def reference(x_onehot, noise, params, *, n_head, n_layers):
    """Faithful per-sequence forward. Matmuls use bf16 operands with f32
    accumulation (the same single-pass MXU precision the kernel uses), so the
    check isolates structural correctness."""
    bf16, f32 = jnp.bfloat16, jnp.float32

    def mm(a, b):
        return jnp.matmul(a.astype(bf16), b.astype(bf16),
                          preferred_element_type=f32)

    N, L, _ = x_onehot.shape
    E = params["w_fc"].shape[0]
    Dh = E // n_head

    xin = jnp.concatenate([x_onehot, noise], axis=-1)                 # (N, L, 9)
    w_in = jnp.concatenate([params["w_dim_x"], params["w_dim_r"]], axis=0)
    h = mm(xin, w_in) + params["b_dim"] + params["pos_emb"]

    def ln(z, g, b):
        mu = z.mean(-1, keepdims=True)
        var = ((z - mu) ** 2).mean(-1, keepdims=True)
        return (z - mu) * jax.lax.rsqrt(var + LN_EPS) * g + b

    for l in range(n_layers):
        qkv = mm(h, params["w_qkv"][l]) + params["b_qkv"][l]
        q, k, v = qkv[..., :E], qkv[..., E:2 * E], qkv[..., 2 * E:]
        qh = q.reshape(N, L, n_head, Dh).transpose(0, 2, 1, 3)
        kh = k.reshape(N, L, n_head, Dh).transpose(0, 2, 1, 3)
        vh = v.reshape(N, L, n_head, Dh).transpose(0, 2, 1, 3)
        s = jnp.einsum("nhqd,nhkd->nhqk", qh.astype(bf16), kh.astype(bf16),
                       preferred_element_type=f32) / math.sqrt(Dh)
        p = jax.nn.softmax(s, axis=-1)
        o = jnp.einsum("nhqk,nhkd->nhqd", p.astype(bf16), vh.astype(bf16),
                       preferred_element_type=f32)                    # (N,H,L,Dh)
        attn = jnp.einsum("nhqd,hde->nqe", o.astype(bf16),
                          params["w_out"][l].astype(bf16),
                          preferred_element_type=f32)
        h = ln(h + attn + params["b_out"][l],
               params["ln1_g"][l], params["ln1_b"][l])
        ff = jax.nn.relu(mm(h, params["w1"][l]) + params["b1"][l])
        h = ln(h + mm(ff, params["w2"][l]) + params["b2"][l],
               params["ln2_g"][l], params["ln2_b"][l])

    y = mm(h, params["w_fc"]) + params["b_fc"]
    return jax.nn.softplus(y)


# ---------------------------------- main --------------------------------------

if __name__ == "__main__":
    # Shapes implied by the module: reads are one-hot over the 8 symbols
    # (A, C, G, T, -, S, E, P) => d_model = output_size = 8; G_input_size = 9.
    N, L = 32, 8                  # batch_size, oligo / read length
    E = 8                         # output_size = len(INV_BASE_MAP)
    H = 2                         # opt.G_num_head
    F = 32                        # opt.G_hidden_size (dim_feedforward)
    NUM_LAYERS = 2                # opt.G_num_layer
    POS_VOCAB = L + 4             # opt.oligo_len + opt.padding_num + 2
    B_BLK = 16                    # 16 seqs/step -> 128-row dots, grid of 2 steps

    key = jax.random.PRNGKey(0)
    k_lbl, k_noise, k_par = jax.random.split(key, 3)

    labels = jax.random.randint(k_lbl, (N, L), 0, E)
    x_onehot = jax.nn.one_hot(labels, E, dtype=jnp.float32)
    # uniform(0, 1) noise column (drawn host-side with jax.random for
    # determinism and fed to the kernel -- matches torch .uniform_(0, 1)).
    noise = jax.random.uniform(k_noise, (N, L, 1), dtype=jnp.float32)

    params = make_params(k_par, d_model=E, n_head=H, dim_ff=F,
                         n_layers=NUM_LAYERS, pos_vocab=POS_VOCAB, seq_len=L)

    out = generator_read_transformer(
        x_onehot, noise, params, n_head=H, n_layers=NUM_LAYERS, b_blk=B_BLK)
    out = jax.block_until_ready(out)

    ref = reference(x_onehot, noise, params, n_head=H, n_layers=NUM_LAYERS)
    assert out.shape == (N, L, E), out.shape
    max_err = float(jnp.max(jnp.abs(out - ref)))
    assert jnp.allclose(out, ref, atol=2e-3, rtol=2e-3), max_err

    print("KERNEL_OK")
</pallas_src>

<mosaic_0001>
module attributes {stable_mosaic.version = 11 : i64} {
  func.func @generator_fused_kernel(%arg0: i32, %arg1: memref<128x16xbf16, #tpu.memory_space<vmem>>, %arg2: memref<128x128xf32, #tpu.memory_space<vmem>>, %arg3: memref<128x8xf32, #tpu.memory_space<vmem>>, %arg4: memref<16x8xbf16, #tpu.memory_space<vmem>>, %arg5: memref<2x2x8x4xbf16, #tpu.memory_space<vmem>>, %arg6: memref<2x2x1x4xf32, #tpu.memory_space<vmem>>, %arg7: memref<2x2x8x4xbf16, #tpu.memory_space<vmem>>, %arg8: memref<2x2x1x4xf32, #tpu.memory_space<vmem>>, %arg9: memref<2x2x8x4xbf16, #tpu.memory_space<vmem>>, %arg10: memref<2x2x1x4xf32, #tpu.memory_space<vmem>>, %arg11: memref<2x2x4x8xbf16, #tpu.memory_space<vmem>>, %arg12: memref<2x1x8xf32, #tpu.memory_space<vmem>>, %arg13: memref<2x1x8xf32, #tpu.memory_space<vmem>>, %arg14: memref<2x1x8xf32, #tpu.memory_space<vmem>>, %arg15: memref<2x8x32xbf16, #tpu.memory_space<vmem>>, %arg16: memref<2x1x32xf32, #tpu.memory_space<vmem>>, %arg17: memref<2x32x8xbf16, #tpu.memory_space<vmem>>, %arg18: memref<2x1x8xf32, #tpu.memory_space<vmem>>, %arg19: memref<2x1x8xf32, #tpu.memory_space<vmem>>, %arg20: memref<2x1x8xf32, #tpu.memory_space<vmem>>, %arg21: memref<8x8xbf16, #tpu.memory_space<vmem>>, %arg22: memref<1x8xf32, #tpu.memory_space<vmem>>, %arg23: memref<128x8xf32, #tpu.memory_space<vmem>>) attributes {dimension_semantics = [#tpu.dimension_semantics<parallel>], iteration_bounds = array<i64: 2>, scalar_prefetch = 0 : i64, scratch_operands = 0 : i64, tpu.core_type = #tpu.core_type<tc>, window_params = [{transform_indices = @transform_0, window_bounds = array<i64: 128, 16>}, {pipeline_mode = #tpu.pipeline_mode<synchronous>, transform_indices = @transform_1, window_bounds = array<i64: 128, 128>}, {pipeline_mode = #tpu.pipeline_mode<synchronous>, transform_indices = @transform_2, window_bounds = array<i64: 128, 8>}, {pipeline_mode = #tpu.pipeline_mode<synchronous>, transform_indices = @transform_3, window_bounds = array<i64: 16, 8>}, {pipeline_mode = #tpu.pipeline_mode<synchronous>, transform_indices = @transform_4, window_bounds = array<i64: 2, 2, 8, 4>}, {pipeline_mode = #tpu.pipeline_mode<synchronous>, transform_indices = @transform_5, window_bounds = array<i64: 2, 2, 1, 4>}, {pipeline_mode = #tpu.pipeline_mode<synchronous>, transform_indices = @transform_6, window_bounds = array<i64: 2, 2, 8, 4>}, {pipeline_mode = #tpu.pipeline_mode<synchronous>, transform_indices = @transform_7, window_bounds = array<i64: 2, 2, 1, 4>}, {pipeline_mode = #tpu.pipeline_mode<synchronous>, transform_indices = @transform_8, window_bounds = array<i64: 2, 2, 8, 4>}, {pipeline_mode = #tpu.pipeline_mode<synchronous>, transform_indices = @transform_9, window_bounds = array<i64: 2, 2, 1, 4>}, {pipeline_mode = #tpu.pipeline_mode<synchronous>, transform_indices = @transform_10, window_bounds = array<i64: 2, 2, 4, 8>}, {pipeline_mode = #tpu.pipeline_mode<synchronous>, transform_indices = @transform_11, window_bounds = array<i64: 2, 1, 8>}, {pipeline_mode = #tpu.pipeline_mode<synchronous>, transform_indices = @transform_12, window_bounds = array<i64: 2, 1, 8>}, {pipeline_mode = #tpu.pipeline_mode<synchronous>, transform_indices = @transform_13, window_bounds = array<i64: 2, 1, 8>}, {pipeline_mode = #tpu.pipeline_mode<synchronous>, transform_indices = @transform_14, window_bounds = array<i64: 2, 8, 32>}, {pipeline_mode = #tpu.pipeline_mode<synchronous>, transform_indices = @transform_15, window_bounds = array<i64: 2, 1, 32>}, {pipeline_mode = #tpu.pipeline_mode<synchronous>, transform_indices = @transform_16, window_bounds = array<i64: 2, 32, 8>}, {pipeline_mode = #tpu.pipeline_mode<synchronous>, transform_indices = @transform_17, window_bounds = array<i64: 2, 1, 8>}, {pipeline_mode = #tpu.pipeline_mode<synchronous>, transform_indices = @transform_18, window_bounds = array<i64: 2, 1, 8>}, {pipeline_mode = #tpu.pipeline_mode<synchronous>, transform_indices = @transform_19, window_bounds = array<i64: 2, 1, 8>}, {pipeline_mode = #tpu.pipeline_mode<synchronous>, transform_indices = @transform_20, window_bounds = array<i64: 8, 8>}, {pipeline_mode = #tpu.pipeline_mode<synchronous>, transform_indices = @transform_21, window_bounds = array<i64: 1, 8>}, {transform_indices = @transform_22, window_bounds = array<i64: 128, 8>}]} {
    %c0 = arith.constant 0 : index
    %c0_0 = arith.constant 0 : index
    %0 = vector.load %arg1[%c0, %c0_0] : memref<128x16xbf16, #tpu.memory_space<vmem>>, vector<128x16xbf16>
    %c0_1 = arith.constant 0 : index
    %c0_2 = arith.constant 0 : index
    %1 = vector.load %arg2[%c0_1, %c0_2] : memref<128x128xf32, #tpu.memory_space<vmem>>, vector<128x128xf32>
    %c0_3 = arith.constant 0 : index
    %c0_4 = arith.constant 0 : index
    %2 = vector.load %arg4[%c0_3, %c0_4] : memref<16x8xbf16, #tpu.memory_space<vmem>>, vector<16x8xbf16>
    %cst = arith.constant dense<0.000000e+00> : vector<128x8xf32>
    %3 = tpu.matmul %0, %2, %cst {dimension_numbers = #tpu.dot_dimension_numbers<[1], [0], [0], [1], [0, 0, 1, 1], [], []>} : vector<128x16xbf16>, vector<16x8xbf16>, vector<128x8xf32> -> vector<128x8xf32>
    %c0_5 = arith.constant 0 : index
    %c0_6 = arith.constant 0 : index
    %4 = vector.load %arg3[%c0_5, %c0_6] : memref<128x8xf32, #tpu.memory_space<vmem>>, vector<128x8xf32>
    %5 = arith.addf %3, %4 : vector<128x8xf32>
    %6 = arith.truncf %5 : vector<128x8xf32> to vector<128x8xbf16>
    %c0_7 = arith.constant 0 : index
    %c0_8 = arith.constant 0 : index
    %c0_9 = arith.constant 0 : index
    %7 = vector.load %arg12[%c0_7, %c0_8, %c0_9] : memref<2x1x8xf32, #tpu.memory_space<vmem>>, vector<1x1x8xf32>
    %8 = vector.shape_cast %7 : vector<1x1x8xf32> to vector<1x8xf32>
    %9 = vector.broadcast %8 : vector<1x8xf32> to vector<128x8xf32>
    %10 = arith.addf %5, %9 : vector<128x8xf32>
    %c0_10 = arith.constant 0 : index
    %c0_11 = arith.constant 0 : index
    %c0_12 = arith.constant 0 : index
    %c0_13 = arith.constant 0 : index
    %11 = vector.load %arg5[%c0_10, %c0_11, %c0_12, %c0_13] : memref<2x2x8x4xbf16, #tpu.memory_space<vmem>>, vector<1x1x8x4xbf16>
    %12 = vector.shape_cast %11 : vector<1x1x8x4xbf16> to vector<8x4xbf16>
    %cst_14 = arith.constant dense<0.000000e+00> : vector<128x4xf32>
    %13 = tpu.matmul %6, %12, %cst_14 {dimension_numbers = #tpu.dot_dimension_numbers<[1], [0], [0], [1], [0, 0, 1, 1], [], []>} : vector<128x8xbf16>, vector<8x4xbf16>, vector<128x4xf32> -> vector<128x4xf32>
    %c0_15 = arith.constant 0 : index
    %c0_16 = arith.constant 0 : index
    %c0_17 = arith.constant 0 : index
    %c0_18 = arith.constant 0 : index
    %14 = vector.load %arg6[%c0_15, %c0_16, %c0_17, %c0_18] : memref<2x2x1x4xf32, #tpu.memory_space<vmem>>, vector<1x1x1x4xf32>
    %15 = vector.shape_cast %14 : vector<1x1x1x4xf32> to vector<1x4xf32>
    %16 = vector.broadcast %15 : vector<1x4xf32> to vector<128x4xf32>
    %17 = arith.addf %13, %16 : vector<128x4xf32>
    %c0_19 = arith.constant 0 : index
    %c0_20 = arith.constant 0 : index
    %c0_21 = arith.constant 0 : index
    %c0_22 = arith.constant 0 : index
    %18 = vector.load %arg7[%c0_19, %c0_20, %c0_21, %c0_22] : memref<2x2x8x4xbf16, #tpu.memory_space<vmem>>, vector<1x1x8x4xbf16>
    %19 = vector.shape_cast %18 : vector<1x1x8x4xbf16> to vector<8x4xbf16>
    %cst_23 = arith.constant dense<0.000000e+00> : vector<128x4xf32>
    %20 = tpu.matmul %6, %19, %cst_23 {dimension_numbers = #tpu.dot_dimension_numbers<[1], [0], [0], [1], [0, 0, 1, 1], [], []>} : vector<128x8xbf16>, vector<8x4xbf16>, vector<128x4xf32> -> vector<128x4xf32>
    %c0_24 = arith.constant 0 : index
    %c0_25 = arith.constant 0 : index
    %c0_26 = arith.constant 0 : index
    %c0_27 = arith.constant 0 : index
    %21 = vector.load %arg8[%c0_24, %c0_25, %c0_26, %c0_27] : memref<2x2x1x4xf32, #tpu.memory_space<vmem>>, vector<1x1x1x4xf32>
    %22 = vector.shape_cast %21 : vector<1x1x1x4xf32> to vector<1x4xf32>
    %23 = vector.broadcast %22 : vector<1x4xf32> to vector<128x4xf32>
    %24 = arith.addf %20, %23 : vector<128x4xf32>
    %c0_28 = arith.constant 0 : index
    %c0_29 = arith.constant 0 : index
    %c0_30 = arith.constant 0 : index
    %c0_31 = arith.constant 0 : index
    %25 = vector.load %arg9[%c0_28, %c0_29, %c0_30, %c0_31] : memref<2x2x8x4xbf16, #tpu.memory_space<vmem>>, vector<1x1x8x4xbf16>
    %26 = vector.shape_cast %25 : vector<1x1x8x4xbf16> to vector<8x4xbf16>
    %cst_32 = arith.constant dense<0.000000e+00> : vector<128x4xf32>
    %27 = tpu.matmul %6, %26, %cst_32 {dimension_numbers = #tpu.dot_dimension_numbers<[1], [0], [0], [1], [0, 0, 1, 1], [], []>} : vector<128x8xbf16>, vector<8x4xbf16>, vector<128x4xf32> -> vector<128x4xf32>
    %c0_33 = arith.constant 0 : index
    %c0_34 = arith.constant 0 : index
    %c0_35 = arith.constant 0 : index
    %c0_36 = arith.constant 0 : index
    %28 = vector.load %arg10[%c0_33, %c0_34, %c0_35, %c0_36] : memref<2x2x1x4xf32, #tpu.memory_space<vmem>>, vector<1x1x1x4xf32>
    %29 = vector.shape_cast %28 : vector<1x1x1x4xf32> to vector<1x4xf32>
    %30 = vector.broadcast %29 : vector<1x4xf32> to vector<128x4xf32>
    %31 = arith.addf %27, %30 : vector<128x4xf32>
    %32 = arith.truncf %17 : vector<128x4xf32> to vector<128x4xbf16>
    %33 = arith.truncf %24 : vector<128x4xf32> to vector<128x4xbf16>
    %cst_37 = arith.constant dense<0.000000e+00> : vector<128x128xf32>
    %34 = tpu.matmul %32, %33, %cst_37 {dimension_numbers = #tpu.dot_dimension_numbers<[1], [1], [0], [0], [0, 0, 1, 0], [], []>} : vector<128x4xbf16>, vector<128x4xbf16>, vector<128x128xf32> -> vector<128x128xf32>
    %cst_38 = arith.constant 5.000000e-01 : f32
    %35 = vector.broadcast %cst_38 : f32 to vector<128x128xf32>
    %36 = arith.mulf %34, %35 : vector<128x128xf32>
    %37 = arith.addf %36, %1 : vector<128x128xf32>
    %cst_39 = arith.constant dense<0xFF800000> : vector<128xf32>
    %38 = vector.multi_reduction <maximumf>, %37, %cst_39 [1] : vector<128x128xf32> to vector<128xf32>
    %39 = vector.shape_cast %38 : vector<128xf32> to vector<128x1xf32>
    %40 = vector.broadcast %39 : vector<128x1xf32> to vector<128x128xf32>
    %41 = arith.subf %37, %40 : vector<128x128xf32>
    %42 = math.exp %41 : vector<128x128xf32>
    %cst_40 = arith.constant dense<0.000000e+00> : vector<128xf32>
    %43 = vector.multi_reduction <add>, %42, %cst_40 [1] : vector<128x128xf32> to vector<128xf32>
    %44 = vector.shape_cast %43 : vector<128xf32> to vector<128x1xf32>
    %45 = vector.broadcast %44 : vector<128x1xf32> to vector<128x128xf32>
    %46 = arith.divf %42, %45 : vector<128x128xf32>
    %47 = arith.truncf %46 : vector<128x128xf32> to vector<128x128xbf16>
    %48 = arith.truncf %31 : vector<128x4xf32> to vector<128x4xbf16>
    %cst_41 = arith.constant dense<0.000000e+00> : vector<128x4xf32>
    %49 = tpu.matmul %47, %48, %cst_41 {dimension_numbers = #tpu.dot_dimension_numbers<[1], [0], [0], [1], [0, 0, 1, 1], [], []>} : vector<128x128xbf16>, vector<128x4xbf16>, vector<128x4xf32> -> vector<128x4xf32>
    %50 = arith.truncf %49 : vector<128x4xf32> to vector<128x4xbf16>
    %c0_42 = arith.constant 0 : index
    %c0_43 = arith.constant 0 : index
    %c0_44 = arith.constant 0 : index
    %c0_45 = arith.constant 0 : index
    %51 = vector.load %arg11[%c0_42, %c0_43, %c0_44, %c0_45] : memref<2x2x4x8xbf16, #tpu.memory_space<vmem>>, vector<1x1x4x8xbf16>
    %52 = vector.shape_cast %51 : vector<1x1x4x8xbf16> to vector<4x8xbf16>
    %cst_46 = arith.constant dense<0.000000e+00> : vector<128x8xf32>
    %53 = tpu.matmul %50, %52, %cst_46 {dimension_numbers = #tpu.dot_dimension_numbers<[1], [0], [0], [1], [0, 0, 1, 1], [], []>} : vector<128x4xbf16>, vector<4x8xbf16>, vector<128x8xf32> -> vector<128x8xf32>
    %54 = arith.addf %10, %53 : vector<128x8xf32>
    %c0_47 = arith.constant 0 : index
    %c1 = arith.constant 1 : index
    %c0_48 = arith.constant 0 : index
    %c0_49 = arith.constant 0 : index
    %55 = vector.load %arg5[%c0_47, %c1, %c0_48, %c0_49] : memref<2x2x8x4xbf16, #tpu.memory_space<vmem>>, vector<1x1x8x4xbf16>
    %56 = vector.shape_cast %55 : vector<1x1x8x4xbf16> to vector<8x4xbf16>
    %cst_50 = arith.constant dense<0.000000e+00> : vector<128x4xf32>
    %57 = tpu.matmul %6, %56, %cst_50 {dimension_numbers = #tpu.dot_dimension_numbers<[1], [0], [0], [1], [0, 0, 1, 1], [], []>} : vector<128x8xbf16>, vector<8x4xbf16>, vector<128x4xf32> -> vector<128x4xf32>
    %c0_51 = arith.constant 0 : index
    %c1_52 = arith.constant 1 : index
    %c0_53 = arith.constant 0 : index
    %c0_54 = arith.constant 0 : index
    %58 = vector.load %arg6[%c0_51, %c1_52, %c0_53, %c0_54] : memref<2x2x1x4xf32, #tpu.memory_space<vmem>>, vector<1x1x1x4xf32>
    %59 = vector.shape_cast %58 : vector<1x1x1x4xf32> to vector<1x4xf32>
    %60 = vector.broadcast %59 : vector<1x4xf32> to vector<128x4xf32>
    %61 = arith.addf %57, %60 : vector<128x4xf32>
    %c0_55 = arith.constant 0 : index
    %c1_56 = arith.constant 1 : index
    %c0_57 = arith.constant 0 : index
    %c0_58 = arith.constant 0 : index
    %62 = vector.load %arg7[%c0_55, %c1_56, %c0_57, %c0_58] : memref<2x2x8x4xbf16, #tpu.memory_space<vmem>>, vector<1x1x8x4xbf16>
    %63 = vector.shape_cast %62 : vector<1x1x8x4xbf16> to vector<8x4xbf16>
    %cst_59 = arith.constant dense<0.000000e+00> : vector<128x4xf32>
    %64 = tpu.matmul %6, %63, %cst_59 {dimension_numbers = #tpu.dot_dimension_numbers<[1], [0], [0], [1], [0, 0, 1, 1], [], []>} : vector<128x8xbf16>, vector<8x4xbf16>, vector<128x4xf32> -> vector<128x4xf32>
    %c0_60 = arith.constant 0 : index
    %c1_61 = arith.constant 1 : index
    %c0_62 = arith.constant 0 : index
    %c0_63 = arith.constant 0 : index
    %65 = vector.load %arg8[%c0_60, %c1_61, %c0_62, %c0_63] : memref<2x2x1x4xf32, #tpu.memory_space<vmem>>, vector<1x1x1x4xf32>
    %66 = vector.shape_cast %65 : vector<1x1x1x4xf32> to vector<1x4xf32>
    %67 = vector.broadcast %66 : vector<1x4xf32> to vector<128x4xf32>
    %68 = arith.addf %64, %67 : vector<128x4xf32>
    %c0_64 = arith.constant 0 : index
    %c1_65 = arith.constant 1 : index
    %c0_66 = arith.constant 0 : index
    %c0_67 = arith.constant 0 : index
    %69 = vector.load %arg9[%c0_64, %c1_65, %c0_66, %c0_67] : memref<2x2x8x4xbf16, #tpu.memory_space<vmem>>, vector<1x1x8x4xbf16>
    %70 = vector.shape_cast %69 : vector<1x1x8x4xbf16> to vector<8x4xbf16>
    %cst_68 = arith.constant dense<0.000000e+00> : vector<128x4xf32>
    %71 = tpu.matmul %6, %70, %cst_68 {dimension_numbers = #tpu.dot_dimension_numbers<[1], [0], [0], [1], [0, 0, 1, 1], [], []>} : vector<128x8xbf16>, vector<8x4xbf16>, vector<128x4xf32> -> vector<128x4xf32>
    %c0_69 = arith.constant 0 : index
    %c1_70 = arith.constant 1 : index
    %c0_71 = arith.constant 0 : index
    %c0_72 = arith.constant 0 : index
    %72 = vector.load %arg10[%c0_69, %c1_70, %c0_71, %c0_72] : memref<2x2x1x4xf32, #tpu.memory_space<vmem>>, vector<1x1x1x4xf32>
    %73 = vector.shape_cast %72 : vector<1x1x1x4xf32> to vector<1x4xf32>
    %74 = vector.broadcast %73 : vector<1x4xf32> to vector<128x4xf32>
    %75 = arith.addf %71, %74 : vector<128x4xf32>
    %76 = arith.truncf %61 : vector<128x4xf32> to vector<128x4xbf16>
    %77 = arith.truncf %68 : vector<128x4xf32> to vector<128x4xbf16>
    %cst_73 = arith.constant dense<0.000000e+00> : vector<128x128xf32>
    %78 = tpu.matmul %76, %77, %cst_73 {dimension_numbers = #tpu.dot_dimension_numbers<[1], [1], [0], [0], [0, 0, 1, 0], [], []>} : vector<128x4xbf16>, vector<128x4xbf16>, vector<128x128xf32> -> vector<128x128xf32>
    %cst_74 = arith.constant 5.000000e-01 : f32
    %79 = vector.broadcast %cst_74 : f32 to vector<128x128xf32>
    %80 = arith.mulf %78, %79 : vector<128x128xf32>
    %81 = arith.addf %80, %1 : vector<128x128xf32>
    %cst_75 = arith.constant dense<0xFF800000> : vector<128xf32>
    %82 = vector.multi_reduction <maximumf>, %81, %cst_75 [1] : vector<128x128xf32> to vector<128xf32>
    %83 = vector.shape_cast %82 : vector<128xf32> to vector<128x1xf32>
    %84 = vector.broadcast %83 : vector<128x1xf32> to vector<128x128xf32>
    %85 = arith.subf %81, %84 : vector<128x128xf32>
    %86 = math.exp %85 : vector<128x128xf32>
    %cst_76 = arith.constant dense<0.000000e+00> : vector<128xf32>
    %87 = vector.multi_reduction <add>, %86, %cst_76 [1] : vector<128x128xf32> to vector<128xf32>
    %88 = vector.shape_cast %87 : vector<128xf32> to vector<128x1xf32>
    %89 = vector.broadcast %88 : vector<128x1xf32> to vector<128x128xf32>
    %90 = arith.divf %86, %89 : vector<128x128xf32>
    %91 = arith.truncf %90 : vector<128x128xf32> to vector<128x128xbf16>
    %92 = arith.truncf %75 : vector<128x4xf32> to vector<128x4xbf16>
    %cst_77 = arith.constant dense<0.000000e+00> : vector<128x4xf32>
    %93 = tpu.matmul %91, %92, %cst_77 {dimension_numbers = #tpu.dot_dimension_numbers<[1], [0], [0], [1], [0, 0, 1, 1], [], []>} : vector<128x128xbf16>, vector<128x4xbf16>, vector<128x4xf32> -> vector<128x4xf32>
    %94 = arith.truncf %93 : vector<128x4xf32> to vector<128x4xbf16>
    %c0_78 = arith.constant 0 : index
    %c1_79 = arith.constant 1 : index
    %c0_80 = arith.constant 0 : index
    %c0_81 = arith.constant 0 : index
    %95 = vector.load %arg11[%c0_78, %c1_79, %c0_80, %c0_81] : memref<2x2x4x8xbf16, #tpu.memory_space<vmem>>, vector<1x1x4x8xbf16>
    %96 = vector.shape_cast %95 : vector<1x1x4x8xbf16> to vector<4x8xbf16>
    %cst_82 = arith.constant dense<0.000000e+00> : vector<128x8xf32>
    %97 = tpu.matmul %94, %96, %cst_82 {dimension_numbers = #tpu.dot_dimension_numbers<[1], [0], [0], [1], [0, 0, 1, 1], [], []>} : vector<128x4xbf16>, vector<4x8xbf16>, vector<128x8xf32> -> vector<128x8xf32>
    %98 = arith.addf %54, %97 : vector<128x8xf32>
    %c0_83 = arith.constant 0 : index
    %c0_84 = arith.constant 0 : index
    %c0_85 = arith.constant 0 : index
    %99 = vector.load %arg13[%c0_83, %c0_84, %c0_85] : memref<2x1x8xf32, #tpu.memory_space<vmem>>, vector<1x1x8xf32>
    %100 = vector.shape_cast %99 : vector<1x1x8xf32> to vector<1x8xf32>
    %c0_86 = arith.constant 0 : index
    %c0_87 = arith.constant 0 : index
    %c0_88 = arith.constant 0 : index
    %101 = vector.load %arg14[%c0_86, %c0_87, %c0_88] : memref<2x1x8xf32, #tpu.memory_space<vmem>>, vector<1x1x8xf32>
    %102 = vector.shape_cast %101 : vector<1x1x8xf32> to vector<1x8xf32>
    %cst_89 = arith.constant dense<0.000000e+00> : vector<128xf32>
    %103 = vector.multi_reduction <add>, %98, %cst_89 [1] : vector<128x8xf32> to vector<128xf32>
    %104 = vector.shape_cast %103 : vector<128xf32> to vector<128x1xf32>
    %cst_90 = arith.constant 8.000000e+00 : f32
    %105 = vector.broadcast %cst_90 : f32 to vector<128x1xf32>
    %106 = arith.divf %104, %105 : vector<128x1xf32>
    %107 = vector.broadcast %106 : vector<128x1xf32> to vector<128x8xf32>
    %108 = arith.subf %98, %107 : vector<128x8xf32>
    %109 = arith.mulf %108, %108 : vector<128x8xf32>
    %cst_91 = arith.constant dense<0.000000e+00> : vector<128xf32>
    %110 = vector.multi_reduction <add>, %109, %cst_91 [1] : vector<128x8xf32> to vector<128xf32>
    %111 = vector.shape_cast %110 : vector<128xf32> to vector<128x1xf32>
    %cst_92 = arith.constant 8.000000e+00 : f32
    %112 = vector.broadcast %cst_92 : f32 to vector<128x1xf32>
    %113 = arith.divf %111, %112 : vector<128x1xf32>
    %cst_93 = arith.constant 9.99999974E-6 : f32
    %114 = vector.broadcast %cst_93 : f32 to vector<128x1xf32>
    %115 = arith.addf %113, %114 : vector<128x1xf32>
    %116 = math.rsqrt %115 : vector<128x1xf32>
    %117 = vector.broadcast %116 : vector<128x1xf32> to vector<128x8xf32>
    %118 = arith.mulf %108, %117 : vector<128x8xf32>
    %119 = vector.broadcast %100 : vector<1x8xf32> to vector<128x8xf32>
    %120 = arith.mulf %118, %119 : vector<128x8xf32>
    %121 = vector.broadcast %102 : vector<1x8xf32> to vector<128x8xf32>
    %122 = arith.addf %120, %121 : vector<128x8xf32>
    %123 = arith.truncf %122 : vector<128x8xf32> to vector<128x8xbf16>
    %c0_94 = arith.constant 0 : index
    %c0_95 = arith.constant 0 : index
    %c0_96 = arith.constant 0 : index
    %124 = vector.load %arg15[%c0_94, %c0_95, %c0_96] : memref<2x8x32xbf16, #tpu.memory_space<vmem>>, vector<1x8x32xbf16>
    %125 = vector.shape_cast %124 : vector<1x8x32xbf16> to vector<8x32xbf16>
    %cst_97 = arith.constant dense<0.000000e+00> : vector<128x32xf32>
    %126 = tpu.matmul %123, %125, %cst_97 {dimension_numbers = #tpu.dot_dimension_numbers<[1], [0], [0], [1], [0, 0, 1, 1], [], []>} : vector<128x8xbf16>, vector<8x32xbf16>, vector<128x32xf32> -> vector<128x32xf32>
    %c0_98 = arith.constant 0 : index
    %c0_99 = arith.constant 0 : index
    %c0_100 = arith.constant 0 : index
    %127 = vector.load %arg16[%c0_98, %c0_99, %c0_100] : memref<2x1x32xf32, #tpu.memory_space<vmem>>, vector<1x1x32xf32>
    %128 = vector.shape_cast %127 : vector<1x1x32xf32> to vector<1x32xf32>
    %129 = vector.broadcast %128 : vector<1x32xf32> to vector<128x32xf32>
    %130 = arith.addf %126, %129 : vector<128x32xf32>
    %cst_101 = arith.constant 0.000000e+00 : f32
    %131 = vector.broadcast %cst_101 : f32 to vector<128x32xf32>
    %132 = arith.maximumf %130, %131 : vector<128x32xf32>
    %133 = arith.truncf %132 : vector<128x32xf32> to vector<128x32xbf16>
    %c0_102 = arith.constant 0 : index
    %c0_103 = arith.constant 0 : index
    %c0_104 = arith.constant 0 : index
    %134 = vector.load %arg17[%c0_102, %c0_103, %c0_104] : memref<2x32x8xbf16, #tpu.memory_space<vmem>>, vector<1x32x8xbf16>
    %135 = vector.shape_cast %134 : vector<1x32x8xbf16> to vector<32x8xbf16>
    %cst_105 = arith.constant dense<0.000000e+00> : vector<128x8xf32>
    %136 = tpu.matmul %133, %135, %cst_105 {dimension_numbers = #tpu.dot_dimension_numbers<[1], [0], [0], [1], [0, 0, 1, 1], [], []>} : vector<128x32xbf16>, vector<32x8xbf16>, vector<128x8xf32> -> vector<128x8xf32>
    %137 = arith.addf %122, %136 : vector<128x8xf32>
    %c0_106 = arith.constant 0 : index
    %c0_107 = arith.constant 0 : index
    %c0_108 = arith.constant 0 : index
    %138 = vector.load %arg18[%c0_106, %c0_107, %c0_108] : memref<2x1x8xf32, #tpu.memory_space<vmem>>, vector<1x1x8xf32>
    %139 = vector.shape_cast %138 : vector<1x1x8xf32> to vector<1x8xf32>
    %140 = vector.broadcast %139 : vector<1x8xf32> to vector<128x8xf32>
    %141 = arith.addf %137, %140 : vector<128x8xf32>
    %c0_109 = arith.constant 0 : index
    %c0_110 = arith.constant 0 : index
    %c0_111 = arith.constant 0 : index
    %142 = vector.load %arg19[%c0_109, %c0_110, %c0_111] : memref<2x1x8xf32, #tpu.memory_space<vmem>>, vector<1x1x8xf32>
    %143 = vector.shape_cast %142 : vector<1x1x8xf32> to vector<1x8xf32>
    %c0_112 = arith.constant 0 : index
    %c0_113 = arith.constant 0 : index
    %c0_114 = arith.constant 0 : index
    %144 = vector.load %arg20[%c0_112, %c0_113, %c0_114] : memref<2x1x8xf32, #tpu.memory_space<vmem>>, vector<1x1x8xf32>
    %145 = vector.shape_cast %144 : vector<1x1x8xf32> to vector<1x8xf32>
    %cst_115 = arith.constant dense<0.000000e+00> : vector<128xf32>
    %146 = vector.multi_reduction <add>, %141, %cst_115 [1] : vector<128x8xf32> to vector<128xf32>
    %147 = vector.shape_cast %146 : vector<128xf32> to vector<128x1xf32>
    %cst_116 = arith.constant 8.000000e+00 : f32
    %148 = vector.broadcast %cst_116 : f32 to vector<128x1xf32>
    %149 = arith.divf %147, %148 : vector<128x1xf32>
    %150 = vector.broadcast %149 : vector<128x1xf32> to vector<128x8xf32>
    %151 = arith.subf %141, %150 : vector<128x8xf32>
    %152 = arith.mulf %151, %151 : vector<128x8xf32>
    %cst_117 = arith.constant dense<0.000000e+00> : vector<128xf32>
    %153 = vector.multi_reduction <add>, %152, %cst_117 [1] : vector<128x8xf32> to vector<128xf32>
    %154 = vector.shape_cast %153 : vector<128xf32> to vector<128x1xf32>
    %cst_118 = arith.constant 8.000000e+00 : f32
    %155 = vector.broadcast %cst_118 : f32 to vector<128x1xf32>
    %156 = arith.divf %154, %155 : vector<128x1xf32>
    %cst_119 = arith.constant 9.99999974E-6 : f32
    %157 = vector.broadcast %cst_119 : f32 to vector<128x1xf32>
    %158 = arith.addf %156, %157 : vector<128x1xf32>
    %159 = math.rsqrt %158 : vector<128x1xf32>
    %160 = vector.broadcast %159 : vector<128x1xf32> to vector<128x8xf32>
    %161 = arith.mulf %151, %160 : vector<128x8xf32>
    %162 = vector.broadcast %143 : vector<1x8xf32> to vector<128x8xf32>
    %163 = arith.mulf %161, %162 : vector<128x8xf32>
    %164 = vector.broadcast %145 : vector<1x8xf32> to vector<128x8xf32>
    %165 = arith.addf %163, %164 : vector<128x8xf32>
    %166 = arith.truncf %165 : vector<128x8xf32> to vector<128x8xbf16>
    %c1_120 = arith.constant 1 : index
    %c0_121 = arith.constant 0 : index
    %c0_122 = arith.constant 0 : index
    %167 = vector.load %arg12[%c1_120, %c0_121, %c0_122] : memref<2x1x8xf32, #tpu.memory_space<vmem>>, vector<1x1x8xf32>
    %168 = vector.shape_cast %167 : vector<1x1x8xf32> to vector<1x8xf32>
    %169 = vector.broadcast %168 : vector<1x8xf32> to vector<128x8xf32>
    %170 = arith.addf %165, %169 : vector<128x8xf32>
    %c1_123 = arith.constant 1 : index
    %c0_124 = arith.constant 0 : index
    %c0_125 = arith.constant 0 : index
    %c0_126 = arith.constant 0 : index
    %171 = vector.load %arg5[%c1_123, %c0_124, %c0_125, %c0_126] : memref<2x2x8x4xbf16, #tpu.memory_space<vmem>>, vector<1x1x8x4xbf16>
    %172 = vector.shape_cast %171 : vector<1x1x8x4xbf16> to vector<8x4xbf16>
    %cst_127 = arith.constant dense<0.000000e+00> : vector<128x4xf32>
    %173 = tpu.matmul %166, %172, %cst_127 {dimension_numbers = #tpu.dot_dimension_numbers<[1], [0], [0], [1], [0, 0, 1, 1], [], []>} : vector<128x8xbf16>, vector<8x4xbf16>, vector<128x4xf32> -> vector<128x4xf32>
    %c1_128 = arith.constant 1 : index
    %c0_129 = arith.constant 0 : index
    %c0_130 = arith.constant 0 : index
    %c0_131 = arith.constant 0 : index
    %174 = vector.load %arg6[%c1_128, %c0_129, %c0_130, %c0_131] : memref<2x2x1x4xf32, #tpu.memory_space<vmem>>, vector<1x1x1x4xf32>
    %175 = vector.shape_cast %174 : vector<1x1x1x4xf32> to vector<1x4xf32>
    %176 = vector.broadcast %175 : vector<1x4xf32> to vector<128x4xf32>
    %177 = arith.addf %173, %176 : vector<128x4xf32>
    %c1_132 = arith.constant 1 : index
    %c0_133 = arith.constant 0 : index
    %c0_134 = arith.constant 0 : index
    %c0_135 = arith.constant 0 : index
    %178 = vector.load %arg7[%c1_132, %c0_133, %c0_134, %c0_135] : memref<2x2x8x4xbf16, #tpu.memory_space<vmem>>, vector<1x1x8x4xbf16>
    %179 = vector.shape_cast %178 : vector<1x1x8x4xbf16> to vector<8x4xbf16>
    %cst_136 = arith.constant dense<0.000000e+00> : vector<128x4xf32>
    %180 = tpu.matmul %166, %179, %cst_136 {dimension_numbers = #tpu.dot_dimension_numbers<[1], [0], [0], [1], [0, 0, 1, 1], [], []>} : vector<128x8xbf16>, vector<8x4xbf16>, vector<128x4xf32> -> vector<128x4xf32>
    %c1_137 = arith.constant 1 : index
    %c0_138 = arith.constant 0 : index
    %c0_139 = arith.constant 0 : index
    %c0_140 = arith.constant 0 : index
    %181 = vector.load %arg8[%c1_137, %c0_138, %c0_139, %c0_140] : memref<2x2x1x4xf32, #tpu.memory_space<vmem>>, vector<1x1x1x4xf32>
    %182 = vector.shape_cast %181 : vector<1x1x1x4xf32> to vector<1x4xf32>
    %183 = vector.broadcast %182 : vector<1x4xf32> to vector<128x4xf32>
    %184 = arith.addf %180, %183 : vector<128x4xf32>
    %c1_141 = arith.constant 1 : index
    %c0_142 = arith.constant 0 : index
    %c0_143 = arith.constant 0 : index
    %c0_144 = arith.constant 0 : index
    %185 = vector.load %arg9[%c1_141, %c0_142, %c0_143, %c0_144] : memref<2x2x8x4xbf16, #tpu.memory_space<vmem>>, vector<1x1x8x4xbf16>
    %186 = vector.shape_cast %185 : vector<1x1x8x4xbf16> to vector<8x4xbf16>
    %cst_145 = arith.constant dense<0.000000e+00> : vector<128x4xf32>
    %187 = tpu.matmul %166, %186, %cst_145 {dimension_numbers = #tpu.dot_dimension_numbers<[1], [0], [0], [1], [0, 0, 1, 1], [], []>} : vector<128x8xbf16>, vector<8x4xbf16>, vector<128x4xf32> -> vector<128x4xf32>
    %c1_146 = arith.constant 1 : index
    %c0_147 = arith.constant 0 : index
    %c0_148 = arith.constant 0 : index
    %c0_149 = arith.constant 0 : index
    %188 = vector.load %arg10[%c1_146, %c0_147, %c0_148, %c0_149] : memref<2x2x1x4xf32, #tpu.memory_space<vmem>>, vector<1x1x1x4xf32>
    %189 = vector.shape_cast %188 : vector<1x1x1x4xf32> to vector<1x4xf32>
    %190 = vector.broadcast %189 : vector<1x4xf32> to vector<128x4xf32>
    %191 = arith.addf %187, %190 : vector<128x4xf32>
    %192 = arith.truncf %177 : vector<128x4xf32> to vector<128x4xbf16>
    %193 = arith.truncf %184 : vector<128x4xf32> to vector<128x4xbf16>
    %cst_150 = arith.constant dense<0.000000e+00> : vector<128x128xf32>
    %194 = tpu.matmul %192, %193, %cst_150 {dimension_numbers = #tpu.dot_dimension_numbers<[1], [1], [0], [0], [0, 0, 1, 0], [], []>} : vector<128x4xbf16>, vector<128x4xbf16>, vector<128x128xf32> -> vector<128x128xf32>
    %cst_151 = arith.constant 5.000000e-01 : f32
    %195 = vector.broadcast %cst_151 : f32 to vector<128x128xf32>
    %196 = arith.mulf %194, %195 : vector<128x128xf32>
    %197 = arith.addf %196, %1 : vector<128x128xf32>
    %cst_152 = arith.constant dense<0xFF800000> : vector<128xf32>
    %198 = vector.multi_reduction <maximumf>, %197, %cst_152 [1] : vector<128x128xf32> to vector<128xf32>
    %199 = vector.shape_cast %198 : vector<128xf32> to vector<128x1xf32>
    %200 = vector.broadcast %199 : vector<128x1xf32> to vector<128x128xf32>
    %201 = arith.subf %197, %200 : vector<128x128xf32>
    %202 = math.exp %201 : vector<128x128xf32>
    %cst_153 = arith.constant dense<0.000000e+00> : vector<128xf32>
    %203 = vector.multi_reduction <add>, %202, %cst_153 [1] : vector<128x128xf32> to vector<128xf32>
    %204 = vector.shape_cast %203 : vector<128xf32> to vector<128x1xf32>
    %205 = vector.broadcast %204 : vector<128x1xf32> to vector<128x128xf32>
    %206 = arith.divf %202, %205 : vector<128x128xf32>
    %207 = arith.truncf %206 : vector<128x128xf32> to vector<128x128xbf16>
    %208 = arith.truncf %191 : vector<128x4xf32> to vector<128x4xbf16>
    %cst_154 = arith.constant dense<0.000000e+00> : vector<128x4xf32>
    %209 = tpu.matmul %207, %208, %cst_154 {dimension_numbers = #tpu.dot_dimension_numbers<[1], [0], [0], [1], [0, 0, 1, 1], [], []>} : vector<128x128xbf16>, vector<128x4xbf16>, vector<128x4xf32> -> vector<128x4xf32>
    %210 = arith.truncf %209 : vector<128x4xf32> to vector<128x4xbf16>
    %c1_155 = arith.constant 1 : index
    %c0_156 = arith.constant 0 : index
    %c0_157 = arith.constant 0 : index
    %c0_158 = arith.constant 0 : index
    %211 = vector.load %arg11[%c1_155, %c0_156, %c0_157, %c0_158] : memref<2x2x4x8xbf16, #tpu.memory_space<vmem>>, vector<1x1x4x8xbf16>
    %212 = vector.shape_cast %211 : vector<1x1x4x8xbf16> to vector<4x8xbf16>
    %cst_159 = arith.constant dense<0.000000e+00> : vector<128x8xf32>
    %213 = tpu.matmul %210, %212, %cst_159 {dimension_numbers = #tpu.dot_dimension_numbers<[1], [0], [0], [1], [0, 0, 1, 1], [], []>} : vector<128x4xbf16>, vector<4x8xbf16>, vector<128x8xf32> -> vector<128x8xf32>
    %214 = arith.addf %170, %213 : vector<128x8xf32>
    %c1_160 = arith.constant 1 : index
    %c1_161 = arith.constant 1 : index
    %c0_162 = arith.constant 0 : index
    %c0_163 = arith.constant 0 : index
    %215 = vector.load %arg5[%c1_160, %c1_161, %c0_162, %c0_163] : memref<2x2x8x4xbf16, #tpu.memory_space<vmem>>, vector<1x1x8x4xbf16>
    %216 = vector.shape_cast %215 : vector<1x1x8x4xbf16> to vector<8x4xbf16>
    %cst_164 = arith.constant dense<0.000000e+00> : vector<128x4xf32>
    %217 = tpu.matmul %166, %216, %cst_164 {dimension_numbers = #tpu.dot_dimension_numbers<[1], [0], [0], [1], [0, 0, 1, 1], [], []>} : vector<128x8xbf16>, vector<8x4xbf16>, vector<128x4xf32> -> vector<128x4xf32>
    %c1_165 = arith.constant 1 : index
    %c1_166 = arith.constant 1 : index
    %c0_167 = arith.constant 0 : index
    %c0_168 = arith.constant 0 : index
    %218 = vector.load %arg6[%c1_165, %c1_166, %c0_167, %c0_168] : memref<2x2x1x4xf32, #tpu.memory_space<vmem>>, vector<1x1x1x4xf32>
    %219 = vector.shape_cast %218 : vector<1x1x1x4xf32> to vector<1x4xf32>
    %220 = vector.broadcast %219 : vector<1x4xf32> to vector<128x4xf32>
    %221 = arith.addf %217, %220 : vector<128x4xf32>
    %c1_169 = arith.constant 1 : index
    %c1_170 = arith.constant 1 : index
    %c0_171 = arith.constant 0 : index
    %c0_172 = arith.constant 0 : index
    %222 = vector.load %arg7[%c1_169, %c1_170, %c0_171, %c0_172] : memref<2x2x8x4xbf16, #tpu.memory_space<vmem>>, vector<1x1x8x4xbf16>
    %223 = vector.shape_cast %222 : vector<1x1x8x4xbf16> to vector<8x4xbf16>
    %cst_173 = arith.constant dense<0.000000e+00> : vector<128x4xf32>
    %224 = tpu.matmul %166, %223, %cst_173 {dimension_numbers = #tpu.dot_dimension_numbers<[1], [0], [0], [1], [0, 0, 1, 1], [], []>} : vector<128x8xbf16>, vector<8x4xbf16>, vector<128x4xf32> -> vector<128x4xf32>
    %c1_174 = arith.constant 1 : index
    %c1_175 = arith.constant 1 : index
    %c0_176 = arith.constant 0 : index
    %c0_177 = arith.constant 0 : index
    %225 = vector.load %arg8[%c1_174, %c1_175, %c0_176, %c0_177] : memref<2x2x1x4xf32, #tpu.memory_space<vmem>>, vector<1x1x1x4xf32>
    %226 = vector.shape_cast %225 : vector<1x1x1x4xf32> to vector<1x4xf32>
    %227 = vector.broadcast %226 : vector<1x4xf32> to vector<128x4xf32>
    %228 = arith.addf %224, %227 : vector<128x4xf32>
    %c1_178 = arith.constant 1 : index
    %c1_179 = arith.constant 1 : index
    %c0_180 = arith.constant 0 : index
    %c0_181 = arith.constant 0 : index
    %229 = vector.load %arg9[%c1_178, %c1_179, %c0_180, %c0_181] : memref<2x2x8x4xbf16, #tpu.memory_space<vmem>>, vector<1x1x8x4xbf16>
    %230 = vector.shape_cast %229 : vector<1x1x8x4xbf16> to vector<8x4xbf16>
    %cst_182 = arith.constant dense<0.000000e+00> : vector<128x4xf32>
    %231 = tpu.matmul %166, %230, %cst_182 {dimension_numbers = #tpu.dot_dimension_numbers<[1], [0], [0], [1], [0, 0, 1, 1], [], []>} : vector<128x8xbf16>, vector<8x4xbf16>, vector<128x4xf32> -> vector<128x4xf32>
    %c1_183 = arith.constant 1 : index
    %c1_184 = arith.constant 1 : index
    %c0_185 = arith.constant 0 : index
    %c0_186 = arith.constant 0 : index
    %232 = vector.load %arg10[%c1_183, %c1_184, %c0_185, %c0_186] : memref<2x2x1x4xf32, #tpu.memory_space<vmem>>, vector<1x1x1x4xf32>
    %233 = vector.shape_cast %232 : vector<1x1x1x4xf32> to vector<1x4xf32>
    %234 = vector.broadcast %233 : vector<1x4xf32> to vector<128x4xf32>
    %235 = arith.addf %231, %234 : vector<128x4xf32>
    %236 = arith.truncf %221 : vector<128x4xf32> to vector<128x4xbf16>
    %237 = arith.truncf %228 : vector<128x4xf32> to vector<128x4xbf16>
    %cst_187 = arith.constant dense<0.000000e+00> : vector<128x128xf32>
    %238 = tpu.matmul %236, %237, %cst_187 {dimension_numbers = #tpu.dot_dimension_numbers<[1], [1], [0], [0], [0, 0, 1, 0], [], []>} : vector<128x4xbf16>, vector<128x4xbf16>, vector<128x128xf32> -> vector<128x128xf32>
    %cst_188 = arith.constant 5.000000e-01 : f32
    %239 = vector.broadcast %cst_188 : f32 to vector<128x128xf32>
    %240 = arith.mulf %238, %239 : vector<128x128xf32>
    %241 = arith.addf %240, %1 : vector<128x128xf32>
    %cst_189 = arith.constant dense<0xFF800000> : vector<128xf32>
    %242 = vector.multi_reduction <maximumf>, %241, %cst_189 [1] : vector<128x128xf32> to vector<128xf32>
    %243 = vector.shape_cast %242 : vector<128xf32> to vector<128x1xf32>
    %244 = vector.broadcast %243 : vector<128x1xf32> to vector<128x128xf32>
    %245 = arith.subf %241, %244 : vector<128x128xf32>
    %246 = math.exp %245 : vector<128x128xf32>
    %cst_190 = arith.constant dense<0.000000e+00> : vector<128xf32>
    %247 = vector.multi_reduction <add>, %246, %cst_190 [1] : vector<128x128xf32> to vector<128xf32>
    %248 = vector.shape_cast %247 : vector<128xf32> to vector<128x1xf32>
    %249 = vector.broadcast %248 : vector<128x1xf32> to vector<128x128xf32>
    %250 = arith.divf %246, %249 : vector<128x128xf32>
    %251 = arith.truncf %250 : vector<128x128xf32> to vector<128x128xbf16>
    %252 = arith.truncf %235 : vector<128x4xf32> to vector<128x4xbf16>
    %cst_191 = arith.constant dense<0.000000e+00> : vector<128x4xf32>
    %253 = tpu.matmul %251, %252, %cst_191 {dimension_numbers = #tpu.dot_dimension_numbers<[1], [0], [0], [1], [0, 0, 1, 1], [], []>} : vector<128x128xbf16>, vector<128x4xbf16>, vector<128x4xf32> -> vector<128x4xf32>
    %254 = arith.truncf %253 : vector<128x4xf32> to vector<128x4xbf16>
    %c1_192 = arith.constant 1 : index
    %c1_193 = arith.constant 1 : index
    %c0_194 = arith.constant 0 : index
    %c0_195 = arith.constant 0 : index
    %255 = vector.load %arg11[%c1_192, %c1_193, %c0_194, %c0_195] : memref<2x2x4x8xbf16, #tpu.memory_space<vmem>>, vector<1x1x4x8xbf16>
    %256 = vector.shape_cast %255 : vector<1x1x4x8xbf16> to vector<4x8xbf16>
    %cst_196 = arith.constant dense<0.000000e+00> : vector<128x8xf32>
    %257 = tpu.matmul %254, %256, %cst_196 {dimension_numbers = #tpu.dot_dimension_numbers<[1], [0], [0], [1], [0, 0, 1, 1], [], []>} : vector<128x4xbf16>, vector<4x8xbf16>, vector<128x8xf32> -> vector<128x8xf32>
    %258 = arith.addf %214, %257 : vector<128x8xf32>
    %c1_197 = arith.constant 1 : index
    %c0_198 = arith.constant 0 : index
    %c0_199 = arith.constant 0 : index
    %259 = vector.load %arg13[%c1_197, %c0_198, %c0_199] : memref<2x1x8xf32, #tpu.memory_space<vmem>>, vector<1x1x8xf32>
    %260 = vector.shape_cast %259 : vector<1x1x8xf32> to vector<1x8xf32>
    %c1_200 = arith.constant 1 : index
    %c0_201 = arith.constant 0 : index
    %c0_202 = arith.constant 0 : index
    %261 = vector.load %arg14[%c1_200, %c0_201, %c0_202] : memref<2x1x8xf32, #tpu.memory_space<vmem>>, vector<1x1x8xf32>
    %262 = vector.shape_cast %261 : vector<1x1x8xf32> to vector<1x8xf32>
    %cst_203 = arith.constant dense<0.000000e+00> : vector<128xf32>
    %263 = vector.multi_reduction <add>, %258, %cst_203 [1] : vector<128x8xf32> to vector<128xf32>
    %264 = vector.shape_cast %263 : vector<128xf32> to vector<128x1xf32>
    %cst_204 = arith.constant 8.000000e+00 : f32
    %265 = vector.broadcast %cst_204 : f32 to vector<128x1xf32>
    %266 = arith.divf %264, %265 : vector<128x1xf32>
    %267 = vector.broadcast %266 : vector<128x1xf32> to vector<128x8xf32>
    %268 = arith.subf %258, %267 : vector<128x8xf32>
    %269 = arith.mulf %268, %268 : vector<128x8xf32>
    %cst_205 = arith.constant dense<0.000000e+00> : vector<128xf32>
    %270 = vector.multi_reduction <add>, %269, %cst_205 [1] : vector<128x8xf32> to vector<128xf32>
    %271 = vector.shape_cast %270 : vector<128xf32> to vector<128x1xf32>
    %cst_206 = arith.constant 8.000000e+00 : f32
    %272 = vector.broadcast %cst_206 : f32 to vector<128x1xf32>
    %273 = arith.divf %271, %272 : vector<128x1xf32>
    %cst_207 = arith.constant 9.99999974E-6 : f32
    %274 = vector.broadcast %cst_207 : f32 to vector<128x1xf32>
    %275 = arith.addf %273, %274 : vector<128x1xf32>
    %276 = math.rsqrt %275 : vector<128x1xf32>
    %277 = vector.broadcast %276 : vector<128x1xf32> to vector<128x8xf32>
    %278 = arith.mulf %268, %277 : vector<128x8xf32>
    %279 = vector.broadcast %260 : vector<1x8xf32> to vector<128x8xf32>
    %280 = arith.mulf %278, %279 : vector<128x8xf32>
    %281 = vector.broadcast %262 : vector<1x8xf32> to vector<128x8xf32>
    %282 = arith.addf %280, %281 : vector<128x8xf32>
    %283 = arith.truncf %282 : vector<128x8xf32> to vector<128x8xbf16>
    %c1_208 = arith.constant 1 : index
    %c0_209 = arith.constant 0 : index
    %c0_210 = arith.constant 0 : index
    %284 = vector.load %arg15[%c1_208, %c0_209, %c0_210] : memref<2x8x32xbf16, #tpu.memory_space<vmem>>, vector<1x8x32xbf16>
    %285 = vector.shape_cast %284 : vector<1x8x32xbf16> to vector<8x32xbf16>
    %cst_211 = arith.constant dense<0.000000e+00> : vector<128x32xf32>
    %286 = tpu.matmul %283, %285, %cst_211 {dimension_numbers = #tpu.dot_dimension_numbers<[1], [0], [0], [1], [0, 0, 1, 1], [], []>} : vector<128x8xbf16>, vector<8x32xbf16>, vector<128x32xf32> -> vector<128x32xf32>
    %c1_212 = arith.constant 1 : index
    %c0_213 = arith.constant 0 : index
    %c0_214 = arith.constant 0 : index
    %287 = vector.load %arg16[%c1_212, %c0_213, %c0_214] : memref<2x1x32xf32, #tpu.memory_space<vmem>>, vector<1x1x32xf32>
    %288 = vector.shape_cast %287 : vector<1x1x32xf32> to vector<1x32xf32>
    %289 = vector.broadcast %288 : vector<1x32xf32> to vector<128x32xf32>
    %290 = arith.addf %286, %289 : vector<128x32xf32>
    %cst_215 = arith.constant 0.000000e+00 : f32
    %291 = vector.broadcast %cst_215 : f32 to vector<128x32xf32>
    %292 = arith.maximumf %290, %291 : vector<128x32xf32>
    %293 = arith.truncf %292 : vector<128x32xf32> to vector<128x32xbf16>
    %c1_216 = arith.constant 1 : index
    %c0_217 = arith.constant 0 : index
    %c0_218 = arith.constant 0 : index
    %294 = vector.load %arg17[%c1_216, %c0_217, %c0_218] : memref<2x32x8xbf16, #tpu.memory_space<vmem>>, vector<1x32x8xbf16>
    %295 = vector.shape_cast %294 : vector<1x32x8xbf16> to vector<32x8xbf16>
    %cst_219 = arith.constant dense<0.000000e+00> : vector<128x8xf32>
    %296 = tpu.matmul %293, %295, %cst_219 {dimension_numbers = #tpu.dot_dimension_numbers<[1], [0], [0], [1], [0, 0, 1, 1], [], []>} : vector<128x32xbf16>, vector<32x8xbf16>, vector<128x8xf32> -> vector<128x8xf32>
    %297 = arith.addf %282, %296 : vector<128x8xf32>
    %c1_220 = arith.constant 1 : index
    %c0_221 = arith.constant 0 : index
    %c0_222 = arith.constant 0 : index
    %298 = vector.load %arg18[%c1_220, %c0_221, %c0_222] : memref<2x1x8xf32, #tpu.memory_space<vmem>>, vector<1x1x8xf32>
    %299 = vector.shape_cast %298 : vector<1x1x8xf32> to vector<1x8xf32>
    %300 = vector.broadcast %299 : vector<1x8xf32> to vector<128x8xf32>
    %301 = arith.addf %297, %300 : vector<128x8xf32>
    %c1_223 = arith.constant 1 : index
    %c0_224 = arith.constant 0 : index
    %c0_225 = arith.constant 0 : index
    %302 = vector.load %arg19[%c1_223, %c0_224, %c0_225] : memref<2x1x8xf32, #tpu.memory_space<vmem>>, vector<1x1x8xf32>
    %303 = vector.shape_cast %302 : vector<1x1x8xf32> to vector<1x8xf32>
    %c1_226 = arith.constant 1 : index
    %c0_227 = arith.constant 0 : index
    %c0_228 = arith.constant 0 : index
    %304 = vector.load %arg20[%c1_226, %c0_227, %c0_228] : memref<2x1x8xf32, #tpu.memory_space<vmem>>, vector<1x1x8xf32>
    %305 = vector.shape_cast %304 : vector<1x1x8xf32> to vector<1x8xf32>
    %cst_229 = arith.constant dense<0.000000e+00> : vector<128xf32>
    %306 = vector.multi_reduction <add>, %301, %cst_229 [1] : vector<128x8xf32> to vector<128xf32>
    %307 = vector.shape_cast %306 : vector<128xf32> to vector<128x1xf32>
    %cst_230 = arith.constant 8.000000e+00 : f32
    %308 = vector.broadcast %cst_230 : f32 to vector<128x1xf32>
    %309 = arith.divf %307, %308 : vector<128x1xf32>
    %310 = vector.broadcast %309 : vector<128x1xf32> to vector<128x8xf32>
    %311 = arith.subf %301, %310 : vector<128x8xf32>
    %312 = arith.mulf %311, %311 : vector<128x8xf32>
    %cst_231 = arith.constant dense<0.000000e+00> : vector<128xf32>
    %313 = vector.multi_reduction <add>, %312, %cst_231 [1] : vector<128x8xf32> to vector<128xf32>
    %314 = vector.shape_cast %313 : vector<128xf32> to vector<128x1xf32>
    %cst_232 = arith.constant 8.000000e+00 : f32
    %315 = vector.broadcast %cst_232 : f32 to vector<128x1xf32>
    %316 = arith.divf %314, %315 : vector<128x1xf32>
    %cst_233 = arith.constant 9.99999974E-6 : f32
    %317 = vector.broadcast %cst_233 : f32 to vector<128x1xf32>
    %318 = arith.addf %316, %317 : vector<128x1xf32>
    %319 = math.rsqrt %318 : vector<128x1xf32>
    %320 = vector.broadcast %319 : vector<128x1xf32> to vector<128x8xf32>
    %321 = arith.mulf %311, %320 : vector<128x8xf32>
    %322 = vector.broadcast %303 : vector<1x8xf32> to vector<128x8xf32>
    %323 = arith.mulf %321, %322 : vector<128x8xf32>
    %324 = vector.broadcast %305 : vector<1x8xf32> to vector<128x8xf32>
    %325 = arith.addf %323, %324 : vector<128x8xf32>
    %326 = arith.truncf %325 : vector<128x8xf32> to vector<128x8xbf16>
    %c0_234 = arith.constant 0 : index
    %c0_235 = arith.constant 0 : index
    %327 = vector.load %arg21[%c0_234, %c0_235] : memref<8x8xbf16, #tpu.memory_space<vmem>>, vector<8x8xbf16>
    %cst_236 = arith.constant dense<0.000000e+00> : vector<128x8xf32>
    %328 = tpu.matmul %326, %327, %cst_236 {dimension_numbers = #tpu.dot_dimension_numbers<[1], [0], [0], [1], [0, 0, 1, 1], [], []>} : vector<128x8xbf16>, vector<8x8xbf16>, vector<128x8xf32> -> vector<128x8xf32>
    %c0_237 = arith.constant 0 : index
    %c0_238 = arith.constant 0 : index
    %329 = vector.load %arg22[%c0_237, %c0_238] : memref<1x8xf32, #tpu.memory_space<vmem>>, vector<1x8xf32>
    %330 = vector.broadcast %329 : vector<1x8xf32> to vector<128x8xf32>
    %331 = arith.addf %328, %330 : vector<128x8xf32>
    %cst_239 = arith.constant 0.000000e+00 : f32
    %332 = vector.broadcast %cst_239 : f32 to vector<128x8xf32>
    %333 = arith.maximumf %331, %332 : vector<128x8xf32>
    %334 = math.absf %331 : vector<128x8xf32>
    %cst_240 = arith.constant 0.000000e+00 : f32
    %335 = vector.broadcast %cst_240 : f32 to vector<128x8xf32>
    %336 = arith.subf %335, %334 : vector<128x8xf32>
    %337 = math.exp %336 : vector<128x8xf32>
    %cst_241 = arith.constant 1.000000e+00 : f32
    %338 = vector.broadcast %cst_241 : f32 to vector<128x8xf32>
    %339 = arith.addf %338, %337 : vector<128x8xf32>
    %340 = math.log %339 : vector<128x8xf32>
    %341 = arith.addf %333, %340 : vector<128x8xf32>
    %c0_242 = arith.constant 0 : index
    %c0_243 = arith.constant 0 : index
    %342 = vector.load %arg23[%c0_242, %c0_243] : memref<128x8xf32, #tpu.memory_space<vmem>>, vector<128x8xf32>
    tpu.vector_store %arg23[%c0_242, %c0_243], %341 {strides = array<i32>} : memref<128x8xf32, #tpu.memory_space<vmem>>, vector<128x8xf32>,
    return
  }
  func.func @transform_0(%arg0: i32) -> (i32, i32) {
    %c0_i32 = arith.constant 0 : i32
    %c0_i32_0 = arith.constant 0 : i32
    return %arg0, %c0_i32 : i32, i32
  }
  func.func @transform_1(%arg0: i32) -> (i32, i32) {
    %c0_i32 = arith.constant 0 : i32
    %c0_i32_0 = arith.constant 0 : i32
    %c0_i32_1 = arith.constant 0 : i32
    return %c0_i32, %c0_i32_0 : i32, i32
  }
  func.func @transform_2(%arg0: i32) -> (i32, i32) {
    %c0_i32 = arith.constant 0 : i32
    %c0_i32_0 = arith.constant 0 : i32
    %c0_i32_1 = arith.constant 0 : i32
    return %c0_i32, %c0_i32_0 : i32, i32
  }
  func.func @transform_3(%arg0: i32) -> (i32, i32) {
    %c0_i32 = arith.constant 0 : i32
    %c0_i32_0 = arith.constant 0 : i32
    %c0_i32_1 = arith.constant 0 : i32
    return %c0_i32, %c0_i32_0 : i32, i32
  }
  func.func @transform_4(%arg0: i32) -> (i32, i32, i32, i32) {
    %c0_i32 = arith.constant 0 : i32
    %c0_i32_0 = arith.constant 0 : i32
    %c0_i32_1 = arith.constant 0 : i32
    %c0_i32_2 = arith.constant 0 : i32
    %c0_i32_3 = arith.constant 0 : i32
    return %c0_i32, %c0_i32_0, %c0_i32_1, %c0_i32_2 : i32, i32, i32, i32
  }
  func.func @transform_5(%arg0: i32) -> (i32, i32, i32, i32) {
    %c0_i32 = arith.constant 0 : i32
    %c0_i32_0 = arith.constant 0 : i32
    %c0_i32_1 = arith.constant 0 : i32
    %c0_i32_2 = arith.constant 0 : i32
    %c0_i32_3 = arith.constant 0 : i32
    return %c0_i32, %c0_i32_0, %c0_i32_1, %c0_i32_2 : i32, i32, i32, i32
  }
  func.func @transform_6(%arg0: i32) -> (i32, i32, i32, i32) {
    %c0_i32 = arith.constant 0 : i32
    %c0_i32_0 = arith.constant 0 : i32
    %c0_i32_1 = arith.constant 0 : i32
    %c0_i32_2 = arith.constant 0 : i32
    %c0_i32_3 = arith.constant 0 : i32
    return %c0_i32, %c0_i32_0, %c0_i32_1, %c0_i32_2 : i32, i32, i32, i32
  }
  func.func @transform_7(%arg0: i32) -> (i32, i32, i32, i32) {
    %c0_i32 = arith.constant 0 : i32
    %c0_i32_0 = arith.constant 0 : i32
    %c0_i32_1 = arith.constant 0 : i32
    %c0_i32_2 = arith.constant 0 : i32
    %c0_i32_3 = arith.constant 0 : i32
    return %c0_i32, %c0_i32_0, %c0_i32_1, %c0_i32_2 : i32, i32, i32, i32
  }
  func.func @transform_8(%arg0: i32) -> (i32, i32, i32, i32) {
    %c0_i32 = arith.constant 0 : i32
    %c0_i32_0 = arith.constant 0 : i32
    %c0_i32_1 = arith.constant 0 : i32
    %c0_i32_2 = arith.constant 0 : i32
    %c0_i32_3 = arith.constant 0 : i32
    return %c0_i32, %c0_i32_0, %c0_i32_1, %c0_i32_2 : i32, i32, i32, i32
  }
  func.func @transform_9(%arg0: i32) -> (i32, i32, i32, i32) {
    %c0_i32 = arith.constant 0 : i32
    %c0_i32_0 = arith.constant 0 : i32
    %c0_i32_1 = arith.constant 0 : i32
    %c0_i32_2 = arith.constant 0 : i32
    %c0_i32_3 = arith.constant 0 : i32
    return %c0_i32, %c0_i32_0, %c0_i32_1, %c0_i32_2 : i32, i32, i32, i32
  }
  func.func @transform_10(%arg0: i32) -> (i32, i32, i32, i32) {
    %c0_i32 = arith.constant 0 : i32
    %c0_i32_0 = arith.constant 0 : i32
    %c0_i32_1 = arith.constant 0 : i32
    %c0_i32_2 = arith.constant 0 : i32
    %c0_i32_3 = arith.constant 0 : i32
    return %c0_i32, %c0_i32_0, %c0_i32_1, %c0_i32_2 : i32, i32, i32, i32
  }
  func.func @transform_11(%arg0: i32) -> (i32, i32, i32) {
    %c0_i32 = arith.constant 0 : i32
    %c0_i32_0 = arith.constant 0 : i32
    %c0_i32_1 = arith.constant 0 : i32
    %c0_i32_2 = arith.constant 0 : i32
    return %c0_i32, %c0_i32_0, %c0_i32_1 : i32, i32, i32
  }
  func.func @transform_12(%arg0: i32) -> (i32, i32, i32) {
    %c0_i32 = arith.constant 0 : i32
    %c0_i32_0 = arith.constant 0 : i32
    %c0_i32_1 = arith.constant 0 : i32
    %c0_i32_2 = arith.constant 0 : i32
    return %c0_i32, %c0_i32_0, %c0_i32_1 : i32, i32, i32
  }
  func.func @transform_13(%arg0: i32) -> (i32, i32, i32) {
    %c0_i32 = arith.constant 0 : i32
    %c0_i32_0 = arith.constant 0 : i32
    %c0_i32_1 = arith.constant 0 : i32
    %c0_i32_2 = arith.constant 0 : i32
    return %c0_i32, %c0_i32_0, %c0_i32_1 : i32, i32, i32
  }
  func.func @transform_14(%arg0: i32) -> (i32, i32, i32) {
    %c0_i32 = arith.constant 0 : i32
    %c0_i32_0 = arith.constant 0 : i32
    %c0_i32_1 = arith.constant 0 : i32
    %c0_i32_2 = arith.constant 0 : i32
    return %c0_i32, %c0_i32_0, %c0_i32_1 : i32, i32, i32
  }
  func.func @transform_15(%arg0: i32) -> (i32, i32, i32) {
    %c0_i32 = arith.constant 0 : i32
    %c0_i32_0 = arith.constant 0 : i32
    %c0_i32_1 = arith.constant 0 : i32
    %c0_i32_2 = arith.constant 0 : i32
    return %c0_i32, %c0_i32_0, %c0_i32_1 : i32, i32, i32
  }
  func.func @transform_16(%arg0: i32) -> (i32, i32, i32) {
    %c0_i32 = arith.constant 0 : i32
    %c0_i32_0 = arith.constant 0 : i32
    %c0_i32_1 = arith.constant 0 : i32
    %c0_i32_2 = arith.constant 0 : i32
    return %c0_i32, %c0_i32_0, %c0_i32_1 : i32, i32, i32
  }
  func.func @transform_17(%arg0: i32) -> (i32, i32, i32) {
    %c0_i32 = arith.constant 0 : i32
    %c0_i32_0 = arith.constant 0 : i32
    %c0_i32_1 = arith.constant 0 : i32
    %c0_i32_2 = arith.constant 0 : i32
    return %c0_i32, %c0_i32_0, %c0_i32_1 : i32, i32, i32
  }
  func.func @transform_18(%arg0: i32) -> (i32, i32, i32) {
    %c0_i32 = arith.constant 0 : i32
    %c0_i32_0 = arith.constant 0 : i32
    %c0_i32_1 = arith.constant 0 : i32
    %c0_i32_2 = arith.constant 0 : i32
    return %c0_i32, %c0_i32_0, %c0_i32_1 : i32, i32, i32
  }
  func.func @transform_19(%arg0: i32) -> (i32, i32, i32) {
    %c0_i32 = arith.constant 0 : i32
    %c0_i32_0 = arith.constant 0 : i32
    %c0_i32_1 = arith.constant 0 : i32
    %c0_i32_2 = arith.constant 0 : i32
    return %c0_i32, %c0_i32_0, %c0_i32_1 : i32, i32, i32
  }
  func.func @transform_20(%arg0: i32) -> (i32, i32) {
    %c0_i32 = arith.constant 0 : i32
    %c0_i32_0 = arith.constant 0 : i32
    %c0_i32_1 = arith.constant 0 : i32
    return %c0_i32, %c0_i32_0 : i32, i32
  }
  func.func @transform_21(%arg0: i32) -> (i32, i32) {
    %c0_i32 = arith.constant 0 : i32
    %c0_i32_0 = arith.constant 0 : i32
    %c0_i32_1 = arith.constant 0 : i32
    return %c0_i32, %c0_i32_0 : i32, i32
  }
  func.func @transform_22(%arg0: i32) -> (i32, i32) {
    %c0_i32 = arith.constant 0 : i32
    %c0_i32_0 = arith.constant 0 : i32
    return %arg0, %c0_i32 : i32, i32
  }
}

</mosaic_0001>

<llo_original>
// kernel: tpu_custom_call.1
$region0: #{tpu_custom_call.1}
  #allocation0 [shape = 'u32[]', space=smem, size = 0x4, offset = 0x4, fixed_abs, tag = 'smem constant byte address 0x4 - core index']
  #allocation1 [shape = 'u32[144,128]{1,0:T(1,128)}', space=vmem, size = 0x12000, scoped, tag = 'internal scratch']
  %s0 = inlined_call_operand.vmem [shape: bf16[256,16], index: 0, kind: input, shape index: {}]
  %s1 = inlined_call_operand.vmem [shape: f32[128,128], index: 1, kind: input, shape index: {}]
  %s2 = inlined_call_operand.vmem [shape: f32[128,8], index: 2, kind: input, shape index: {}]
  %s3 = inlined_call_operand.vmem [shape: bf16[16,8], index: 3, kind: input, shape index: {}]
  %s4 = inlined_call_operand.vmem [shape: bf16[2,2,8,4], index: 4, kind: input, shape index: {}]
  %s5 = inlined_call_operand.vmem [shape: f32[2,2,1,4], index: 5, kind: input, shape index: {}]
  %s6 = inlined_call_operand.vmem [shape: bf16[2,2,8,4], index: 6, kind: input, shape index: {}]
  %s7 = inlined_call_operand.vmem [shape: f32[2,2,1,4], index: 7, kind: input, shape index: {}]
  %s8 = inlined_call_operand.vmem [shape: bf16[2,2,8,4], index: 8, kind: input, shape index: {}]
  %s9 = inlined_call_operand.vmem [shape: f32[2,2,1,4], index: 9, kind: input, shape index: {}]
  %s10 = inlined_call_operand.vmem [shape: bf16[2,2,4,8], index: 10, kind: input, shape index: {}]
  %s11 = inlined_call_operand.vmem [shape: f32[2,1,8], index: 11, kind: input, shape index: {}]
  %s12 = inlined_call_operand.vmem [shape: f32[2,1,8], index: 12, kind: input, shape index: {}]
  %s13 = inlined_call_operand.vmem [shape: f32[2,1,8], index: 13, kind: input, shape index: {}]
  %s14 = inlined_call_operand.vmem [shape: bf16[2,8,32], index: 14, kind: input, shape index: {}]
  %s15 = inlined_call_operand.vmem [shape: f32[2,1,32], index: 15, kind: input, shape index: {}]
  %s16 = inlined_call_operand.vmem [shape: bf16[2,32,8], index: 16, kind: input, shape index: {}]
  %s17 = inlined_call_operand.vmem [shape: f32[2,1,8], index: 17, kind: input, shape index: {}]
  %s18 = inlined_call_operand.vmem [shape: f32[2,1,8], index: 18, kind: input, shape index: {}]
  %s19 = inlined_call_operand.vmem [shape: f32[2,1,8], index: 19, kind: input, shape index: {}]
  %s20 = inlined_call_operand.vmem [shape: bf16[8,8], index: 20, kind: input, shape index: {}]
  %s21 = inlined_call_operand.vmem [shape: f32[1,8], index: 21, kind: input, shape index: {}]
  %s22 = inlined_call_operand.vmem [shape: f32[256,8], index: 22, kind: output, shape index: {}]
  %s23 = sld [smem:[#allocation0]]
  $region121: #{tpu_custom_call.1} parent=0
    _
  %s25 = ssub.s32 1, %s23
  %s26 = scalar_select 0, %s25, %s23
  loop: start=0, step=1, limit=4
  $region2: #{tpu_custom_call.1} parent=0 // loop_pre_header
    _
  $region3: #{tpu_custom_call.1} parent=0 // loop_header
    %s28 = sphi 0, %s32
    %p29 = scmp.ge.s32.totalorder %s28, 4
    %s38 = sphi 0, %s40
    %s41 = sphi 0, %s38
    %s42 = sphi 0, %s41
    %s58 = sphi 0, %s42
    %s62 = sphi 0, %s62
    %s64 = sphi 0, %s62
    %s65 = sphi 0, %s64
    %s79 = sphi 0, %s65
    %s83 = sphi 0, %s83
    %s85 = sphi 0, %s83
    %s86 = sphi 0, %s85
    %s100 = sphi 0, %s86
    %s104 = sphi 0, %s104
    %s106 = sphi 0, %s104
    %s107 = sphi 0, %s106
    %s121 = sphi 0, %s107
    %s125 = sphi 0, %s125
    %s127 = sphi 0, %s125
    %s128 = sphi 0, %s127
    %s142 = sphi 0, %s128
    %s146 = sphi 0, %s146
    %s148 = sphi 0, %s146
    %s149 = sphi 0, %s148
    %s163 = sphi 0, %s149
    %s167 = sphi 0, %s167
    %s169 = sphi 0, %s167
    %s170 = sphi 0, %s169
    %s184 = sphi 0, %s170
    %s188 = sphi 0, %s188
    %s190 = sphi 0, %s188
    %s191 = sphi 0, %s190
    %s205 = sphi 0, %s191
    %s209 = sphi 0, %s209
    %s211 = sphi 0, %s209
    %s212 = sphi 0, %s211
    %s226 = sphi 0, %s212
    %s230 = sphi 0, %s230
    %s232 = sphi 0, %s230
    %s233 = sphi 0, %s232
    %s247 = sphi 0, %s233
    %s251 = sphi 0, %s251
    %s253 = sphi 0, %s251
    %s254 = sphi 0, %s253
    %s268 = sphi 0, %s254
    %s272 = sphi 0, %s272
    %s274 = sphi 0, %s272
    %s275 = sphi 0, %s274
    %s289 = sphi 0, %s275
    %s293 = sphi 0, %s293
    %s295 = sphi 0, %s293
    %s296 = sphi 0, %s295
    %s310 = sphi 0, %s296
    %s314 = sphi 0, %s314
    %s316 = sphi 0, %s314
    %s317 = sphi 0, %s316
    %s331 = sphi 0, %s317
    %s335 = sphi 0, %s335
    %s337 = sphi 0, %s335
    %s338 = sphi 0, %s337
    %s352 = sphi 0, %s338
    %s356 = sphi 0, %s356
    %s358 = sphi 0, %s356
    %s359 = sphi 0, %s358
    %s373 = sphi 0, %s359
    %s377 = sphi 0, %s377
    %s379 = sphi 0, %s377
    %s380 = sphi 0, %s379
    %s394 = sphi 0, %s380
    %s398 = sphi 0, %s398
    %s400 = sphi 0, %s398
    %s401 = sphi 0, %s400
    %s415 = sphi 0, %s401
    %s419 = sphi 0, %s419
    %s421 = sphi 0, %s419
    %s422 = sphi 0, %s421
    %s436 = sphi 0, %s422
    %s440 = sphi 0, %s440
    %s442 = sphi 0, %s440
    %s443 = sphi 0, %s442
    %s457 = sphi 0, %s443
    %s461 = sphi 0, %s461
    %s463 = sphi 0, %s461
    %s464 = sphi 0, %s463
    %s478 = sphi 0, %s464
    %s482 = sphi 0, %s482
    %s484 = sphi 0, %s482
    %s485 = sphi 0, %s484
    %s499 = sphi 0, %s485
    %s505 = sphi 0, %s507
    %s508 = sphi 0, %s505
    %s509 = sphi 0, %s508
    %s525 = sphi 0, %s509
  $region4: #{tpu_custom_call.1} parent=0 // loop_header_branch
    %31 = sbr.rel (%p29) target = $region8
  $region5: #{tpu_custom_call.1} parent=0 // loop_body
    %s33 = ssub.s32 %s28, 1
    %s34 = ssub.s32 %s28, 2
    %s35 = sadd.s32 %s28, 1
    %s36 = ssub.s32 %s28, %s35
    %p37 = scmp.eq.s32.totalorder %s36, 0
    %s39 = sadd.s32 %s38, 1
    %s40 = scalar_select %p37, %s38, %s39
    %p43 = pneg %p37
    %p44 = scmp.eq.s32.totalorder %s28, 1
    %p45 = por %p43, %p44
    %p46 = scmp.ne.s32.totalorder %s38, %s41
    %p47 = scmp.eq.s32.totalorder %s28, 0
    %p48 = por %p46, %p47
    %p49 = scmp.ne.s32.totalorder %s38, %s41
    %p50 = scmp.eq.s32.totalorder %s33, 1
    %p51 = por %p49, %p50
    %p52 = scmp.ne.s32.totalorder %s41, %s42
    %p53 = scmp.eq.s32.totalorder %s33, 0
    %p54 = por %p52, %p53
    %p55 = scmp.ne.s32.totalorder %s41, %s42
    %p56 = scmp.eq.s32.totalorder %s34, 1
    %p57 = por %p55, %p56
    %p59 = scmp.ne.s32.totalorder %s42, %s58
    %p60 = scmp.eq.s32.totalorder %s34, 0
    %p61 = por %p59, %p60
    %s63 = sadd.s32 %s62, 1
    %p66 = scmp.eq.s32.totalorder %s28, 1
    %p67 = scmp.ne.s32.totalorder %s62, %s64
    %p68 = scmp.eq.s32.totalorder %s28, 0
    %p69 = por %p67, %p68
    %p70 = scmp.ne.s32.totalorder %s62, %s64
    %p71 = scmp.eq.s32.totalorder %s33, 1
    %p72 = por %p70, %p71
    %p73 = scmp.ne.s32.totalorder %s64, %s65
    %p74 = scmp.eq.s32.totalorder %s33, 0
    %p75 = por %p73, %p74
    %p76 = scmp.ne.s32.totalorder %s64, %s65
    %p77 = scmp.eq.s32.totalorder %s34, 1
    %p78 = por %p76, %p77
    %p80 = scmp.ne.s32.totalorder %s65, %s79
    %p81 = scmp.eq.s32.totalorder %s34, 0
    %p82 = por %p80, %p81
    %s84 = sadd.s32 %s83, 1
    %p87 = scmp.eq.s32.totalorder %s28, 1
    %p88 = scmp.ne.s32.totalorder %s83, %s85
    %p89 = scmp.eq.s32.totalorder %s28, 0
    %p90 = por %p88, %p89
    %p91 = scmp.ne.s32.totalorder %s83, %s85
    %p92 = scmp.eq.s32.totalorder %s33, 1
    %p93 = por %p91, %p92
    %p94 = scmp.ne.s32.totalorder %s85, %s86
    %p95 = scmp.eq.s32.totalorder %s33, 0
    %p96 = por %p94, %p95
    %p97 = scmp.ne.s32.totalorder %s85, %s86
    %p98 = scmp.eq.s32.totalorder %s34, 1
    %p99 = por %p97, %p98
    %p101 = scmp.ne.s32.totalorder %s86, %s100
    %p102 = scmp.eq.s32.totalorder %s34, 0
    %p103 = por %p101, %p102
    %s105 = sadd.s32 %s104, 1
    %p108 = scmp.eq.s32.totalorder %s28, 1
    %p109 = scmp.ne.s32.totalorder %s104, %s106
    %p110 = scmp.eq.s32.totalorder %s28, 0
    %p111 = por %p109, %p110
    %p112 = scmp.ne.s32.totalorder %s104, %s106
    %p113 = scmp.eq.s32.totalorder %s33, 1
    %p114 = por %p112, %p113
    %p115 = scmp.ne.s32.totalorder %s106, %s107
    %p116 = scmp.eq.s32.totalorder %s33, 0
    %p117 = por %p115, %p116
    %p118 = scmp.ne.s32.totalorder %s106, %s107
    %p119 = scmp.eq.s32.totalorder %s34, 1
    %p120 = por %p118, %p119
    %p122 = scmp.ne.s32.totalorder %s107, %s121
    %p123 = scmp.eq.s32.totalorder %s34, 0
    %p124 = por %p122, %p123
    %s126 = sadd.s32 %s125, 1
    %p129 = scmp.eq.s32.totalorder %s28, 1
    %p130 = scmp.ne.s32.totalorder %s125, %s127
    %p131 = scmp.eq.s32.totalorder %s28, 0
    %p132 = por %p130, %p131
    %p133 = scmp.ne.s32.totalorder %s125, %s127
    %p134 = scmp.eq.s32.totalorder %s33, 1
    %p135 = por %p133, %p134
    %p136 = scmp.ne.s32.totalorder %s127, %s128
    %p137 = scmp.eq.s32.totalorder %s33, 0
    %p138 = por %p136, %p137
    %p139 = scmp.ne.s32.totalorder %s127, %s128
    %p140 = scmp.eq.s32.totalorder %s34, 1
    %p141 = por %p139, %p140
    %p143 = scmp.ne.s32.totalorder %s128, %s142
    %p144 = scmp.eq.s32.totalorder %s34, 0
    %p145 = por %p143, %p144
    %s147 = sadd.s32 %s146, 1
    %p150 = scmp.eq.s32.totalorder %s28, 1
    %p151 = scmp.ne.s32.totalorder %s146, %s148
    %p152 = scmp.eq.s32.totalorder %s28, 0
    %p153 = por %p151, %p152
    %p154 = scmp.ne.s32.totalorder %s146, %s148
    %p155 = scmp.eq.s32.totalorder %s33, 1
    %p156 = por %p154, %p155
    %p157 = scmp.ne.s32.totalorder %s148, %s149
    %p158 = scmp.eq.s32.totalorder %s33, 0
    %p159 = por %p157, %p158
    %p160 = scmp.ne.s32.totalorder %s148, %s149
    %p161 = scmp.eq.s32.totalorder %s34, 1
    %p162 = por %p160, %p161
    %p164 = scmp.ne.s32.totalorder %s149, %s163
    %p165 = scmp.eq.s32.totalorder %s34, 0
    %p166 = por %p164, %p165
    %s168 = sadd.s32 %s167, 1
    %p171 = scmp.eq.s32.totalorder %s28, 1
    %p172 = scmp.ne.s32.totalorder %s167, %s169
    %p173 = scmp.eq.s32.totalorder %s28, 0
    %p174 = por %p172, %p173
    %p175 = scmp.ne.s32.totalorder %s167, %s169
    %p176 = scmp.eq.s32.totalorder %s33, 1
    %p177 = por %p175, %p176
    %p178 = scmp.ne.s32.totalorder %s169, %s170
    %p179 = scmp.eq.s32.totalorder %s33, 0
    %p180 = por %p178, %p179
    %p181 = scmp.ne.s32.totalorder %s169, %s170
    %p182 = scmp.eq.s32.totalorder %s34, 1
    %p183 = por %p181, %p182
    %p185 = scmp.ne.s32.totalorder %s170, %s184
    %p186 = scmp.eq.s32.totalorder %s34, 0
    %p187 = por %p185, %p186
    %s189 = sadd.s32 %s188, 1
    %p192 = scmp.eq.s32.totalorder %s28, 1
    %p193 = scmp.ne.s32.totalorder %s188, %s190
    %p194 = scmp.eq.s32.totalorder %s28, 0
    %p195 = por %p193, %p194
    %p196 = scmp.ne.s32.totalorder %s188, %s190
    %p197 = scmp.eq.s32.totalorder %s33, 1
    %p198 = por %p196, %p197
    %p199 = scmp.ne.s32.totalorder %s190, %s191
    %p200 = scmp.eq.s32.totalorder %s33, 0
    %p201 = por %p199, %p200
    %p202 = scmp.ne.s32.totalorder %s190, %s191
    %p203 = scmp.eq.s32.totalorder %s34, 1
    %p204 = por %p202, %p203
    %p206 = scmp.ne.s32.totalorder %s191, %s205
    %p207 = scmp.eq.s32.totalorder %s34, 0
    %p208 = por %p206, %p207
    %s210 = sadd.s32 %s209, 1
    %p213 = scmp.eq.s32.totalorder %s28, 1
    %p214 = scmp.ne.s32.totalorder %s209, %s211
    %p215 = scmp.eq.s32.totalorder %s28, 0
    %p216 = por %p214, %p215
    %p217 = scmp.ne.s32.totalorder %s209, %s211
    %p218 = scmp.eq.s32.totalorder %s33, 1
    %p219 = por %p217, %p218
    %p220 = scmp.ne.s32.totalorder %s211, %s212
    %p221 = scmp.eq.s32.totalorder %s33, 0
    %p222 = por %p220, %p221
    %p223 = scmp.ne.s32.totalorder %s211, %s212
    %p224 = scmp.eq.s32.totalorder %s34, 1
    %p225 = por %p223, %p224
    %p227 = scmp.ne.s32.totalorder %s212, %s226
    %p228 = scmp.eq.s32.totalorder %s34, 0
    %p229 = por %p227, %p228
    %s231 = sadd.s32 %s230, 1
    %p234 = scmp.eq.s32.totalorder %s28, 1
    %p235 = scmp.ne.s32.totalorder %s230, %s232
    %p236 = scmp.eq.s32.totalorder %s28, 0
    %p237 = por %p235, %p236
    %p238 = scmp.ne.s32.totalorder %s230, %s232
    %p239 = scmp.eq.s32.totalorder %s33, 1
    %p240 = por %p238, %p239
    %p241 = scmp.ne.s32.totalorder %s232, %s233
    %p242 = scmp.eq.s32.totalorder %s33, 0
    %p243 = por %p241, %p242
    %p244 = scmp.ne.s32.totalorder %s232, %s233
    %p245 = scmp.eq.s32.totalorder %s34, 1
    %p246 = por %p244, %p245
    %p248 = scmp.ne.s32.totalorder %s233, %s247
    %p249 = scmp.eq.s32.totalorder %s34, 0
    %p250 = por %p248, %p249
    %s252 = sadd.s32 %s251, 1
    %p255 = scmp.eq.s32.totalorder %s28, 1
    %p256 = scmp.ne.s32.totalorder %s251, %s253
    %p257 = scmp.eq.s32.totalorder %s28, 0
    %p258 = por %p256, %p257
    %p259 = scmp.ne.s32.totalorder %s251, %s253
    %p260 = scmp.eq.s32.totalorder %s33, 1
    %p261 = por %p259, %p260
    %p262 = scmp.ne.s32.totalorder %s253, %s254
    %p263 = scmp.eq.s32.totalorder %s33, 0
    %p264 = por %p262, %p263
    %p265 = scmp.ne.s32.totalorder %s253, %s254
    %p266 = scmp.eq.s32.totalorder %s34, 1
    %p267 = por %p265, %p266
    %p269 = scmp.ne.s32.totalorder %s254, %s268
    %p270 = scmp.eq.s32.totalorder %s34, 0
    %p271 = por %p269, %p270
    %s273 = sadd.s32 %s272, 1
    %p276 = scmp.eq.s32.totalorder %s28, 1
    %p277 = scmp.ne.s32.totalorder %s272, %s274
    %p278 = scmp.eq.s32.totalorder %s28, 0
    %p279 = por %p277, %p278
    %p280 = scmp.ne.s32.totalorder %s272, %s274
    %p281 = scmp.eq.s32.totalorder %s33, 1
    %p282 = por %p280, %p281
    %p283 = scmp.ne.s32.totalorder %s274, %s275
    %p284 = scmp.eq.s32.totalorder %s33, 0
    %p285 = por %p283, %p284
    %p286 = scmp.ne.s32.totalorder %s274, %s275
    %p287 = scmp.eq.s32.totalorder %s34, 1
    %p288 = por %p286, %p287
    %p290 = scmp.ne.s32.totalorder %s275, %s289
    %p291 = scmp.eq.s32.totalorder %s34, 0
    %p292 = por %p290, %p291
    %s294 = sadd.s32 %s293, 1
    %p297 = scmp.eq.s32.totalorder %s28, 1
    %p298 = scmp.ne.s32.totalorder %s293, %s295
    %p299 = scmp.eq.s32.totalorder %s28, 0
    %p300 = por %p298, %p299
    %p301 = scmp.ne.s32.totalorder %s293, %s295
    %p302 = scmp.eq.s32.totalorder %s33, 1
    %p303 = por %p301, %p302
    %p304 = scmp.ne.s32.totalorder %s295, %s296
    %p305 = scmp.eq.s32.totalorder %s33, 0
    %p306 = por %p304, %p305
    %p307 = scmp.ne.s32.totalorder %s295, %s296
    %p308 = scmp.eq.s32.totalorder %s34, 1
    %p309 = por %p307, %p308
    %p311 = scmp.ne.s32.totalorder %s296, %s310
    %p312 = scmp.eq.s32.totalorder %s34, 0
    %p313 = por %p311, %p312
    %s315 = sadd.s32 %s314, 1
    %p318 = scmp.eq.s32.totalorder %s28, 1
    %p319 = scmp.ne.s32.totalorder %s314, %s316
    %p320 = scmp.eq.s32.totalorder %s28, 0
    %p321 = por %p319, %p320
    %p322 = scmp.ne.s32.totalorder %s314, %s316
    %p323 = scmp.eq.s32.totalorder %s33, 1
    %p324 = por %p322, %p323
    %p325 = scmp.ne.s32.totalorder %s316, %s317
    %p326 = scmp.eq.s32.totalorder %s33, 0
    %p327 = por %p325, %p326
    %p328 = scmp.ne.s32.totalorder %s316, %s317
    %p329 = scmp.eq.s32.totalorder %s34, 1
    %p330 = por %p328, %p329
    %p332 = scmp.ne.s32.totalorder %s317, %s331
    %p333 = scmp.eq.s32.totalorder %s34, 0
    %p334 = por %p332, %p333
    %s336 = sadd.s32 %s335, 1
    %p339 = scmp.eq.s32.totalorder %s28, 1
    %p340 = scmp.ne.s32.totalorder %s335, %s337
    %p341 = scmp.eq.s32.totalorder %s28, 0
    %p342 = por %p340, %p341
    %p343 = scmp.ne.s32.totalorder %s335, %s337
    %p344 = scmp.eq.s32.totalorder %s33, 1
    %p345 = por %p343, %p344
    %p346 = scmp.ne.s32.totalorder %s337, %s338
    %p347 = scmp.eq.s32.totalorder %s33, 0
    %p348 = por %p346, %p347
    %p349 = scmp.ne.s32.totalorder %s337, %s338
    %p350 = scmp.eq.s32.totalorder %s34, 1
    %p351 = por %p349, %p350
    %p353 = scmp.ne.s32.totalorder %s338, %s352
    %p354 = scmp.eq.s32.totalorder %s34, 0
    %p355 = por %p353, %p354
    %s357 = sadd.s32 %s356, 1
    %p360 = scmp.eq.s32.totalorder %s28, 1
    %p361 = scmp.ne.s32.totalorder %s356, %s358
    %p362 = scmp.eq.s32.totalorder %s28, 0
    %p363 = por %p361, %p362
    %p364 = scmp.ne.s32.totalorder %s356, %s358
    %p365 = scmp.eq.s32.totalorder %s33, 1
    %p366 = por %p364, %p365
    %p367 = scmp.ne.s32.totalorder %s358, %s359
    %p368 = scmp.eq.s32.totalorder %s33, 0
    %p369 = por %p367, %p368
    %p370 = scmp.ne.s32.totalorder %s358, %s359
    %p371 = scmp.eq.s32.totalorder %s34, 1
    %p372 = por %p370, %p371
    %p374 = scmp.ne.s32.totalorder %s359, %s373
    %p375 = scmp.eq.s32.totalorder %s34, 0
    %p376 = por %p374, %p375
    %s378 = sadd.s32 %s377, 1
    %p381 = scmp.eq.s32.totalorder %s28, 1
    %p382 = scmp.ne.s32.totalorder %s377, %s379
    %p383 = scmp.eq.s32.totalorder %s28, 0
    %p384 = por %p382, %p383
    %p385 = scmp.ne.s32.totalorder %s377, %s379
    %p386 = scmp.eq.s32.totalorder %s33, 1
    %p387 = por %p385, %p386
    %p388 = scmp.ne.s32.totalorder %s379, %s380
    %p389 = scmp.eq.s32.totalorder %s33, 0
    %p390 = por %p388, %p389
    %p391 = scmp.ne.s32.totalorder %s379, %s380
    %p392 = scmp.eq.s32.totalorder %s34, 1
    %p393 = por %p391, %p392
    %p395 = scmp.ne.s32.totalorder %s380, %s394
    %p396 = scmp.eq.s32.totalorder %s34, 0
    %p397 = por %p395, %p396
    %s399 = sadd.s32 %s398, 1
    %p402 = scmp.eq.s32.totalorder %s28, 1
    %p403 = scmp.ne.s32.totalorder %s398, %s400
    %p404 = scmp.eq.s32.totalorder %s28, 0
    %p405 = por %p403, %p404
    %p406 = scmp.ne.s32.totalorder %s398, %s400
    %p407 = scmp.eq.s32.totalorder %s33, 1
    %p408 = por %p406, %p407
    %p409 = scmp.ne.s32.totalorder %s400, %s401
    %p410 = scmp.eq.s32.totalorder %s33, 0
    %p411 = por %p409, %p410
    %p412 = scmp.ne.s32.totalorder %s400, %s401
    %p413 = scmp.eq.s32.totalorder %s34, 1
    %p414 = por %p412, %p413
    %p416 = scmp.ne.s32.totalorder %s401, %s415
    %p417 = scmp.eq.s32.totalorder %s34, 0
    %p418 = por %p416, %p417
    %s420 = sadd.s32 %s419, 1
    %p423 = scmp.eq.s32.totalorder %s28, 1
    %p424 = scmp.ne.s32.totalorder %s419, %s421
    %p425 = scmp.eq.s32.totalorder %s28, 0
    %p426 = por %p424, %p425
    %p427 = scmp.ne.s32.totalorder %s419, %s421
    %p428 = scmp.eq.s32.totalorder %s33, 1
    %p429 = por %p427, %p428
    %p430 = scmp.ne.s32.totalorder %s421, %s422
    %p431 = scmp.eq.s32.totalorder %s33, 0
    %p432 = por %p430, %p431
    %p433 = scmp.ne.s32.totalorder %s421, %s422
    %p434 = scmp.eq.s32.totalorder %s34, 1
    %p435 = por %p433, %p434
    %p437 = scmp.ne.s32.totalorder %s422, %s436
    %p438 = scmp.eq.s32.totalorder %s34, 0
    %p439 = por %p437, %p438
    %s441 = sadd.s32 %s440, 1
    %p444 = scmp.eq.s32.totalorder %s28, 1
    %p445 = scmp.ne.s32.totalorder %s440, %s442
    %p446 = scmp.eq.s32.totalorder %s28, 0
    %p447 = por %p445, %p446
    %p448 = scmp.ne.s32.totalorder %s440, %s442
    %p449 = scmp.eq.s32.totalorder %s33, 1
    %p450 = por %p448, %p449
    %p451 = scmp.ne.s32.totalorder %s442, %s443
    %p452 = scmp.eq.s32.totalorder %s33, 0
    %p453 = por %p451, %p452
    %p454 = scmp.ne.s32.totalorder %s442, %s443
    %p455 = scmp.eq.s32.totalorder %s34, 1
    %p456 = por %p454, %p455
    %p458 = scmp.ne.s32.totalorder %s443, %s457
    %p459 = scmp.eq.s32.totalorder %s34, 0
    %p460 = por %p458, %p459
    %s462 = sadd.s32 %s461, 1
    %p465 = scmp.eq.s32.totalorder %s28, 1
    %p466 = scmp.ne.s32.totalorder %s461, %s463
    %p467 = scmp.eq.s32.totalorder %s28, 0
    %p468 = por %p466, %p467
    %p469 = scmp.ne.s32.totalorder %s461, %s463
    %p470 = scmp.eq.s32.totalorder %s33, 1
    %p471 = por %p469, %p470
    %p472 = scmp.ne.s32.totalorder %s463, %s464
    %p473 = scmp.eq.s32.totalorder %s33, 0
    %p474 = por %p472, %p473
    %p475 = scmp.ne.s32.totalorder %s463, %s464
    %p476 = scmp.eq.s32.totalorder %s34, 1
    %p477 = por %p475, %p476
    %p479 = scmp.ne.s32.totalorder %s464, %s478
    %p480 = scmp.eq.s32.totalorder %s34, 0
    %p481 = por %p479, %p480
    %s483 = sadd.s32 %s482, 1
    %p486 = scmp.eq.s32.totalorder %s28, 1
    %p487 = scmp.ne.s32.totalorder %s482, %s484
    %p488 = scmp.eq.s32.totalorder %s28, 0
    %p489 = por %p487, %p488
    %p490 = scmp.ne.s32.totalorder %s482, %s484
    %p491 = scmp.eq.s32.totalorder %s33, 1
    %p492 = por %p490, %p491
    %p493 = scmp.ne.s32.totalorder %s484, %s485
    %p494 = scmp.eq.s32.totalorder %s33, 0
    %p495 = por %p493, %p494
    %p496 = scmp.ne.s32.totalorder %s484, %s485
    %p497 = scmp.eq.s32.totalorder %s34, 1
    %p498 = por %p496, %p497
    %p500 = scmp.ne.s32.totalorder %s485, %s499
    %p501 = scmp.eq.s32.totalorder %s34, 0
    %p502 = por %p500, %p501
    %s503 = ssub.s32 %s28, %s35
    %p504 = scmp.eq.s32.totalorder %s503, 0
    %s506 = sadd.s32 %s505, 1
    %s507 = scalar_select %p504, %s505, %s506
    %p510 = pneg %p504
    %p511 = scmp.eq.s32.totalorder %s28, 1
    %p512 = por %p510, %p511
    %p513 = scmp.ne.s32.totalorder %s505, %s508
    %p514 = scmp.eq.s32.totalorder %s28, 0
    %p515 = por %p513, %p514
    %p516 = scmp.ne.s32.totalorder %s505, %s508
    %p517 = scmp.eq.s32.totalorder %s33, 1
    %p518 = por %p516, %p517
    %p519 = scmp.ne.s32.totalorder %s508, %s509
    %p520 = scmp.eq.s32.totalorder %s33, 0
    %p521 = por %p519, %p520
    %p522 = scmp.ne.s32.totalorder %s508, %s509
    %p523 = scmp.eq.s32.totalorder %s34, 1
    %p524 = por %p522, %p523
    %p526 = scmp.ne.s32.totalorder %s509, %s525
    %p527 = scmp.eq.s32.totalorder %s34, 0
    %p528 = por %p526, %p527
    %p529 = scmp.le.s32.totalorder 1, %s28
    %p530 = scmp.lt.s32.totalorder %s28, 3
    %p531 = pnand %p529, %p530
    %p532 = pneg %p531
    // Predicated region
    $region9: #{tpu_custom_call.1} parent=5 // pred_check
      _
    $region10: #{tpu_custom_call.1} parent=5 // pred_check_branch
      %534 = sbr.rel (%p531) target = $region12
    $region11: #{tpu_custom_call.1} parent=5 // pred_region
      %s535 = ssub.s32 %s28, 1
      // Predicated region
      $region13: #{tpu_custom_call.1} parent=11 // pred_check
        %p536 = pneg %p75
      $region14: #{tpu_custom_call.1} parent=11 // pred_check_branch
        %538 = sbr.rel (%p536) target = $region16
      $region15: #{tpu_custom_call.1} parent=11 // pred_region
        _
      $region16: #{tpu_custom_call.1} parent=11 // pred_fallthru
        _
      // Predicated region
      $region17: #{tpu_custom_call.1} parent=11 // pred_check
        %p539 = pneg %p96
      $region18: #{tpu_custom_call.1} parent=11 // pred_check_branch
        %541 = sbr.rel (%p539) target = $region20
      $region19: #{tpu_custom_call.1} parent=11 // pred_region
        _
      $region20: #{tpu_custom_call.1} parent=11 // pred_fallthru
        _
      // Predicated region
      $region21: #{tpu_custom_call.1} parent=11 // pred_check
        %p542 = pneg %p117
      $region22: #{tpu_custom_call.1} parent=11 // pred_check_branch
        %544 = sbr.rel (%p542) target = $region24
      $region23: #{tpu_custom_call.1} parent=11 // pred_region
        _
      $region24: #{tpu_custom_call.1} parent=11 // pred_fallthru
        _
      // Predicated region
      $region25: #{tpu_custom_call.1} parent=11 // pred_check
        %p545 = pneg %p138
      $region26: #{tpu_custom_call.1} parent=11 // pred_check_branch
        %547 = sbr.rel (%p545) target = $region28
      $region27: #{tpu_custom_call.1} parent=11 // pred_region
        _
      $region28: #{tpu_custom_call.1} parent=11 // pred_fallthru
        _
      // Predicated region
      $region29: #{tpu_custom_call.1} parent=11 // pred_check
        %p548 = pneg %p159
      $region30: #{tpu_custom_call.1} parent=11 // pred_check_branch
        %550 = sbr.rel (%p548) target = $region32
      $region31: #{tpu_custom_call.1} parent=11 // pred_region
        _
      $region32: #{tpu_custom_call.1} parent=11 // pred_fallthru
        _
      // Predicated region
      $region33: #{tpu_custom_call.1} parent=11 // pred_check
        %p551 = pneg %p180
      $region34: #{tpu_custom_call.1} parent=11 // pred_check_branch
        %553 = sbr.rel (%p551) target = $region36
      $region35: #{tpu_custom_call.1} parent=11 // pred_region
        _
      $region36: #{tpu_custom_call.1} parent=11 // pred_fallthru
        _
      // Predicated region
      $region37: #{tpu_custom_call.1} parent=11 // pred_check
        %p554 = pneg %p201
      $region38: #{tpu_custom_call.1} parent=11 // pred_check_branch
        %556 = sbr.rel (%p554) target = $region40
      $region39: #{tpu_custom_call.1} parent=11 // pred_region
        _
      $region40: #{tpu_custom_call.1} parent=11 // pred_fallthru
        _
      // Predicated region
      $region41: #{tpu_custom_call.1} parent=11 // pred_check
        %p557 = pneg %p222
      $region42: #{tpu_custom_call.1} parent=11 // pred_check_branch
        %559 = sbr.rel (%p557) target = $region44
      $region43: #{tpu_custom_call.1} parent=11 // pred_region
        _
      $region44: #{tpu_custom_call.1} parent=11 // pred_fallthru
        _
      // Predicated region
      $region45: #{tpu_custom_call.1} parent=11 // pred_check
        %p560 = pneg %p243
      $region46: #{tpu_custom_call.1} parent=11 // pred_check_branch
        %562 = sbr.rel (%p560) target = $region48
      $region47: #{tpu_custom_call.1} parent=11 // pred_region
        _
      $region48: #{tpu_custom_call.1} parent=11 // pred_fallthru
        _
      // Predicated region
      $region49: #{tpu_custom_call.1} parent=11 // pred_check
        %p563 = pneg %p264
      $region50: #{tpu_custom_call.1} parent=11 // pred_check_branch
        %565 = sbr.rel (%p563) target = $region52
      $region51: #{tpu_custom_call.1} parent=11 // pred_region
        _
      $region52: #{tpu_custom_call.1} parent=11 // pred_fallthru
        _
      // Predicated region
      $region53: #{tpu_custom_call.1} parent=11 // pred_check
        %p566 = pneg %p285
      $region54: #{tpu_custom_call.1} parent=11 // pred_check_branch
        %568 = sbr.rel (%p566) target = $region56
      $region55: #{tpu_custom_call.1} parent=11 // pred_region
        _
      $region56: #{tpu_custom_call.1} parent=11 // pred_fallthru
        _
      // Predicated region
      $region57: #{tpu_custom_call.1} parent=11 // pred_check
        %p569 = pneg %p306
      $region58: #{tpu_custom_call.1} parent=11 // pred_check_branch
        %571 = sbr.rel (%p569) target = $region60
      $region59: #{tpu_custom_call.1} parent=11 // pred_region
        _
      $region60: #{tpu_custom_call.1} parent=11 // pred_fallthru
        _
      // Predicated region
      $region61: #{tpu_custom_call.1} parent=11 // pred_check
        %p572 = pneg %p327
      $region62: #{tpu_custom_call.1} parent=11 // pred_check_branch
        %574 = sbr.rel (%p572) target = $region64
      $region63: #{tpu_custom_call.1} parent=11 // pred_region
        _
      $region64: #{tpu_custom_call.1} parent=11 // pred_fallthru
        _
      // Predicated region
      $region65: #{tpu_custom_call.1} parent=11 // pred_check
        %p575 = pneg %p348
      $region66: #{tpu_custom_call.1} parent=11 // pred_check_branch
        %577 = sbr.rel (%p575) target = $region68
      $region67: #{tpu_custom_call.1} parent=11 // pred_region
        _
      $region68: #{tpu_custom_call.1} parent=11 // pred_fallthru
        _
      // Predicated region
      $region69: #{tpu_custom_call.1} parent=11 // pred_check
        %p578 = pneg %p369
      $region70: #{tpu_custom_call.1} parent=11 // pred_check_branch
        %580 = sbr.rel (%p578) target = $region72
      $region71: #{tpu_custom_call.1} parent=11 // pred_region
        _
      $region72: #{tpu_custom_call.1} parent=11 // pred_fallthru
        _
      // Predicated region
      $region73: #{tpu_custom_call.1} parent=11 // pred_check
        %p581 = pneg %p390
      $region74: #{tpu_custom_call.1} parent=11 // pred_check_branch
        %583 = sbr.rel (%p581) target = $region76
      $region75: #{tpu_custom_call.1} parent=11 // pred_region
        _
      $region76: #{tpu_custom_call.1} parent=11 // pred_fallthru
        _
      // Predicated region
      $region77: #{tpu_custom_call.1} parent=11 // pred_check
        %p584 = pneg %p411
      $region78: #{tpu_custom_call.1} parent=11 // pred_check_branch
        %586 = sbr.rel (%p584) target = $region80
      $region79: #{tpu_custom_call.1} parent=11 // pred_region
        _
      $region80: #{tpu_custom_call.1} parent=11 // pred_fallthru
        _
      // Predicated region
      $region81: #{tpu_custom_call.1} parent=11 // pred_check
        %p587 = pneg %p432
      $region82: #{tpu_custom_call.1} parent=11 // pred_check_branch
        %589 = sbr.rel (%p587) target = $region84
      $region83: #{tpu_custom_call.1} parent=11 // pred_region
        _
      $region84: #{tpu_custom_call.1} parent=11 // pred_fallthru
        _
      // Predicated region
      $region85: #{tpu_custom_call.1} parent=11 // pred_check
        %p590 = pneg %p453
      $region86: #{tpu_custom_call.1} parent=11 // pred_check_branch
        %592 = sbr.rel (%p590) target = $region88
      $region87: #{tpu_custom_call.1} parent=11 // pred_region
        _
      $region88: #{tpu_custom_call.1} parent=11 // pred_fallthru
        _
      // Predicated region
      $region89: #{tpu_custom_call.1} parent=11 // pred_check
        %p593 = pneg %p474
      $region90: #{tpu_custom_call.1} parent=11 // pred_check_branch
        %595 = sbr.rel (%p593) target = $region92
      $region91: #{tpu_custom_call.1} parent=11 // pred_region
        _
      $region92: #{tpu_custom_call.1} parent=11 // pred_fallthru
        _
      // Predicated region
      $region93: #{tpu_custom_call.1} parent=11 // pred_check
        %p596 = pneg %p495
      $region94: #{tpu_custom_call.1} parent=11 // pred_check_branch
        %598 = sbr.rel (%p596) target = $region96
      $region95: #{tpu_custom_call.1} parent=11 // pred_region
        _
      $region96: #{tpu_custom_call.1} parent=11 // pred_fallthru
        _
    $region12: #{tpu_custom_call.1} parent=5 // pred_fallthru
      _
    %p599 = scmp.lt.s32.totalorder %s28, 2
    // Predicated region
    $region97: #{tpu_custom_call.1} parent=5 // pred_check
      %p600 = pneg %p599
    $region98: #{tpu_custom_call.1} parent=5 // pred_check_branch
      %602 = sbr.rel (%p600) target = $region100
    $region99: #{tpu_custom_call.1} parent=5 // pred_region
      // Predicated region
      $region101: #{tpu_custom_call.1} parent=99 // pred_check
        %p603 = pneg %p48
      $region102: #{tpu_custom_call.1} parent=99 // pred_check_branch
        %605 = sbr.rel (%p603) target = $region104
      $region103: #{tpu_custom_call.1} parent=99 // pred_region
        %s606 = smul.u32 16, %s28
        %p607 = scmp.lt.s32.totalorder %s606, 31
        %s608 = scalar_select %p607, %s606, 31
        %s609 = smul.addr %s608, 4
        %s610 = scalar_lea.vmem %s0, %s609
        %s611 = smul.u32 16, %s28
      $region104: #{tpu_custom_call.1} parent=99 // pred_fallthru
        _
    $region100: #{tpu_custom_call.1} parent=5 // pred_fallthru
      _
    %p612 = scmp.le.s32.totalorder 1, %s28
    %p613 = scmp.lt.s32.totalorder %s28, 3
    %p614 = pnand %p612, %p613
    %p615 = pneg %p614
    // Predicated region
    $region105: #{tpu_custom_call.1} parent=5 // pred_check
      _
    $region106: #{tpu_custom_call.1} parent=5 // pred_check_branch
      %617 = sbr.rel (%p614) target = $region108
    $region107: #{tpu_custom_call.1} parent=5 // pred_region
      %s618 = ssub.s32 %s28, 1
      %s619 = smul.u32 16, %s33
      %p620 = scmp.lt.s32.totalorder %s619, 31
      %s621 = scalar_select %p620, %s619, 31
      %s622 = smul.addr %s621, 4
      %s623 = scalar_lea.vmem %s0, %s622
      %p624 = pneg %p54
      %p625 = pneg %p51
      %p626 = pneg %p75
      %p627 = pneg %p72
      %p628 = pneg %p96
      %p629 = pneg %p93
      %p630 = pneg %p117
      %p631 = pneg %p114
      %p632 = pneg %p138
      %p633 = pneg %p135
      %p634 = pneg %p159
      %p635 = pneg %p156
      %p636 = pneg %p180
      %p637 = pneg %p177
      %p638 = pneg %p201
      %p639 = pneg %p198
      %p640 = pneg %p222
      %p641 = pneg %p219
      %p642 = pneg %p243
      %p643 = pneg %p240
      %p644 = pneg %p264
      %p645 = pneg %p261
      %p646 = pneg %p285
      %p647 = pneg %p282
      %p648 = pneg %p306
      %p649 = pneg %p303
      %p650 = pneg %p327
      %p651 = pneg %p324
      %p652 = pneg %p348
      %p653 = pneg %p345
      %p654 = pneg %p369
      %p655 = pneg %p366
      %p656 = pneg %p390
      %p657 = pneg %p387
      %p658 = pneg %p411
      %p659 = pneg %p408
      %p660 = pneg %p432
      %p661 = pneg %p429
      %p662 = pneg %p453
      %p663 = pneg %p450
      %p664 = pneg %p474
      %p665 = pneg %p471
      %p666 = pneg %p495
      %p667 = pneg %p492
      %p668 = pneg %p521
      %p669 = pneg %p518
      %s670 = smul.u32 16, %s33
      %p671 = scmp.lt.s32.totalorder %s670, 31
      %s672 = scalar_select %p671, %s670, 31
      %s673 = smul.addr %s672, 8
      %s674 = scalar_lea.vmem %s22, %s673
      %s675 = smul.u32 16, %s33
      %p676 = scmp.lt.s32.totalorder %s675, 31
      %s677 = scalar_select %p676, %s675, 31
      %s678 = smul.addr %s677, 4
      %s679 = scalar_lea.vmem %s0, %s678
      %s680 = smul.u32 16, %s33
      %s681 = smul.u32 16, %s33
      %p682 = scmp.lt.s32.totalorder %s681, 31
      %s683 = scalar_select %p682, %s681, 31
      %s684 = smul.addr %s683, 8
      %s685 = scalar_lea.vmem %s22, %s684
      %s686 = smul.u32 16, %s33
      %v688 = vld [vmem:[%s679] sm:$0xf]
      %v689 = vld [vmem:[%s679 + $0x4] sm:$0xf]
      %v690 = vld [vmem:[%s679 + $0x8] sm:$0xf]
      %v691 = vld [vmem:[%s679 + $0xc] sm:$0xf]
      %v692 = vld [vmem:[%s679 + $0x10] sm:$0xf]
      %v693 = vld [vmem:[%s679 + $0x14] sm:$0xf]
      %v694 = vld [vmem:[%s679 + $0x18] sm:$0xf]
      %v695 = vld [vmem:[%s679 + $0x1c] sm:$0xf]
      %v696 = vld [vmem:[%s679 + $0x20] sm:$0xf]
      %v697 = vld [vmem:[%s679 + $0x24] sm:$0xf]
      %v698 = vld [vmem:[%s679 + $0x28] sm:$0xf]
      %v699 = vld [vmem:[%s679 + $0x2c] sm:$0xf]
      %v700 = vld [vmem:[%s679 + $0x30] sm:$0xf]
      %v701 = vld [vmem:[%s679 + $0x34] sm:$0xf]
      %v702 = vld [vmem:[%s679 + $0x38] sm:$0xf]
      %v703 = vld [vmem:[%s679 + $0x3c] sm:$0xf]
      %v704 = vld [vmem:[%s1] sm:$0xff]
      %v705 = vld [vmem:[%s1 + $0x8] sm:$0xff]
      %v706 = vld [vmem:[%s1 + $0x10] sm:$0xff]
      %v707 = vld [vmem:[%s1 + $0x18] sm:$0xff]
      %v708 = vld [vmem:[%s1 + $0x20] sm:$0xff]
      %v709 = vld [vmem:[%s1 + $0x28] sm:$0xff]
      %v710 = vld [vmem:[%s1 + $0x30] sm:$0xff]
      %v711 = vld [vmem:[%s1 + $0x38] sm:$0xff]
      %v712 = vld [vmem:[%s1 + $0x40] sm:$0xff]
      %v713 = vld [vmem:[%s1 + $0x48] sm:$0xff]
      %v714 = vld [vmem:[%s1 + $0x50] sm:$0xff]
      %v715 = vld [vmem:[%s1 + $0x58] sm:$0xff]
      %v716 = vld [vmem:[%s1 + $0x60] sm:$0xff]
      %v717 = vld [vmem:[%s1 + $0x68] sm:$0xff]
      %v718 = vld [vmem:[%s1 + $0x70] sm:$0xff]
      %v719 = vld [vmem:[%s1 + $0x78] sm:$0xff]
      %v720 = vld [vmem:[%s3] sm:$0xf]
      %v721 = vld [vmem:[%s3 + $0x4] sm:$0xf]
      %v722 = vld [vmem:[%s2] sm:$0xff]
      %v723 = vld [vmem:[%s2 + $0x8] sm:$0xff]
      %v724 = vld [vmem:[%s2 + $0x10] sm:$0xff]
      %v725 = vld [vmem:[%s2 + $0x18] sm:$0xff]
      %v726 = vld [vmem:[%s2 + $0x20] sm:$0xff]
      %v727 = vld [vmem:[%s2 + $0x28] sm:$0xff]
      %v728 = vld [vmem:[%s2 + $0x30] sm:$0xff]
      %v729 = vld [vmem:[%s2 + $0x38] sm:$0xff]
      %v730 = vld [vmem:[%s2 + $0x40] sm:$0xff]
      %v731 = vld [vmem:[%s2 + $0x48] sm:$0xff]
      %v732 = vld [vmem:[%s2 + $0x50] sm:$0xff]
      %v733 = vld [vmem:[%s2 + $0x58] sm:$0xff]
      %v734 = vld [vmem:[%s2 + $0x60] sm:$0xff]
      %v735 = vld [vmem:[%s2 + $0x68] sm:$0xff]
      %v736 = vld [vmem:[%s2 + $0x70] sm:$0xff]
      %v737 = vld [vmem:[%s2 + $0x78] sm:$0xff]
      %v754 = vunpack.c.l.b16 %v688
      %v755 = vunpack.c.l.b16 %v689
      %v756 = vunpack.c.l.b16 %v690
      %v757 = vunpack.c.l.b16 %v691
      %v758 = vunpack.c.l.b16 %v692
      %v759 = vunpack.c.l.b16 %v693
      %v760 = vunpack.c.l.b16 %v694
      %v761 = vunpack.c.l.b16 %v695
      %v762 = vunpack.c.l.b16 %v696
      %v763 = vunpack.c.l.b16 %v697
      %v764 = vunpack.c.l.b16 %v698
      %v765 = vunpack.c.l.b16 %v699
      %v766 = vunpack.c.l.b16 %v700
      %v767 = vunpack.c.l.b16 %v701
      %v768 = vunpack.c.l.b16 %v702
      %v769 = vunpack.c.l.b16 %v703
      %v770 = vpack.c.b16 %v755, %v754
      %v771 = vpack.c.b16 %v757, %v756
      %v772 = vpack.c.b16 %v759, %v758
      %v773 = vpack.c.b16 %v761, %v760
      %v774 = vpack.c.b16 %v763, %v762
      %v775 = vpack.c.b16 %v765, %v764
      %v776 = vpack.c.b16 %v767, %v766
      %v777 = vpack.c.b16 %v769, %v768
      %v780 = vunpack.c.l.b16 %v720
      %v781 = vunpack.c.l.b16 %v721
      %v782 = vpack.c.b16 %v781, %v780
      %vm784 = vcmask 130048
      %v786 = vsel %vm784, %v770, 0
      %v789 = vsel %vm784, %v771, 0
      %v792 = vsel %vm784, %v772, 0
      %v795 = vsel %vm784, %v773, 0
      %v798 = vsel %vm784, %v774, 0
      %v801 = vsel %vm784, %v775, 0
      %v804 = vsel %vm784, %v776, 0
      %v807 = vsel %vm784, %v777, 0
      %809 = vmatprep.subr.bf16.mxu0 0
      %810 = vmatpush1.bf16.msra.mxu0 0
      %811 = vmatprep.subr.bf16.mxu0 0
      %812 = vmatpush1.bf16.msra.mxu0 0
      %813 = vmatprep.subr.bf16.mxu0 0
      %814 = vmatpush1.bf16.msra.mxu0 0
      %815 = vmatprep.subr.bf16.mxu0 0
      %816 = vmatpush1.bf16.msra.mxu0 0
      %817 = vmatprep.subr.bf16.mxu0 0
      %818 = vmatpush1.bf16.msra.mxu0 0
      %819 = vmatprep.subr.bf16.mxu0 0
      %820 = vmatpush1.bf16.msra.mxu0 0
      %821 = vmatprep.subr.bf16.mxu0 0
      %822 = vmatpush1.bf16.msra.mxu0 0
      %823 = vmatprep.subr.bf16.mxu0 0
      %824 = vmatpush1.bf16.msra.mxu0 %v782
      %825 = vmatprep.subr.bf16.mxu0 0
      %826 = vmatpush2.bf16.msra.mxu0 0
      %827 = vmatprep.subr.bf16.mxu0 0
      %828 = vmatpush2.bf16.msra.mxu0 0
      %829 = vmatprep.subr.bf16.mxu0 0
      %830 = vmatpush2.bf16.msra.mxu0 0
      %831 = vmatprep.subr.bf16.mxu0 0
      %832 = vmatpush2.bf16.msra.mxu0 0
      %833 = vmatprep.subr.bf16.mxu0 0
      %834 = vmatpush2.bf16.msra.mxu0 0
      %835 = vmatprep.subr.bf16.mxu0 0
      %836 = vmatpush2.bf16.msra.mxu0 0
      %837 = vmatprep.subr.bf16.mxu0 0
      %838 = vmatpush2.bf16.msra.mxu0 0
      %839 = vmatprep.subr.bf16.mxu0 0
      %840 = vmatpush2.bf16.msra.mxu0 0
      %841 = vmatprep.mubr.bf16.mxu0 0
      %842 = vmatmul.mubr.bf16.gmra.mxu0 %v786
      %v843 = vpop.f32.mrf.mxu0
      %v844 = vadd.f32 %v722, %v843
      %v845 = vpop.f32.mrf.mxu0
      %v846 = vpop.f32.mrf.mxu0
      %v847 = vadd.f32 %v723, %v846
      %v848 = vpop.f32.mrf.mxu0
      %849 = vmatprep.mubr.bf16.mxu0 0
      %850 = vmatmul.mubr.bf16.gmra.mxu0 %v789
      %v851 = vpop.f32.mrf.mxu0
      %v852 = vadd.f32 %v724, %v851
      %v853 = vpop.f32.mrf.mxu0
      %v854 = vpop.f32.mrf.mxu0
      %v855 = vadd.f32 %v725, %v854
      %v856 = vpop.f32.mrf.mxu0
      %857 = vmatprep.mubr.bf16.mxu0 0
      %858 = vmatmul.mubr.bf16.gmra.mxu0 %v792
      %v859 = vpop.f32.mrf.mxu0
      %v860 = vadd.f32 %v726, %v859
      %v861 = vpop.f32.mrf.mxu0
      %v862 = vpop.f32.mrf.mxu0
      %v863 = vadd.f32 %v727, %v862
      %v864 = vpop.f32.mrf.mxu0
      %865 = vmatprep.mubr.bf16.mxu0 0
      %866 = vmatmul.mubr.bf16.gmra.mxu0 %v795
      %v867 = vpop.f32.mrf.mxu0
      %v868 = vadd.f32 %v728, %v867
      %v869 = vpop.f32.mrf.mxu0
      %v870 = vpop.f32.mrf.mxu0
      %v871 = vadd.f32 %v729, %v870
      %v872 = vpop.f32.mrf.mxu0
      %873 = vmatprep.mubr.bf16.mxu0 0
      %874 = vmatmul.mubr.bf16.gmra.mxu0 %v798
      %v875 = vpop.f32.mrf.mxu0
      %v876 = vadd.f32 %v730, %v875
      %v877 = vpop.f32.mrf.mxu0
      %v878 = vpop.f32.mrf.mxu0
      %v879 = vadd.f32 %v731, %v878
      %v880 = vpop.f32.mrf.mxu0
      %881 = vmatprep.mubr.bf16.mxu0 0
      %882 = vmatmul.mubr.bf16.gmra.mxu0 %v801
      %v883 = vpop.f32.mrf.mxu0
      %v884 = vadd.f32 %v732, %v883
      %v885 = vpop.f32.mrf.mxu0
      %v886 = vpop.f32.mrf.mxu0
      %v887 = vadd.f32 %v733, %v886
      %v888 = vpop.f32.mrf.mxu0
      %889 = vmatprep.mubr.bf16.mxu0 0
      %890 = vmatmul.mubr.bf16.gmra.mxu0 %v804
      %v891 = vpop.f32.mrf.mxu0
      %v892 = vadd.f32 %v734, %v891
      %v893 = vpop.f32.mrf.mxu0
      %v894 = vpop.f32.mrf.mxu0
      %v895 = vadd.f32 %v735, %v894
      %v896 = vpop.f32.mrf.mxu0
      %897 = vmatprep.mubr.bf16.mxu0 0
      %898 = vmatmul.mubr.bf16.gmra.mxu0 %v807
      %v899 = vpop.f32.mrf.mxu0
      %v900 = vadd.f32 %v736, %v899
      %v901 = vpop.f32.mrf.mxu0
      %v902 = vpop.f32.mrf.mxu0
      %v903 = vadd.f32 %v737, %v902
      %v904 = vpop.f32.mrf.mxu0
      %905 = vdwg.mxu0
      %v906 = vpack.c.bf16 %v847, %v844
      %v907 = vpack.c.bf16 %v855, %v852
      %v908 = vpack.c.bf16 %v863, %v860
      %v909 = vpack.c.bf16 %v871, %v868
      %v910 = vpack.c.bf16 %v879, %v876
      %v911 = vpack.c.bf16 %v887, %v884
      %v912 = vpack.c.bf16 %v895, %v892
      %v913 = vpack.c.bf16 %v903, %v900
      %v914 = vld [vmem:[%s11] sm:$0x1]
      %v916 = vlaneseq
      %v917 = vshrl.u32 %v916, 7
      %v918 = vsub.s32 0, %v917
      %v919 = vrot.slane %v914, %v918
      %v921 = vadd.f32 %v844, %v919
      %v922 = vadd.f32 %v847, %v919
      %v923 = vadd.f32 %v852, %v919
      %v924 = vadd.f32 %v855, %v919
      %v925 = vadd.f32 %v860, %v919
      %v926 = vadd.f32 %v863, %v919
      %v927 = vadd.f32 %v868, %v919
      %v928 = vadd.f32 %v871, %v919
      %v929 = vadd.f32 %v876, %v919
      %v930 = vadd.f32 %v879, %v919
      %v931 = vadd.f32 %v884, %v919
      %v932 = vadd.f32 %v887, %v919
      %v933 = vadd.f32 %v892, %v919
      %v934 = vadd.f32 %v895, %v919
      %v935 = vadd.f32 %v900, %v919
      %v936 = vadd.f32 %v903, %v919
      %v937 = vld [vmem:[%s4] sm:$0xf]
      %v938 = vld [vmem:[%s5] sm:$0x1]
      %v940 = vlaneseq
      %v941 = vshrl.u32 %v940, 7
      %v942 = vsub.s32 0, %v941
      %v943 = vrot.slane %v938, %v942
      %vm945 = vcmask 64512
      %v947 = vsel %vm945, %v906, 0
      %v950 = vsel %vm945, %v907, 0
      %v953 = vsel %vm945, %v908, 0
      %v956 = vsel %vm945, %v909, 0
      %v959 = vsel %vm945, %v910, 0
      %v962 = vsel %vm945, %v911, 0
      %v965 = vsel %vm945, %v912, 0
      %v968 = vsel %vm945, %v913, 0
      %vm970 = vcmask 1043456
      %v972 = vsel %vm970, %v937, 0
      %974 = vmatprep.subr.bf16.mxu0 0
      %975 = vmatpush1.bf16.msra.mxu0 0
      %976 = vmatprep.subr.bf16.mxu0 0
      %977 = vmatpush1.bf16.msra.mxu0 0
      %978 = vmatprep.subr.bf16.mxu0 0
      %979 = vmatpush1.bf16.msra.mxu0 0
      %980 = vmatprep.subr.bf16.mxu0 0
      %981 = vmatpush1.bf16.msra.mxu0 0
      %982 = vmatprep.subr.bf16.mxu0 0
      %983 = vmatpush1.bf16.msra.mxu0 0
      %984 = vmatprep.subr.bf16.mxu0 0
      %985 = vmatpush1.bf16.msra.mxu0 0
      %986 = vmatprep.subr.bf16.mxu0 0
      %987 = vmatpush1.bf16.msra.mxu0 0
      %988 = vmatprep.subr.bf16.mxu0 0
      %989 = vmatpush1.bf16.msra.mxu0 %v972
      %990 = vmatprep.subr.bf16.mxu0 0
      %991 = vmatpush2.bf16.msra.mxu0 0
      %992 = vmatprep.subr.bf16.mxu0 0
      %993 = vmatpush2.bf16.msra.mxu0 0
      %994 = vmatprep.subr.bf16.mxu0 0
      %995 = vmatpush2.bf16.msra.mxu0 0
      %996 = vmatprep.subr.bf16.mxu0 0
      %997 = vmatpush2.bf16.msra.mxu0 0
      %998 = vmatprep.subr.bf16.mxu0 0
      %999 = vmatpush2.bf16.msra.mxu0 0
      %1000 = vmatprep.subr.bf16.mxu0 0
      %1001 = vmatpush2.bf16.msra.mxu0 0
      %1002 = vmatprep.subr.bf16.mxu0 0
      %1003 = vmatpush2.bf16.msra.mxu0 0
      %1004 = vmatprep.subr.bf16.mxu0 0
      %1005 = vmatpush2.bf16.msra.mxu0 0
      %1006 = vmatprep.mubr.bf16.mxu0 0
      %1007 = vmatmul.mubr.bf16.gmra.mxu0 %v947
      %v1008 = vpop.f32.mrf.mxu0
      %v1009 = vadd.f32 %v943, %v1008
      %v1010 = vpop.f32.mrf.mxu0
      %v1011 = vpop.f32.mrf.mxu0
      %v1012 = vadd.f32 %v943, %v1011
      %v1013 = vpop.f32.mrf.mxu0
      %1014 = vmatprep.mubr.bf16.mxu0 0
      %1015 = vmatmul.mubr.bf16.gmra.mxu0 %v950
      %v1016 = vpop.f32.mrf.mxu0
      %v1017 = vadd.f32 %v943, %v1016
      %v1018 = vpop.f32.mrf.mxu0
      %v1019 = vpop.f32.mrf.mxu0
      %v1020 = vadd.f32 %v943, %v1019
      %v1021 = vpop.f32.mrf.mxu0
      %1022 = vmatprep.mubr.bf16.mxu0 0
      %1023 = vmatmul.mubr.bf16.gmra.mxu0 %v953
      %v1024 = vpop.f32.mrf.mxu0
      %v1025 = vadd.f32 %v943, %v1024
      %v1026 = vpop.f32.mrf.mxu0
      %v1027 = vpop.f32.mrf.mxu0
      %v1028 = vadd.f32 %v943, %v1027
      %v1029 = vpop.f32.mrf.mxu0
      %1030 = vmatprep.mubr.bf16.mxu0 0
      %1031 = vmatmul.mubr.bf16.gmra.mxu0 %v956
      %v1032 = vpop.f32.mrf.mxu0
      %v1033 = vadd.f32 %v943, %v1032
      %v1034 = vpop.f32.mrf.mxu0
      %v1035 = vpop.f32.mrf.mxu0
      %v1036 = vadd.f32 %v943, %v1035
      %v1037 = vpop.f32.mrf.mxu0
      %1038 = vmatprep.mubr.bf16.mxu0 0
      %1039 = vmatmul.mubr.bf16.gmra.mxu0 %v959
      %v1040 = vpop.f32.mrf.mxu0
      %v1041 = vadd.f32 %v943, %v1040
      %v1042 = vpop.f32.mrf.mxu0
      %v1043 = vpop.f32.mrf.mxu0
      %v1044 = vadd.f32 %v943, %v1043
      %v1045 = vpop.f32.mrf.mxu0
      %1046 = vmatprep.mubr.bf16.mxu0 0
      %1047 = vmatmul.mubr.bf16.gmra.mxu0 %v962
      %v1048 = vpop.f32.mrf.mxu0
      %v1049 = vadd.f32 %v943, %v1048
      %v1050 = vpop.f32.mrf.mxu0
      %v1051 = vpop.f32.mrf.mxu0
      %v1052 = vadd.f32 %v943, %v1051
      %v1053 = vpop.f32.mrf.mxu0
      %1054 = vmatprep.mubr.bf16.mxu0 0
      %1055 = vmatmul.mubr.bf16.gmra.mxu0 %v965
      %v1056 = vpop.f32.mrf.mxu0
      %v1057 = vadd.f32 %v943, %v1056
      %v1058 = vpop.f32.mrf.mxu0
      %v1059 = vpop.f32.mrf.mxu0
      %v1060 = vadd.f32 %v943, %v1059
      %v1061 = vpop.f32.mrf.mxu0
      %1062 = vmatprep.mubr.bf16.mxu0 0
      %1063 = vmatmul.mubr.bf16.gmra.mxu0 %v968
      %v1064 = vpop.f32.mrf.mxu0
      %v1065 = vadd.f32 %v943, %v1064
      %v1066 = vpop.f32.mrf.mxu0
      %v1067 = vpop.f32.mrf.mxu0
      %v1068 = vadd.f32 %v943, %v1067
      %v1069 = vpop.f32.mrf.mxu0
      %1070 = vdwg.mxu0
      %v1071 = vld [vmem:[%s6] sm:$0xf]
      %v1072 = vld [vmem:[%s7] sm:$0x1]
      %v1074 = vlaneseq
      %v1075 = vshrl.u32 %v1074, 7
      %v1076 = vsub.s32 0, %v1075
      %v1077 = vrot.slane %v1072, %v1076
      %v1080 = vsel %vm970, %v1071, 0
      %1082 = vmatprep.subr.bf16.mxu0 0
      %1083 = vmatpush1.bf16.msra.mxu0 0
      %1084 = vmatprep.subr.bf16.mxu0 0
      %1085 = vmatpush1.bf16.msra.mxu0 0
      %1086 = vmatprep.subr.bf16.mxu0 0
      %1087 = vmatpush1.bf16.msra.mxu0 0
      %1088 = vmatprep.subr.bf16.mxu0 0
      %1089 = vmatpush1.bf16.msra.mxu0 0
      %1090 = vmatprep.subr.bf16.mxu0 0
      %1091 = vmatpush1.bf16.msra.mxu0 0
      %1092 = vmatprep.subr.bf16.mxu0 0
      %1093 = vmatpush1.bf16.msra.mxu0 0
      %1094 = vmatprep.subr.bf16.mxu0 0
      %1095 = vmatpush1.bf16.msra.mxu0 0
      %1096 = vmatprep.subr.bf16.mxu0 0
      %1097 = vmatpush1.bf16.msra.mxu0 %v1080
      %1098 = vmatprep.subr.bf16.mxu0 0
      %1099 = vmatpush2.bf16.msra.mxu0 0
      %1100 = vmatprep.subr.bf16.mxu0 0
      %1101 = vmatpush2.bf16.msra.mxu0 0
      %1102 = vmatprep.subr.bf16.mxu0 0
      %1103 = vmatpush2.bf16.msra.mxu0 0
      %1104 = vmatprep.subr.bf16.mxu0 0
      %1105 = vmatpush2.bf16.msra.mxu0 0
      %1106 = vmatprep.subr.bf16.mxu0 0
      %1107 = vmatpush2.bf16.msra.mxu0 0
      %1108 = vmatprep.subr.bf16.mxu0 0
      %1109 = vmatpush2.bf16.msra.mxu0 0
      %1110 = vmatprep.subr.bf16.mxu0 0
      %1111 = vmatpush2.bf16.msra.mxu0 0
      %1112 = vmatprep.subr.bf16.mxu0 0
      %1113 = vmatpush2.bf16.msra.mxu0 0
      %1114 = vmatprep.mubr.bf16.mxu0 0
      %1115 = vmatmul.mubr.bf16.gmra.mxu0 %v947
      %v1116 = vpop.f32.mrf.mxu0
      %v1117 = vadd.f32 %v1077, %v1116
      %v1118 = vpop.f32.mrf.mxu0
      %v1119 = vpop.f32.mrf.mxu0
      %v1120 = vadd.f32 %v1077, %v1119
      %v1121 = vpop.f32.mrf.mxu0
      %1122 = vmatprep.mubr.bf16.mxu0 0
      %1123 = vmatmul.mubr.bf16.gmra.mxu0 %v950
      %v1124 = vpop.f32.mrf.mxu0
      %v1125 = vadd.f32 %v1077, %v1124
      %v1126 = vpop.f32.mrf.mxu0
      %v1127 = vpop.f32.mrf.mxu0
      %v1128 = vadd.f32 %v1077, %v1127
      %v1129 = vpop.f32.mrf.mxu0
      %1130 = vmatprep.mubr.bf16.mxu0 0
      %1131 = vmatmul.mubr.bf16.gmra.mxu0 %v953
      %v1132 = vpop.f32.mrf.mxu0
      %v1133 = vadd.f32 %v1077, %v1132
      %v1134 = vpop.f32.mrf.mxu0
      %v1135 = vpop.f32.mrf.mxu0
      %v1136 = vadd.f32 %v1077, %v1135
      %v1137 = vpop.f32.mrf.mxu0
      %1138 = vmatprep.mubr.bf16.mxu0 0
      %1139 = vmatmul.mubr.bf16.gmra.mxu0 %v956
      %v1140 = vpop.f32.mrf.mxu0
      %v1141 = vadd.f32 %v1077, %v1140
      %v1142 = vpop.f32.mrf.mxu0
      %v1143 = vpop.f32.mrf.mxu0
      %v1144 = vadd.f32 %v1077, %v1143
      %v1145 = vpop.f32.mrf.mxu0
      %1146 = vmatprep.mubr.bf16.mxu0 0
      %1147 = vmatmul.mubr.bf16.gmra.mxu0 %v959
      %v1148 = vpop.f32.mrf.mxu0
      %v1149 = vadd.f32 %v1077, %v1148
      %v1150 = vpop.f32.mrf.mxu0
      %v1151 = vpop.f32.mrf.mxu0
      %v1152 = vadd.f32 %v1077, %v1151
      %v1153 = vpop.f32.mrf.mxu0
      %1154 = vmatprep.mubr.bf16.mxu0 0
      %1155 = vmatmul.mubr.bf16.gmra.mxu0 %v962
      %v1156 = vpop.f32.mrf.mxu0
      %v1157 = vadd.f32 %v1077, %v1156
      %v1158 = vpop.f32.mrf.mxu0
      %v1159 = vpop.f32.mrf.mxu0
      %v1160 = vadd.f32 %v1077, %v1159
      %v1161 = vpop.f32.mrf.mxu0
      %1162 = vmatprep.mubr.bf16.mxu0 0
      %1163 = vmatmul.mubr.bf16.gmra.mxu0 %v965
      %v1164 = vpop.f32.mrf.mxu0
      %v1165 = vadd.f32 %v1077, %v1164
      %v1166 = vpop.f32.mrf.mxu0
      %v1167 = vpop.f32.mrf.mxu0
      %v1168 = vadd.f32 %v1077, %v1167
      %v1169 = vpop.f32.mrf.mxu0
      %1170 = vmatprep.mubr.bf16.mxu0 0
      %1171 = vmatmul.mubr.bf16.gmra.mxu0 %v968
      %v1172 = vpop.f32.mrf.mxu0
      %v1173 = vadd.f32 %v1077, %v1172
      %v1174 = vpop.f32.mrf.mxu0
      %v1175 = vpop.f32.mrf.mxu0
      %v1176 = vadd.f32 %v1077, %v1175
      %v1177 = vpop.f32.mrf.mxu0
      %1178 = vdwg.mxu0
      %v1179 = vld [vmem:[%s8] sm:$0xf]
      %v1180 = vld [vmem:[%s9] sm:$0x1]
      %v1182 = vlaneseq
      %v1183 = vshrl.u32 %v1182, 7
      %v1184 = vsub.s32 0, %v1183
      %v1185 = vrot.slane %v1180, %v1184
      %v1188 = vsel %vm970, %v1179, 0
      %1190 = vmatprep.subr.bf16.mxu0 0
      %1191 = vmatpush1.bf16.msra.mxu0 0
      %1192 = vmatprep.subr.bf16.mxu0 0
      %1193 = vmatpush1.bf16.msra.mxu0 0
      %1194 = vmatprep.subr.bf16.mxu0 0
      %1195 = vmatpush1.bf16.msra.mxu0 0
      %1196 = vmatprep.subr.bf16.mxu0 0
      %1197 = vmatpush1.bf16.msra.mxu0 0
      %1198 = vmatprep.subr.bf16.mxu0 0
      %1199 = vmatpush1.bf16.msra.mxu0 0
      %1200 = vmatprep.subr.bf16.mxu0 0
      %1201 = vmatpush1.bf16.msra.mxu0 0
      %1202 = vmatprep.subr.bf16.mxu0 0
      %1203 = vmatpush1.bf16.msra.mxu0 0
      %1204 = vmatprep.subr.bf16.mxu0 0
      %1205 = vmatpush1.bf16.msra.mxu0 %v1188
      %1206 = vmatprep.subr.bf16.mxu0 0
      %1207 = vmatpush2.bf16.msra.mxu0 0
      %1208 = vmatprep.subr.bf16.mxu0 0
      %1209 = vmatpush2.bf16.msra.mxu0 0
      %1210 = vmatprep.subr.bf16.mxu0 0
      %1211 = vmatpush2.bf16.msra.mxu0 0
      %1212 = vmatprep.subr.bf16.mxu0 0
      %1213 = vmatpush2.bf16.msra.mxu0 0
      %1214 = vmatprep.subr.bf16.mxu0 0
      %1215 = vmatpush2.bf16.msra.mxu0 0
      %1216 = vmatprep.subr.bf16.mxu0 0
      %1217 = vmatpush2.bf16.msra.mxu0 0
      %1218 = vmatprep.subr.bf16.mxu0 0
      %1219 = vmatpush2.bf16.msra.mxu0 0
      %1220 = vmatprep.subr.bf16.mxu0 0
      %1221 = vmatpush2.bf16.msra.mxu0 0
      %1222 = vmatprep.mubr.bf16.mxu0 0
      %1223 = vmatmul.mubr.bf16.gmra.mxu0 %v947
      %v1224 = vpop.f32.mrf.mxu0
      %v1225 = vadd.f32 %v1185, %v1224
      %v1226 = vpop.f32.mrf.mxu0
      %v1227 = vpop.f32.mrf.mxu0
      %v1228 = vadd.f32 %v1185, %v1227
      %v1229 = vpop.f32.mrf.mxu0
      %1230 = vmatprep.mubr.bf16.mxu0 0
      %1231 = vmatmul.mubr.bf16.gmra.mxu0 %v950
      %v1232 = vpop.f32.mrf.mxu0
      %v1233 = vadd.f32 %v1185, %v1232
      %v1234 = vpop.f32.mrf.mxu0
      %v1235 = vpop.f32.mrf.mxu0
      %v1236 = vadd.f32 %v1185, %v1235
      %v1237 = vpop.f32.mrf.mxu0
      %1238 = vmatprep.mubr.bf16.mxu0 0
      %1239 = vmatmul.mubr.bf16.gmra.mxu0 %v953
      %v1240 = vpop.f32.mrf.mxu0
      %v1241 = vadd.f32 %v1185, %v1240
      %v1242 = vpop.f32.mrf.mxu0
      %v1243 = vpop.f32.mrf.mxu0
      %v1244 = vadd.f32 %v1185, %v1243
      %v1245 = vpop.f32.mrf.mxu0
      %1246 = vmatprep.mubr.bf16.mxu0 0
      %1247 = vmatmul.mubr.bf16.gmra.mxu0 %v956
      %v1248 = vpop.f32.mrf.mxu0
      %v1249 = vadd.f32 %v1185, %v1248
      %v1250 = vpop.f32.mrf.mxu0
      %v1251 = vpop.f32.mrf.mxu0
      %v1252 = vadd.f32 %v1185, %v1251
      %v1253 = vpop.f32.mrf.mxu0
      %1254 = vmatprep.mubr.bf16.mxu0 0
      %1255 = vmatmul.mubr.bf16.gmra.mxu0 %v959
      %v1256 = vpop.f32.mrf.mxu0
      %v1257 = vadd.f32 %v1185, %v1256
      %v1258 = vpop.f32.mrf.mxu0
      %v1259 = vpop.f32.mrf.mxu0
      %v1260 = vadd.f32 %v1185, %v1259
      %v1261 = vpop.f32.mrf.mxu0
      %1262 = vmatprep.mubr.bf16.mxu0 0
      %1263 = vmatmul.mubr.bf16.gmra.mxu0 %v962
      %v1264 = vpop.f32.mrf.mxu0
      %v1265 = vadd.f32 %v1185, %v1264
      %v1266 = vpop.f32.mrf.mxu0
      %v1267 = vpop.f32.mrf.mxu0
      %v1268 = vadd.f32 %v1185, %v1267
      %v1269 = vpop.f32.mrf.mxu0
      %1270 = vmatprep.mubr.bf16.mxu0 0
      %1271 = vmatmul.mubr.bf16.gmra.mxu0 %v965
      %v1272 = vpop.f32.mrf.mxu0
      %v1273 = vadd.f32 %v1185, %v1272
      %v1274 = vpop.f32.mrf.mxu0
      %v1275 = vpop.f32.mrf.mxu0
      %v1276 = vadd.f32 %v1185, %v1275
      %v1277 = vpop.f32.mrf.mxu0
      %1278 = vmatprep.mubr.bf16.mxu0 0
      %1279 = vmatmul.mubr.bf16.gmra.mxu0 %v968
      %v1280 = vpop.f32.mrf.mxu0
      %v1281 = vadd.f32 %v1185, %v1280
      %v1282 = vpop.f32.mrf.mxu0
      %v1283 = vpop.f32.mrf.mxu0
      %v1284 = vadd.f32 %v1185, %v1283
      %v1285 = vpop.f32.mrf.mxu0
      %1286 = vdwg.mxu0
      %v1287 = vpack.c.bf16 %v1012, %v1009
      %v1288 = vpack.c.bf16 %v1020, %v1017
      %v1289 = vpack.c.bf16 %v1028, %v1025
      %v1290 = vpack.c.bf16 %v1036, %v1033
      %v1291 = vpack.c.bf16 %v1044, %v1041
      %v1292 = vpack.c.bf16 %v1052, %v1049
      %v1293 = vpack.c.bf16 %v1060, %v1057
      %v1294 = vpack.c.bf16 %v1068, %v1065
      %v1295 = vpack.c.bf16 %v1120, %v1117
      %v1296 = vpack.c.bf16 %v1128, %v1125
      %v1297 = vpack.c.bf16 %v1136, %v1133
      %v1298 = vpack.c.bf16 %v1144, %v1141
      %v1299 = vpack.c.bf16 %v1152, %v1149
      %v1300 = vpack.c.bf16 %v1160, %v1157
      %v1301 = vpack.c.bf16 %v1168, %v1165
      %v1302 = vpack.c.bf16 %v1176, %v1173
      %vm1303 = vcmask 31744
      %v1305 = vsel %vm1303, %v1287, 0
      %v1308 = vsel %vm1303, %v1288, 0
      %v1311 = vsel %vm1303, %v1289, 0
      %v1314 = vsel %vm1303, %v1290, 0
      %v1317 = vsel %vm1303, %v1291, 0
      %v1320 = vsel %vm1303, %v1292, 0
      %v1323 = vsel %vm1303, %v1293, 0
      %v1326 = vsel %vm1303, %v1294, 0
      %v1329 = vsel %vm1303, %v1295, 0
      %v1332 = vsel %vm1303, %v1296, 0
      %v1335 = vsel %vm1303, %v1297, 0
      %v1338 = vsel %vm1303, %v1298, 0
      %v1341 = vsel %vm1303, %v1299, 0
      %v1344 = vsel %vm1303, %v1300, 0
      %v1347 = vsel %vm1303, %v1301, 0
      %v1350 = vsel %vm1303, %v1302, 0
      %1352 = vmatprep.subr.bf16.mxu0 0
      %1353 = vmatpush1.bf16.xpose.msra.mxu0 %v1350
      %1354 = vmatprep.subr.bf16.mxu0 0
      %1355 = vmatpush1.bf16.xpose.msra.mxu0 %v1347
      %1356 = vmatprep.subr.bf16.mxu0 0
      %1357 = vmatpush1.bf16.xpose.msra.mxu0 %v1344
      %1358 = vmatprep.subr.bf16.mxu0 0
      %1359 = vmatpush1.bf16.xpose.msra.mxu0 %v1341
      %1360 = vmatprep.subr.bf16.mxu0 0
      %1361 = vmatpush1.bf16.xpose.msra.mxu0 %v1338
      %1362 = vmatprep.subr.bf16.mxu0 0
      %1363 = vmatpush1.bf16.xpose.msra.mxu0 %v1335
      %1364 = vmatprep.subr.bf16.mxu0 0
      %1365 = vmatpush1.bf16.xpose.msra.mxu0 %v1332
      %1366 = vmatprep.subr.bf16.mxu0 0
      %1367 = vmatpush1.bf16.xpose.msra.mxu0 %v1329
      %1368 = vmatprep.subr.bf16.mxu0 0
      %1369 = vmatpush2.bf16.xpose.msra.mxu0 0
      %1370 = vmatprep.subr.bf16.mxu0 0
      %1371 = vmatpush2.bf16.xpose.msra.mxu0 0
      %1372 = vmatprep.subr.bf16.mxu0 0
      %1373 = vmatpush2.bf16.xpose.msra.mxu0 0
      %1374 = vmatprep.subr.bf16.mxu0 0
      %1375 = vmatpush2.bf16.xpose.msra.mxu0 0
      %1376 = vmatprep.subr.bf16.mxu0 0
      %1377 = vmatpush2.bf16.xpose.msra.mxu0 0
      %1378 = vmatprep.subr.bf16.mxu0 0
      %1379 = vmatpush2.bf16.xpose.msra.mxu0 0
      %1380 = vmatprep.subr.bf16.mxu0 0
      %1381 = vmatpush2.bf16.xpose.msra.mxu0 0
      %1382 = vmatprep.subr.bf16.mxu0 0
      %1383 = vmatpush2.bf16.xpose.msra.mxu0 0
      %1384 = vmatprep.mubr.bf16.mxu0 0
      %1385 = vmatmul.mubr.bf16.gmra.mxu0 %v1305
      %v1386 = vpop.f32.mrf.mxu0
      %v1387 = vadd.f32 0.0, %v1386
      %v1388 = vpop.f32.mrf.mxu0
      %v1389 = vpop.f32.mrf.mxu0
      %v1390 = vadd.f32 0.0, %v1389
      %v1391 = vpop.f32.mrf.mxu0
      %1392 = vmatprep.mubr.bf16.mxu0 0
      %1393 = vmatmul.mubr.bf16.gmra.mxu0 %v1308
      %v1394 = vpop.f32.mrf.mxu0
      %v1395 = vadd.f32 0.0, %v1394
      %v1396 = vpop.f32.mrf.mxu0
      %v1397 = vpop.f32.mrf.mxu0
      %v1398 = vadd.f32 0.0, %v1397
      %v1399 = vpop.f32.mrf.mxu0
      %1400 = vmatprep.mubr.bf16.mxu0 0
      %1401 = vmatmul.mubr.bf16.gmra.mxu0 %v1311
      %v1402 = vpop.f32.mrf.mxu0
      %v1403 = vadd.f32 0.0, %v1402
      %v1404 = vpop.f32.mrf.mxu0
      %v1405 = vpop.f32.mrf.mxu0
      %v1406 = vadd.f32 0.0, %v1405
      %v1407 = vpop.f32.mrf.mxu0
      %1408 = vmatprep.mubr.bf16.mxu0 0
      %1409 = vmatmul.mubr.bf16.gmra.mxu0 %v1314
      %v1410 = vpop.f32.mrf.mxu0
      %v1411 = vadd.f32 0.0, %v1410
      %v1412 = vpop.f32.mrf.mxu0
      %v1413 = vpop.f32.mrf.mxu0
      %v1414 = vadd.f32 0.0, %v1413
      %v1415 = vpop.f32.mrf.mxu0
      %1416 = vmatprep.mubr.bf16.mxu0 0
      %1417 = vmatmul.mubr.bf16.gmra.mxu0 %v1317
      %v1418 = vpop.f32.mrf.mxu0
      %v1419 = vadd.f32 0.0, %v1418
      %v1420 = vpop.f32.mrf.mxu0
      %v1421 = vpop.f32.mrf.mxu0
      %v1422 = vadd.f32 0.0, %v1421
      %v1423 = vpop.f32.mrf.mxu0
      %1424 = vmatprep.mubr.bf16.mxu0 0
      %1425 = vmatmul.mubr.bf16.gmra.mxu0 %v1320
      %v1426 = vpop.f32.mrf.mxu0
      %v1427 = vadd.f32 0.0, %v1426
      %v1428 = vpop.f32.mrf.mxu0
      %v1429 = vpop.f32.mrf.mxu0
      %v1430 = vadd.f32 0.0, %v1429
      %v1431 = vpop.f32.mrf.mxu0
      %1432 = vmatprep.mubr.bf16.mxu0 0
      %1433 = vmatmul.mubr.bf16.gmra.mxu0 %v1323
      %v1434 = vpop.f32.mrf.mxu0
      %v1435 = vadd.f32 0.0, %v1434
      %v1436 = vpop.f32.mrf.mxu0
      %v1437 = vpop.f32.mrf.mxu0
      %v1438 = vadd.f32 0.0, %v1437
      %v1439 = vpop.f32.mrf.mxu0
      %1440 = vmatprep.mubr.bf16.mxu0 0
      %1441 = vmatmul.mubr.bf16.gmra.mxu0 %v1326
      %v1442 = vpop.f32.mrf.mxu0
      %v1443 = vadd.f32 0.0, %v1442
      %v1444 = vpop.f32.mrf.mxu0
      %v1445 = vpop.f32.mrf.mxu0
      %v1446 = vadd.f32 0.0, %v1445
      %v1447 = vpop.f32.mrf.mxu0
      %1448 = vdwg.mxu0
      %v1449 = vmul.f32 %v1387, 0.5
      %v1450 = vmul.f32 %v1390, 0.5
      %v1451 = vmul.f32 %v1395, 0.5
      %v1452 = vmul.f32 %v1398, 0.5
      %v1453 = vmul.f32 %v1403, 0.5
      %v1454 = vmul.f32 %v1406, 0.5
      %v1455 = vmul.f32 %v1411, 0.5
      %v1456 = vmul.f32 %v1414, 0.5
      %v1457 = vmul.f32 %v1419, 0.5
      %v1458 = vmul.f32 %v1422, 0.5
      %v1459 = vmul.f32 %v1427, 0.5
      %v1460 = vmul.f32 %v1430, 0.5
      %v1461 = vmul.f32 %v1435, 0.5
      %v1462 = vmul.f32 %v1438, 0.5
      %v1463 = vmul.f32 %v1443, 0.5
      %v1464 = vmul.f32 %v1446, 0.5
      %v1465 = vadd.f32 %v1449, %v704
      %v1466 = vadd.f32 %v1450, %v705
      %v1467 = vadd.f32 %v1451, %v706
      %v1468 = vadd.f32 %v1452, %v707
      %v1469 = vadd.f32 %v1453, %v708
      %v1470 = vadd.f32 %v1454, %v709
      %v1471 = vadd.f32 %v1455, %v710
      %v1472 = vadd.f32 %v1456, %v711
      %v1473 = vadd.f32 %v1457, %v712
      %v1474 = vadd.f32 %v1458, %v713
      %v1475 = vadd.f32 %v1459, %v714
      %v1476 = vadd.f32 %v1460, %v715
      %v1477 = vadd.f32 %v1461, %v716
      %v1478 = vadd.f32 %v1462, %v717
      %v1479 = vadd.f32 %v1463, %v718
      %v1480 = vadd.f32 %v1464, %v719
      %1481 = vmax.xlane.f32.xlu0 %v1465
      %v1482 = vpop.xlane.xlu0 %1481
      %1483 = vmax.xlane.f32.xlu0 %v1466
      %v1484 = vpop.xlane.xlu0 %1483
      %1485 = vmax.xlane.f32.xlu0 %v1467
      %v1486 = vpop.xlane.xlu0 %1485
      %1487 = vmax.xlane.f32.xlu0 %v1468
      %v1488 = vpop.xlane.xlu0 %1487
      %1489 = vmax.xlane.f32.xlu0 %v1469
      %v1490 = vpop.xlane.xlu0 %1489
      %1491 = vmax.xlane.f32.xlu0 %v1470
      %v1492 = vpop.xlane.xlu0 %1491
      %1493 = vmax.xlane.f32.xlu0 %v1471
      %v1494 = vpop.xlane.xlu0 %1493
      %1495 = vmax.xlane.f32.xlu0 %v1472
      %v1496 = vpop.xlane.xlu0 %1495
      %1497 = vmax.xlane.f32.xlu0 %v1473
      %v1498 = vpop.xlane.xlu0 %1497
      %1499 = vmax.xlane.f32.xlu0 %v1474
      %v1500 = vpop.xlane.xlu0 %1499
      %1501 = vmax.xlane.f32.xlu0 %v1475
      %v1502 = vpop.xlane.xlu0 %1501
      %1503 = vmax.xlane.f32.xlu0 %v1476
      %v1504 = vpop.xlane.xlu0 %1503
      %1505 = vmax.xlane.f32.xlu0 %v1477
      %v1506 = vpop.xlane.xlu0 %1505
      %1507 = vmax.xlane.f32.xlu0 %v1478
      %v1508 = vpop.xlane.xlu0 %1507
      %1509 = vmax.xlane.f32.xlu0 %v1479
      %v1510 = vpop.xlane.xlu0 %1509
      %1511 = vmax.xlane.f32.xlu0 %v1480
      %v1512 = vpop.xlane.xlu0 %1511
      %v1513 = vsub.f32 %v1465, %v1482
      %v1514 = vsub.f32 %v1466, %v1484
      %v1515 = vsub.f32 %v1467, %v1486
      %v1516 = vsub.f32 %v1468, %v1488
      %v1517 = vsub.f32 %v1469, %v1490
      %v1518 = vsub.f32 %v1470, %v1492
      %v1519 = vsub.f32 %v1471, %v1494
      %v1520 = vsub.f32 %v1472, %v1496
      %v1521 = vsub.f32 %v1473, %v1498
      %v1522 = vsub.f32 %v1474, %v1500
      %v1523 = vsub.f32 %v1475, %v1502
      %v1524 = vsub.f32 %v1476, %v1504
      %v1525 = vsub.f32 %v1477, %v1506
      %v1526 = vsub.f32 %v1478, %v1508
      %v1527 = vsub.f32 %v1479, %v1510
      %v1528 = vsub.f32 %v1480, %v1512
      %v1529 = vmul.f32 %v1513, 1.442695
      %v1530 = vpow.pop %v1529
      %v1531 = vmul.f32 %v1514, 1.442695
      %v1532 = vpow.pop %v1531
      %v1533 = vmul.f32 %v1515, 1.442695
      %v1534 = vpow.pop %v1533
      %v1535 = vmul.f32 %v1516, 1.442695
      %v1536 = vpow.pop %v1535
      %v1537 = vmul.f32 %v1517, 1.442695
      %v1538 = vpow.pop %v1537
      %v1539 = vmul.f32 %v1518, 1.442695
      %v1540 = vpow.pop %v1539
      %v1541 = vmul.f32 %v1519, 1.442695
      %v1542 = vpow.pop %v1541
      %v1543 = vmul.f32 %v1520, 1.442695
      %v1544 = vpow.pop %v1543
      %v1545 = vmul.f32 %v1521, 1.442695
      %v1546 = vpow.pop %v1545
      %v1547 = vmul.f32 %v1522, 1.442695
      %v1548 = vpow.pop %v1547
      %v1549 = vmul.f32 %v1523, 1.442695
      %v1550 = vpow.pop %v1549
      %v1551 = vmul.f32 %v1524, 1.442695
      %v1552 = vpow.pop %v1551
      %v1553 = vmul.f32 %v1525, 1.442695
      %v1554 = vpow.pop %v1553
      %v1555 = vmul.f32 %v1526, 1.442695
      %v1556 = vpow.pop %v1555
      %v1557 = vmul.f32 %v1527, 1.442695
      %v1558 = vpow.pop %v1557
      %v1559 = vmul.f32 %v1528, 1.442695
      %v1560 = vpow.pop %v1559
      %1561 = vadd.xlane.f32.xlu0 %v1530
      %v1562 = vpop.xlane.xlu0 %1561
      %1563 = vadd.xlane.f32.xlu0 %v1532
      %v1564 = vpop.xlane.xlu0 %1563
      %1565 = vadd.xlane.f32.xlu0 %v1534
      %v1566 = vpop.xlane.xlu0 %1565
      %1567 = vadd.xlane.f32.xlu0 %v1536
      %v1568 = vpop.xlane.xlu0 %1567
      %1569 = vadd.xlane.f32.xlu0 %v1538
      %v1570 = vpop.xlane.xlu0 %1569
      %1571 = vadd.xlane.f32.xlu0 %v1540
      %v1572 = vpop.xlane.xlu0 %1571
      %1573 = vadd.xlane.f32.xlu0 %v1542
      %v1574 = vpop.xlane.xlu0 %1573
      %1575 = vadd.xlane.f32.xlu0 %v1544
      %v1576 = vpop.xlane.xlu0 %1575
      %1577 = vadd.xlane.f32.xlu0 %v1546
      %v1578 = vpop.xlane.xlu0 %1577
      %1579 = vadd.xlane.f32.xlu0 %v1548
      %v1580 = vpop.xlane.xlu0 %1579
      %1581 = vadd.xlane.f32.xlu0 %v1550
      %v1582 = vpop.xlane.xlu0 %1581
      %1583 = vadd.xlane.f32.xlu0 %v1552
      %v1584 = vpop.xlane.xlu0 %1583
      %1585 = vadd.xlane.f32.xlu0 %v1554
      %v1586 = vpop.xlane.xlu0 %1585
      %1587 = vadd.xlane.f32.xlu0 %v1556
      %v1588 = vpop.xlane.xlu0 %1587
      %1589 = vadd.xlane.f32.xlu0 %v1558
      %v1590 = vpop.xlane.xlu0 %1589
      %1591 = vadd.xlane.f32.xlu0 %v1560
      %v1592 = vpop.xlane.xlu0 %1591
      %v1593 = vrcp.pop %v1562
      %v1594 = vmul.f32 %v1530, %v1593
      %v1595 = vrcp.pop %v1564
      %v1596 = vmul.f32 %v1532, %v1595
      %v1597 = vrcp.pop %v1566
      %v1598 = vmul.f32 %v1534, %v1597
      %v1599 = vrcp.pop %v1568
      %v1600 = vmul.f32 %v1536, %v1599
      %v1601 = vrcp.pop %v1570
      %v1602 = vmul.f32 %v1538, %v1601
      %v1603 = vrcp.pop %v1572
      %v1604 = vmul.f32 %v1540, %v1603
      %v1605 = vrcp.pop %v1574
      %v1606 = vmul.f32 %v1542, %v1605
      %v1607 = vrcp.pop %v1576
      %v1608 = vmul.f32 %v1544, %v1607
      %v1609 = vrcp.pop %v1578
      %v1610 = vmul.f32 %v1546, %v1609
      %v1611 = vrcp.pop %v1580
      %v1612 = vmul.f32 %v1548, %v1611
      %v1613 = vrcp.pop %v1582
      %v1614 = vmul.f32 %v1550, %v1613
      %v1615 = vrcp.pop %v1584
      %v1616 = vmul.f32 %v1552, %v1615
      %v1617 = vrcp.pop %v1586
      %v1618 = vmul.f32 %v1554, %v1617
      %v1619 = vrcp.pop %v1588
      %v1620 = vmul.f32 %v1556, %v1619
      %v1621 = vrcp.pop %v1590
      %v1622 = vmul.f32 %v1558, %v1621
      %v1623 = vrcp.pop %v1592
      %v1624 = vmul.f32 %v1560, %v1623
      %v1625 = vpack.c.bf16 %v1596, %v1594
      %v1626 = vpack.c.bf16 %v1600, %v1598
      %v1627 = vpack.c.bf16 %v1604, %v1602
      %v1628 = vpack.c.bf16 %v1608, %v1606
      %v1629 = vpack.c.bf16 %v1612, %v1610
      %v1630 = vpack.c.bf16 %v1616, %v1614
      %v1631 = vpack.c.bf16 %v1620, %v1618
      %v1632 = vpack.c.bf16 %v1624, %v1622
      %v1633 = vpack.c.bf16 %v1228, %v1225
      %v1634 = vpack.c.bf16 %v1236, %v1233
      %v1635 = vpack.c.bf16 %v1244, %v1241
      %v1636 = vpack.c.bf16 %v1252, %v1249
      %v1637 = vpack.c.bf16 %v1260, %v1257
      %v1638 = vpack.c.bf16 %v1268, %v1265
      %v1639 = vpack.c.bf16 %v1276, %v1273
      %v1640 = vpack.c.bf16 %v1284, %v1281
      %1641 = vmatprep.subr.bf16.mxu0 0
      %1642 = vmatpush1.bf16.msra.mxu0 %v1640
      %1643 = vmatprep.subr.bf16.mxu0 0
      %1644 = vmatpush1.bf16.msra.mxu0 %v1639
      %1645 = vmatprep.subr.bf16.mxu0 0
      %1646 = vmatpush1.bf16.msra.mxu0 %v1638
      %1647 = vmatprep.subr.bf16.mxu0 0
      %1648 = vmatpush1.bf16.msra.mxu0 %v1637
      %1649 = vmatprep.subr.bf16.mxu0 0
      %1650 = vmatpush1.bf16.msra.mxu0 %v1636
      %1651 = vmatprep.subr.bf16.mxu0 0
      %1652 = vmatpush1.bf16.msra.mxu0 %v1635
      %1653 = vmatprep.subr.bf16.mxu0 0
      %1654 = vmatpush1.bf16.msra.mxu0 %v1634
      %1655 = vmatprep.subr.bf16.mxu0 0
      %1656 = vmatpush1.bf16.msra.mxu0 %v1633
      %1657 = vmatprep.subr.bf16.mxu0 0
      %1658 = vmatpush2.bf16.msra.mxu0 0
      %1659 = vmatprep.subr.bf16.mxu0 0
      %1660 = vmatpush2.bf16.msra.mxu0 0
      %1661 = vmatprep.subr.bf16.mxu0 0
      %1662 = vmatpush2.bf16.msra.mxu0 0
      %1663 = vmatprep.subr.bf16.mxu0 0
      %1664 = vmatpush2.bf16.msra.mxu0 0
      %1665 = vmatprep.subr.bf16.mxu0 0
      %1666 = vmatpush2.bf16.msra.mxu0 0
      %1667 = vmatprep.subr.bf16.mxu0 0
      %1668 = vmatpush2.bf16.msra.mxu0 0
      %1669 = vmatprep.subr.bf16.mxu0 0
      %1670 = vmatpush2.bf16.msra.mxu0 0
      %1671 = vmatprep.subr.bf16.mxu0 0
      %1672 = vmatpush2.bf16.msra.mxu0 0
      %1673 = vmatprep.mubr.bf16.mxu0 0
      %1674 = vmatmul.mubr.bf16.gmra.mxu0 %v1625
      %v1675 = vpop.f32.mrf.mxu0
      %v1676 = vadd.f32 0.0, %v1675
      %v1677 = vpop.f32.mrf.mxu0
      %v1678 = vpop.f32.mrf.mxu0
      %v1679 = vadd.f32 0.0, %v1678
      %v1680 = vpop.f32.mrf.mxu0
      %1681 = vmatprep.mubr.bf16.mxu0 0
      %1682 = vmatmul.mubr.bf16.gmra.mxu0 %v1626
      %v1683 = vpop.f32.mrf.mxu0
      %v1684 = vadd.f32 0.0, %v1683
      %v1685 = vpop.f32.mrf.mxu0
      %v1686 = vpop.f32.mrf.mxu0
      %v1687 = vadd.f32 0.0, %v1686
      %v1688 = vpop.f32.mrf.mxu0
      %1689 = vmatprep.mubr.bf16.mxu0 0
      %1690 = vmatmul.mubr.bf16.gmra.mxu0 %v1627
      %v1691 = vpop.f32.mrf.mxu0
      %v1692 = vadd.f32 0.0, %v1691
      %v1693 = vpop.f32.mrf.mxu0
      %v1694 = vpop.f32.mrf.mxu0
      %v1695 = vadd.f32 0.0, %v1694
      %v1696 = vpop.f32.mrf.mxu0
      %1697 = vmatprep.mubr.bf16.mxu0 0
      %1698 = vmatmul.mubr.bf16.gmra.mxu0 %v1628
      %v1699 = vpop.f32.mrf.mxu0
      %v1700 = vadd.f32 0.0, %v1699
      %v1701 = vpop.f32.mrf.mxu0
      %v1702 = vpop.f32.mrf.mxu0
      %v1703 = vadd.f32 0.0, %v1702
      %v1704 = vpop.f32.mrf.mxu0
      %1705 = vmatprep.mubr.bf16.mxu0 0
      %1706 = vmatmul.mubr.bf16.gmra.mxu0 %v1629
      %v1707 = vpop.f32.mrf.mxu0
      %v1708 = vadd.f32 0.0, %v1707
      %v1709 = vpop.f32.mrf.mxu0
      %v1710 = vpop.f32.mrf.mxu0
      %v1711 = vadd.f32 0.0, %v1710
      %v1712 = vpop.f32.mrf.mxu0
      %1713 = vmatprep.mubr.bf16.mxu0 0
      %1714 = vmatmul.mubr.bf16.gmra.mxu0 %v1630
      %v1715 = vpop.f32.mrf.mxu0
      %v1716 = vadd.f32 0.0, %v1715
      %v1717 = vpop.f32.mrf.mxu0
      %v1718 = vpop.f32.mrf.mxu0
      %v1719 = vadd.f32 0.0, %v1718
      %v1720 = vpop.f32.mrf.mxu0
      %1721 = vmatprep.mubr.bf16.mxu0 0
      %1722 = vmatmul.mubr.bf16.gmra.mxu0 %v1631
      %v1723 = vpop.f32.mrf.mxu0
      %v1724 = vadd.f32 0.0, %v1723
      %v1725 = vpop.f32.mrf.mxu0
      %v1726 = vpop.f32.mrf.mxu0
      %v1727 = vadd.f32 0.0, %v1726
      %v1728 = vpop.f32.mrf.mxu0
      %1729 = vmatprep.mubr.bf16.mxu0 0
      %1730 = vmatmul.mubr.bf16.gmra.mxu0 %v1632
      %v1731 = vpop.f32.mrf.mxu0
      %v1732 = vadd.f32 0.0, %v1731
      %v1733 = vpop.f32.mrf.mxu0
      %v1734 = vpop.f32.mrf.mxu0
      %v1735 = vadd.f32 0.0, %v1734
      %v1736 = vpop.f32.mrf.mxu0
      %1737 = vdwg.mxu0
      %v1738 = vpack.c.bf16 %v1679, %v1676
      %v1739 = vpack.c.bf16 %v1687, %v1684
      %v1740 = vpack.c.bf16 %v1695, %v1692
      %v1741 = vpack.c.bf16 %v1703, %v1700
      %v1742 = vpack.c.bf16 %v1711, %v1708
      %v1743 = vpack.c.bf16 %v1719, %v1716
      %v1744 = vpack.c.bf16 %v1727, %v1724
      %v1745 = vpack.c.bf16 %v1735, %v1732
      %v1746 = vld [vmem:[%s10] sm:$0x3]
      %v1748 = vsel %vm1303, %v1738, 0
      %v1751 = vsel %vm1303, %v1739, 0
      %v1754 = vsel %vm1303, %v1740, 0
      %v1757 = vsel %vm1303, %v1741, 0
      %v1760 = vsel %vm1303, %v1742, 0
      %v1763 = vsel %vm1303, %v1743, 0
      %v1766 = vsel %vm1303, %v1744, 0
      %v1769 = vsel %vm1303, %v1745, 0
      %vm1771 = vcmask 1041408
      %v1773 = vsel %vm1771, %v1746, 0
      %1775 = vmatprep.subr.bf16.mxu0 0
      %1776 = vmatpush1.bf16.msra.mxu0 0
      %1777 = vmatprep.subr.bf16.mxu0 0
      %1778 = vmatpush1.bf16.msra.mxu0 0
      %1779 = vmatprep.subr.bf16.mxu0 0
      %1780 = vmatpush1.bf16.msra.mxu0 0
      %1781 = vmatprep.subr.bf16.mxu0 0
      %1782 = vmatpush1.bf16.msra.mxu0 0
      %1783 = vmatprep.subr.bf16.mxu0 0
      %1784 = vmatpush1.bf16.msra.mxu0 0
      %1785 = vmatprep.subr.bf16.mxu0 0
      %1786 = vmatpush1.bf16.msra.mxu0 0
      %1787 = vmatprep.subr.bf16.mxu0 0
      %1788 = vmatpush1.bf16.msra.mxu0 0
      %1789 = vmatprep.subr.bf16.mxu0 0
      %1790 = vmatpush1.bf16.msra.mxu0 %v1773
      %1791 = vmatprep.subr.bf16.mxu0 0
      %1792 = vmatpush2.bf16.msra.mxu0 0
      %1793 = vmatprep.subr.bf16.mxu0 0
      %1794 = vmatpush2.bf16.msra.mxu0 0
      %1795 = vmatprep.subr.bf16.mxu0 0
      %1796 = vmatpush2.bf16.msra.mxu0 0
      %1797 = vmatprep.subr.bf16.mxu0 0
      %1798 = vmatpush2.bf16.msra.mxu0 0
      %1799 = vmatprep.subr.bf16.mxu0 0
      %1800 = vmatpush2.bf16.msra.mxu0 0
      %1801 = vmatprep.subr.bf16.mxu0 0
      %1802 = vmatpush2.bf16.msra.mxu0 0
      %1803 = vmatprep.subr.bf16.mxu0 0
      %1804 = vmatpush2.bf16.msra.mxu0 0
      %1805 = vmatprep.subr.bf16.mxu0 0
      %1806 = vmatpush2.bf16.msra.mxu0 0
      %1807 = vmatprep.mubr.bf16.mxu0 0
      %1808 = vmatmul.mubr.bf16.gmra.mxu0 %v1748
      %v1809 = vpop.f32.mrf.mxu0
      %v1810 = vadd.f32 0.0, %v1809
      %v1811 = vpop.f32.mrf.mxu0
      %v1812 = vpop.f32.mrf.mxu0
      %v1813 = vadd.f32 0.0, %v1812
      %v1814 = vpop.f32.mrf.mxu0
      %1815 = vmatprep.mubr.bf16.mxu0 0
      %1816 = vmatmul.mubr.bf16.gmra.mxu0 %v1751
      %v1817 = vpop.f32.mrf.mxu0
      %v1818 = vadd.f32 0.0, %v1817
      %v1819 = vpop.f32.mrf.mxu0
      %v1820 = vpop.f32.mrf.mxu0
      %v1821 = vadd.f32 0.0, %v1820
      %v1822 = vpop.f32.mrf.mxu0
      %1823 = vmatprep.mubr.bf16.mxu0 0
      %1824 = vmatmul.mubr.bf16.gmra.mxu0 %v1754
      %v1825 = vpop.f32.mrf.mxu0
      %v1826 = vadd.f32 0.0, %v1825
      %v1827 = vpop.f32.mrf.mxu0
      %v1828 = vpop.f32.mrf.mxu0
      %v1829 = vadd.f32 0.0, %v1828
      %v1830 = vpop.f32.mrf.mxu0
      %1831 = vmatprep.mubr.bf16.mxu0 0
      %1832 = vmatmul.mubr.bf16.gmra.mxu0 %v1757
      %v1833 = vpop.f32.mrf.mxu0
      %v1834 = vadd.f32 0.0, %v1833
      %v1835 = vpop.f32.mrf.mxu0
      %v1836 = vpop.f32.mrf.mxu0
      %v1837 = vadd.f32 0.0, %v1836
      %v1838 = vpop.f32.mrf.mxu0
      %1839 = vmatprep.mubr.bf16.mxu0 0
      %1840 = vmatmul.mubr.bf16.gmra.mxu0 %v1760
      %v1841 = vpop.f32.mrf.mxu0
      %v1842 = vadd.f32 0.0, %v1841
      %v1843 = vpop.f32.mrf.mxu0
      %v1844 = vpop.f32.mrf.mxu0
      %v1845 = vadd.f32 0.0, %v1844
      %v1846 = vpop.f32.mrf.mxu0
      %1847 = vmatprep.mubr.bf16.mxu0 0
      %1848 = vmatmul.mubr.bf16.gmra.mxu0 %v1763
      %v1849 = vpop.f32.mrf.mxu0
      %v1850 = vadd.f32 0.0, %v1849
      %v1851 = vpop.f32.mrf.mxu0
      %v1852 = vpop.f32.mrf.mxu0
      %v1853 = vadd.f32 0.0, %v1852
      %v1854 = vpop.f32.mrf.mxu0
      %1855 = vmatprep.mubr.bf16.mxu0 0
      %1856 = vmatmul.mubr.bf16.gmra.mxu0 %v1766
      %v1857 = vpop.f32.mrf.mxu0
      %v1858 = vadd.f32 0.0, %v1857
      %v1859 = vpop.f32.mrf.mxu0
      %v1860 = vpop.f32.mrf.mxu0
      %v1861 = vadd.f32 0.0, %v1860
      %v1862 = vpop.f32.mrf.mxu0
      %1863 = vmatprep.mubr.bf16.mxu0 0
      %1864 = vmatmul.mubr.bf16.gmra.mxu0 %v1769
      %v1865 = vpop.f32.mrf.mxu0
      %v1866 = vadd.f32 0.0, %v1865
      %v1867 = vpop.f32.mrf.mxu0
      %v1868 = vpop.f32.mrf.mxu0
      %v1869 = vadd.f32 0.0, %v1868
      %v1870 = vpop.f32.mrf.mxu0
      %1871 = vdwg.mxu0
      %v1872 = vadd.f32 %v921, %v1810
      %v1873 = vadd.f32 %v922, %v1813
      %v1874 = vadd.f32 %v923, %v1818
      %v1875 = vadd.f32 %v924, %v1821
      %v1876 = vadd.f32 %v925, %v1826
      %v1877 = vadd.f32 %v926, %v1829
      %v1878 = vadd.f32 %v927, %v1834
      %v1879 = vadd.f32 %v928, %v1837
      %v1880 = vadd.f32 %v929, %v1842
      %v1881 = vadd.f32 %v930, %v1845
      %v1882 = vadd.f32 %v931, %v1850
      %v1883 = vadd.f32 %v932, %v1853
      %v1884 = vadd.f32 %v933, %v1858
      %v1885 = vadd.f32 %v934, %v1861
      %v1886 = vadd.f32 %v935, %v1866
      %v1887 = vadd.f32 %v936, %v1869
      %s1888 = scalar_lea.vmem %s4, 4
      %v1889 = vld [vmem:[%s1888] sm:$0xf]
      %s1890 = scalar_lea.vmem %s5, 1
      %v1891 = vld [vmem:[%s1890] sm:$0x1]
      %v1893 = vlaneseq
      %v1894 = vshrl.u32 %v1893, 7
      %v1895 = vsub.s32 0, %v1894
      %v1896 = vrot.slane %v1891, %v1895
      %v1899 = vsel %vm970, %v1889, 0
      %1901 = vmatprep.subr.bf16.mxu0 0
      %1902 = vmatpush1.bf16.msra.mxu0 0
      %1903 = vmatprep.subr.bf16.mxu0 0
      %1904 = vmatpush1.bf16.msra.mxu0 0
      %1905 = vmatprep.subr.bf16.mxu0 0
      %1906 = vmatpush1.bf16.msra.mxu0 0
      %1907 = vmatprep.subr.bf16.mxu0 0
      %1908 = vmatpush1.bf16.msra.mxu0 0
      %1909 = vmatprep.subr.bf16.mxu0 0
      %1910 = vmatpush1.bf16.msra.mxu0 0
      %1911 = vmatprep.subr.bf16.mxu0 0
      %1912 = vmatpush1.bf16.msra.mxu0 0
      %1913 = vmatprep.subr.bf16.mxu0 0
      %1914 = vmatpush1.bf16.msra.mxu0 0
      %1915 = vmatprep.subr.bf16.mxu0 0
      %1916 = vmatpush1.bf16.msra.mxu0 %v1899
      %1917 = vmatprep.subr.bf16.mxu0 0
      %1918 = vmatpush2.bf16.msra.mxu0 0
      %1919 = vmatprep.subr.bf16.mxu0 0
      %1920 = vmatpush2.bf16.msra.mxu0 0
      %1921 = vmatprep.subr.bf16.mxu0 0
      %1922 = vmatpush2.bf16.msra.mxu0 0
      %1923 = vmatprep.subr.bf16.mxu0 0
      %1924 = vmatpush2.bf16.msra.mxu0 0
      %1925 = vmatprep.subr.bf16.mxu0 0
      %1926 = vmatpush2.bf16.msra.mxu0 0
      %1927 = vmatprep.subr.bf16.mxu0 0
      %1928 = vmatpush2.bf16.msra.mxu0 0
      %1929 = vmatprep.subr.bf16.mxu0 0
      %1930 = vmatpush2.bf16.msra.mxu0 0
      %1931 = vmatprep.subr.bf16.mxu0 0
      %1932 = vmatpush2.bf16.msra.mxu0 0
      %1933 = vmatprep.mubr.bf16.mxu0 0
      %1934 = vmatmul.mubr.bf16.gmra.mxu0 %v947
      %v1935 = vpop.f32.mrf.mxu0
      %v1936 = vadd.f32 %v1896, %v1935
      %v1937 = vpop.f32.mrf.mxu0
      %v1938 = vpop.f32.mrf.mxu0
      %v1939 = vadd.f32 %v1896, %v1938
      %v1940 = vpop.f32.mrf.mxu0
      %1941 = vmatprep.mubr.bf16.mxu0 0
      %1942 = vmatmul.mubr.bf16.gmra.mxu0 %v950
      %v1943 = vpop.f32.mrf.mxu0
      %v1944 = vadd.f32 %v1896, %v1943
      %v1945 = vpop.f32.mrf.mxu0
      %v1946 = vpop.f32.mrf.mxu0
      %v1947 = vadd.f32 %v1896, %v1946
      %v1948 = vpop.f32.mrf.mxu0
      %1949 = vmatprep.mubr.bf16.mxu0 0
      %1950 = vmatmul.mubr.bf16.gmra.mxu0 %v953
      %v1951 = vpop.f32.mrf.mxu0
      %v1952 = vadd.f32 %v1896, %v1951
      %v1953 = vpop.f32.mrf.mxu0
      %v1954 = vpop.f32.mrf.mxu0
      %v1955 = vadd.f32 %v1896, %v1954
      %v1956 = vpop.f32.mrf.mxu0
      %1957 = vmatprep.mubr.bf16.mxu0 0
      %1958 = vmatmul.mubr.bf16.gmra.mxu0 %v956
      %v1959 = vpop.f32.mrf.mxu0
      %v1960 = vadd.f32 %v1896, %v1959
      %v1961 = vpop.f32.mrf.mxu0
      %v1962 = vpop.f32.mrf.mxu0
      %v1963 = vadd.f32 %v1896, %v1962
      %v1964 = vpop.f32.mrf.mxu0
      %1965 = vmatprep.mubr.bf16.mxu0 0
      %1966 = vmatmul.mubr.bf16.gmra.mxu0 %v959
      %v1967 = vpop.f32.mrf.mxu0
      %v1968 = vadd.f32 %v1896, %v1967
      %v1969 = vpop.f32.mrf.mxu0
      %v1970 = vpop.f32.mrf.mxu0
      %v1971 = vadd.f32 %v1896, %v1970
      %v1972 = vpop.f32.mrf.mxu0
      %1973 = vmatprep.mubr.bf16.mxu0 0
      %1974 = vmatmul.mubr.bf16.gmra.mxu0 %v962
      %v1975 = vpop.f32.mrf.mxu0
      %v1976 = vadd.f32 %v1896, %v1975
      %v1977 = vpop.f32.mrf.mxu0
      %v1978 = vpop.f32.mrf.mxu0
      %v1979 = vadd.f32 %v1896, %v1978
      %v1980 = vpop.f32.mrf.mxu0
      %1981 = vmatprep.mubr.bf16.mxu0 0
      %1982 = vmatmul.mubr.bf16.gmra.mxu0 %v965
      %v1983 = vpop.f32.mrf.mxu0
      %v1984 = vadd.f32 %v1896, %v1983
      %v1985 = vpop.f32.mrf.mxu0
      %v1986 = vpop.f32.mrf.mxu0
      %v1987 = vadd.f32 %v1896, %v1986
      %v1988 = vpop.f32.mrf.mxu0
      %1989 = vmatprep.mubr.bf16.mxu0 0
      %1990 = vmatmul.mubr.bf16.gmra.mxu0 %v968
      %v1991 = vpop.f32.mrf.mxu0
      %v1992 = vadd.f32 %v1896, %v1991
      %v1993 = vpop.f32.mrf.mxu0
      %v1994 = vpop.f32.mrf.mxu0
      %v1995 = vadd.f32 %v1896, %v1994
      %v1996 = vpop.f32.mrf.mxu0
      %1997 = vdwg.mxu0
      %s1998 = scalar_lea.vmem %s6, 4
      %v1999 = vld [vmem:[%s1998] sm:$0xf]
      %s2000 = scalar_lea.vmem %s7, 1
      %v2001 = vld [vmem:[%s2000] sm:$0x1]
      %v2003 = vlaneseq
      %v2004 = vshrl.u32 %v2003, 7
      %v2005 = vsub.s32 0, %v2004
      %v2006 = vrot.slane %v2001, %v2005
      %v2009 = vsel %vm970, %v1999, 0
      %2011 = vmatprep.subr.bf16.mxu0 0
      %2012 = vmatpush1.bf16.msra.mxu0 0
      %2013 = vmatprep.subr.bf16.mxu0 0
      %2014 = vmatpush1.bf16.msra.mxu0 0
      %2015 = vmatprep.subr.bf16.mxu0 0
      %2016 = vmatpush1.bf16.msra.mxu0 0
      %2017 = vmatprep.subr.bf16.mxu0 0
      %2018 = vmatpush1.bf16.msra.mxu0 0
      %2019 = vmatprep.subr.bf16.mxu0 0
      %2020 = vmatpush1.bf16.msra.mxu0 0
      %2021 = vmatprep.subr.bf16.mxu0 0
      %2022 = vmatpush1.bf16.msra.mxu0 0
      %2023 = vmatprep.subr.bf16.mxu0 0
      %2024 = vmatpush1.bf16.msra.mxu0 0
      %2025 = vmatprep.subr.bf16.mxu0 0
      %2026 = vmatpush1.bf16.msra.mxu0 %v2009
      %2027 = vmatprep.subr.bf16.mxu0 0
      %2028 = vmatpush2.bf16.msra.mxu0 0
      %2029 = vmatprep.subr.bf16.mxu0 0
      %2030 = vmatpush2.bf16.msra.mxu0 0
      %2031 = vmatprep.subr.bf16.mxu0 0
      %2032 = vmatpush2.bf16.msra.mxu0 0
      %2033 = vmatprep.subr.bf16.mxu0 0
      %2034 = vmatpush2.bf16.msra.mxu0 0
      %2035 = vmatprep.subr.bf16.mxu0 0
      %2036 = vmatpush2.bf16.msra.mxu0 0
      %2037 = vmatprep.subr.bf16.mxu0 0
      %2038 = vmatpush2.bf16.msra.mxu0 0
      %2039 = vmatprep.subr.bf16.mxu0 0
      %2040 = vmatpush2.bf16.msra.mxu0 0
      %2041 = vmatprep.subr.bf16.mxu0 0
      %2042 = vmatpush2.bf16.msra.mxu0 0
      %2043 = vmatprep.mubr.bf16.mxu0 0
      %2044 = vmatmul.mubr.bf16.gmra.mxu0 %v947
      %v2045 = vpop.f32.mrf.mxu0
      %v2046 = vadd.f32 %v2006, %v2045
      %v2047 = vpop.f32.mrf.mxu0
      %v2048 = vpop.f32.mrf.mxu0
      %v2049 = vadd.f32 %v2006, %v2048
      %v2050 = vpop.f32.mrf.mxu0
      %2051 = vmatprep.mubr.bf16.mxu0 0
      %2052 = vmatmul.mubr.bf16.gmra.mxu0 %v950
      %v2053 = vpop.f32.mrf.mxu0
      %v2054 = vadd.f32 %v2006, %v2053
      %v2055 = vpop.f32.mrf.mxu0
      %v2056 = vpop.f32.mrf.mxu0
      %v2057 = vadd.f32 %v2006, %v2056
      %v2058 = vpop.f32.mrf.mxu0
      %2059 = vmatprep.mubr.bf16.mxu0 0
      %2060 = vmatmul.mubr.bf16.gmra.mxu0 %v953
      %v2061 = vpop.f32.mrf.mxu0
      %v2062 = vadd.f32 %v2006, %v2061
      %v2063 = vpop.f32.mrf.mxu0
      %v2064 = vpop.f32.mrf.mxu0
      %v2065 = vadd.f32 %v2006, %v2064
      %v2066 = vpop.f32.mrf.mxu0
      %2067 = vmatprep.mubr.bf16.mxu0 0
      %2068 = vmatmul.mubr.bf16.gmra.mxu0 %v956
      %v2069 = vpop.f32.mrf.mxu0
      %v2070 = vadd.f32 %v2006, %v2069
      %v2071 = vpop.f32.mrf.mxu0
      %v2072 = vpop.f32.mrf.mxu0
      %v2073 = vadd.f32 %v2006, %v2072
      %v2074 = vpop.f32.mrf.mxu0
      %2075 = vmatprep.mubr.bf16.mxu0 0
      %2076 = vmatmul.mubr.bf16.gmra.mxu0 %v959
      %v2077 = vpop.f32.mrf.mxu0
      %v2078 = vadd.f32 %v2006, %v2077
      %v2079 = vpop.f32.mrf.mxu0
      %v2080 = vpop.f32.mrf.mxu0
      %v2081 = vadd.f32 %v2006, %v2080
      %v2082 = vpop.f32.mrf.mxu0
      %2083 = vmatprep.mubr.bf16.mxu0 0
      %2084 = vmatmul.mubr.bf16.gmra.mxu0 %v962
      %v2085 = vpop.f32.mrf.mxu0
      %v2086 = vadd.f32 %v2006, %v2085
      %v2087 = vpop.f32.mrf.mxu0
      %v2088 = vpop.f32.mrf.mxu0
      %v2089 = vadd.f32 %v2006, %v2088
      %v2090 = vpop.f32.mrf.mxu0
      %2091 = vmatprep.mubr.bf16.mxu0 0
      %2092 = vmatmul.mubr.bf16.gmra.mxu0 %v965
      %v2093 = vpop.f32.mrf.mxu0
      %v2094 = vadd.f32 %v2006, %v2093
      %v2095 = vpop.f32.mrf.mxu0
      %v2096 = vpop.f32.mrf.mxu0
      %v2097 = vadd.f32 %v2006, %v2096
      %v2098 = vpop.f32.mrf.mxu0
      %2099 = vmatprep.mubr.bf16.mxu0 0
      %2100 = vmatmul.mubr.bf16.gmra.mxu0 %v968
      %v2101 = vpop.f32.mrf.mxu0
      %v2102 = vadd.f32 %v2006, %v2101
      %v2103 = vpop.f32.mrf.mxu0
      %v2104 = vpop.f32.mrf.mxu0
      %v2105 = vadd.f32 %v2006, %v2104
      %v2106 = vpop.f32.mrf.mxu0
      %2107 = vdwg.mxu0
      %s2108 = scalar_lea.vmem %s8, 4
      %v2109 = vld [vmem:[%s2108] sm:$0xf]
      %s2110 = scalar_lea.vmem %s9, 1
      %v2111 = vld [vmem:[%s2110] sm:$0x1]
      %v2113 = vlaneseq
      %v2114 = vshrl.u32 %v2113, 7
      %v2115 = vsub.s32 0, %v2114
      %v2116 = vrot.slane %v2111, %v2115
      %v2119 = vsel %vm970, %v2109, 0
      %2121 = vmatprep.subr.bf16.mxu0 0
      %2122 = vmatpush1.bf16.msra.mxu0 0
      %2123 = vmatprep.subr.bf16.mxu0 0
      %2124 = vmatpush1.bf16.msra.mxu0 0
      %2125 = vmatprep.subr.bf16.mxu0 0
      %2126 = vmatpush1.bf16.msra.mxu0 0
      %2127 = vmatprep.subr.bf16.mxu0 0
      %2128 = vmatpush1.bf16.msra.mxu0 0
      %2129 = vmatprep.subr.bf16.mxu0 0
      %2130 = vmatpush1.bf16.msra.mxu0 0
      %2131 = vmatprep.subr.bf16.mxu0 0
      %2132 = vmatpush1.bf16.msra.mxu0 0
      %2133 = vmatprep.subr.bf16.mxu0 0
      %2134 = vmatpush1.bf16.msra.mxu0 0
      %2135 = vmatprep.subr.bf16.mxu0 0
      %2136 = vmatpush1.bf16.msra.mxu0 %v2119
      %2137 = vmatprep.subr.bf16.mxu0 0
      %2138 = vmatpush2.bf16.msra.mxu0 0
      %2139 = vmatprep.subr.bf16.mxu0 0
      %2140 = vmatpush2.bf16.msra.mxu0 0
      %2141 = vmatprep.subr.bf16.mxu0 0
      %2142 = vmatpush2.bf16.msra.mxu0 0
      %2143 = vmatprep.subr.bf16.mxu0 0
      %2144 = vmatpush2.bf16.msra.mxu0 0
      %2145 = vmatprep.subr.bf16.mxu0 0
      %2146 = vmatpush2.bf16.msra.mxu0 0
      %2147 = vmatprep.subr.bf16.mxu0 0
      %2148 = vmatpush2.bf16.msra.mxu0 0
      %2149 = vmatprep.subr.bf16.mxu0 0
      %2150 = vmatpush2.bf16.msra.mxu0 0
      %2151 = vmatprep.subr.bf16.mxu0 0
      %2152 = vmatpush2.bf16.msra.mxu0 0
      %2153 = vmatprep.mubr.bf16.mxu0 0
      %2154 = vmatmul.mubr.bf16.gmra.mxu0 %v947
      %v2155 = vpop.f32.mrf.mxu0
      %v2156 = vadd.f32 %v2116, %v2155
      %v2157 = vpop.f32.mrf.mxu0
      %v2158 = vpop.f32.mrf.mxu0
      %v2159 = vadd.f32 %v2116, %v2158
      %v2160 = vpop.f32.mrf.mxu0
      %2161 = vmatprep.mubr.bf16.mxu0 0
      %2162 = vmatmul.mubr.bf16.gmra.mxu0 %v950
      %v2163 = vpop.f32.mrf.mxu0
      %v2164 = vadd.f32 %v2116, %v2163
      %v2165 = vpop.f32.mrf.mxu0
      %v2166 = vpop.f32.mrf.mxu0
      %v2167 = vadd.f32 %v2116, %v2166
      %v2168 = vpop.f32.mrf.mxu0
      %2169 = vmatprep.mubr.bf16.mxu0 0
      %2170 = vmatmul.mubr.bf16.gmra.mxu0 %v953
      %v2171 = vpop.f32.mrf.mxu0
      %v2172 = vadd.f32 %v2116, %v2171
      %v2173 = vpop.f32.mrf.mxu0
      %v2174 = vpop.f32.mrf.mxu0
      %v2175 = vadd.f32 %v2116, %v2174
      %v2176 = vpop.f32.mrf.mxu0
      %2177 = vmatprep.mubr.bf16.mxu0 0
      %2178 = vmatmul.mubr.bf16.gmra.mxu0 %v956
      %v2179 = vpop.f32.mrf.mxu0
      %v2180 = vadd.f32 %v2116, %v2179
      %v2181 = vpop.f32.mrf.mxu0
      %v2182 = vpop.f32.mrf.mxu0
      %v2183 = vadd.f32 %v2116, %v2182
      %v2184 = vpop.f32.mrf.mxu0
      %2185 = vmatprep.mubr.bf16.mxu0 0
      %2186 = vmatmul.mubr.bf16.gmra.mxu0 %v959
      %v2187 = vpop.f32.mrf.mxu0
      %v2188 = vadd.f32 %v2116, %v2187
      %v2189 = vpop.f32.mrf.mxu0
      %v2190 = vpop.f32.mrf.mxu0
      %v2191 = vadd.f32 %v2116, %v2190
      %v2192 = vpop.f32.mrf.mxu0
      %2193 = vmatprep.mubr.bf16.mxu0 0
      %2194 = vmatmul.mubr.bf16.gmra.mxu0 %v962
      %v2195 = vpop.f32.mrf.mxu0
      %v2196 = vadd.f32 %v2116, %v2195
      %v2197 = vpop.f32.mrf.mxu0
      %v2198 = vpop.f32.mrf.mxu0
      %v2199 = vadd.f32 %v2116, %v2198
      %v2200 = vpop.f32.mrf.mxu0
      %2201 = vmatprep.mubr.bf16.mxu0 0
      %2202 = vmatmul.mubr.bf16.gmra.mxu0 %v965
      %v2203 = vpop.f32.mrf.mxu0
      %v2204 = vadd.f32 %v2116, %v2203
      %v2205 = vpop.f32.mrf.mxu0
      %v2206 = vpop.f32.mrf.mxu0
      %v2207 = vadd.f32 %v2116, %v2206
      %v2208 = vpop.f32.mrf.mxu0
      %2209 = vmatprep.mubr.bf16.mxu0 0
      %2210 = vmatmul.mubr.bf16.gmra.mxu0 %v968
      %v2211 = vpop.f32.mrf.mxu0
      %v2212 = vadd.f32 %v2116, %v2211
      %v2213 = vpop.f32.mrf.mxu0
      %v2214 = vpop.f32.mrf.mxu0
      %v2215 = vadd.f32 %v2116, %v2214
      %v2216 = vpop.f32.mrf.mxu0
      %2217 = vdwg.mxu0
      %v2218 = vpack.c.bf16 %v1939, %v1936
      %v2219 = vpack.c.bf16 %v1947, %v1944
      %v2220 = vpack.c.bf16 %v1955, %v1952
      %v2221 = vpack.c.bf16 %v1963, %v1960
      %v2222 = vpack.c.bf16 %v1971, %v1968
      %v2223 = vpack.c.bf16 %v1979, %v1976
      %v2224 = vpack.c.bf16 %v1987, %v1984
      %v2225 = vpack.c.bf16 %v1995, %v1992
      %v2226 = vpack.c.bf16 %v2049, %v2046
      %v2227 = vpack.c.bf16 %v2057, %v2054
      %v2228 = vpack.c.bf16 %v2065, %v2062
      %v2229 = vpack.c.bf16 %v2073, %v2070
      %v2230 = vpack.c.bf16 %v2081, %v2078
      %v2231 = vpack.c.bf16 %v2089, %v2086
      %v2232 = vpack.c.bf16 %v2097, %v2094
      %v2233 = vpack.c.bf16 %v2105, %v2102
      %v2235 = vsel %vm1303, %v2218, 0
      %v2238 = vsel %vm1303, %v2219, 0
      %v2241 = vsel %vm1303, %v2220, 0
      %v2244 = vsel %vm1303, %v2221, 0
      %v2247 = vsel %vm1303, %v2222, 0
      %v2250 = vsel %vm1303, %v2223, 0
      %v2253 = vsel %vm1303, %v2224, 0
      %v2256 = vsel %vm1303, %v2225, 0
      %v2259 = vsel %vm1303, %v2226, 0
      %v2262 = vsel %vm1303, %v2227, 0
      %v2265 = vsel %vm1303, %v2228, 0
      %v2268 = vsel %vm1303, %v2229, 0
      %v2271 = vsel %vm1303, %v2230, 0
      %v2274 = vsel %vm1303, %v2231, 0
      %v2277 = vsel %vm1303, %v2232, 0
      %v2280 = vsel %vm1303, %v2233, 0
      %2282 = vmatprep.subr.bf16.mxu0 0
      %2283 = vmatpush1.bf16.xpose.msra.mxu0 %v2280
      %2284 = vmatprep.subr.bf16.mxu0 0
      %2285 = vmatpush1.bf16.xpose.msra.mxu0 %v2277
      %2286 = vmatprep.subr.bf16.mxu0 0
      %2287 = vmatpush1.bf16.xpose.msra.mxu0 %v2274
      %2288 = vmatprep.subr.bf16.mxu0 0
      %2289 = vmatpush1.bf16.xpose.msra.mxu0 %v2271
      %2290 = vmatprep.subr.bf16.mxu0 0
      %2291 = vmatpush1.bf16.xpose.msra.mxu0 %v2268
      %2292 = vmatprep.subr.bf16.mxu0 0
      %2293 = vmatpush1.bf16.xpose.msra.mxu0 %v2265
      %2294 = vmatprep.subr.bf16.mxu0 0
      %2295 = vmatpush1.bf16.xpose.msra.mxu0 %v2262
      %2296 = vmatprep.subr.bf16.mxu0 0
      %2297 = vmatpush1.bf16.xpose.msra.mxu0 %v2259
      %2298 = vmatprep.subr.bf16.mxu0 0
      %2299 = vmatpush2.bf16.xpose.msra.mxu0 0
      %2300 = vmatprep.subr.bf16.mxu0 0
      %2301 = vmatpush2.bf16.xpose.msra.mxu0 0
      %2302 = vmatprep.subr.bf16.mxu0 0
      %2303 = vmatpush2.bf16.xpose.msra.mxu0 0
      %2304 = vmatprep.subr.bf16.mxu0 0
      %2305 = vmatpush2.bf16.xpose.msra.mxu0 0
      %2306 = vmatprep.subr.bf16.mxu0 0
      %2307 = vmatpush2.bf16.xpose.msra.mxu0 0
      %2308 = vmatprep.subr.bf16.mxu0 0
      %2309 = vmatpush2.bf16.xpose.msra.mxu0 0
      %2310 = vmatprep.subr.bf16.mxu0 0
      %2311 = vmatpush2.bf16.xpose.msra.mxu0 0
      %2312 = vmatprep.subr.bf16.mxu0 0
      %2313 = vmatpush2.bf16.xpose.msra.mxu0 0
      %2314 = vmatprep.mubr.bf16.mxu0 0
      %2315 = vmatmul.mubr.bf16.gmra.mxu0 %v2235
      %v2316 = vpop.f32.mrf.mxu0
      %v2317 = vadd.f32 0.0, %v2316
      %v2318 = vpop.f32.mrf.mxu0
      %v2319 = vpop.f32.mrf.mxu0
      %v2320 = vadd.f32 0.0, %v2319
      %v2321 = vpop.f32.mrf.mxu0
      %2322 = vmatprep.mubr.bf16.mxu0 0
      %2323 = vmatmul.mubr.bf16.gmra.mxu0 %v2238
      %v2324 = vpop.f32.mrf.mxu0
      %v2325 = vadd.f32 0.0, %v2324
      %v2326 = vpop.f32.mrf.mxu0
      %v2327 = vpop.f32.mrf.mxu0
      %v2328 = vadd.f32 0.0, %v2327
      %v2329 = vpop.f32.mrf.mxu0
      %2330 = vmatprep.mubr.bf16.mxu0 0
      %2331 = vmatmul.mubr.bf16.gmra.mxu0 %v2241
      %v2332 = vpop.f32.mrf.mxu0
      %v2333 = vadd.f32 0.0, %v2332
      %v2334 = vpop.f32.mrf.mxu0
      %v2335 = vpop.f32.mrf.mxu0
      %v2336 = vadd.f32 0.0, %v2335
      %v2337 = vpop.f32.mrf.mxu0
      %2338 = vmatprep.mubr.bf16.mxu0 0
      %2339 = vmatmul.mubr.bf16.gmra.mxu0 %v2244
      %v2340 = vpop.f32.mrf.mxu0
      %v2341 = vadd.f32 0.0, %v2340
      %v2342 = vpop.f32.mrf.mxu0
      %v2343 = vpop.f32.mrf.mxu0
      %v2344 = vadd.f32 0.0, %v2343
      %v2345 = vpop.f32.mrf.mxu0
      %2346 = vmatprep.mubr.bf16.mxu0 0
      %2347 = vmatmul.mubr.bf16.gmra.mxu0 %v2247
      %v2348 = vpop.f32.mrf.mxu0
      %v2349 = vadd.f32 0.0, %v2348
      %v2350 = vpop.f32.mrf.mxu0
      %v2351 = vpop.f32.mrf.mxu0
      %v2352 = vadd.f32 0.0, %v2351
      %v2353 = vpop.f32.mrf.mxu0
      %2354 = vmatprep.mubr.bf16.mxu0 0
      %2355 = vmatmul.mubr.bf16.gmra.mxu0 %v2250
      %v2356 = vpop.f32.mrf.mxu0
      %v2357 = vadd.f32 0.0, %v2356
      %v2358 = vpop.f32.mrf.mxu0
      %v2359 = vpop.f32.mrf.mxu0
      %v2360 = vadd.f32 0.0, %v2359
      %v2361 = vpop.f32.mrf.mxu0
      %2362 = vmatprep.mubr.bf16.mxu0 0
      %2363 = vmatmul.mubr.bf16.gmra.mxu0 %v2253
      %v2364 = vpop.f32.mrf.mxu0
      %v2365 = vadd.f32 0.0, %v2364
      %v2366 = vpop.f32.mrf.mxu0
      %v2367 = vpop.f32.mrf.mxu0
      %v2368 = vadd.f32 0.0, %v2367
      %v2369 = vpop.f32.mrf.mxu0
      %2370 = vmatprep.mubr.bf16.mxu0 0
      %2371 = vmatmul.mubr.bf16.gmra.mxu0 %v2256
      %v2372 = vpop.f32.mrf.mxu0
      %v2373 = vadd.f32 0.0, %v2372
      %v2374 = vpop.f32.mrf.mxu0
      %v2375 = vpop.f32.mrf.mxu0
      %v2376 = vadd.f32 0.0, %v2375
      %v2377 = vpop.f32.mrf.mxu0
      %2378 = vdwg.mxu0
      %v2379 = vmul.f32 %v2317, 0.5
      %v2380 = vmul.f32 %v2320, 0.5
      %v2381 = vmul.f32 %v2325, 0.5
      %v2382 = vmul.f32 %v2328, 0.5
      %v2383 = vmul.f32 %v2333, 0.5
      %v2384 = vmul.f32 %v2336, 0.5
      %v2385 = vmul.f32 %v2341, 0.5
      %v2386 = vmul.f32 %v2344, 0.5
      %v2387 = vmul.f32 %v2349, 0.5
      %v2388 = vmul.f32 %v2352, 0.5
      %v2389 = vmul.f32 %v2357, 0.5
      %v2390 = vmul.f32 %v2360, 0.5
      %v2391 = vmul.f32 %v2365, 0.5
      %v2392 = vmul.f32 %v2368, 0.5
      %v2393 = vmul.f32 %v2373, 0.5
      %v2394 = vmul.f32 %v2376, 0.5
      %v2395 = vadd.f32 %v2379, %v704
      %v2396 = vadd.f32 %v2380, %v705
      %v2397 = vadd.f32 %v2381, %v706
      %v2398 = vadd.f32 %v2382, %v707
      %v2399 = vadd.f32 %v2383, %v708
      %v2400 = vadd.f32 %v2384, %v709
      %v2401 = vadd.f32 %v2385, %v710
      %v2402 = vadd.f32 %v2386, %v711
      %v2403 = vadd.f32 %v2387, %v712
      %v2404 = vadd.f32 %v2388, %v713
      %v2405 = vadd.f32 %v2389, %v714
      %v2406 = vadd.f32 %v2390, %v715
      %v2407 = vadd.f32 %v2391, %v716
      %v2408 = vadd.f32 %v2392, %v717
      %v2409 = vadd.f32 %v2393, %v718
      %v2410 = vadd.f32 %v2394, %v719
      %2411 = vmax.xlane.f32.xlu0 %v2395
      %v2412 = vpop.xlane.xlu0 %2411
      %2413 = vmax.xlane.f32.xlu0 %v2396
      %v2414 = vpop.xlane.xlu0 %2413
      %2415 = vmax.xlane.f32.xlu0 %v2397
      %v2416 = vpop.xlane.xlu0 %2415
      %2417 = vmax.xlane.f32.xlu0 %v2398
      %v2418 = vpop.xlane.xlu0 %2417
      %2419 = vmax.xlane.f32.xlu0 %v2399
      %v2420 = vpop.xlane.xlu0 %2419
      %2421 = vmax.xlane.f32.xlu0 %v2400
      %v2422 = vpop.xlane.xlu0 %2421
      %2423 = vmax.xlane.f32.xlu0 %v2401
      %v2424 = vpop.xlane.xlu0 %2423
      %2425 = vmax.xlane.f32.xlu0 %v2402
      %v2426 = vpop.xlane.xlu0 %2425
      %2427 = vmax.xlane.f32.xlu0 %v2403
      %v2428 = vpop.xlane.xlu0 %2427
      %2429 = vmax.xlane.f32.xlu0 %v2404
      %v2430 = vpop.xlane.xlu0 %2429
      %2431 = vmax.xlane.f32.xlu0 %v2405
      %v2432 = vpop.xlane.xlu0 %2431
      %2433 = vmax.xlane.f32.xlu0 %v2406
      %v2434 = vpop.xlane.xlu0 %2433
      %2435 = vmax.xlane.f32.xlu0 %v2407
      %v2436 = vpop.xlane.xlu0 %2435
      %2437 = vmax.xlane.f32.xlu0 %v2408
      %v2438 = vpop.xlane.xlu0 %2437
      %2439 = vmax.xlane.f32.xlu0 %v2409
      %v2440 = vpop.xlane.xlu0 %2439
      %2441 = vmax.xlane.f32.xlu0 %v2410
      %v2442 = vpop.xlane.xlu0 %2441
      %v2443 = vsub.f32 %v2395, %v2412
      %v2444 = vsub.f32 %v2396, %v2414
      %v2445 = vsub.f32 %v2397, %v2416
      %v2446 = vsub.f32 %v2398, %v2418
      %v2447 = vsub.f32 %v2399, %v2420
      %v2448 = vsub.f32 %v2400, %v2422
      %v2449 = vsub.f32 %v2401, %v2424
      %v2450 = vsub.f32 %v2402, %v2426
      %v2451 = vsub.f32 %v2403, %v2428
      %v2452 = vsub.f32 %v2404, %v2430
      %v2453 = vsub.f32 %v2405, %v2432
      %v2454 = vsub.f32 %v2406, %v2434
      %v2455 = vsub.f32 %v2407, %v2436
      %v2456 = vsub.f32 %v2408, %v2438
      %v2457 = vsub.f32 %v2409, %v2440
      %v2458 = vsub.f32 %v2410, %v2442
      %v2459 = vmul.f32 %v2443, 1.442695
      %v2460 = vpow.pop %v2459
      %v2461 = vmul.f32 %v2444, 1.442695
      %v2462 = vpow.pop %v2461
      %v2463 = vmul.f32 %v2445, 1.442695
      %v2464 = vpow.pop %v2463
      %v2465 = vmul.f32 %v2446, 1.442695
      %v2466 = vpow.pop %v2465
      %v2467 = vmul.f32 %v2447, 1.442695
      %v2468 = vpow.pop %v2467
      %v2469 = vmul.f32 %v2448, 1.442695
      %v2470 = vpow.pop %v2469
      %v2471 = vmul.f32 %v2449, 1.442695
      %v2472 = vpow.pop %v2471
      %v2473 = vmul.f32 %v2450, 1.442695
      %v2474 = vpow.pop %v2473
      %v2475 = vmul.f32 %v2451, 1.442695
      %v2476 = vpow.pop %v2475
      %v2477 = vmul.f32 %v2452, 1.442695
      %v2478 = vpow.pop %v2477
      %v2479 = vmul.f32 %v2453, 1.442695
      %v2480 = vpow.pop %v2479
      %v2481 = vmul.f32 %v2454, 1.442695
      %v2482 = vpow.pop %v2481
      %v2483 = vmul.f32 %v2455, 1.442695
      %v2484 = vpow.pop %v2483
      %v2485 = vmul.f32 %v2456, 1.442695
      %v2486 = vpow.pop %v2485
      %v2487 = vmul.f32 %v2457, 1.442695
      %v2488 = vpow.pop %v2487
      %v2489 = vmul.f32 %v2458, 1.442695
      %v2490 = vpow.pop %v2489
      %2491 = vadd.xlane.f32.xlu0 %v2460
      %v2492 = vpop.xlane.xlu0 %2491
      %2493 = vadd.xlane.f32.xlu0 %v2462
      %v2494 = vpop.xlane.xlu0 %2493
      %2495 = vadd.xlane.f32.xlu0 %v2464
      %v2496 = vpop.xlane.xlu0 %2495
      %2497 = vadd.xlane.f32.xlu0 %v2466
      %v2498 = vpop.xlane.xlu0 %2497
      %2499 = vadd.xlane.f32.xlu0 %v2468
      %v2500 = vpop.xlane.xlu0 %2499
      %2501 = vadd.xlane.f32.xlu0 %v2470
      %v2502 = vpop.xlane.xlu0 %2501
      %2503 = vadd.xlane.f32.xlu0 %v2472
      %v2504 = vpop.xlane.xlu0 %2503
      %2505 = vadd.xlane.f32.xlu0 %v2474
      %v2506 = vpop.xlane.xlu0 %2505
      %2507 = vadd.xlane.f32.xlu0 %v2476
      %v2508 = vpop.xlane.xlu0 %2507
      %2509 = vadd.xlane.f32.xlu0 %v2478
      %v2510 = vpop.xlane.xlu0 %2509
      %2511 = vadd.xlane.f32.xlu0 %v2480
      %v2512 = vpop.xlane.xlu0 %2511
      %2513 = vadd.xlane.f32.xlu0 %v2482
      %v2514 = vpop.xlane.xlu0 %2513
      %2515 = vadd.xlane.f32.xlu0 %v2484
      %v2516 = vpop.xlane.xlu0 %2515
      %2517 = vadd.xlane.f32.xlu0 %v2486
      %v2518 = vpop.xlane.xlu0 %2517
      %2519 = vadd.xlane.f32.xlu0 %v2488
      %v2520 = vpop.xlane.xlu0 %2519
      %2521 = vadd.xlane.f32.xlu0 %v2490
      %v2522 = vpop.xlane.xlu0 %2521
      %v2523 = vrcp.pop %v2492
      %v2524 = vmul.f32 %v2460, %v2523
      %v2525 = vrcp.pop %v2494
      %v2526 = vmul.f32 %v2462, %v2525
      %v2527 = vrcp.pop %v2496
      %v2528 = vmul.f32 %v2464, %v2527
      %v2529 = vrcp.pop %v2498
      %v2530 = vmul.f32 %v2466, %v2529
      %v2531 = vrcp.pop %v2500
      %v2532 = vmul.f32 %v2468, %v2531
      %v2533 = vrcp.pop %v2502
      %v2534 = vmul.f32 %v2470, %v2533
      %v2535 = vrcp.pop %v2504
      %v2536 = vmul.f32 %v2472, %v2535
      %v2537 = vrcp.pop %v2506
      %v2538 = vmul.f32 %v2474, %v2537
      %v2539 = vrcp.pop %v2508
      %v2540 = vmul.f32 %v2476, %v2539
      %v2541 = vrcp.pop %v2510
      %v2542 = vmul.f32 %v2478, %v2541
      %v2543 = vrcp.pop %v2512
      %v2544 = vmul.f32 %v2480, %v2543
      %v2545 = vrcp.pop %v2514
      %v2546 = vmul.f32 %v2482, %v2545
      %v2547 = vrcp.pop %v2516
      %v2548 = vmul.f32 %v2484, %v2547
      %v2549 = vrcp.pop %v2518
      %v2550 = vmul.f32 %v2486, %v2549
      %v2551 = vrcp.pop %v2520
      %v2552 = vmul.f32 %v2488, %v2551
      %v2553 = vrcp.pop %v2522
      %v2554 = vmul.f32 %v2490, %v2553
      %v2555 = vpack.c.bf16 %v2526, %v2524
      %v2556 = vpack.c.bf16 %v2530, %v2528
      %v2557 = vpack.c.bf16 %v2534, %v2532
      %v2558 = vpack.c.bf16 %v2538, %v2536
      %v2559 = vpack.c.bf16 %v2542, %v2540
      %v2560 = vpack.c.bf16 %v2546, %v2544
      %v2561 = vpack.c.bf16 %v2550, %v2548
      %v2562 = vpack.c.bf16 %v2554, %v2552
      %v2563 = vpack.c.bf16 %v2159, %v2156
      %v2564 = vpack.c.bf16 %v2167, %v2164
      %v2565 = vpack.c.bf16 %v2175, %v2172
      %v2566 = vpack.c.bf16 %v2183, %v2180
      %v2567 = vpack.c.bf16 %v2191, %v2188
      %v2568 = vpack.c.bf16 %v2199, %v2196
      %v2569 = vpack.c.bf16 %v2207, %v2204
      %v2570 = vpack.c.bf16 %v2215, %v2212
      %2571 = vmatprep.subr.bf16.mxu0 0
      %2572 = vmatpush1.bf16.msra.mxu0 %v2570
      %2573 = vmatprep.subr.bf16.mxu0 0
      %2574 = vmatpush1.bf16.msra.mxu0 %v2569
      %2575 = vmatprep.subr.bf16.mxu0 0
      %2576 = vmatpush1.bf16.msra.mxu0 %v2568
      %2577 = vmatprep.subr.bf16.mxu0 0
      %2578 = vmatpush1.bf16.msra.mxu0 %v2567
      %2579 = vmatprep.subr.bf16.mxu0 0
      %2580 = vmatpush1.bf16.msra.mxu0 %v2566
      %2581 = vmatprep.subr.bf16.mxu0 0
      %2582 = vmatpush1.bf16.msra.mxu0 %v2565
      %2583 = vmatprep.subr.bf16.mxu0 0
      %2584 = vmatpush1.bf16.msra.mxu0 %v2564
      %2585 = vmatprep.subr.bf16.mxu0 0
      %2586 = vmatpush1.bf16.msra.mxu0 %v2563
      %2587 = vmatprep.subr.bf16.mxu0 0
      %2588 = vmatpush2.bf16.msra.mxu0 0
      %2589 = vmatprep.subr.bf16.mxu0 0
      %2590 = vmatpush2.bf16.msra.mxu0 0
      %2591 = vmatprep.subr.bf16.mxu0 0
      %2592 = vmatpush2.bf16.msra.mxu0 0
      %2593 = vmatprep.subr.bf16.mxu0 0
      %2594 = vmatpush2.bf16.msra.mxu0 0
      %2595 = vmatprep.subr.bf16.mxu0 0
      %2596 = vmatpush2.bf16.msra.mxu0 0
      %2597 = vmatprep.subr.bf16.mxu0 0
      %2598 = vmatpush2.bf16.msra.mxu0 0
      %2599 = vmatprep.subr.bf16.mxu0 0
      %2600 = vmatpush2.bf16.msra.mxu0 0
      %2601 = vmatprep.subr.bf16.mxu0 0
      %2602 = vmatpush2.bf16.msra.mxu0 0
      %2603 = vmatprep.mubr.bf16.mxu0 0
      %2604 = vmatmul.mubr.bf16.gmra.mxu0 %v2555
      %v2605 = vpop.f32.mrf.mxu0
      %v2606 = vadd.f32 0.0, %v2605
      %v2607 = vpop.f32.mrf.mxu0
      %v2608 = vpop.f32.mrf.mxu0
      %v2609 = vadd.f32 0.0, %v2608
      %v2610 = vpop.f32.mrf.mxu0
      %2611 = vmatprep.mubr.bf16.mxu0 0
      %2612 = vmatmul.mubr.bf16.gmra.mxu0 %v2556
      %v2613 = vpop.f32.mrf.mxu0
      %v2614 = vadd.f32 0.0, %v2613
      %v2615 = vpop.f32.mrf.mxu0
      %v2616 = vpop.f32.mrf.mxu0
      %v2617 = vadd.f32 0.0, %v2616
      %v2618 = vpop.f32.mrf.mxu0
      %2619 = vmatprep.mubr.bf16.mxu0 0
      %2620 = vmatmul.mubr.bf16.gmra.mxu0 %v2557
      %v2621 = vpop.f32.mrf.mxu0
      %v2622 = vadd.f32 0.0, %v2621
      %v2623 = vpop.f32.mrf.mxu0
      %v2624 = vpop.f32.mrf.mxu0
      %v2625 = vadd.f32 0.0, %v2624
      %v2626 = vpop.f32.mrf.mxu0
      %2627 = vmatprep.mubr.bf16.mxu0 0
      %2628 = vmatmul.mubr.bf16.gmra.mxu0 %v2558
      %v2629 = vpop.f32.mrf.mxu0
      %v2630 = vadd.f32 0.0, %v2629
      %v2631 = vpop.f32.mrf.mxu0
      %v2632 = vpop.f32.mrf.mxu0
      %v2633 = vadd.f32 0.0, %v2632
      %v2634 = vpop.f32.mrf.mxu0
      %2635 = vmatprep.mubr.bf16.mxu0 0
      %2636 = vmatmul.mubr.bf16.gmra.mxu0 %v2559
      %v2637 = vpop.f32.mrf.mxu0
      %v2638 = vadd.f32 0.0, %v2637
      %v2639 = vpop.f32.mrf.mxu0
      %v2640 = vpop.f32.mrf.mxu0
      %v2641 = vadd.f32 0.0, %v2640
      %v2642 = vpop.f32.mrf.mxu0
      %2643 = vmatprep.mubr.bf16.mxu0 0
      %2644 = vmatmul.mubr.bf16.gmra.mxu0 %v2560
      %v2645 = vpop.f32.mrf.mxu0
      %v2646 = vadd.f32 0.0, %v2645
      %v2647 = vpop.f32.mrf.mxu0
      %v2648 = vpop.f32.mrf.mxu0
      %v2649 = vadd.f32 0.0, %v2648
      %v2650 = vpop.f32.mrf.mxu0
      %2651 = vmatprep.mubr.bf16.mxu0 0
      %2652 = vmatmul.mubr.bf16.gmra.mxu0 %v2561
      %v2653 = vpop.f32.mrf.mxu0
      %v2654 = vadd.f32 0.0, %v2653
      %v2655 = vpop.f32.mrf.mxu0
      %v2656 = vpop.f32.mrf.mxu0
      %v2657 = vadd.f32 0.0, %v2656
      %v2658 = vpop.f32.mrf.mxu0
      %2659 = vmatprep.mubr.bf16.mxu0 0
      %2660 = vmatmul.mubr.bf16.gmra.mxu0 %v2562
      %v2661 = vpop.f32.mrf.mxu0
      %v2662 = vadd.f32 0.0, %v2661
      %v2663 = vpop.f32.mrf.mxu0
      %v2664 = vpop.f32.mrf.mxu0
      %v2665 = vadd.f32 0.0, %v2664
      %v2666 = vpop.f32.mrf.mxu0
      %2667 = vdwg.mxu0
      %v2668 = vpack.c.bf16 %v2609, %v2606
      %v2669 = vpack.c.bf16 %v2617, %v2614
      %v2670 = vpack.c.bf16 %v2625, %v2622
      %v2671 = vpack.c.bf16 %v2633, %v2630
      %v2672 = vpack.c.bf16 %v2641, %v2638
      %v2673 = vpack.c.bf16 %v2649, %v2646
      %v2674 = vpack.c.bf16 %v2657, %v2654
      %v2675 = vpack.c.bf16 %v2665, %v2662
      %s2676 = scalar_lea.vmem %s10, 2
      %v2677 = vld [vmem:[%s2676] sm:$0x3]
      %v2679 = vsel %vm1303, %v2668, 0
      %v2682 = vsel %vm1303, %v2669, 0
      %v2685 = vsel %vm1303, %v2670, 0
      %v2688 = vsel %vm1303, %v2671, 0
      %v2691 = vsel %vm1303, %v2672, 0
      %v2694 = vsel %vm1303, %v2673, 0
      %v2697 = vsel %vm1303, %v2674, 0
      %v2700 = vsel %vm1303, %v2675, 0
      %v2703 = vsel %vm1771, %v2677, 0
      %2705 = vmatprep.subr.bf16.mxu0 0
      %2706 = vmatpush1.bf16.msra.mxu0 0
      %2707 = vmatprep.subr.bf16.mxu0 0
      %2708 = vmatpush1.bf16.msra.mxu0 0
      %2709 = vmatprep.subr.bf16.mxu0 0
      %2710 = vmatpush1.bf16.msra.mxu0 0
      %2711 = vmatprep.subr.bf16.mxu0 0
      %2712 = vmatpush1.bf16.msra.mxu0 0
      %2713 = vmatprep.subr.bf16.mxu0 0
      %2714 = vmatpush1.bf16.msra.mxu0 0
      %2715 = vmatprep.subr.bf16.mxu0 0
      %2716 = vmatpush1.bf16.msra.mxu0 0
      %2717 = vmatprep.subr.bf16.mxu0 0
      %2718 = vmatpush1.bf16.msra.mxu0 0
      %2719 = vmatprep.subr.bf16.mxu0 0
      %2720 = vmatpush1.bf16.msra.mxu0 %v2703
      %2721 = vmatprep.subr.bf16.mxu0 0
      %2722 = vmatpush2.bf16.msra.mxu0 0
      %2723 = vmatprep.subr.bf16.mxu0 0
      %2724 = vmatpush2.bf16.msra.mxu0 0
      %2725 = vmatprep.subr.bf16.mxu0 0
      %2726 = vmatpush2.bf16.msra.mxu0 0
      %2727 = vmatprep.subr.bf16.mxu0 0
      %2728 = vmatpush2.bf16.msra.mxu0 0
      %2729 = vmatprep.subr.bf16.mxu0 0
      %2730 = vmatpush2.bf16.msra.mxu0 0
      %2731 = vmatprep.subr.bf16.mxu0 0
      %2732 = vmatpush2.bf16.msra.mxu0 0
      %2733 = vmatprep.subr.bf16.mxu0 0
      %2734 = vmatpush2.bf16.msra.mxu0 0
      %2735 = vmatprep.subr.bf16.mxu0 0
      %2736 = vmatpush2.bf16.msra.mxu0 0
      %2737 = vmatprep.mubr.bf16.mxu0 0
      %2738 = vmatmul.mubr.bf16.gmra.mxu0 %v2679
      %v2739 = vpop.f32.mrf.mxu0
      %v2740 = vadd.f32 0.0, %v2739
      %v2741 = vpop.f32.mrf.mxu0
      %v2742 = vpop.f32.mrf.mxu0
      %v2743 = vadd.f32 0.0, %v2742
      %v2744 = vpop.f32.mrf.mxu0
      %2745 = vmatprep.mubr.bf16.mxu0 0
      %2746 = vmatmul.mubr.bf16.gmra.mxu0 %v2682
      %v2747 = vpop.f32.mrf.mxu0
      %v2748 = vadd.f32 0.0, %v2747
      %v2749 = vpop.f32.mrf.mxu0
      %v2750 = vpop.f32.mrf.mxu0
      %v2751 = vadd.f32 0.0, %v2750
      %v2752 = vpop.f32.mrf.mxu0
      %2753 = vmatprep.mubr.bf16.mxu0 0
      %2754 = vmatmul.mubr.bf16.gmra.mxu0 %v2685
      %v2755 = vpop.f32.mrf.mxu0
      %v2756 = vadd.f32 0.0, %v2755
      %v2757 = vpop.f32.mrf.mxu0
      %v2758 = vpop.f32.mrf.mxu0
      %v2759 = vadd.f32 0.0, %v2758
      %v2760 = vpop.f32.mrf.mxu0
      %2761 = vmatprep.mubr.bf16.mxu0 0
      %2762 = vmatmul.mubr.bf16.gmra.mxu0 %v2688
      %v2763 = vpop.f32.mrf.mxu0
      %v2764 = vadd.f32 0.0, %v2763
      %v2765 = vpop.f32.mrf.mxu0
      %v2766 = vpop.f32.mrf.mxu0
      %v2767 = vadd.f32 0.0, %v2766
      %v2768 = vpop.f32.mrf.mxu0
      %2769 = vmatprep.mubr.bf16.mxu0 0
      %2770 = vmatmul.mubr.bf16.gmra.mxu0 %v2691
      %v2771 = vpop.f32.mrf.mxu0
      %v2772 = vadd.f32 0.0, %v2771
      %v2773 = vpop.f32.mrf.mxu0
      %v2774 = vpop.f32.mrf.mxu0
      %v2775 = vadd.f32 0.0, %v2774
      %v2776 = vpop.f32.mrf.mxu0
      %2777 = vmatprep.mubr.bf16.mxu0 0
      %2778 = vmatmul.mubr.bf16.gmra.mxu0 %v2694
      %v2779 = vpop.f32.mrf.mxu0
      %v2780 = vadd.f32 0.0, %v2779
      %v2781 = vpop.f32.mrf.mxu0
      %v2782 = vpop.f32.mrf.mxu0
      %v2783 = vadd.f32 0.0, %v2782
      %v2784 = vpop.f32.mrf.mxu0
      %2785 = vmatprep.mubr.bf16.mxu0 0
      %2786 = vmatmul.mubr.bf16.gmra.mxu0 %v2697
      %v2787 = vpop.f32.mrf.mxu0
      %v2788 = vadd.f32 0.0, %v2787
      %v2789 = vpop.f32.mrf.mxu0
      %v2790 = vpop.f32.mrf.mxu0
      %v2791 = vadd.f32 0.0, %v2790
      %v2792 = vpop.f32.mrf.mxu0
      %2793 = vmatprep.mubr.bf16.mxu0 0
      %2794 = vmatmul.mubr.bf16.gmra.mxu0 %v2700
      %v2795 = vpop.f32.mrf.mxu0
      %v2796 = vadd.f32 0.0, %v2795
      %v2797 = vpop.f32.mrf.mxu0
      %v2798 = vpop.f32.mrf.mxu0
      %v2799 = vadd.f32 0.0, %v2798
      %v2800 = vpop.f32.mrf.mxu0
      %2801 = vdwg.mxu0
      %v2802 = vadd.f32 %v1872, %v2740
      %v2803 = vadd.f32 %v1873, %v2743
      %v2804 = vadd.f32 %v1874, %v2748
      %v2805 = vadd.f32 %v1875, %v2751
      %v2806 = vadd.f32 %v1876, %v2756
      %v2807 = vadd.f32 %v1877, %v2759
      %v2808 = vadd.f32 %v1878, %v2764
      %v2809 = vadd.f32 %v1879, %v2767
      %v2810 = vadd.f32 %v1880, %v2772
      %v2811 = vadd.f32 %v1881, %v2775
      %v2812 = vadd.f32 %v1882, %v2780
      %v2813 = vadd.f32 %v1883, %v2783
      %v2814 = vadd.f32 %v1884, %v2788
      %v2815 = vadd.f32 %v1885, %v2791
      %v2816 = vadd.f32 %v1886, %v2796
      %v2817 = vadd.f32 %v1887, %v2799
      %v2818 = vld [vmem:[%s12] sm:$0x1]
      %v2819 = vld [vmem:[%s13] sm:$0x1]
      %v2820 = vsel %vm945, %v2802, 0.0
      %2821 = vadd.xlane.f32.xlu0 %v2820
      %v2822 = vpop.xlane.xlu0 %2821
      %v2823 = vsel %vm945, %v2803, 0.0
      %2824 = vadd.xlane.f32.xlu0 %v2823
      %v2825 = vpop.xlane.xlu0 %2824
      %v2826 = vsel %vm945, %v2804, 0.0
      %2827 = vadd.xlane.f32.xlu0 %v2826
      %v2828 = vpop.xlane.xlu0 %2827
      %v2829 = vsel %vm945, %v2805, 0.0
      %2830 = vadd.xlane.f32.xlu0 %v2829
      %v2831 = vpop.xlane.xlu0 %2830
      %v2832 = vsel %vm945, %v2806, 0.0
      %2833 = vadd.xlane.f32.xlu0 %v2832
      %v2834 = vpop.xlane.xlu0 %2833
      %v2835 = vsel %vm945, %v2807, 0.0
      %2836 = vadd.xlane.f32.xlu0 %v2835
      %v2837 = vpop.xlane.xlu0 %2836
      %v2838 = vsel %vm945, %v2808, 0.0
      %2839 = vadd.xlane.f32.xlu0 %v2838
      %v2840 = vpop.xlane.xlu0 %2839
      %v2841 = vsel %vm945, %v2809, 0.0
      %2842 = vadd.xlane.f32.xlu0 %v2841
      %v2843 = vpop.xlane.xlu0 %2842
      %v2844 = vsel %vm945, %v2810, 0.0
      %2845 = vadd.xlane.f32.xlu0 %v2844
      %v2846 = vpop.xlane.xlu0 %2845
      %v2847 = vsel %vm945, %v2811, 0.0
      %2848 = vadd.xlane.f32.xlu0 %v2847
      %v2849 = vpop.xlane.xlu0 %2848
      %v2850 = vsel %vm945, %v2812, 0.0
      %2851 = vadd.xlane.f32.xlu0 %v2850
      %v2852 = vpop.xlane.xlu0 %2851
      %v2853 = vsel %vm945, %v2813, 0.0
      %2854 = vadd.xlane.f32.xlu0 %v2853
      %v2855 = vpop.xlane.xlu0 %2854
      %v2856 = vsel %vm945, %v2814, 0.0
      %2857 = vadd.xlane.f32.xlu0 %v2856
      %v2858 = vpop.xlane.xlu0 %2857
      %v2859 = vsel %vm945, %v2815, 0.0
      %2860 = vadd.xlane.f32.xlu0 %v2859
      %v2861 = vpop.xlane.xlu0 %2860
      %v2862 = vsel %vm945, %v2816, 0.0
      %2863 = vadd.xlane.f32.xlu0 %v2862
      %v2864 = vpop.xlane.xlu0 %2863
      %v2865 = vsel %vm945, %v2817, 0.0
      %2866 = vadd.xlane.f32.xlu0 %v2865
      %v2867 = vpop.xlane.xlu0 %2866
      %v2868 = vrcp.pop 8.0
      %v2869 = vmul.f32 %v2822, %v2868
      %v2870 = vmul.f32 %v2825, %v2868
      %v2871 = vmul.f32 %v2828, %v2868
      %v2872 = vmul.f32 %v2831, %v2868
      %v2873 = vmul.f32 %v2834, %v2868
      %v2874 = vmul.f32 %v2837, %v2868
      %v2875 = vmul.f32 %v2840, %v2868
      %v2876 = vmul.f32 %v2843, %v2868
      %v2877 = vmul.f32 %v2846, %v2868
      %v2878 = vmul.f32 %v2849, %v2868
      %v2879 = vmul.f32 %v2852, %v2868
      %v2880 = vmul.f32 %v2855, %v2868
      %v2881 = vmul.f32 %v2858, %v2868
      %v2882 = vmul.f32 %v2861, %v2868
      %v2883 = vmul.f32 %v2864, %v2868
      %v2884 = vmul.f32 %v2867, %v2868
      %v2885 = vsub.f32 %v2802, %v2869
      %v2886 = vsub.f32 %v2803, %v2870
      %v2887 = vsub.f32 %v2804, %v2871
      %v2888 = vsub.f32 %v2805, %v2872
      %v2889 = vsub.f32 %v2806, %v2873
      %v2890 = vsub.f32 %v2807, %v2874
      %v2891 = vsub.f32 %v2808, %v2875
      %v2892 = vsub.f32 %v2809, %v2876
      %v2893 = vsub.f32 %v2810, %v2877
      %v2894 = vsub.f32 %v2811, %v2878
      %v2895 = vsub.f32 %v2812, %v2879
      %v2896 = vsub.f32 %v2813, %v2880
      %v2897 = vsub.f32 %v2814, %v2881
      %v2898 = vsub.f32 %v2815, %v2882
      %v2899 = vsub.f32 %v2816, %v2883
      %v2900 = vsub.f32 %v2817, %v2884
      %v2901 = vmul.f32 %v2885, %v2885
      %v2902 = vmul.f32 %v2886, %v2886
      %v2903 = vmul.f32 %v2887, %v2887
      %v2904 = vmul.f32 %v2888, %v2888
      %v2905 = vmul.f32 %v2889, %v2889
      %v2906 = vmul.f32 %v2890, %v2890
      %v2907 = vmul.f32 %v2891, %v2891
      %v2908 = vmul.f32 %v2892, %v2892
      %v2909 = vmul.f32 %v2893, %v2893
      %v2910 = vmul.f32 %v2894, %v2894
      %v2911 = vmul.f32 %v2895, %v2895
      %v2912 = vmul.f32 %v2896, %v2896
      %v2913 = vmul.f32 %v2897, %v2897
      %v2914 = vmul.f32 %v2898, %v2898
      %v2915 = vmul.f32 %v2899, %v2899
      %v2916 = vmul.f32 %v2900, %v2900
      %v2917 = vsel %vm945, %v2901, 0.0
      %2918 = vadd.xlane.f32.xlu0 %v2917
      %v2919 = vpop.xlane.xlu0 %2918
      %v2920 = vsel %vm945, %v2902, 0.0
      %2921 = vadd.xlane.f32.xlu0 %v2920
      %v2922 = vpop.xlane.xlu0 %2921
      %v2923 = vsel %vm945, %v2903, 0.0
      %2924 = vadd.xlane.f32.xlu0 %v2923
      %v2925 = vpop.xlane.xlu0 %2924
      %v2926 = vsel %vm945, %v2904, 0.0
      %2927 = vadd.xlane.f32.xlu0 %v2926
      %v2928 = vpop.xlane.xlu0 %2927
      %v2929 = vsel %vm945, %v2905, 0.0
      %2930 = vadd.xlane.f32.xlu0 %v2929
      %v2931 = vpop.xlane.xlu0 %2930
      %v2932 = vsel %vm945, %v2906, 0.0
      %2933 = vadd.xlane.f32.xlu0 %v2932
      %v2934 = vpop.xlane.xlu0 %2933
      %v2935 = vsel %vm945, %v2907, 0.0
      %2936 = vadd.xlane.f32.xlu0 %v2935
      %v2937 = vpop.xlane.xlu0 %2936
      %v2938 = vsel %vm945, %v2908, 0.0
      %2939 = vadd.xlane.f32.xlu0 %v2938
      %v2940 = vpop.xlane.xlu0 %2939
      %v2941 = vsel %vm945, %v2909, 0.0
      %2942 = vadd.xlane.f32.xlu0 %v2941
      %v2943 = vpop.xlane.xlu0 %2942
      %v2944 = vsel %vm945, %v2910, 0.0
      %2945 = vadd.xlane.f32.xlu0 %v2944
      %v2946 = vpop.xlane.xlu0 %2945
      %v2947 = vsel %vm945, %v2911, 0.0
      %2948 = vadd.xlane.f32.xlu0 %v2947
      %v2949 = vpop.xlane.xlu0 %2948
      %v2950 = vsel %vm945, %v2912, 0.0
      %2951 = vadd.xlane.f32.xlu0 %v2950
      %v2952 = vpop.xlane.xlu0 %2951
      %v2953 = vsel %vm945, %v2913, 0.0
      %2954 = vadd.xlane.f32.xlu0 %v2953
      %v2955 = vpop.xlane.xlu0 %2954
      %v2956 = vsel %vm945, %v2914, 0.0
      %2957 = vadd.xlane.f32.xlu0 %v2956
      %v2958 = vpop.xlane.xlu0 %2957
      %v2959 = vsel %vm945, %v2915, 0.0
      %2960 = vadd.xlane.f32.xlu0 %v2959
      %v2961 = vpop.xlane.xlu0 %2960
      %v2962 = vsel %vm945, %v2916, 0.0
      %2963 = vadd.xlane.f32.xlu0 %v2962
      %v2964 = vpop.xlane.xlu0 %2963
      %v2965 = vmul.f32 %v2919, %v2868
      %v2966 = vmul.f32 %v2922, %v2868
      %v2967 = vmul.f32 %v2925, %v2868
      %v2968 = vmul.f32 %v2928, %v2868
      %v2969 = vmul.f32 %v2931, %v2868
      %v2970 = vmul.f32 %v2934, %v2868
      %v2971 = vmul.f32 %v2937, %v2868
      %v2972 = vmul.f32 %v2940, %v2868
      %v2973 = vmul.f32 %v2943, %v2868
      %v2974 = vmul.f32 %v2946, %v2868
      %v2975 = vmul.f32 %v2949, %v2868
      %v2976 = vmul.f32 %v2952, %v2868
      %v2977 = vmul.f32 %v2955, %v2868
      %v2978 = vmul.f32 %v2958, %v2868
      %v2979 = vmul.f32 %v2961, %v2868
      %v2980 = vmul.f32 %v2964, %v2868
      %v2981 = vadd.f32 %v2965, 1e-05
      %v2982 = vadd.f32 %v2966, 1e-05
      %v2983 = vadd.f32 %v2967, 1e-05
      %v2984 = vadd.f32 %v2968, 1e-05
      %v2985 = vadd.f32 %v2969, 1e-05
      %v2986 = vadd.f32 %v2970, 1e-05
      %v2987 = vadd.f32 %v2971, 1e-05
      %v2988 = vadd.f32 %v2972, 1e-05
      %v2989 = vadd.f32 %v2973, 1e-05
      %v2990 = vadd.f32 %v2974, 1e-05
      %v2991 = vadd.f32 %v2975, 1e-05
      %v2992 = vadd.f32 %v2976, 1e-05
      %v2993 = vadd.f32 %v2977, 1e-05
      %v2994 = vadd.f32 %v2978, 1e-05
      %v2995 = vadd.f32 %v2979, 1e-05
      %v2996 = vadd.f32 %v2980, 1e-05
      %v2997 = vrsqrt.pop %v2981
      %v2998 = vrsqrt.pop %v2982
      %v2999 = vrsqrt.pop %v2983
      %v3000 = vrsqrt.pop %v2984
      %v3001 = vrsqrt.pop %v2985
      %v3002 = vrsqrt.pop %v2986
      %v3003 = vrsqrt.pop %v2987
      %v3004 = vrsqrt.pop %v2988
      %v3005 = vrsqrt.pop %v2989
      %v3006 = vrsqrt.pop %v2990
      %v3007 = vrsqrt.pop %v2991
      %v3008 = vrsqrt.pop %v2992
      %v3009 = vrsqrt.pop %v2993
      %v3010 = vrsqrt.pop %v2994
      %v3011 = vrsqrt.pop %v2995
      %v3012 = vrsqrt.pop %v2996
      %v3013 = vmul.f32 %v2885, %v2997
      %v3014 = vmul.f32 %v2886, %v2998
      %v3015 = vmul.f32 %v2887, %v2999
      %v3016 = vmul.f32 %v2888, %v3000
      %v3017 = vmul.f32 %v2889, %v3001
      %v3018 = vmul.f32 %v2890, %v3002
      %v3019 = vmul.f32 %v2891, %v3003
      %v3020 = vmul.f32 %v2892, %v3004
      %v3021 = vmul.f32 %v2893, %v3005
      %v3022 = vmul.f32 %v2894, %v3006
      %v3023 = vmul.f32 %v2895, %v3007
      %v3024 = vmul.f32 %v2896, %v3008
      %v3025 = vmul.f32 %v2897, %v3009
      %v3026 = vmul.f32 %v2898, %v3010
      %v3027 = vmul.f32 %v2899, %v3011
      %v3028 = vmul.f32 %v2900, %v3012
      %v3030 = vlaneseq
      %v3031 = vshrl.u32 %v3030, 7
      %v3032 = vsub.s32 0, %v3031
      %v3033 = vrot.slane %v2818, %v3032
      %v3035 = vmul.f32 %v3013, %v3033
      %v3036 = vmul.f32 %v3014, %v3033
      %v3037 = vmul.f32 %v3015, %v3033
      %v3038 = vmul.f32 %v3016, %v3033
      %v3039 = vmul.f32 %v3017, %v3033
      %v3040 = vmul.f32 %v3018, %v3033
      %v3041 = vmul.f32 %v3019, %v3033
      %v3042 = vmul.f32 %v3020, %v3033
      %v3043 = vmul.f32 %v3021, %v3033
      %v3044 = vmul.f32 %v3022, %v3033
      %v3045 = vmul.f32 %v3023, %v3033
      %v3046 = vmul.f32 %v3024, %v3033
      %v3047 = vmul.f32 %v3025, %v3033
      %v3048 = vmul.f32 %v3026, %v3033
      %v3049 = vmul.f32 %v3027, %v3033
      %v3050 = vmul.f32 %v3028, %v3033
      %v3052 = vlaneseq
      %v3053 = vshrl.u32 %v3052, 7
      %v3054 = vsub.s32 0, %v3053
      %v3055 = vrot.slane %v2819, %v3054
      %v3057 = vadd.f32 %v3035, %v3055
      %v3058 = vadd.f32 %v3036, %v3055
      %v3059 = vadd.f32 %v3037, %v3055
      %v3060 = vadd.f32 %v3038, %v3055
      %v3061 = vadd.f32 %v3039, %v3055
      %v3062 = vadd.f32 %v3040, %v3055
      %v3063 = vadd.f32 %v3041, %v3055
      %v3064 = vadd.f32 %v3042, %v3055
      %v3065 = vadd.f32 %v3043, %v3055
      %v3066 = vadd.f32 %v3044, %v3055
      %v3067 = vadd.f32 %v3045, %v3055
      %v3068 = vadd.f32 %v3046, %v3055
      %v3069 = vadd.f32 %v3047, %v3055
      %v3070 = vadd.f32 %v3048, %v3055
      %v3071 = vadd.f32 %v3049, %v3055
      %v3072 = vadd.f32 %v3050, %v3055
      %v3073 = vpack.c.bf16 %v3058, %v3057
      %v3074 = vpack.c.bf16 %v3060, %v3059
      %v3075 = vpack.c.bf16 %v3062, %v3061
      %v3076 = vpack.c.bf16 %v3064, %v3063
      %v3077 = vpack.c.bf16 %v3066, %v3065
      %v3078 = vpack.c.bf16 %v3068, %v3067
      %v3079 = vpack.c.bf16 %v3070, %v3069
      %v3080 = vpack.c.bf16 %v3072, %v3071
      %v3081 = vld [vmem:[%s14] sm:$0xf]
      %v3082 = vld [vmem:[%s15] sm:$0x1]
      %v3084 = vlaneseq
      %v3085 = vshrl.u32 %v3084, 7
      %v3086 = vsub.s32 0, %v3085
      %v3087 = vrot.slane %v3082, %v3086
      %v3090 = vsel %vm945, %v3073, 0
      %v3093 = vsel %vm945, %v3074, 0
      %v3096 = vsel %vm945, %v3075, 0
      %v3099 = vsel %vm945, %v3076, 0
      %v3102 = vsel %vm945, %v3077, 0
      %v3105 = vsel %vm945, %v3078, 0
      %v3108 = vsel %vm945, %v3079, 0
      %v3111 = vsel %vm945, %v3080, 0
      %v3114 = vsel %vm970, %v3081, 0
      %3116 = vmatprep.subr.bf16.mxu0 0
      %3117 = vmatpush1.bf16.msra.mxu0 0
      %3118 = vmatprep.subr.bf16.mxu0 0
      %3119 = vmatpush1.bf16.msra.mxu0 0
      %3120 = vmatprep.subr.bf16.mxu0 0
      %3121 = vmatpush1.bf16.msra.mxu0 0
      %3122 = vmatprep.subr.bf16.mxu0 0
      %3123 = vmatpush1.bf16.msra.mxu0 0
      %3124 = vmatprep.subr.bf16.mxu0 0
      %3125 = vmatpush1.bf16.msra.mxu0 0
      %3126 = vmatprep.subr.bf16.mxu0 0
      %3127 = vmatpush1.bf16.msra.mxu0 0
      %3128 = vmatprep.subr.bf16.mxu0 0
      %3129 = vmatpush1.bf16.msra.mxu0 0
      %3130 = vmatprep.subr.bf16.mxu0 0
      %3131 = vmatpush1.bf16.msra.mxu0 %v3114
      %3132 = vmatprep.subr.bf16.mxu0 0
      %3133 = vmatpush2.bf16.msra.mxu0 0
      %3134 = vmatprep.subr.bf16.mxu0 0
      %3135 = vmatpush2.bf16.msra.mxu0 0
      %3136 = vmatprep.subr.bf16.mxu0 0
      %3137 = vmatpush2.bf16.msra.mxu0 0
      %3138 = vmatprep.subr.bf16.mxu0 0
      %3139 = vmatpush2.bf16.msra.mxu0 0
      %3140 = vmatprep.subr.bf16.mxu0 0
      %3141 = vmatpush2.bf16.msra.mxu0 0
      %3142 = vmatprep.subr.bf16.mxu0 0
      %3143 = vmatpush2.bf16.msra.mxu0 0
      %3144 = vmatprep.subr.bf16.mxu0 0
      %3145 = vmatpush2.bf16.msra.mxu0 0
      %3146 = vmatprep.subr.bf16.mxu0 0
      %3147 = vmatpush2.bf16.msra.mxu0 0
      %3148 = vmatprep.mubr.bf16.mxu0 0
      %3149 = vmatmul.mubr.bf16.gmra.mxu0 %v3090
      %v3150 = vpop.f32.mrf.mxu0
      %v3151 = vadd.f32 %v3087, %v3150
      %v3152 = vpop.f32.mrf.mxu0
      %v3153 = vpop.f32.mrf.mxu0
      %v3154 = vadd.f32 %v3087, %v3153
      %v3155 = vpop.f32.mrf.mxu0
      %3156 = vmatprep.mubr.bf16.mxu0 0
      %3157 = vmatmul.mubr.bf16.gmra.mxu0 %v3093
      %v3158 = vpop.f32.mrf.mxu0
      %v3159 = vadd.f32 %v3087, %v3158
      %v3160 = vpop.f32.mrf.mxu0
      %v3161 = vpop.f32.mrf.mxu0
      %v3162 = vadd.f32 %v3087, %v3161
      %v3163 = vpop.f32.mrf.mxu0
      %3164 = vmatprep.mubr.bf16.mxu0 0
      %3165 = vmatmul.mubr.bf16.gmra.mxu0 %v3096
      %v3166 = vpop.f32.mrf.mxu0
      %v3167 = vadd.f32 %v3087, %v3166
      %v3168 = vpop.f32.mrf.mxu0
      %v3169 = vpop.f32.mrf.mxu0
      %v3170 = vadd.f32 %v3087, %v3169
      %v3171 = vpop.f32.mrf.mxu0
      %3172 = vmatprep.mubr.bf16.mxu0 0
      %3173 = vmatmul.mubr.bf16.gmra.mxu0 %v3099
      %v3174 = vpop.f32.mrf.mxu0
      %v3175 = vadd.f32 %v3087, %v3174
      %v3176 = vpop.f32.mrf.mxu0
      %v3177 = vpop.f32.mrf.mxu0
      %v3178 = vadd.f32 %v3087, %v3177
      %v3179 = vpop.f32.mrf.mxu0
      %3180 = vmatprep.mubr.bf16.mxu0 0
      %3181 = vmatmul.mubr.bf16.gmra.mxu0 %v3102
      %v3182 = vpop.f32.mrf.mxu0
      %v3183 = vadd.f32 %v3087, %v3182
      %v3184 = vpop.f32.mrf.mxu0
      %v3185 = vpop.f32.mrf.mxu0
      %v3186 = vadd.f32 %v3087, %v3185
      %v3187 = vpop.f32.mrf.mxu0
      %3188 = vmatprep.mubr.bf16.mxu0 0
      %3189 = vmatmul.mubr.bf16.gmra.mxu0 %v3105
      %v3190 = vpop.f32.mrf.mxu0
      %v3191 = vadd.f32 %v3087, %v3190
      %v3192 = vpop.f32.mrf.mxu0
      %v3193 = vpop.f32.mrf.mxu0
      %v3194 = vadd.f32 %v3087, %v3193
      %v3195 = vpop.f32.mrf.mxu0
      %3196 = vmatprep.mubr.bf16.mxu0 0
      %3197 = vmatmul.mubr.bf16.gmra.mxu0 %v3108
      %v3198 = vpop.f32.mrf.mxu0
      %v3199 = vadd.f32 %v3087, %v3198
      %v3200 = vpop.f32.mrf.mxu0
      %v3201 = vpop.f32.mrf.mxu0
      %v3202 = vadd.f32 %v3087, %v3201
      %v3203 = vpop.f32.mrf.mxu0
      %3204 = vmatprep.mubr.bf16.mxu0 0
      %3205 = vmatmul.mubr.bf16.gmra.mxu0 %v3111
      %v3206 = vpop.f32.mrf.mxu0
      %v3207 = vadd.f32 %v3087, %v3206
      %v3208 = vpop.f32.mrf.mxu0
      %v3209 = vpop.f32.mrf.mxu0
      %v3210 = vadd.f32 %v3087, %v3209
      %v3211 = vpop.f32.mrf.mxu0
      %3212 = vdwg.mxu0
      %v3213 = vmax.f32 %v3151, 0.0
      %v3214 = vmax.f32 %v3154, 0.0
      %v3215 = vmax.f32 %v3159, 0.0
      %v3216 = vmax.f32 %v3162, 0.0
      %v3217 = vmax.f32 %v3167, 0.0
      %v3218 = vmax.f32 %v3170, 0.0
      %v3219 = vmax.f32 %v3175, 0.0
      %v3220 = vmax.f32 %v3178, 0.0
      %v3221 = vmax.f32 %v3183, 0.0
      %v3222 = vmax.f32 %v3186, 0.0
      %v3223 = vmax.f32 %v3191, 0.0
      %v3224 = vmax.f32 %v3194, 0.0
      %v3225 = vmax.f32 %v3199, 0.0
      %v3226 = vmax.f32 %v3202, 0.0
      %v3227 = vmax.f32 %v3207, 0.0
      %v3228 = vmax.f32 %v3210, 0.0
      %v3229 = vpack.c.bf16 %v3214, %v3213
      %v3230 = vpack.c.bf16 %v3216, %v3215
      %v3231 = vpack.c.bf16 %v3218, %v3217
      %v3232 = vpack.c.bf16 %v3220, %v3219
      %v3233 = vpack.c.bf16 %v3222, %v3221
      %v3234 = vpack.c.bf16 %v3224, %v3223
      %v3235 = vpack.c.bf16 %v3226, %v3225
      %v3236 = vpack.c.bf16 %v3228, %v3227
      %v3237 = vld [vmem:[%s16] sm:$0xf]
      %v3238 = vld [vmem:[%s16 + $0x4] sm:$0xf]
      %v3239 = vld [vmem:[%s16 + $0x8] sm:$0xf]
      %v3240 = vld [vmem:[%s16 + $0xc] sm:$0xf]
      %v3245 = vunpack.c.l.b16 %v3237
      %v3246 = vunpack.c.l.b16 %v3238
      %v3247 = vunpack.c.l.b16 %v3239
      %v3248 = vunpack.c.l.b16 %v3240
      %v3249 = vpack.c.b16 %v3246, %v3245
      %v3250 = vpack.c.b16 %v3248, %v3247
      %vm3253 = vcmask 261120
      %v3255 = vsel %vm3253, %v3229, 0
      %v3258 = vsel %vm3253, %v3230, 0
      %v3261 = vsel %vm3253, %v3231, 0
      %v3264 = vsel %vm3253, %v3232, 0
      %v3267 = vsel %vm3253, %v3233, 0
      %v3270 = vsel %vm3253, %v3234, 0
      %v3273 = vsel %vm3253, %v3235, 0
      %v3276 = vsel %vm3253, %v3236, 0
      %3278 = vmatprep.subr.bf16.mxu0 0
      %3279 = vmatpush1.bf16.msra.mxu0 0
      %3280 = vmatprep.subr.bf16.mxu0 0
      %3281 = vmatpush1.bf16.msra.mxu0 0
      %3282 = vmatprep.subr.bf16.mxu0 0
      %3283 = vmatpush1.bf16.msra.mxu0 0
      %3284 = vmatprep.subr.bf16.mxu0 0
      %3285 = vmatpush1.bf16.msra.mxu0 0
      %3286 = vmatprep.subr.bf16.mxu0 0
      %3287 = vmatpush1.bf16.msra.mxu0 0
      %3288 = vmatprep.subr.bf16.mxu0 0
      %3289 = vmatpush1.bf16.msra.mxu0 0
      %3290 = vmatprep.subr.bf16.mxu0 0
      %3291 = vmatpush1.bf16.msra.mxu0 %v3250
      %3292 = vmatprep.subr.bf16.mxu0 0
      %3293 = vmatpush1.bf16.msra.mxu0 %v3249
      %3294 = vmatprep.subr.bf16.mxu0 0
      %3295 = vmatpush2.bf16.msra.mxu0 0
      %3296 = vmatprep.subr.bf16.mxu0 0
      %3297 = vmatpush2.bf16.msra.mxu0 0
      %3298 = vmatprep.subr.bf16.mxu0 0
      %3299 = vmatpush2.bf16.msra.mxu0 0
      %3300 = vmatprep.subr.bf16.mxu0 0
      %3301 = vmatpush2.bf16.msra.mxu0 0
      %3302 = vmatprep.subr.bf16.mxu0 0
      %3303 = vmatpush2.bf16.msra.mxu0 0
      %3304 = vmatprep.subr.bf16.mxu0 0
      %3305 = vmatpush2.bf16.msra.mxu0 0
      %3306 = vmatprep.subr.bf16.mxu0 0
      %3307 = vmatpush2.bf16.msra.mxu0 0
      %3308 = vmatprep.subr.bf16.mxu0 0
      %3309 = vmatpush2.bf16.msra.mxu0 0
      %3310 = vmatprep.mubr.bf16.mxu0 0
      %3311 = vmatmul.mubr.bf16.gmra.mxu0 %v3255
      %v3312 = vpop.f32.mrf.mxu0
      %v3313 = vadd.f32 0.0, %v3312
      %v3314 = vpop.f32.mrf.mxu0
      %v3315 = vpop.f32.mrf.mxu0
      %v3316 = vadd.f32 0.0, %v3315
      %v3317 = vpop.f32.mrf.mxu0
      %3318 = vmatprep.mubr.bf16.mxu0 0
      %3319 = vmatmul.mubr.bf16.gmra.mxu0 %v3258
      %v3320 = vpop.f32.mrf.mxu0
      %v3321 = vadd.f32 0.0, %v3320
      %v3322 = vpop.f32.mrf.mxu0
      %v3323 = vpop.f32.mrf.mxu0
      %v3324 = vadd.f32 0.0, %v3323
      %v3325 = vpop.f32.mrf.mxu0
      %3326 = vmatprep.mubr.bf16.mxu0 0
      %3327 = vmatmul.mubr.bf16.gmra.mxu0 %v3261
      %v3328 = vpop.f32.mrf.mxu0
      %v3329 = vadd.f32 0.0, %v3328
      %v3330 = vpop.f32.mrf.mxu0
      %v3331 = vpop.f32.mrf.mxu0
      %v3332 = vadd.f32 0.0, %v3331
      %v3333 = vpop.f32.mrf.mxu0
      %3334 = vmatprep.mubr.bf16.mxu0 0
      %3335 = vmatmul.mubr.bf16.gmra.mxu0 %v3264
      %v3336 = vpop.f32.mrf.mxu0
      %v3337 = vadd.f32 0.0, %v3336
      %v3338 = vpop.f32.mrf.mxu0
      %v3339 = vpop.f32.mrf.mxu0
      %v3340 = vadd.f32 0.0, %v3339
      %v3341 = vpop.f32.mrf.mxu0
      %3342 = vmatprep.mubr.bf16.mxu0 0
      %3343 = vmatmul.mubr.bf16.gmra.mxu0 %v3267
      %v3344 = vpop.f32.mrf.mxu0
      %v3345 = vadd.f32 0.0, %v3344
      %v3346 = vpop.f32.mrf.mxu0
      %v3347 = vpop.f32.mrf.mxu0
      %v3348 = vadd.f32 0.0, %v3347
      %v3349 = vpop.f32.mrf.mxu0
      %3350 = vmatprep.mubr.bf16.mxu0 0
      %3351 = vmatmul.mubr.bf16.gmra.mxu0 %v3270
      %v3352 = vpop.f32.mrf.mxu0
      %v3353 = vadd.f32 0.0, %v3352
      %v3354 = vpop.f32.mrf.mxu0
      %v3355 = vpop.f32.mrf.mxu0
      %v3356 = vadd.f32 0.0, %v3355
      %v3357 = vpop.f32.mrf.mxu0
      %3358 = vmatprep.mubr.bf16.mxu0 0
      %3359 = vmatmul.mubr.bf16.gmra.mxu0 %v3273
      %v3360 = vpop.f32.mrf.mxu0
      %v3361 = vadd.f32 0.0, %v3360
      %v3362 = vpop.f32.mrf.mxu0
      %v3363 = vpop.f32.mrf.mxu0
      %v3364 = vadd.f32 0.0, %v3363
      %v3365 = vpop.f32.mrf.mxu0
      %3366 = vmatprep.mubr.bf16.mxu0 0
      %3367 = vmatmul.mubr.bf16.gmra.mxu0 %v3276
      %v3368 = vpop.f32.mrf.mxu0
      %v3369 = vadd.f32 0.0, %v3368
      %v3370 = vpop.f32.mrf.mxu0
      %v3371 = vpop.f32.mrf.mxu0
      %v3372 = vadd.f32 0.0, %v3371
      %v3373 = vpop.f32.mrf.mxu0
      %3374 = vdwg.mxu0
      %v3375 = vadd.f32 %v3057, %v3313
      %v3376 = vadd.f32 %v3058, %v3316
      %v3377 = vadd.f32 %v3059, %v3321
      %v3378 = vadd.f32 %v3060, %v3324
      %v3379 = vadd.f32 %v3061, %v3329
      %v3380 = vadd.f32 %v3062, %v3332
      %v3381 = vadd.f32 %v3063, %v3337
      %v3382 = vadd.f32 %v3064, %v3340
      %v3383 = vadd.f32 %v3065, %v3345
      %v3384 = vadd.f32 %v3066, %v3348
      %v3385 = vadd.f32 %v3067, %v3353
      %v3386 = vadd.f32 %v3068, %v3356
      %v3387 = vadd.f32 %v3069, %v3361
      %v3388 = vadd.f32 %v3070, %v3364
      %v3389 = vadd.f32 %v3071, %v3369
      %v3390 = vadd.f32 %v3072, %v3372
      %v3391 = vld [vmem:[%s17] sm:$0x1]
      %v3393 = vlaneseq
      %v3394 = vshrl.u32 %v3393, 7
      %v3395 = vsub.s32 0, %v3394
      %v3396 = vrot.slane %v3391, %v3395
      %v3398 = vadd.f32 %v3375, %v3396
      %v3399 = vadd.f32 %v3376, %v3396
      %v3400 = vadd.f32 %v3377, %v3396
      %v3401 = vadd.f32 %v3378, %v3396
      %v3402 = vadd.f32 %v3379, %v3396
      %v3403 = vadd.f32 %v3380, %v3396
      %v3404 = vadd.f32 %v3381, %v3396
      %v3405 = vadd.f32 %v3382, %v3396
      %v3406 = vadd.f32 %v3383, %v3396
      %v3407 = vadd.f32 %v3384, %v3396
      %v3408 = vadd.f32 %v3385, %v3396
      %v3409 = vadd.f32 %v3386, %v3396
      %v3410 = vadd.f32 %v3387, %v3396
      %v3411 = vadd.f32 %v3388, %v3396
      %v3412 = vadd.f32 %v3389, %v3396
      %v3413 = vadd.f32 %v3390, %v3396
      %v3414 = vld [vmem:[%s18] sm:$0x1]
      %v3415 = vld [vmem:[%s19] sm:$0x1]
      %v3416 = vsel %vm945, %v3398, 0.0
      %3417 = vadd.xlane.f32.xlu0 %v3416
      %v3418 = vpop.xlane.xlu0 %3417
      %v3419 = vsel %vm945, %v3399, 0.0
      %3420 = vadd.xlane.f32.xlu0 %v3419
      %v3421 = vpop.xlane.xlu0 %3420
      %v3422 = vsel %vm945, %v3400, 0.0
      %3423 = vadd.xlane.f32.xlu0 %v3422
      %v3424 = vpop.xlane.xlu0 %3423
      %v3425 = vsel %vm945, %v3401, 0.0
      %3426 = vadd.xlane.f32.xlu0 %v3425
      %v3427 = vpop.xlane.xlu0 %3426
      %v3428 = vsel %vm945, %v3402, 0.0
      %3429 = vadd.xlane.f32.xlu0 %v3428
      %v3430 = vpop.xlane.xlu0 %3429
      %v3431 = vsel %vm945, %v3403, 0.0
      %3432 = vadd.xlane.f32.xlu0 %v3431
      %v3433 = vpop.xlane.xlu0 %3432
      %v3434 = vsel %vm945, %v3404, 0.0
      %3435 = vadd.xlane.f32.xlu0 %v3434
      %v3436 = vpop.xlane.xlu0 %3435
      %v3437 = vsel %vm945, %v3405, 0.0
      %3438 = vadd.xlane.f32.xlu0 %v3437
      %v3439 = vpop.xlane.xlu0 %3438
      %v3440 = vsel %vm945, %v3406, 0.0
      %3441 = vadd.xlane.f32.xlu0 %v3440
      %v3442 = vpop.xlane.xlu0 %3441
      %v3443 = vsel %vm945, %v3407, 0.0
      %3444 = vadd.xlane.f32.xlu0 %v3443
      %v3445 = vpop.xlane.xlu0 %3444
      %v3446 = vsel %vm945, %v3408, 0.0
      %3447 = vadd.xlane.f32.xlu0 %v3446
      %v3448 = vpop.xlane.xlu0 %3447
      %v3449 = vsel %vm945, %v3409, 0.0
      %3450 = vadd.xlane.f32.xlu0 %v3449
      %v3451 = vpop.xlane.xlu0 %3450
      %v3452 = vsel %vm945, %v3410, 0.0
      %3453 = vadd.xlane.f32.xlu0 %v3452
      %v3454 = vpop.xlane.xlu0 %3453
      %v3455 = vsel %vm945, %v3411, 0.0
      %3456 = vadd.xlane.f32.xlu0 %v3455
      %v3457 = vpop.xlane.xlu0 %3456
      %v3458 = vsel %vm945, %v3412, 0.0
      %3459 = vadd.xlane.f32.xlu0 %v3458
      %v3460 = vpop.xlane.xlu0 %3459
      %v3461 = vsel %vm945, %v3413, 0.0
      %3462 = vadd.xlane.f32.xlu0 %v3461
      %v3463 = vpop.xlane.xlu0 %3462
      %v3464 = vmul.f32 %v3418, %v2868
      %v3465 = vmul.f32 %v3421, %v2868
      %v3466 = vmul.f32 %v3424, %v2868
      %v3467 = vmul.f32 %v3427, %v2868
      %v3468 = vmul.f32 %v3430, %v2868
      %v3469 = vmul.f32 %v3433, %v2868
      %v3470 = vmul.f32 %v3436, %v2868
      %v3471 = vmul.f32 %v3439, %v2868
      %v3472 = vmul.f32 %v3442, %v2868
      %v3473 = vmul.f32 %v3445, %v2868
      %v3474 = vmul.f32 %v3448, %v2868
      %v3475 = vmul.f32 %v3451, %v2868
      %v3476 = vmul.f32 %v3454, %v2868
      %v3477 = vmul.f32 %v3457, %v2868
      %v3478 = vmul.f32 %v3460, %v2868
      %v3479 = vmul.f32 %v3463, %v2868
      %v3480 = vsub.f32 %v3398, %v3464
      %v3481 = vsub.f32 %v3399, %v3465
      %v3482 = vsub.f32 %v3400, %v3466
      %v3483 = vsub.f32 %v3401, %v3467
      %v3484 = vsub.f32 %v3402, %v3468
      %v3485 = vsub.f32 %v3403, %v3469
      %v3486 = vsub.f32 %v3404, %v3470
      %v3487 = vsub.f32 %v3405, %v3471
      %v3488 = vsub.f32 %v3406, %v3472
      %v3489 = vsub.f32 %v3407, %v3473
      %v3490 = vsub.f32 %v3408, %v3474
      %v3491 = vsub.f32 %v3409, %v3475
      %v3492 = vsub.f32 %v3410, %v3476
      %v3493 = vsub.f32 %v3411, %v3477
      %v3494 = vsub.f32 %v3412, %v3478
      %v3495 = vsub.f32 %v3413, %v3479
      %v3496 = vmul.f32 %v3480, %v3480
      %v3497 = vmul.f32 %v3481, %v3481
      %v3498 = vmul.f32 %v3482, %v3482
      %v3499 = vmul.f32 %v3483, %v3483
      %v3500 = vmul.f32 %v3484, %v3484
      %v3501 = vmul.f32 %v3485, %v3485
      %v3502 = vmul.f32 %v3486, %v3486
      %v3503 = vmul.f32 %v3487, %v3487
      %v3504 = vmul.f32 %v3488, %v3488
      %v3505 = vmul.f32 %v3489, %v3489
      %v3506 = vmul.f32 %v3490, %v3490
      %v3507 = vmul.f32 %v3491, %v3491
      %v3508 = vmul.f32 %v3492, %v3492
      %v3509 = vmul.f32 %v3493, %v3493
      %v3510 = vmul.f32 %v3494, %v3494
      %v3511 = vmul.f32 %v3495, %v3495
      %v3512 = vsel %vm945, %v3496, 0.0
      %3513 = vadd.xlane.f32.xlu0 %v3512
      %v3514 = vpop.xlane.xlu0 %3513
      %v3515 = vsel %vm945, %v3497, 0.0
      %3516 = vadd.xlane.f32.xlu0 %v3515
      %v3517 = vpop.xlane.xlu0 %3516
      %v3518 = vsel %vm945, %v3498, 0.0
      %3519 = vadd.xlane.f32.xlu0 %v3518
      %v3520 = vpop.xlane.xlu0 %3519
      %v3521 = vsel %vm945, %v3499, 0.0
      %3522 = vadd.xlane.f32.xlu0 %v3521
      %v3523 = vpop.xlane.xlu0 %3522
      %v3524 = vsel %vm945, %v3500, 0.0
      %3525 = vadd.xlane.f32.xlu0 %v3524
      %v3526 = vpop.xlane.xlu0 %3525
      %v3527 = vsel %vm945, %v3501, 0.0
      %3528 = vadd.xlane.f32.xlu0 %v3527
      %v3529 = vpop.xlane.xlu0 %3528
      %v3530 = vsel %vm945, %v3502, 0.0
      %3531 = vadd.xlane.f32.xlu0 %v3530
      %v3532 = vpop.xlane.xlu0 %3531
      %v3533 = vsel %vm945, %v3503, 0.0
      %3534 = vadd.xlane.f32.xlu0 %v3533
      %v3535 = vpop.xlane.xlu0 %3534
      %v3536 = vsel %vm945, %v3504, 0.0
      %3537 = vadd.xlane.f32.xlu0 %v3536
      %v3538 = vpop.xlane.xlu0 %3537
      %v3539 = vsel %vm945, %v3505, 0.0
      %3540 = vadd.xlane.f32.xlu0 %v3539
      %v3541 = vpop.xlane.xlu0 %3540
      %v3542 = vsel %vm945, %v3506, 0.0
      %3543 = vadd.xlane.f32.xlu0 %v3542
      %v3544 = vpop.xlane.xlu0 %3543
      %v3545 = vsel %vm945, %v3507, 0.0
      %3546 = vadd.xlane.f32.xlu0 %v3545
      %v3547 = vpop.xlane.xlu0 %3546
      %v3548 = vsel %vm945, %v3508, 0.0
      %3549 = vadd.xlane.f32.xlu0 %v3548
      %v3550 = vpop.xlane.xlu0 %3549
      %v3551 = vsel %vm945, %v3509, 0.0
      %3552 = vadd.xlane.f32.xlu0 %v3551
      %v3553 = vpop.xlane.xlu0 %3552
      %v3554 = vsel %vm945, %v3510, 0.0
      %3555 = vadd.xlane.f32.xlu0 %v3554
      %v3556 = vpop.xlane.xlu0 %3555
      %v3557 = vsel %vm945, %v3511, 0.0
      %3558 = vadd.xlane.f32.xlu0 %v3557
      %v3559 = vpop.xlane.xlu0 %3558
      %v3560 = vmul.f32 %v3514, %v2868
      %v3561 = vmul.f32 %v3517, %v2868
      %v3562 = vmul.f32 %v3520, %v2868
      %v3563 = vmul.f32 %v3523, %v2868
      %v3564 = vmul.f32 %v3526, %v2868
      %v3565 = vmul.f32 %v3529, %v2868
      %v3566 = vmul.f32 %v3532, %v2868
      %v3567 = vmul.f32 %v3535, %v2868
      %v3568 = vmul.f32 %v3538, %v2868
      %v3569 = vmul.f32 %v3541, %v2868
      %v3570 = vmul.f32 %v3544, %v2868
      %v3571 = vmul.f32 %v3547, %v2868
      %v3572 = vmul.f32 %v3550, %v2868
      %v3573 = vmul.f32 %v3553, %v2868
      %v3574 = vmul.f32 %v3556, %v2868
      %v3575 = vmul.f32 %v3559, %v2868
      %v3576 = vadd.f32 %v3560, 1e-05
      %v3577 = vadd.f32 %v3561, 1e-05
      %v3578 = vadd.f32 %v3562, 1e-05
      %v3579 = vadd.f32 %v3563, 1e-05
      %v3580 = vadd.f32 %v3564, 1e-05
      %v3581 = vadd.f32 %v3565, 1e-05
      %v3582 = vadd.f32 %v3566, 1e-05
      %v3583 = vadd.f32 %v3567, 1e-05
      %v3584 = vadd.f32 %v3568, 1e-05
      %v3585 = vadd.f32 %v3569, 1e-05
      %v3586 = vadd.f32 %v3570, 1e-05
      %v3587 = vadd.f32 %v3571, 1e-05
      %v3588 = vadd.f32 %v3572, 1e-05
      %v3589 = vadd.f32 %v3573, 1e-05
      %v3590 = vadd.f32 %v3574, 1e-05
      %v3591 = vadd.f32 %v3575, 1e-05
      %v3592 = vrsqrt.pop %v3576
      %v3593 = vrsqrt.pop %v3577
      %v3594 = vrsqrt.pop %v3578
      %v3595 = vrsqrt.pop %v3579
      %v3596 = vrsqrt.pop %v3580
      %v3597 = vrsqrt.pop %v3581
      %v3598 = vrsqrt.pop %v3582
      %v3599 = vrsqrt.pop %v3583
      %v3600 = vrsqrt.pop %v3584
      %v3601 = vrsqrt.pop %v3585
      %v3602 = vrsqrt.pop %v3586
      %v3603 = vrsqrt.pop %v3587
      %v3604 = vrsqrt.pop %v3588
      %v3605 = vrsqrt.pop %v3589
      %v3606 = vrsqrt.pop %v3590
      %v3607 = vrsqrt.pop %v3591
      %v3608 = vmul.f32 %v3480, %v3592
      %v3609 = vmul.f32 %v3481, %v3593
      %v3610 = vmul.f32 %v3482, %v3594
      %v3611 = vmul.f32 %v3483, %v3595
      %v3612 = vmul.f32 %v3484, %v3596
      %v3613 = vmul.f32 %v3485, %v3597
      %v3614 = vmul.f32 %v3486, %v3598
      %v3615 = vmul.f32 %v3487, %v3599
      %v3616 = vmul.f32 %v3488, %v3600
      %v3617 = vmul.f32 %v3489, %v3601
      %v3618 = vmul.f32 %v3490, %v3602
      %v3619 = vmul.f32 %v3491, %v3603
      %v3620 = vmul.f32 %v3492, %v3604
      %v3621 = vmul.f32 %v3493, %v3605
      %v3622 = vmul.f32 %v3494, %v3606
      %v3623 = vmul.f32 %v3495, %v3607
      %v3625 = vlaneseq
      %v3626 = vshrl.u32 %v3625, 7
      %v3627 = vsub.s32 0, %v3626
      %v3628 = vrot.slane %v3414, %v3627
      %v3630 = vmul.f32 %v3608, %v3628
      %v3631 = vmul.f32 %v3609, %v3628
      %v3632 = vmul.f32 %v3610, %v3628
      %v3633 = vmul.f32 %v3611, %v3628
      %v3634 = vmul.f32 %v3612, %v3628
      %v3635 = vmul.f32 %v3613, %v3628
      %v3636 = vmul.f32 %v3614, %v3628
      %v3637 = vmul.f32 %v3615, %v3628
      %v3638 = vmul.f32 %v3616, %v3628
      %v3639 = vmul.f32 %v3617, %v3628
      %v3640 = vmul.f32 %v3618, %v3628
      %v3641 = vmul.f32 %v3619, %v3628
      %v3642 = vmul.f32 %v3620, %v3628
      %v3643 = vmul.f32 %v3621, %v3628
      %v3644 = vmul.f32 %v3622, %v3628
      %v3645 = vmul.f32 %v3623, %v3628
      %v3647 = vlaneseq
      %v3648 = vshrl.u32 %v3647, 7
      %v3649 = vsub.s32 0, %v3648
      %v3650 = vrot.slane %v3415, %v3649
      %v3652 = vadd.f32 %v3630, %v3650
      %v3653 = vadd.f32 %v3631, %v3650
      %v3654 = vadd.f32 %v3632, %v3650
      %v3655 = vadd.f32 %v3633, %v3650
      %v3656 = vadd.f32 %v3634, %v3650
      %v3657 = vadd.f32 %v3635, %v3650
      %v3658 = vadd.f32 %v3636, %v3650
      %v3659 = vadd.f32 %v3637, %v3650
      %v3660 = vadd.f32 %v3638, %v3650
      %v3661 = vadd.f32 %v3639, %v3650
      %v3662 = vadd.f32 %v3640, %v3650
      %v3663 = vadd.f32 %v3641, %v3650
      %v3664 = vadd.f32 %v3642, %v3650
      %v3665 = vadd.f32 %v3643, %v3650
      %v3666 = vadd.f32 %v3644, %v3650
      %v3667 = vadd.f32 %v3645, %v3650
      %v3668 = vpack.c.bf16 %v3653, %v3652
      %v3669 = vpack.c.bf16 %v3655, %v3654
      %v3670 = vpack.c.bf16 %v3657, %v3656
      %v3671 = vpack.c.bf16 %v3659, %v3658
      %v3672 = vpack.c.bf16 %v3661, %v3660
      %v3673 = vpack.c.bf16 %v3663, %v3662
      %v3674 = vpack.c.bf16 %v3665, %v3664
      %v3675 = vpack.c.bf16 %v3667, %v3666
      %s3676 = scalar_lea.vmem %s11, 1
      %v3677 = vld [vmem:[%s3676] sm:$0x1]
      %v3679 = vlaneseq
      %v3680 = vshrl.u32 %v3679, 7
      %v3681 = vsub.s32 0, %v3680
      %v3682 = vrot.slane %v3677, %v3681
      %v3684 = vadd.f32 %v3652, %v3682
      %v3685 = vadd.f32 %v3653, %v3682
      %v3686 = vadd.f32 %v3654, %v3682
      %v3687 = vadd.f32 %v3655, %v3682
      %v3688 = vadd.f32 %v3656, %v3682
      %v3689 = vadd.f32 %v3657, %v3682
      %v3690 = vadd.f32 %v3658, %v3682
      %v3691 = vadd.f32 %v3659, %v3682
      %v3692 = vadd.f32 %v3660, %v3682
      %v3693 = vadd.f32 %v3661, %v3682
      %v3694 = vadd.f32 %v3662, %v3682
      %v3695 = vadd.f32 %v3663, %v3682
      %v3696 = vadd.f32 %v3664, %v3682
      %v3697 = vadd.f32 %v3665, %v3682
      %v3698 = vadd.f32 %v3666, %v3682
      %v3699 = vadd.f32 %v3667, %v3682
      %s3700 = scalar_lea.vmem %s4, 8
      %v3701 = vld [vmem:[%s3700] sm:$0xf]
      %s3702 = scalar_lea.vmem %s5, 2
      %v3703 = vld [vmem:[%s3702] sm:$0x1]
      %v3705 = vlaneseq
      %v3706 = vshrl.u32 %v3705, 7
      %v3707 = vsub.s32 0, %v3706
      %v3708 = vrot.slane %v3703, %v3707
      %v3711 = vsel %vm945, %v3668, 0
      %v3714 = vsel %vm945, %v3669, 0
      %v3717 = vsel %vm945, %v3670, 0
      %v3720 = vsel %vm945, %v3671, 0
      %v3723 = vsel %vm945, %v3672, 0
      %v3726 = vsel %vm945, %v3673, 0
      %v3729 = vsel %vm945, %v3674, 0
      %v3732 = vsel %vm945, %v3675, 0
      %v3735 = vsel %vm970, %v3701, 0
      %3737 = vmatprep.subr.bf16.mxu0 0
      %3738 = vmatpush1.bf16.msra.mxu0 0
      %3739 = vmatprep.subr.bf16.mxu0 0
      %3740 = vmatpush1.bf16.msra.mxu0 0
      %3741 = vmatprep.subr.bf16.mxu0 0
      %3742 = vmatpush1.bf16.msra.mxu0 0
      %3743 = vmatprep.subr.bf16.mxu0 0
      %3744 = vmatpush1.bf16.msra.mxu0 0
      %3745 = vmatprep.subr.bf16.mxu0 0
      %3746 = vmatpush1.bf16.msra.mxu0 0
      %3747 = vmatprep.subr.bf16.mxu0 0
      %3748 = vmatpush1.bf16.msra.mxu0 0
      %3749 = vmatprep.subr.bf16.mxu0 0
      %3750 = vmatpush1.bf16.msra.mxu0 0
      %3751 = vmatprep.subr.bf16.mxu0 0
      %3752 = vmatpush1.bf16.msra.mxu0 %v3735
      %3753 = vmatprep.subr.bf16.mxu0 0
      %3754 = vmatpush2.bf16.msra.mxu0 0
      %3755 = vmatprep.subr.bf16.mxu0 0
      %3756 = vmatpush2.bf16.msra.mxu0 0
      %3757 = vmatprep.subr.bf16.mxu0 0
      %3758 = vmatpush2.bf16.msra.mxu0 0
      %3759 = vmatprep.subr.bf16.mxu0 0
      %3760 = vmatpush2.bf16.msra.mxu0 0
      %3761 = vmatprep.subr.bf16.mxu0 0
      %3762 = vmatpush2.bf16.msra.mxu0 0
      %3763 = vmatprep.subr.bf16.mxu0 0
      %3764 = vmatpush2.bf16.msra.mxu0 0
      %3765 = vmatprep.subr.bf16.mxu0 0
      %3766 = vmatpush2.bf16.msra.mxu0 0
      %3767 = vmatprep.subr.bf16.mxu0 0
      %3768 = vmatpush2.bf16.msra.mxu0 0
      %3769 = vmatprep.mubr.bf16.mxu0 0
      %3770 = vmatmul.mubr.bf16.gmra.mxu0 %v3711
      %v3771 = vpop.f32.mrf.mxu0
      %v3772 = vadd.f32 %v3708, %v3771
      %v3773 = vpop.f32.mrf.mxu0
      %v3774 = vpop.f32.mrf.mxu0
      %v3775 = vadd.f32 %v3708, %v3774
      %v3776 = vpop.f32.mrf.mxu0
      %3777 = vmatprep.mubr.bf16.mxu0 0
      %3778 = vmatmul.mubr.bf16.gmra.mxu0 %v3714
      %v3779 = vpop.f32.mrf.mxu0
      %v3780 = vadd.f32 %v3708, %v3779
      %v3781 = vpop.f32.mrf.mxu0
      %v3782 = vpop.f32.mrf.mxu0
      %v3783 = vadd.f32 %v3708, %v3782
      %v3784 = vpop.f32.mrf.mxu0
      %3785 = vmatprep.mubr.bf16.mxu0 0
      %3786 = vmatmul.mubr.bf16.gmra.mxu0 %v3717
      %v3787 = vpop.f32.mrf.mxu0
      %v3788 = vadd.f32 %v3708, %v3787
      %v3789 = vpop.f32.mrf.mxu0
      %v3790 = vpop.f32.mrf.mxu0
      %v3791 = vadd.f32 %v3708, %v3790
      %v3792 = vpop.f32.mrf.mxu0
      %3793 = vmatprep.mubr.bf16.mxu0 0
      %3794 = vmatmul.mubr.bf16.gmra.mxu0 %v3720
      %v3795 = vpop.f32.mrf.mxu0
      %v3796 = vadd.f32 %v3708, %v3795
      %v3797 = vpop.f32.mrf.mxu0
      %v3798 = vpop.f32.mrf.mxu0
      %v3799 = vadd.f32 %v3708, %v3798
      %v3800 = vpop.f32.mrf.mxu0
      %3801 = vmatprep.mubr.bf16.mxu0 0
      %3802 = vmatmul.mubr.bf16.gmra.mxu0 %v3723
      %v3803 = vpop.f32.mrf.mxu0
      %v3804 = vadd.f32 %v3708, %v3803
      %v3805 = vpop.f32.mrf.mxu0
      %v3806 = vpop.f32.mrf.mxu0
      %v3807 = vadd.f32 %v3708, %v3806
      %v3808 = vpop.f32.mrf.mxu0
      %3809 = vmatprep.mubr.bf16.mxu0 0
      %3810 = vmatmul.mubr.bf16.gmra.mxu0 %v3726
      %v3811 = vpop.f32.mrf.mxu0
      %v3812 = vadd.f32 %v3708, %v3811
      %v3813 = vpop.f32.mrf.mxu0
      %v3814 = vpop.f32.mrf.mxu0
      %v3815 = vadd.f32 %v3708, %v3814
      %v3816 = vpop.f32.mrf.mxu0
      %3817 = vmatprep.mubr.bf16.mxu0 0
      %3818 = vmatmul.mubr.bf16.gmra.mxu0 %v3729
      %v3819 = vpop.f32.mrf.mxu0
      %v3820 = vadd.f32 %v3708, %v3819
      %v3821 = vpop.f32.mrf.mxu0
      %v3822 = vpop.f32.mrf.mxu0
      %v3823 = vadd.f32 %v3708, %v3822
      %v3824 = vpop.f32.mrf.mxu0
      %3825 = vmatprep.mubr.bf16.mxu0 0
      %3826 = vmatmul.mubr.bf16.gmra.mxu0 %v3732
      %v3827 = vpop.f32.mrf.mxu0
      %v3828 = vadd.f32 %v3708, %v3827
      %v3829 = vpop.f32.mrf.mxu0
      %v3830 = vpop.f32.mrf.mxu0
      %v3831 = vadd.f32 %v3708, %v3830
      %v3832 = vpop.f32.mrf.mxu0
      %3833 = vdwg.mxu0
      %s3834 = scalar_lea.vmem %s6, 8
      %v3835 = vld [vmem:[%s3834] sm:$0xf]
      %s3836 = scalar_lea.vmem %s7, 2
      %v3837 = vld [vmem:[%s3836] sm:$0x1]
      %v3839 = vlaneseq
      %v3840 = vshrl.u32 %v3839, 7
      %v3841 = vsub.s32 0, %v3840
      %v3842 = vrot.slane %v3837, %v3841
      %v3845 = vsel %vm970, %v3835, 0
      %3847 = vmatprep.subr.bf16.mxu0 0
      %3848 = vmatpush1.bf16.msra.mxu0 0
      %3849 = vmatprep.subr.bf16.mxu0 0
      %3850 = vmatpush1.bf16.msra.mxu0 0
      %3851 = vmatprep.subr.bf16.mxu0 0
      %3852 = vmatpush1.bf16.msra.mxu0 0
      %3853 = vmatprep.subr.bf16.mxu0 0
      %3854 = vmatpush1.bf16.msra.mxu0 0
      %3855 = vmatprep.subr.bf16.mxu0 0
      %3856 = vmatpush1.bf16.msra.mxu0 0
      %3857 = vmatprep.subr.bf16.mxu0 0
      %3858 = vmatpush1.bf16.msra.mxu0 0
      %3859 = vmatprep.subr.bf16.mxu0 0
      %3860 = vmatpush1.bf16.msra.mxu0 0
      %3861 = vmatprep.subr.bf16.mxu0 0
      %3862 = vmatpush1.bf16.msra.mxu0 %v3845
      %3863 = vmatprep.subr.bf16.mxu0 0
      %3864 = vmatpush2.bf16.msra.mxu0 0
      %3865 = vmatprep.subr.bf16.mxu0 0
      %3866 = vmatpush2.bf16.msra.mxu0 0
      %3867 = vmatprep.subr.bf16.mxu0 0
      %3868 = vmatpush2.bf16.msra.mxu0 0
      %3869 = vmatprep.subr.bf16.mxu0 0
      %3870 = vmatpush2.bf16.msra.mxu0 0
      %3871 = vmatprep.subr.bf16.mxu0 0
      %3872 = vmatpush2.bf16.msra.mxu0 0
      %3873 = vmatprep.subr.bf16.mxu0 0
      %3874 = vmatpush2.bf16.msra.mxu0 0
      %3875 = vmatprep.subr.bf16.mxu0 0
      %3876 = vmatpush2.bf16.msra.mxu0 0
      %3877 = vmatprep.subr.bf16.mxu0 0
      %3878 = vmatpush2.bf16.msra.mxu0 0
      %3879 = vmatprep.mubr.bf16.mxu0 0
      %3880 = vmatmul.mubr.bf16.gmra.mxu0 %v3711
      %v3881 = vpop.f32.mrf.mxu0
      %v3882 = vadd.f32 %v3842, %v3881
      %v3883 = vpop.f32.mrf.mxu0
      %v3884 = vpop.f32.mrf.mxu0
      %v3885 = vadd.f32 %v3842, %v3884
      %v3886 = vpop.f32.mrf.mxu0
      %3887 = vmatprep.mubr.bf16.mxu0 0
      %3888 = vmatmul.mubr.bf16.gmra.mxu0 %v3714
      %v3889 = vpop.f32.mrf.mxu0
      %v3890 = vadd.f32 %v3842, %v3889
      %v3891 = vpop.f32.mrf.mxu0
      %v3892 = vpop.f32.mrf.mxu0
      %v3893 = vadd.f32 %v3842, %v3892
      %v3894 = vpop.f32.mrf.mxu0
      %3895 = vmatprep.mubr.bf16.mxu0 0
      %3896 = vmatmul.mubr.bf16.gmra.mxu0 %v3717
      %v3897 = vpop.f32.mrf.mxu0
      %v3898 = vadd.f32 %v3842, %v3897
      %v3899 = vpop.f32.mrf.mxu0
      %v3900 = vpop.f32.mrf.mxu0
      %v3901 = vadd.f32 %v3842, %v3900
      %v3902 = vpop.f32.mrf.mxu0
      %3903 = vmatprep.mubr.bf16.mxu0 0
      %3904 = vmatmul.mubr.bf16.gmra.mxu0 %v3720
      %v3905 = vpop.f32.mrf.mxu0
      %v3906 = vadd.f32 %v3842, %v3905
      %v3907 = vpop.f32.mrf.mxu0
      %v3908 = vpop.f32.mrf.mxu0
      %v3909 = vadd.f32 %v3842, %v3908
      %v3910 = vpop.f32.mrf.mxu0
      %3911 = vmatprep.mubr.bf16.mxu0 0
      %3912 = vmatmul.mubr.bf16.gmra.mxu0 %v3723
      %v3913 = vpop.f32.mrf.mxu0
      %v3914 = vadd.f32 %v3842, %v3913
      %v3915 = vpop.f32.mrf.mxu0
      %v3916 = vpop.f32.mrf.mxu0
      %v3917 = vadd.f32 %v3842, %v3916
      %v3918 = vpop.f32.mrf.mxu0
      %3919 = vmatprep.mubr.bf16.mxu0 0
      %3920 = vmatmul.mubr.bf16.gmra.mxu0 %v3726
      %v3921 = vpop.f32.mrf.mxu0
      %v3922 = vadd.f32 %v3842, %v3921
      %v3923 = vpop.f32.mrf.mxu0
      %v3924 = vpop.f32.mrf.mxu0
      %v3925 = vadd.f32 %v3842, %v3924
      %v3926 = vpop.f32.mrf.mxu0
      %3927 = vmatprep.mubr.bf16.mxu0 0
      %3928 = vmatmul.mubr.bf16.gmra.mxu0 %v3729
      %v3929 = vpop.f32.mrf.mxu0
      %v3930 = vadd.f32 %v3842, %v3929
      %v3931 = vpop.f32.mrf.mxu0
      %v3932 = vpop.f32.mrf.mxu0
      %v3933 = vadd.f32 %v3842, %v3932
      %v3934 = vpop.f32.mrf.mxu0
      %3935 = vmatprep.mubr.bf16.mxu0 0
      %3936 = vmatmul.mubr.bf16.gmra.mxu0 %v3732
      %v3937 = vpop.f32.mrf.mxu0
      %v3938 = vadd.f32 %v3842, %v3937
      %v3939 = vpop.f32.mrf.mxu0
      %v3940 = vpop.f32.mrf.mxu0
      %v3941 = vadd.f32 %v3842, %v3940
      %v3942 = vpop.f32.mrf.mxu0
      %3943 = vdwg.mxu0
      %s3944 = scalar_lea.vmem %s8, 8
      %v3945 = vld [vmem:[%s3944] sm:$0xf]
      %s3946 = scalar_lea.vmem %s9, 2
      %v3947 = vld [vmem:[%s3946] sm:$0x1]
      %v3949 = vlaneseq
      %v3950 = vshrl.u32 %v3949, 7
      %v3951 = vsub.s32 0, %v3950
      %v3952 = vrot.slane %v3947, %v3951
      %v3955 = vsel %vm970, %v3945, 0
      %3957 = vmatprep.subr.bf16.mxu0 0
      %3958 = vmatpush1.bf16.msra.mxu0 0
      %3959 = vmatprep.subr.bf16.mxu0 0
      %3960 = vmatpush1.bf16.msra.mxu0 0
      %3961 = vmatprep.subr.bf16.mxu0 0
      %3962 = vmatpush1.bf16.msra.mxu0 0
      %3963 = vmatprep.subr.bf16.mxu0 0
      %3964 = vmatpush1.bf16.msra.mxu0 0
      %3965 = vmatprep.subr.bf16.mxu0 0
      %3966 = vmatpush1.bf16.msra.mxu0 0
      %3967 = vmatprep.subr.bf16.mxu0 0
      %3968 = vmatpush1.bf16.msra.mxu0 0
      %3969 = vmatprep.subr.bf16.mxu0 0
      %3970 = vmatpush1.bf16.msra.mxu0 0
      %3971 = vmatprep.subr.bf16.mxu0 0
      %3972 = vmatpush1.bf16.msra.mxu0 %v3955
      %3973 = vmatprep.subr.bf16.mxu0 0
      %3974 = vmatpush2.bf16.msra.mxu0 0
      %3975 = vmatprep.subr.bf16.mxu0 0
      %3976 = vmatpush2.bf16.msra.mxu0 0
      %3977 = vmatprep.subr.bf16.mxu0 0
      %3978 = vmatpush2.bf16.msra.mxu0 0
      %3979 = vmatprep.subr.bf16.mxu0 0
      %3980 = vmatpush2.bf16.msra.mxu0 0
      %3981 = vmatprep.subr.bf16.mxu0 0
      %3982 = vmatpush2.bf16.msra.mxu0 0
      %3983 = vmatprep.subr.bf16.mxu0 0
      %3984 = vmatpush2.bf16.msra.mxu0 0
      %3985 = vmatprep.subr.bf16.mxu0 0
      %3986 = vmatpush2.bf16.msra.mxu0 0
      %3987 = vmatprep.subr.bf16.mxu0 0
      %3988 = vmatpush2.bf16.msra.mxu0 0
      %3989 = vmatprep.mubr.bf16.mxu0 0
      %3990 = vmatmul.mubr.bf16.gmra.mxu0 %v3711
      %v3991 = vpop.f32.mrf.mxu0
      %v3992 = vadd.f32 %v3952, %v3991
      %v3993 = vpop.f32.mrf.mxu0
      %v3994 = vpop.f32.mrf.mxu0
      %v3995 = vadd.f32 %v3952, %v3994
      %v3996 = vpop.f32.mrf.mxu0
      %3997 = vmatprep.mubr.bf16.mxu0 0
      %3998 = vmatmul.mubr.bf16.gmra.mxu0 %v3714
      %v3999 = vpop.f32.mrf.mxu0
      %v4000 = vadd.f32 %v3952, %v3999
      %v4001 = vpop.f32.mrf.mxu0
      %v4002 = vpop.f32.mrf.mxu0
      %v4003 = vadd.f32 %v3952, %v4002
      %v4004 = vpop.f32.mrf.mxu0
      %4005 = vmatprep.mubr.bf16.mxu0 0
      %4006 = vmatmul.mubr.bf16.gmra.mxu0 %v3717
      %v4007 = vpop.f32.mrf.mxu0
      %v4008 = vadd.f32 %v3952, %v4007
      %v4009 = vpop.f32.mrf.mxu0
      %v4010 = vpop.f32.mrf.mxu0
      %v4011 = vadd.f32 %v3952, %v4010
      %v4012 = vpop.f32.mrf.mxu0
      %4013 = vmatprep.mubr.bf16.mxu0 0
      %4014 = vmatmul.mubr.bf16.gmra.mxu0 %v3720
      %v4015 = vpop.f32.mrf.mxu0
      %v4016 = vadd.f32 %v3952, %v4015
      %v4017 = vpop.f32.mrf.mxu0
      %v4018 = vpop.f32.mrf.mxu0
      %v4019 = vadd.f32 %v3952, %v4018
      %v4020 = vpop.f32.mrf.mxu0
      %4021 = vmatprep.mubr.bf16.mxu0 0
      %4022 = vmatmul.mubr.bf16.gmra.mxu0 %v3723
      %v4023 = vpop.f32.mrf.mxu0
      %v4024 = vadd.f32 %v3952, %v4023
      %v4025 = vpop.f32.mrf.mxu0
      %v4026 = vpop.f32.mrf.mxu0
      %v4027 = vadd.f32 %v3952, %v4026
      %v4028 = vpop.f32.mrf.mxu0
      %4029 = vmatprep.mubr.bf16.mxu0 0
      %4030 = vmatmul.mubr.bf16.gmra.mxu0 %v3726
      %v4031 = vpop.f32.mrf.mxu0
      %v4032 = vadd.f32 %v3952, %v4031
      %v4033 = vpop.f32.mrf.mxu0
      %v4034 = vpop.f32.mrf.mxu0
      %v4035 = vadd.f32 %v3952, %v4034
      %v4036 = vpop.f32.mrf.mxu0
      %4037 = vmatprep.mubr.bf16.mxu0 0
      %4038 = vmatmul.mubr.bf16.gmra.mxu0 %v3729
      %v4039 = vpop.f32.mrf.mxu0
      %v4040 = vadd.f32 %v3952, %v4039
      %v4041 = vpop.f32.mrf.mxu0
      %v4042 = vpop.f32.mrf.mxu0
      %v4043 = vadd.f32 %v3952, %v4042
      %v4044 = vpop.f32.mrf.mxu0
      %4045 = vmatprep.mubr.bf16.mxu0 0
      %4046 = vmatmul.mubr.bf16.gmra.mxu0 %v3732
      %v4047 = vpop.f32.mrf.mxu0
      %v4048 = vadd.f32 %v3952, %v4047
      %v4049 = vpop.f32.mrf.mxu0
      %v4050 = vpop.f32.mrf.mxu0
      %v4051 = vadd.f32 %v3952, %v4050
      %v4052 = vpop.f32.mrf.mxu0
      %4053 = vdwg.mxu0
      %v4054 = vpack.c.bf16 %v3775, %v3772
      %v4055 = vpack.c.bf16 %v3783, %v3780
      %v4056 = vpack.c.bf16 %v3791, %v3788
      %v4057 = vpack.c.bf16 %v3799, %v3796
      %v4058 = vpack.c.bf16 %v3807, %v3804
      %v4059 = vpack.c.bf16 %v3815, %v3812
      %v4060 = vpack.c.bf16 %v3823, %v3820
      %v4061 = vpack.c.bf16 %v3831, %v3828
      %v4062 = vpack.c.bf16 %v3885, %v3882
      %v4063 = vpack.c.bf16 %v3893, %v3890
      %v4064 = vpack.c.bf16 %v3901, %v3898
      %v4065 = vpack.c.bf16 %v3909, %v3906
      %v4066 = vpack.c.bf16 %v3917, %v3914
      %v4067 = vpack.c.bf16 %v3925, %v3922
      %v4068 = vpack.c.bf16 %v3933, %v3930
      %v4069 = vpack.c.bf16 %v3941, %v3938
      %v4071 = vsel %vm1303, %v4054, 0
      %v4074 = vsel %vm1303, %v4055, 0
      %v4077 = vsel %vm1303, %v4056, 0
      %v4080 = vsel %vm1303, %v4057, 0
      %v4083 = vsel %vm1303, %v4058, 0
      %v4086 = vsel %vm1303, %v4059, 0
      %v4089 = vsel %vm1303, %v4060, 0
      %v4092 = vsel %vm1303, %v4061, 0
      %v4095 = vsel %vm1303, %v4062, 0
      %v4098 = vsel %vm1303, %v4063, 0
      %v4101 = vsel %vm1303, %v4064, 0
      %v4104 = vsel %vm1303, %v4065, 0
      %v4107 = vsel %vm1303, %v4066, 0
      %v4110 = vsel %vm1303, %v4067, 0
      %v4113 = vsel %vm1303, %v4068, 0
      %v4116 = vsel %vm1303, %v4069, 0
      %4118 = vmatprep.subr.bf16.mxu0 0
      %4119 = vmatpush1.bf16.xpose.msra.mxu0 %v4116
      %4120 = vmatprep.subr.bf16.mxu0 0
      %4121 = vmatpush1.bf16.xpose.msra.mxu0 %v4113
      %4122 = vmatprep.subr.bf16.mxu0 0
      %4123 = vmatpush1.bf16.xpose.msra.mxu0 %v4110
      %4124 = vmatprep.subr.bf16.mxu0 0
      %4125 = vmatpush1.bf16.xpose.msra.mxu0 %v4107
      %4126 = vmatprep.subr.bf16.mxu0 0
      %4127 = vmatpush1.bf16.xpose.msra.mxu0 %v4104
      %4128 = vmatprep.subr.bf16.mxu0 0
      %4129 = vmatpush1.bf16.xpose.msra.mxu0 %v4101
      %4130 = vmatprep.subr.bf16.mxu0 0
      %4131 = vmatpush1.bf16.xpose.msra.mxu0 %v4098
      %4132 = vmatprep.subr.bf16.mxu0 0
      %4133 = vmatpush1.bf16.xpose.msra.mxu0 %v4095
      %4134 = vmatprep.subr.bf16.mxu0 0
      %4135 = vmatpush2.bf16.xpose.msra.mxu0 0
      %4136 = vmatprep.subr.bf16.mxu0 0
      %4137 = vmatpush2.bf16.xpose.msra.mxu0 0
      %4138 = vmatprep.subr.bf16.mxu0 0
      %4139 = vmatpush2.bf16.xpose.msra.mxu0 0
      %4140 = vmatprep.subr.bf16.mxu0 0
      %4141 = vmatpush2.bf16.xpose.msra.mxu0 0
      %4142 = vmatprep.subr.bf16.mxu0 0
      %4143 = vmatpush2.bf16.xpose.msra.mxu0 0
      %4144 = vmatprep.subr.bf16.mxu0 0
      %4145 = vmatpush2.bf16.xpose.msra.mxu0 0
      %4146 = vmatprep.subr.bf16.mxu0 0
      %4147 = vmatpush2.bf16.xpose.msra.mxu0 0
      %4148 = vmatprep.subr.bf16.mxu0 0
      %4149 = vmatpush2.bf16.xpose.msra.mxu0 0
      %4150 = vmatprep.mubr.bf16.mxu0 0
      %4151 = vmatmul.mubr.bf16.gmra.mxu0 %v4071
      %v4152 = vpop.f32.mrf.mxu0
      %v4153 = vadd.f32 0.0, %v4152
      %v4154 = vpop.f32.mrf.mxu0
      %v4155 = vpop.f32.mrf.mxu0
      %v4156 = vadd.f32 0.0, %v4155
      %v4157 = vpop.f32.mrf.mxu0
      %4158 = vmatprep.mubr.bf16.mxu0 0
      %4159 = vmatmul.mubr.bf16.gmra.mxu0 %v4074
      %v4160 = vpop.f32.mrf.mxu0
      %v4161 = vadd.f32 0.0, %v4160
      %v4162 = vpop.f32.mrf.mxu0
      %v4163 = vpop.f32.mrf.mxu0
      %v4164 = vadd.f32 0.0, %v4163
      %v4165 = vpop.f32.mrf.mxu0
      %4166 = vmatprep.mubr.bf16.mxu0 0
      %4167 = vmatmul.mubr.bf16.gmra.mxu0 %v4077
      %v4168 = vpop.f32.mrf.mxu0
      %v4169 = vadd.f32 0.0, %v4168
      %v4170 = vpop.f32.mrf.mxu0
      %v4171 = vpop.f32.mrf.mxu0
      %v4172 = vadd.f32 0.0, %v4171
      %v4173 = vpop.f32.mrf.mxu0
      %4174 = vmatprep.mubr.bf16.mxu0 0
      %4175 = vmatmul.mubr.bf16.gmra.mxu0 %v4080
      %v4176 = vpop.f32.mrf.mxu0
      %v4177 = vadd.f32 0.0, %v4176
      %v4178 = vpop.f32.mrf.mxu0
      %v4179 = vpop.f32.mrf.mxu0
      %v4180 = vadd.f32 0.0, %v4179
      %v4181 = vpop.f32.mrf.mxu0
      %4182 = vmatprep.mubr.bf16.mxu0 0
      %4183 = vmatmul.mubr.bf16.gmra.mxu0 %v4083
      %v4184 = vpop.f32.mrf.mxu0
      %v4185 = vadd.f32 0.0, %v4184
      %v4186 = vpop.f32.mrf.mxu0
      %v4187 = vpop.f32.mrf.mxu0
      %v4188 = vadd.f32 0.0, %v4187
      %v4189 = vpop.f32.mrf.mxu0
      %4190 = vmatprep.mubr.bf16.mxu0 0
      %4191 = vmatmul.mubr.bf16.gmra.mxu0 %v4086
      %v4192 = vpop.f32.mrf.mxu0
      %v4193 = vadd.f32 0.0, %v4192
      %v4194 = vpop.f32.mrf.mxu0
      %v4195 = vpop.f32.mrf.mxu0
      %v4196 = vadd.f32 0.0, %v4195
      %v4197 = vpop.f32.mrf.mxu0
      %4198 = vmatprep.mubr.bf16.mxu0 0
      %4199 = vmatmul.mubr.bf16.gmra.mxu0 %v4089
      %v4200 = vpop.f32.mrf.mxu0
      %v4201 = vadd.f32 0.0, %v4200
      %v4202 = vpop.f32.mrf.mxu0
      %v4203 = vpop.f32.mrf.mxu0
      %v4204 = vadd.f32 0.0, %v4203
      %v4205 = vpop.f32.mrf.mxu0
      %4206 = vmatprep.mubr.bf16.mxu0 0
      %4207 = vmatmul.mubr.bf16.gmra.mxu0 %v4092
      %v4208 = vpop.f32.mrf.mxu0
      %v4209 = vadd.f32 0.0, %v4208
      %v4210 = vpop.f32.mrf.mxu0
      %v4211 = vpop.f32.mrf.mxu0
      %v4212 = vadd.f32 0.0, %v4211
      %v4213 = vpop.f32.mrf.mxu0
      %4214 = vdwg.mxu0
      %v4215 = vmul.f32 %v4153, 0.5
      %v4216 = vmul.f32 %v4156, 0.5
      %v4217 = vmul.f32 %v4161, 0.5
      %v4218 = vmul.f32 %v4164, 0.5
      %v4219 = vmul.f32 %v4169, 0.5
      %v4220 = vmul.f32 %v4172, 0.5
      %v4221 = vmul.f32 %v4177, 0.5
      %v4222 = vmul.f32 %v4180, 0.5
      %v4223 = vmul.f32 %v4185, 0.5
      %v4224 = vmul.f32 %v4188, 0.5
      %v4225 = vmul.f32 %v4193, 0.5
      %v4226 = vmul.f32 %v4196, 0.5
      %v4227 = vmul.f32 %v4201, 0.5
      %v4228 = vmul.f32 %v4204, 0.5
      %v4229 = vmul.f32 %v4209, 0.5
      %v4230 = vmul.f32 %v4212, 0.5
      %v4231 = vadd.f32 %v4215, %v704
      %v4232 = vadd.f32 %v4216, %v705
      %v4233 = vadd.f32 %v4217, %v706
      %v4234 = vadd.f32 %v4218, %v707
      %v4235 = vadd.f32 %v4219, %v708
      %v4236 = vadd.f32 %v4220, %v709
      %v4237 = vadd.f32 %v4221, %v710
      %v4238 = vadd.f32 %v4222, %v711
      %v4239 = vadd.f32 %v4223, %v712
      %v4240 = vadd.f32 %v4224, %v713
      %v4241 = vadd.f32 %v4225, %v714
      %v4242 = vadd.f32 %v4226, %v715
      %v4243 = vadd.f32 %v4227, %v716
      %v4244 = vadd.f32 %v4228, %v717
      %v4245 = vadd.f32 %v4229, %v718
      %v4246 = vadd.f32 %v4230, %v719
      %4247 = vmax.xlane.f32.xlu0 %v4231
      %v4248 = vpop.xlane.xlu0 %4247
      %4249 = vmax.xlane.f32.xlu0 %v4232
      %v4250 = vpop.xlane.xlu0 %4249
      %4251 = vmax.xlane.f32.xlu0 %v4233
      %v4252 = vpop.xlane.xlu0 %4251
      %4253 = vmax.xlane.f32.xlu0 %v4234
      %v4254 = vpop.xlane.xlu0 %4253
      %4255 = vmax.xlane.f32.xlu0 %v4235
      %v4256 = vpop.xlane.xlu0 %4255
      %4257 = vmax.xlane.f32.xlu0 %v4236
      %v4258 = vpop.xlane.xlu0 %4257
      %4259 = vmax.xlane.f32.xlu0 %v4237
      %v4260 = vpop.xlane.xlu0 %4259
      %4261 = vmax.xlane.f32.xlu0 %v4238
      %v4262 = vpop.xlane.xlu0 %4261
      %4263 = vmax.xlane.f32.xlu0 %v4239
      %v4264 = vpop.xlane.xlu0 %4263
      %4265 = vmax.xlane.f32.xlu0 %v4240
      %v4266 = vpop.xlane.xlu0 %4265
      %4267 = vmax.xlane.f32.xlu0 %v4241
      %v4268 = vpop.xlane.xlu0 %4267
      %4269 = vmax.xlane.f32.xlu0 %v4242
      %v4270 = vpop.xlane.xlu0 %4269
      %4271 = vmax.xlane.f32.xlu0 %v4243
      %v4272 = vpop.xlane.xlu0 %4271
      %4273 = vmax.xlane.f32.xlu0 %v4244
      %v4274 = vpop.xlane.xlu0 %4273
      %4275 = vmax.xlane.f32.xlu0 %v4245
      %v4276 = vpop.xlane.xlu0 %4275
      %4277 = vmax.xlane.f32.xlu0 %v4246
      %v4278 = vpop.xlane.xlu0 %4277
      %v4279 = vsub.f32 %v4231, %v4248
      %v4280 = vsub.f32 %v4232, %v4250
      %v4281 = vsub.f32 %v4233, %v4252
      %v4282 = vsub.f32 %v4234, %v4254
      %v4283 = vsub.f32 %v4235, %v4256
      %v4284 = vsub.f32 %v4236, %v4258
      %v4285 = vsub.f32 %v4237, %v4260
      %v4286 = vsub.f32 %v4238, %v4262
      %v4287 = vsub.f32 %v4239, %v4264
      %v4288 = vsub.f32 %v4240, %v4266
      %v4289 = vsub.f32 %v4241, %v4268
      %v4290 = vsub.f32 %v4242, %v4270
      %v4291 = vsub.f32 %v4243, %v4272
      %v4292 = vsub.f32 %v4244, %v4274
      %v4293 = vsub.f32 %v4245, %v4276
      %v4294 = vsub.f32 %v4246, %v4278
      %v4295 = vmul.f32 %v4279, 1.442695
      %v4296 = vpow.pop %v4295
      %v4297 = vmul.f32 %v4280, 1.442695
      %v4298 = vpow.pop %v4297
      %v4299 = vmul.f32 %v4281, 1.442695
      %v4300 = vpow.pop %v4299
      %v4301 = vmul.f32 %v4282, 1.442695
      %v4302 = vpow.pop %v4301
      %v4303 = vmul.f32 %v4283, 1.442695
      %v4304 = vpow.pop %v4303
      %v4305 = vmul.f32 %v4284, 1.442695
      %v4306 = vpow.pop %v4305
      %v4307 = vmul.f32 %v4285, 1.442695
      %v4308 = vpow.pop %v4307
      %v4309 = vmul.f32 %v4286, 1.442695
      %v4310 = vpow.pop %v4309
      %v4311 = vmul.f32 %v4287, 1.442695
      %v4312 = vpow.pop %v4311
      %v4313 = vmul.f32 %v4288, 1.442695
      %v4314 = vpow.pop %v4313
      %v4315 = vmul.f32 %v4289, 1.442695
      %v4316 = vpow.pop %v4315
      %v4317 = vmul.f32 %v4290, 1.442695
      %v4318 = vpow.pop %v4317
      %v4319 = vmul.f32 %v4291, 1.442695
      %v4320 = vpow.pop %v4319
      %v4321 = vmul.f32 %v4292, 1.442695
      %v4322 = vpow.pop %v4321
      %v4323 = vmul.f32 %v4293, 1.442695
      %v4324 = vpow.pop %v4323
      %v4325 = vmul.f32 %v4294, 1.442695
      %v4326 = vpow.pop %v4325
      %4327 = vadd.xlane.f32.xlu0 %v4296
      %v4328 = vpop.xlane.xlu0 %4327
      %4329 = vadd.xlane.f32.xlu0 %v4298
      %v4330 = vpop.xlane.xlu0 %4329
      %4331 = vadd.xlane.f32.xlu0 %v4300
      %v4332 = vpop.xlane.xlu0 %4331
      %4333 = vadd.xlane.f32.xlu0 %v4302
      %v4334 = vpop.xlane.xlu0 %4333
      %4335 = vadd.xlane.f32.xlu0 %v4304
      %v4336 = vpop.xlane.xlu0 %4335
      %4337 = vadd.xlane.f32.xlu0 %v4306
      %v4338 = vpop.xlane.xlu0 %4337
      %4339 = vadd.xlane.f32.xlu0 %v4308
      %v4340 = vpop.xlane.xlu0 %4339
      %4341 = vadd.xlane.f32.xlu0 %v4310
      %v4342 = vpop.xlane.xlu0 %4341
      %4343 = vadd.xlane.f32.xlu0 %v4312
      %v4344 = vpop.xlane.xlu0 %4343
      %4345 = vadd.xlane.f32.xlu0 %v4314
      %v4346 = vpop.xlane.xlu0 %4345
      %4347 = vadd.xlane.f32.xlu0 %v4316
      %v4348 = vpop.xlane.xlu0 %4347
      %4349 = vadd.xlane.f32.xlu0 %v4318
      %v4350 = vpop.xlane.xlu0 %4349
      %4351 = vadd.xlane.f32.xlu0 %v4320
      %v4352 = vpop.xlane.xlu0 %4351
      %4353 = vadd.xlane.f32.xlu0 %v4322
      %v4354 = vpop.xlane.xlu0 %4353
      %4355 = vadd.xlane.f32.xlu0 %v4324
      %v4356 = vpop.xlane.xlu0 %4355
      %4357 = vadd.xlane.f32.xlu0 %v4326
      %v4358 = vpop.xlane.xlu0 %4357
      %v4359 = vrcp.pop %v4328
      %v4360 = vmul.f32 %v4296, %v4359
      %v4361 = vrcp.pop %v4330
      %v4362 = vmul.f32 %v4298, %v4361
      %v4363 = vrcp.pop %v4332
      %v4364 = vmul.f32 %v4300, %v4363
      %v4365 = vrcp.pop %v4334
      %v4366 = vmul.f32 %v4302, %v4365
      %v4367 = vrcp.pop %v4336
      %v4368 = vmul.f32 %v4304, %v4367
      %v4369 = vrcp.pop %v4338
      %v4370 = vmul.f32 %v4306, %v4369
      %v4371 = vrcp.pop %v4340
      %v4372 = vmul.f32 %v4308, %v4371
      %v4373 = vrcp.pop %v4342
      %v4374 = vmul.f32 %v4310, %v4373
      %v4375 = vrcp.pop %v4344
      %v4376 = vmul.f32 %v4312, %v4375
      %v4377 = vrcp.pop %v4346
      %v4378 = vmul.f32 %v4314, %v4377
      %v4379 = vrcp.pop %v4348
      %v4380 = vmul.f32 %v4316, %v4379
      %v4381 = vrcp.pop %v4350
      %v4382 = vmul.f32 %v4318, %v4381
      %v4383 = vrcp.pop %v4352
      %v4384 = vmul.f32 %v4320, %v4383
      %v4385 = vrcp.pop %v4354
      %v4386 = vmul.f32 %v4322, %v4385
      %v4387 = vrcp.pop %v4356
      %v4388 = vmul.f32 %v4324, %v4387
      %v4389 = vrcp.pop %v4358
      %v4390 = vmul.f32 %v4326, %v4389
      %v4391 = vpack.c.bf16 %v4362, %v4360
      %v4392 = vpack.c.bf16 %v4366, %v4364
      %v4393 = vpack.c.bf16 %v4370, %v4368
      %v4394 = vpack.c.bf16 %v4374, %v4372
      %v4395 = vpack.c.bf16 %v4378, %v4376
      %v4396 = vpack.c.bf16 %v4382, %v4380
      %v4397 = vpack.c.bf16 %v4386, %v4384
      %v4398 = vpack.c.bf16 %v4390, %v4388
      %v4399 = vpack.c.bf16 %v3995, %v3992
      %v4400 = vpack.c.bf16 %v4003, %v4000
      %v4401 = vpack.c.bf16 %v4011, %v4008
      %v4402 = vpack.c.bf16 %v4019, %v4016
      %v4403 = vpack.c.bf16 %v4027, %v4024
      %v4404 = vpack.c.bf16 %v4035, %v4032
      %v4405 = vpack.c.bf16 %v4043, %v4040
      %v4406 = vpack.c.bf16 %v4051, %v4048
      %4407 = vmatprep.subr.bf16.mxu0 0
      %4408 = vmatpush1.bf16.msra.mxu0 %v4406
      %4409 = vmatprep.subr.bf16.mxu0 0
      %4410 = vmatpush1.bf16.msra.mxu0 %v4405
      %4411 = vmatprep.subr.bf16.mxu0 0
      %4412 = vmatpush1.bf16.msra.mxu0 %v4404
      %4413 = vmatprep.subr.bf16.mxu0 0
      %4414 = vmatpush1.bf16.msra.mxu0 %v4403
      %4415 = vmatprep.subr.bf16.mxu0 0
      %4416 = vmatpush1.bf16.msra.mxu0 %v4402
      %4417 = vmatprep.subr.bf16.mxu0 0
      %4418 = vmatpush1.bf16.msra.mxu0 %v4401
      %4419 = vmatprep.subr.bf16.mxu0 0
      %4420 = vmatpush1.bf16.msra.mxu0 %v4400
      %4421 = vmatprep.subr.bf16.mxu0 0
      %4422 = vmatpush1.bf16.msra.mxu0 %v4399
      %4423 = vmatprep.subr.bf16.mxu0 0
      %4424 = vmatpush2.bf16.msra.mxu0 0
      %4425 = vmatprep.subr.bf16.mxu0 0
      %4426 = vmatpush2.bf16.msra.mxu0 0
      %4427 = vmatprep.subr.bf16.mxu0 0
      %4428 = vmatpush2.bf16.msra.mxu0 0
      %4429 = vmatprep.subr.bf16.mxu0 0
      %4430 = vmatpush2.bf16.msra.mxu0 0
      %4431 = vmatprep.subr.bf16.mxu0 0
      %4432 = vmatpush2.bf16.msra.mxu0 0
      %4433 = vmatprep.subr.bf16.mxu0 0
      %4434 = vmatpush2.bf16.msra.mxu0 0
      %4435 = vmatprep.subr.bf16.mxu0 0
      %4436 = vmatpush2.bf16.msra.mxu0 0
      %4437 = vmatprep.subr.bf16.mxu0 0
      %4438 = vmatpush2.bf16.msra.mxu0 0
      %4439 = vmatprep.mubr.bf16.mxu0 0
      %4440 = vmatmul.mubr.bf16.gmra.mxu0 %v4391
      %v4441 = vpop.f32.mrf.mxu0
      %v4442 = vadd.f32 0.0, %v4441
      %v4443 = vpop.f32.mrf.mxu0
      %v4444 = vpop.f32.mrf.mxu0
      %v4445 = vadd.f32 0.0, %v4444
      %v4446 = vpop.f32.mrf.mxu0
      %4447 = vmatprep.mubr.bf16.mxu0 0
      %4448 = vmatmul.mubr.bf16.gmra.mxu0 %v4392
      %v4449 = vpop.f32.mrf.mxu0
      %v4450 = vadd.f32 0.0, %v4449
      %v4451 = vpop.f32.mrf.mxu0
      %v4452 = vpop.f32.mrf.mxu0
      %v4453 = vadd.f32 0.0, %v4452
      %v4454 = vpop.f32.mrf.mxu0
      %4455 = vmatprep.mubr.bf16.mxu0 0
      %4456 = vmatmul.mubr.bf16.gmra.mxu0 %v4393
      %v4457 = vpop.f32.mrf.mxu0
      %v4458 = vadd.f32 0.0, %v4457
      %v4459 = vpop.f32.mrf.mxu0
      %v4460 = vpop.f32.mrf.mxu0
      %v4461 = vadd.f32 0.0, %v4460
      %v4462 = vpop.f32.mrf.mxu0
      %4463 = vmatprep.mubr.bf16.mxu0 0
      %4464 = vmatmul.mubr.bf16.gmra.mxu0 %v4394
      %v4465 = vpop.f32.mrf.mxu0
      %v4466 = vadd.f32 0.0, %v4465
      %v4467 = vpop.f32.mrf.mxu0
      %v4468 = vpop.f32.mrf.mxu0
      %v4469 = vadd.f32 0.0, %v4468
      %v4470 = vpop.f32.mrf.mxu0
      %4471 = vmatprep.mubr.bf16.mxu0 0
      %4472 = vmatmul.mubr.bf16.gmra.mxu0 %v4395
      %v4473 = vpop.f32.mrf.mxu0
      %v4474 = vadd.f32 0.0, %v4473
      %v4475 = vpop.f32.mrf.mxu0
      %v4476 = vpop.f32.mrf.mxu0
      %v4477 = vadd.f32 0.0, %v4476
      %v4478 = vpop.f32.mrf.mxu0
      %4479 = vmatprep.mubr.bf16.mxu0 0
      %4480 = vmatmul.mubr.bf16.gmra.mxu0 %v4396
      %v4481 = vpop.f32.mrf.mxu0
      %v4482 = vadd.f32 0.0, %v4481
      %v4483 = vpop.f32.mrf.mxu0
      %v4484 = vpop.f32.mrf.mxu0
      %v4485 = vadd.f32 0.0, %v4484
      %v4486 = vpop.f32.mrf.mxu0
      %4487 = vmatprep.mubr.bf16.mxu0 0
      %4488 = vmatmul.mubr.bf16.gmra.mxu0 %v4397
      %v4489 = vpop.f32.mrf.mxu0
      %v4490 = vadd.f32 0.0, %v4489
      %v4491 = vpop.f32.mrf.mxu0
      %v4492 = vpop.f32.mrf.mxu0
      %v4493 = vadd.f32 0.0, %v4492
      %v4494 = vpop.f32.mrf.mxu0
      %4495 = vmatprep.mubr.bf16.mxu0 0
      %4496 = vmatmul.mubr.bf16.gmra.mxu0 %v4398
      %v4497 = vpop.f32.mrf.mxu0
      %v4498 = vadd.f32 0.0, %v4497
      %v4499 = vpop.f32.mrf.mxu0
      %v4500 = vpop.f32.mrf.mxu0
      %v4501 = vadd.f32 0.0, %v4500
      %v4502 = vpop.f32.mrf.mxu0
      %4503 = vdwg.mxu0
      %v4504 = vpack.c.bf16 %v4445, %v4442
      %v4505 = vpack.c.bf16 %v4453, %v4450
      %v4506 = vpack.c.bf16 %v4461, %v4458
      %v4507 = vpack.c.bf16 %v4469, %v4466
      %v4508 = vpack.c.bf16 %v4477, %v4474
      %v4509 = vpack.c.bf16 %v4485, %v4482
      %v4510 = vpack.c.bf16 %v4493, %v4490
      %v4511 = vpack.c.bf16 %v4501, %v4498
      %s4512 = scalar_lea.vmem %s10, 4
      %v4513 = vld [vmem:[%s4512] sm:$0x3]
      %v4515 = vsel %vm1303, %v4504, 0
      %v4518 = vsel %vm1303, %v4505, 0
      %v4521 = vsel %vm1303, %v4506, 0
      %v4524 = vsel %vm1303, %v4507, 0
      %v4527 = vsel %vm1303, %v4508, 0
      %v4530 = vsel %vm1303, %v4509, 0
      %v4533 = vsel %vm1303, %v4510, 0
      %v4536 = vsel %vm1303, %v4511, 0
      %v4539 = vsel %vm1771, %v4513, 0
      %4541 = vmatprep.subr.bf16.mxu0 0
      %4542 = vmatpush1.bf16.msra.mxu0 0
      %4543 = vmatprep.subr.bf16.mxu0 0
      %4544 = vmatpush1.bf16.msra.mxu0 0
      %4545 = vmatprep.subr.bf16.mxu0 0
      %4546 = vmatpush1.bf16.msra.mxu0 0
      %4547 = vmatprep.subr.bf16.mxu0 0
      %4548 = vmatpush1.bf16.msra.mxu0 0
      %4549 = vmatprep.subr.bf16.mxu0 0
      %4550 = vmatpush1.bf16.msra.mxu0 0
      %4551 = vmatprep.subr.bf16.mxu0 0
      %4552 = vmatpush1.bf16.msra.mxu0 0
      %4553 = vmatprep.subr.bf16.mxu0 0
      %4554 = vmatpush1.bf16.msra.mxu0 0
      %4555 = vmatprep.subr.bf16.mxu0 0
      %4556 = vmatpush1.bf16.msra.mxu0 %v4539
      %4557 = vmatprep.subr.bf16.mxu0 0
      %4558 = vmatpush2.bf16.msra.mxu0 0
      %4559 = vmatprep.subr.bf16.mxu0 0
      %4560 = vmatpush2.bf16.msra.mxu0 0
      %4561 = vmatprep.subr.bf16.mxu0 0
      %4562 = vmatpush2.bf16.msra.mxu0 0
      %4563 = vmatprep.subr.bf16.mxu0 0
      %4564 = vmatpush2.bf16.msra.mxu0 0
      %4565 = vmatprep.subr.bf16.mxu0 0
      %4566 = vmatpush2.bf16.msra.mxu0 0
      %4567 = vmatprep.subr.bf16.mxu0 0
      %4568 = vmatpush2.bf16.msra.mxu0 0
      %4569 = vmatprep.subr.bf16.mxu0 0
      %4570 = vmatpush2.bf16.msra.mxu0 0
      %4571 = vmatprep.subr.bf16.mxu0 0
      %4572 = vmatpush2.bf16.msra.mxu0 0
      %4573 = vmatprep.mubr.bf16.mxu0 0
      %4574 = vmatmul.mubr.bf16.gmra.mxu0 %v4515
      %v4575 = vpop.f32.mrf.mxu0
      %v4576 = vadd.f32 0.0, %v4575
      %v4577 = vpop.f32.mrf.mxu0
      %v4578 = vpop.f32.mrf.mxu0
      %v4579 = vadd.f32 0.0, %v4578
      %v4580 = vpop.f32.mrf.mxu0
      %4581 = vmatprep.mubr.bf16.mxu0 0
      %4582 = vmatmul.mubr.bf16.gmra.mxu0 %v4518
      %v4583 = vpop.f32.mrf.mxu0
      %v4584 = vadd.f32 0.0, %v4583
      %v4585 = vpop.f32.mrf.mxu0
      %v4586 = vpop.f32.mrf.mxu0
      %v4587 = vadd.f32 0.0, %v4586
      %v4588 = vpop.f32.mrf.mxu0
      %4589 = vmatprep.mubr.bf16.mxu0 0
      %4590 = vmatmul.mubr.bf16.gmra.mxu0 %v4521
      %v4591 = vpop.f32.mrf.mxu0
      %v4592 = vadd.f32 0.0, %v4591
      %v4593 = vpop.f32.mrf.mxu0
      %v4594 = vpop.f32.mrf.mxu0
      %v4595 = vadd.f32 0.0, %v4594
      %v4596 = vpop.f32.mrf.mxu0
      %4597 = vmatprep.mubr.bf16.mxu0 0
      %4598 = vmatmul.mubr.bf16.gmra.mxu0 %v4524
      %v4599 = vpop.f32.mrf.mxu0
      %v4600 = vadd.f32 0.0, %v4599
      %v4601 = vpop.f32.mrf.mxu0
      %v4602 = vpop.f32.mrf.mxu0
      %v4603 = vadd.f32 0.0, %v4602
      %v4604 = vpop.f32.mrf.mxu0
      %4605 = vmatprep.mubr.bf16.mxu0 0
      %4606 = vmatmul.mubr.bf16.gmra.mxu0 %v4527
      %v4607 = vpop.f32.mrf.mxu0
      %v4608 = vadd.f32 0.0, %v4607
      %v4609 = vpop.f32.mrf.mxu0
      %v4610 = vpop.f32.mrf.mxu0
      %v4611 = vadd.f32 0.0, %v4610
      %v4612 = vpop.f32.mrf.mxu0
      %4613 = vmatprep.mubr.bf16.mxu0 0
      %4614 = vmatmul.mubr.bf16.gmra.mxu0 %v4530
      %v4615 = vpop.f32.mrf.mxu0
      %v4616 = vadd.f32 0.0, %v4615
      %v4617 = vpop.f32.mrf.mxu0
      %v4618 = vpop.f32.mrf.mxu0
      %v4619 = vadd.f32 0.0, %v4618
      %v4620 = vpop.f32.mrf.mxu0
      %4621 = vmatprep.mubr.bf16.mxu0 0
      %4622 = vmatmul.mubr.bf16.gmra.mxu0 %v4533
      %v4623 = vpop.f32.mrf.mxu0
      %v4624 = vadd.f32 0.0, %v4623
      %v4625 = vpop.f32.mrf.mxu0
      %v4626 = vpop.f32.mrf.mxu0
      %v4627 = vadd.f32 0.0, %v4626
      %v4628 = vpop.f32.mrf.mxu0
      %4629 = vmatprep.mubr.bf16.mxu0 0
      %4630 = vmatmul.mubr.bf16.gmra.mxu0 %v4536
      %v4631 = vpop.f32.mrf.mxu0
      %v4632 = vadd.f32 0.0, %v4631
      %v4633 = vpop.f32.mrf.mxu0
      %v4634 = vpop.f32.mrf.mxu0
      %v4635 = vadd.f32 0.0, %v4634
      %v4636 = vpop.f32.mrf.mxu0
      %4637 = vdwg.mxu0
      %v4638 = vadd.f32 %v3684, %v4576
      %v4639 = vadd.f32 %v3685, %v4579
      %v4640 = vadd.f32 %v3686, %v4584
      %v4641 = vadd.f32 %v3687, %v4587
      %v4642 = vadd.f32 %v3688, %v4592
      %v4643 = vadd.f32 %v3689, %v4595
      %v4644 = vadd.f32 %v3690, %v4600
      %v4645 = vadd.f32 %v3691, %v4603
      %v4646 = vadd.f32 %v3692, %v4608
      %v4647 = vadd.f32 %v3693, %v4611
      %v4648 = vadd.f32 %v3694, %v4616
      %v4649 = vadd.f32 %v3695, %v4619
      %v4650 = vadd.f32 %v3696, %v4624
      %v4651 = vadd.f32 %v3697, %v4627
      %v4652 = vadd.f32 %v3698, %v4632
      %v4653 = vadd.f32 %v3699, %v4635
      %s4654 = scalar_lea.vmem %s4, 12
      %v4655 = vld [vmem:[%s4654] sm:$0xf]
      %s4656 = scalar_lea.vmem %s5, 3
      %v4657 = vld [vmem:[%s4656] sm:$0x1]
      %v4659 = vlaneseq
      %v4660 = vshrl.u32 %v4659, 7
      %v4661 = vsub.s32 0, %v4660
      %v4662 = vrot.slane %v4657, %v4661
      %v4665 = vsel %vm970, %v4655, 0
      %4667 = vmatprep.subr.bf16.mxu0 0
      %4668 = vmatpush1.bf16.msra.mxu0 0
      %4669 = vmatprep.subr.bf16.mxu0 0
      %4670 = vmatpush1.bf16.msra.mxu0 0
      %4671 = vmatprep.subr.bf16.mxu0 0
      %4672 = vmatpush1.bf16.msra.mxu0 0
      %4673 = vmatprep.subr.bf16.mxu0 0
      %4674 = vmatpush1.bf16.msra.mxu0 0
      %4675 = vmatprep.subr.bf16.mxu0 0
      %4676 = vmatpush1.bf16.msra.mxu0 0
      %4677 = vmatprep.subr.bf16.mxu0 0
      %4678 = vmatpush1.bf16.msra.mxu0 0
      %4679 = vmatprep.subr.bf16.mxu0 0
      %4680 = vmatpush1.bf16.msra.mxu0 0
      %4681 = vmatprep.subr.bf16.mxu0 0
      %4682 = vmatpush1.bf16.msra.mxu0 %v4665
      %4683 = vmatprep.subr.bf16.mxu0 0
      %4684 = vmatpush2.bf16.msra.mxu0 0
      %4685 = vmatprep.subr.bf16.mxu0 0
      %4686 = vmatpush2.bf16.msra.mxu0 0
      %4687 = vmatprep.subr.bf16.mxu0 0
      %4688 = vmatpush2.bf16.msra.mxu0 0
      %4689 = vmatprep.subr.bf16.mxu0 0
      %4690 = vmatpush2.bf16.msra.mxu0 0
      %4691 = vmatprep.subr.bf16.mxu0 0
      %4692 = vmatpush2.bf16.msra.mxu0 0
      %4693 = vmatprep.subr.bf16.mxu0 0
      %4694 = vmatpush2.bf16.msra.mxu0 0
      %4695 = vmatprep.subr.bf16.mxu0 0
      %4696 = vmatpush2.bf16.msra.mxu0 0
      %4697 = vmatprep.subr.bf16.mxu0 0
      %4698 = vmatpush2.bf16.msra.mxu0 0
      %4699 = vmatprep.mubr.bf16.mxu0 0
      %4700 = vmatmul.mubr.bf16.gmra.mxu0 %v3711
      %v4701 = vpop.f32.mrf.mxu0
      %v4702 = vadd.f32 %v4662, %v4701
      %v4703 = vpop.f32.mrf.mxu0
      %v4704 = vpop.f32.mrf.mxu0
      %v4705 = vadd.f32 %v4662, %v4704
      %v4706 = vpop.f32.mrf.mxu0
      %4707 = vmatprep.mubr.bf16.mxu0 0
      %4708 = vmatmul.mubr.bf16.gmra.mxu0 %v3714
      %v4709 = vpop.f32.mrf.mxu0
      %v4710 = vadd.f32 %v4662, %v4709
      %v4711 = vpop.f32.mrf.mxu0
      %v4712 = vpop.f32.mrf.mxu0
      %v4713 = vadd.f32 %v4662, %v4712
      %v4714 = vpop.f32.mrf.mxu0
      %4715 = vmatprep.mubr.bf16.mxu0 0
      %4716 = vmatmul.mubr.bf16.gmra.mxu0 %v3717
      %v4717 = vpop.f32.mrf.mxu0
      %v4718 = vadd.f32 %v4662, %v4717
      %v4719 = vpop.f32.mrf.mxu0
      %v4720 = vpop.f32.mrf.mxu0
      %v4721 = vadd.f32 %v4662, %v4720
      %v4722 = vpop.f32.mrf.mxu0
      %4723 = vmatprep.mubr.bf16.mxu0 0
      %4724 = vmatmul.mubr.bf16.gmra.mxu0 %v3720
      %v4725 = vpop.f32.mrf.mxu0
      %v4726 = vadd.f32 %v4662, %v4725
      %v4727 = vpop.f32.mrf.mxu0
      %v4728 = vpop.f32.mrf.mxu0
      %v4729 = vadd.f32 %v4662, %v4728
      %v4730 = vpop.f32.mrf.mxu0
      %4731 = vmatprep.mubr.bf16.mxu0 0
      %4732 = vmatmul.mubr.bf16.gmra.mxu0 %v3723
      %v4733 = vpop.f32.mrf.mxu0
      %v4734 = vadd.f32 %v4662, %v4733
      %v4735 = vpop.f32.mrf.mxu0
      %v4736 = vpop.f32.mrf.mxu0
      %v4737 = vadd.f32 %v4662, %v4736
      %v4738 = vpop.f32.mrf.mxu0
      %4739 = vmatprep.mubr.bf16.mxu0 0
      %4740 = vmatmul.mubr.bf16.gmra.mxu0 %v3726
      %v4741 = vpop.f32.mrf.mxu0
      %v4742 = vadd.f32 %v4662, %v4741
      %v4743 = vpop.f32.mrf.mxu0
      %v4744 = vpop.f32.mrf.mxu0
      %v4745 = vadd.f32 %v4662, %v4744
      %v4746 = vpop.f32.mrf.mxu0
      %4747 = vmatprep.mubr.bf16.mxu0 0
      %4748 = vmatmul.mubr.bf16.gmra.mxu0 %v3729
      %v4749 = vpop.f32.mrf.mxu0
      %v4750 = vadd.f32 %v4662, %v4749
      %v4751 = vpop.f32.mrf.mxu0
      %v4752 = vpop.f32.mrf.mxu0
      %v4753 = vadd.f32 %v4662, %v4752
      %v4754 = vpop.f32.mrf.mxu0
      %4755 = vmatprep.mubr.bf16.mxu0 0
      %4756 = vmatmul.mubr.bf16.gmra.mxu0 %v3732
      %v4757 = vpop.f32.mrf.mxu0
      %v4758 = vadd.f32 %v4662, %v4757
      %v4759 = vpop.f32.mrf.mxu0
      %v4760 = vpop.f32.mrf.mxu0
      %v4761 = vadd.f32 %v4662, %v4760
      %v4762 = vpop.f32.mrf.mxu0
      %4763 = vdwg.mxu0
      %s4764 = scalar_lea.vmem %s6, 12
      %v4765 = vld [vmem:[%s4764] sm:$0xf]
      %s4766 = scalar_lea.vmem %s7, 3
      %v4767 = vld [vmem:[%s4766] sm:$0x1]
      %v4769 = vlaneseq
      %v4770 = vshrl.u32 %v4769, 7
      %v4771 = vsub.s32 0, %v4770
      %v4772 = vrot.slane %v4767, %v4771
      %v4775 = vsel %vm970, %v4765, 0
      %4777 = vmatprep.subr.bf16.mxu0 0
      %4778 = vmatpush1.bf16.msra.mxu0 0
      %4779 = vmatprep.subr.bf16.mxu0 0
      %4780 = vmatpush1.bf16.msra.mxu0 0
      %4781 = vmatprep.subr.bf16.mxu0 0
      %4782 = vmatpush1.bf16.msra.mxu0 0
      %4783 = vmatprep.subr.bf16.mxu0 0
      %4784 = vmatpush1.bf16.msra.mxu0 0
      %4785 = vmatprep.subr.bf16.mxu0 0
      %4786 = vmatpush1.bf16.msra.mxu0 0
      %4787 = vmatprep.subr.bf16.mxu0 0
      %4788 = vmatpush1.bf16.msra.mxu0 0
      %4789 = vmatprep.subr.bf16.mxu0 0
      %4790 = vmatpush1.bf16.msra.mxu0 0
      %4791 = vmatprep.subr.bf16.mxu0 0
      %4792 = vmatpush1.bf16.msra.mxu0 %v4775
      %4793 = vmatprep.subr.bf16.mxu0 0
      %4794 = vmatpush2.bf16.msra.mxu0 0
      %4795 = vmatprep.subr.bf16.mxu0 0
      %4796 = vmatpush2.bf16.msra.mxu0 0
      %4797 = vmatprep.subr.bf16.mxu0 0
      %4798 = vmatpush2.bf16.msra.mxu0 0
      %4799 = vmatprep.subr.bf16.mxu0 0
      %4800 = vmatpush2.bf16.msra.mxu0 0
      %4801 = vmatprep.subr.bf16.mxu0 0
      %4802 = vmatpush2.bf16.msra.mxu0 0
      %4803 = vmatprep.subr.bf16.mxu0 0
      %4804 = vmatpush2.bf16.msra.mxu0 0
      %4805 = vmatprep.subr.bf16.mxu0 0
      %4806 = vmatpush2.bf16.msra.mxu0 0
      %4807 = vmatprep.subr.bf16.mxu0 0
      %4808 = vmatpush2.bf16.msra.mxu0 0
      %4809 = vmatprep.mubr.bf16.mxu0 0
      %4810 = vmatmul.mubr.bf16.gmra.mxu0 %v3711
      %v4811 = vpop.f32.mrf.mxu0
      %v4812 = vadd.f32 %v4772, %v4811
      %v4813 = vpop.f32.mrf.mxu0
      %v4814 = vpop.f32.mrf.mxu0
      %v4815 = vadd.f32 %v4772, %v4814
      %v4816 = vpop.f32.mrf.mxu0
      %4817 = vmatprep.mubr.bf16.mxu0 0
      %4818 = vmatmul.mubr.bf16.gmra.mxu0 %v3714
      %v4819 = vpop.f32.mrf.mxu0
      %v4820 = vadd.f32 %v4772, %v4819
      %v4821 = vpop.f32.mrf.mxu0
      %v4822 = vpop.f32.mrf.mxu0
      %v4823 = vadd.f32 %v4772, %v4822
      %v4824 = vpop.f32.mrf.mxu0
      %4825 = vmatprep.mubr.bf16.mxu0 0
      %4826 = vmatmul.mubr.bf16.gmra.mxu0 %v3717
      %v4827 = vpop.f32.mrf.mxu0
      %v4828 = vadd.f32 %v4772, %v4827
      %v4829 = vpop.f32.mrf.mxu0
      %v4830 = vpop.f32.mrf.mxu0
      %v4831 = vadd.f32 %v4772, %v4830
      %v4832 = vpop.f32.mrf.mxu0
      %4833 = vmatprep.mubr.bf16.mxu0 0
      %4834 = vmatmul.mubr.bf16.gmra.mxu0 %v3720
      %v4835 = vpop.f32.mrf.mxu0
      %v4836 = vadd.f32 %v4772, %v4835
      %v4837 = vpop.f32.mrf.mxu0
      %v4838 = vpop.f32.mrf.mxu0
      %v4839 = vadd.f32 %v4772, %v4838
      %v4840 = vpop.f32.mrf.mxu0
      %4841 = vmatprep.mubr.bf16.mxu0 0
      %4842 = vmatmul.mubr.bf16.gmra.mxu0 %v3723
      %v4843 = vpop.f32.mrf.mxu0
      %v4844 = vadd.f32 %v4772, %v4843
      %v4845 = vpop.f32.mrf.mxu0
      %v4846 = vpop.f32.mrf.mxu0
      %v4847 = vadd.f32 %v4772, %v4846
      %v4848 = vpop.f32.mrf.mxu0
      %4849 = vmatprep.mubr.bf16.mxu0 0
      %4850 = vmatmul.mubr.bf16.gmra.mxu0 %v3726
      %v4851 = vpop.f32.mrf.mxu0
      %v4852 = vadd.f32 %v4772, %v4851
      %v4853 = vpop.f32.mrf.mxu0
      %v4854 = vpop.f32.mrf.mxu0
      %v4855 = vadd.f32 %v4772, %v4854
      %v4856 = vpop.f32.mrf.mxu0
      %4857 = vmatprep.mubr.bf16.mxu0 0
      %4858 = vmatmul.mubr.bf16.gmra.mxu0 %v3729
      %v4859 = vpop.f32.mrf.mxu0
      %v4860 = vadd.f32 %v4772, %v4859
      %v4861 = vpop.f32.mrf.mxu0
      %v4862 = vpop.f32.mrf.mxu0
      %v4863 = vadd.f32 %v4772, %v4862
      %v4864 = vpop.f32.mrf.mxu0
      %4865 = vmatprep.mubr.bf16.mxu0 0
      %4866 = vmatmul.mubr.bf16.gmra.mxu0 %v3732
      %v4867 = vpop.f32.mrf.mxu0
      %v4868 = vadd.f32 %v4772, %v4867
      %v4869 = vpop.f32.mrf.mxu0
      %v4870 = vpop.f32.mrf.mxu0
      %v4871 = vadd.f32 %v4772, %v4870
      %v4872 = vpop.f32.mrf.mxu0
      %4873 = vdwg.mxu0
      %s4874 = scalar_lea.vmem %s8, 12
      %v4875 = vld [vmem:[%s4874] sm:$0xf]
      %s4876 = scalar_lea.vmem %s9, 3
      %v4877 = vld [vmem:[%s4876] sm:$0x1]
      %v4879 = vlaneseq
      %v4880 = vshrl.u32 %v4879, 7
      %v4881 = vsub.s32 0, %v4880
      %v4882 = vrot.slane %v4877, %v4881
      %v4885 = vsel %vm970, %v4875, 0
      %4887 = vmatprep.subr.bf16.mxu0 0
      %4888 = vmatpush1.bf16.msra.mxu0 0
      %4889 = vmatprep.subr.bf16.mxu0 0
      %4890 = vmatpush1.bf16.msra.mxu0 0
      %4891 = vmatprep.subr.bf16.mxu0 0
      %4892 = vmatpush1.bf16.msra.mxu0 0
      %4893 = vmatprep.subr.bf16.mxu0 0
      %4894 = vmatpush1.bf16.msra.mxu0 0
      %4895 = vmatprep.subr.bf16.mxu0 0
      %4896 = vmatpush1.bf16.msra.mxu0 0
      %4897 = vmatprep.subr.bf16.mxu0 0
      %4898 = vmatpush1.bf16.msra.mxu0 0
      %4899 = vmatprep.subr.bf16.mxu0 0
      %4900 = vmatpush1.bf16.msra.mxu0 0
      %4901 = vmatprep.subr.bf16.mxu0 0
      %4902 = vmatpush1.bf16.msra.mxu0 %v4885
      %4903 = vmatprep.subr.bf16.mxu0 0
      %4904 = vmatpush2.bf16.msra.mxu0 0
      %4905 = vmatprep.subr.bf16.mxu0 0
      %4906 = vmatpush2.bf16.msra.mxu0 0
      %4907 = vmatprep.subr.bf16.mxu0 0
      %4908 = vmatpush2.bf16.msra.mxu0 0
      %4909 = vmatprep.subr.bf16.mxu0 0
      %4910 = vmatpush2.bf16.msra.mxu0 0
      %4911 = vmatprep.subr.bf16.mxu0 0
      %4912 = vmatpush2.bf16.msra.mxu0 0
      %4913 = vmatprep.subr.bf16.mxu0 0
      %4914 = vmatpush2.bf16.msra.mxu0 0
      %4915 = vmatprep.subr.bf16.mxu0 0
      %4916 = vmatpush2.bf16.msra.mxu0 0
      %4917 = vmatprep.subr.bf16.mxu0 0
      %4918 = vmatpush2.bf16.msra.mxu0 0
      %4919 = vmatprep.mubr.bf16.mxu0 0
      %4920 = vmatmul.mubr.bf16.gmra.mxu0 %v3711
      %v4921 = vpop.f32.mrf.mxu0
      %v4922 = vadd.f32 %v4882, %v4921
      %v4923 = vpop.f32.mrf.mxu0
      %v4924 = vpop.f32.mrf.mxu0
      %v4925 = vadd.f32 %v4882, %v4924
      %v4926 = vpop.f32.mrf.mxu0
      %4927 = vmatprep.mubr.bf16.mxu0 0
      %4928 = vmatmul.mubr.bf16.gmra.mxu0 %v3714
      %v4929 = vpop.f32.mrf.mxu0
      %v4930 = vadd.f32 %v4882, %v4929
      %v4931 = vpop.f32.mrf.mxu0
      %v4932 = vpop.f32.mrf.mxu0
      %v4933 = vadd.f32 %v4882, %v4932
      %v4934 = vpop.f32.mrf.mxu0
      %4935 = vmatprep.mubr.bf16.mxu0 0
      %4936 = vmatmul.mubr.bf16.gmra.mxu0 %v3717
      %v4937 = vpop.f32.mrf.mxu0
      %v4938 = vadd.f32 %v4882, %v4937
      %v4939 = vpop.f32.mrf.mxu0
      %v4940 = vpop.f32.mrf.mxu0
      %v4941 = vadd.f32 %v4882, %v4940
      %v4942 = vpop.f32.mrf.mxu0
      %4943 = vmatprep.mubr.bf16.mxu0 0
      %4944 = vmatmul.mubr.bf16.gmra.mxu0 %v3720
      %v4945 = vpop.f32.mrf.mxu0
      %v4946 = vadd.f32 %v4882, %v4945
      %v4947 = vpop.f32.mrf.mxu0
      %v4948 = vpop.f32.mrf.mxu0
      %v4949 = vadd.f32 %v4882, %v4948
      %v4950 = vpop.f32.mrf.mxu0
      %4951 = vmatprep.mubr.bf16.mxu0 0
      %4952 = vmatmul.mubr.bf16.gmra.mxu0 %v3723
      %v4953 = vpop.f32.mrf.mxu0
      %v4954 = vadd.f32 %v4882, %v4953
      %v4955 = vpop.f32.mrf.mxu0
      %v4956 = vpop.f32.mrf.mxu0
      %v4957 = vadd.f32 %v4882, %v4956
      %v4958 = vpop.f32.mrf.mxu0
      %4959 = vmatprep.mubr.bf16.mxu0 0
      %4960 = vmatmul.mubr.bf16.gmra.mxu0 %v3726
      %v4961 = vpop.f32.mrf.mxu0
      %v4962 = vadd.f32 %v4882, %v4961
      %v4963 = vpop.f32.mrf.mxu0
      %v4964 = vpop.f32.mrf.mxu0
      %v4965 = vadd.f32 %v4882, %v4964
      %v4966 = vpop.f32.mrf.mxu0
      %4967 = vmatprep.mubr.bf16.mxu0 0
      %4968 = vmatmul.mubr.bf16.gmra.mxu0 %v3729
      %v4969 = vpop.f32.mrf.mxu0
      %v4970 = vadd.f32 %v4882, %v4969
      %v4971 = vpop.f32.mrf.mxu0
      %v4972 = vpop.f32.mrf.mxu0
      %v4973 = vadd.f32 %v4882, %v4972
      %v4974 = vpop.f32.mrf.mxu0
      %4975 = vmatprep.mubr.bf16.mxu0 0
      %4976 = vmatmul.mubr.bf16.gmra.mxu0 %v3732
      %v4977 = vpop.f32.mrf.mxu0
      %v4978 = vadd.f32 %v4882, %v4977
      %v4979 = vpop.f32.mrf.mxu0
      %v4980 = vpop.f32.mrf.mxu0
      %v4981 = vadd.f32 %v4882, %v4980
      %v4982 = vpop.f32.mrf.mxu0
      %4983 = vdwg.mxu0
      %v4984 = vpack.c.bf16 %v4705, %v4702
      %v4985 = vpack.c.bf16 %v4713, %v4710
      %v4986 = vpack.c.bf16 %v4721, %v4718
      %v4987 = vpack.c.bf16 %v4729, %v4726
      %v4988 = vpack.c.bf16 %v4737, %v4734
      %v4989 = vpack.c.bf16 %v4745, %v4742
      %v4990 = vpack.c.bf16 %v4753, %v4750
      %v4991 = vpack.c.bf16 %v4761, %v4758
      %v4992 = vpack.c.bf16 %v4815, %v4812
      %v4993 = vpack.c.bf16 %v4823, %v4820
      %v4994 = vpack.c.bf16 %v4831, %v4828
      %v4995 = vpack.c.bf16 %v4839, %v4836
      %v4996 = vpack.c.bf16 %v4847, %v4844
      %v4997 = vpack.c.bf16 %v4855, %v4852
      %v4998 = vpack.c.bf16 %v4863, %v4860
      %v4999 = vpack.c.bf16 %v4871, %v4868
      %v5001 = vsel %vm1303, %v4984, 0
      %v5004 = vsel %vm1303, %v4985, 0
      %v5007 = vsel %vm1303, %v4986, 0
      %v5010 = vsel %vm1303, %v4987, 0
      %v5013 = vsel %vm1303, %v4988, 0
      %v5016 = vsel %vm1303, %v4989, 0
      %v5019 = vsel %vm1303, %v4990, 0
      %v5022 = vsel %vm1303, %v4991, 0
      %v5025 = vsel %vm1303, %v4992, 0
      %v5028 = vsel %vm1303, %v4993, 0
      %v5031 = vsel %vm1303, %v4994, 0
      %v5034 = vsel %vm1303, %v4995, 0
      %v5037 = vsel %vm1303, %v4996, 0
      %v5040 = vsel %vm1303, %v4997, 0
      %v5043 = vsel %vm1303, %v4998, 0
      %v5046 = vsel %vm1303, %v4999, 0
      %5048 = vmatprep.subr.bf16.mxu0 0
      %5049 = vmatpush1.bf16.xpose.msra.mxu0 %v5046
      %5050 = vmatprep.subr.bf16.mxu0 0
      %5051 = vmatpush1.bf16.xpose.msra.mxu0 %v5043
      %5052 = vmatprep.subr.bf16.mxu0 0
      %5053 = vmatpush1.bf16.xpose.msra.mxu0 %v5040
      %5054 = vmatprep.subr.bf16.mxu0 0
      %5055 = vmatpush1.bf16.xpose.msra.mxu0 %v5037
      %5056 = vmatprep.subr.bf16.mxu0 0
      %5057 = vmatpush1.bf16.xpose.msra.mxu0 %v5034
      %5058 = vmatprep.subr.bf16.mxu0 0
      %5059 = vmatpush1.bf16.xpose.msra.mxu0 %v5031
      %5060 = vmatprep.subr.bf16.mxu0 0
      %5061 = vmatpush1.bf16.xpose.msra.mxu0 %v5028
      %5062 = vmatprep.subr.bf16.mxu0 0
      %5063 = vmatpush1.bf16.xpose.msra.mxu0 %v5025
      %5064 = vmatprep.subr.bf16.mxu0 0
      %5065 = vmatpush2.bf16.xpose.msra.mxu0 0
      %5066 = vmatprep.subr.bf16.mxu0 0
      %5067 = vmatpush2.bf16.xpose.msra.mxu0 0
      %5068 = vmatprep.subr.bf16.mxu0 0
      %5069 = vmatpush2.bf16.xpose.msra.mxu0 0
      %5070 = vmatprep.subr.bf16.mxu0 0
      %5071 = vmatpush2.bf16.xpose.msra.mxu0 0
      %5072 = vmatprep.subr.bf16.mxu0 0
      %5073 = vmatpush2.bf16.xpose.msra.mxu0 0
      %5074 = vmatprep.subr.bf16.mxu0 0
      %5075 = vmatpush2.bf16.xpose.msra.mxu0 0
      %5076 = vmatprep.subr.bf16.mxu0 0
      %5077 = vmatpush2.bf16.xpose.msra.mxu0 0
      %5078 = vmatprep.subr.bf16.mxu0 0
      %5079 = vmatpush2.bf16.xpose.msra.mxu0 0
      %5080 = vmatprep.mubr.bf16.mxu0 0
      %5081 = vmatmul.mubr.bf16.gmra.mxu0 %v5001
      %v5082 = vpop.f32.mrf.mxu0
      %v5083 = vadd.f32 0.0, %v5082
      %v5084 = vpop.f32.mrf.mxu0
      %v5085 = vpop.f32.mrf.mxu0
      %v5086 = vadd.f32 0.0, %v5085
      %v5087 = vpop.f32.mrf.mxu0
      %5088 = vmatprep.mubr.bf16.mxu0 0
      %5089 = vmatmul.mubr.bf16.gmra.mxu0 %v5004
      %v5090 = vpop.f32.mrf.mxu0
      %v5091 = vadd.f32 0.0, %v5090
      %v5092 = vpop.f32.mrf.mxu0
      %v5093 = vpop.f32.mrf.mxu0
      %v5094 = vadd.f32 0.0, %v5093
      %v5095 = vpop.f32.mrf.mxu0
      %5096 = vmatprep.mubr.bf16.mxu0 0
      %5097 = vmatmul.mubr.bf16.gmra.mxu0 %v5007
      %v5098 = vpop.f32.mrf.mxu0
      %v5099 = vadd.f32 0.0, %v5098
      %v5100 = vpop.f32.mrf.mxu0
      %v5101 = vpop.f32.mrf.mxu0
      %v5102 = vadd.f32 0.0, %v5101
      %v5103 = vpop.f32.mrf.mxu0
      %5104 = vmatprep.mubr.bf16.mxu0 0
      %5105 = vmatmul.mubr.bf16.gmra.mxu0 %v5010
      %v5106 = vpop.f32.mrf.mxu0
      %v5107 = vadd.f32 0.0, %v5106
      %v5108 = vpop.f32.mrf.mxu0
      %v5109 = vpop.f32.mrf.mxu0
      %v5110 = vadd.f32 0.0, %v5109
      %v5111 = vpop.f32.mrf.mxu0
      %5112 = vmatprep.mubr.bf16.mxu0 0
      %5113 = vmatmul.mubr.bf16.gmra.mxu0 %v5013
      %v5114 = vpop.f32.mrf.mxu0
      %v5115 = vadd.f32 0.0, %v5114
      %v5116 = vpop.f32.mrf.mxu0
      %v5117 = vpop.f32.mrf.mxu0
      %v5118 = vadd.f32 0.0, %v5117
      %v5119 = vpop.f32.mrf.mxu0
      %5120 = vmatprep.mubr.bf16.mxu0 0
      %5121 = vmatmul.mubr.bf16.gmra.mxu0 %v5016
      %v5122 = vpop.f32.mrf.mxu0
      %v5123 = vadd.f32 0.0, %v5122
      %v5124 = vpop.f32.mrf.mxu0
      %v5125 = vpop.f32.mrf.mxu0
      %v5126 = vadd.f32 0.0, %v5125
      %v5127 = vpop.f32.mrf.mxu0
      %5128 = vmatprep.mubr.bf16.mxu0 0
      %5129 = vmatmul.mubr.bf16.gmra.mxu0 %v5019
      %v5130 = vpop.f32.mrf.mxu0
      %v5131 = vadd.f32 0.0, %v5130
      %v5132 = vpop.f32.mrf.mxu0
      %v5133 = vpop.f32.mrf.mxu0
      %v5134 = vadd.f32 0.0, %v5133
      %v5135 = vpop.f32.mrf.mxu0
      %5136 = vmatprep.mubr.bf16.mxu0 0
      %5137 = vmatmul.mubr.bf16.gmra.mxu0 %v5022
      %v5138 = vpop.f32.mrf.mxu0
      %v5139 = vadd.f32 0.0, %v5138
      %v5140 = vpop.f32.mrf.mxu0
      %v5141 = vpop.f32.mrf.mxu0
      %v5142 = vadd.f32 0.0, %v5141
      %v5143 = vpop.f32.mrf.mxu0
      %5144 = vdwg.mxu0
      %v5145 = vmul.f32 %v5083, 0.5
      %v5146 = vmul.f32 %v5086, 0.5
      %v5147 = vmul.f32 %v5091, 0.5
      %v5148 = vmul.f32 %v5094, 0.5
      %v5149 = vmul.f32 %v5099, 0.5
      %v5150 = vmul.f32 %v5102, 0.5
      %v5151 = vmul.f32 %v5107, 0.5
      %v5152 = vmul.f32 %v5110, 0.5
      %v5153 = vmul.f32 %v5115, 0.5
      %v5154 = vmul.f32 %v5118, 0.5
      %v5155 = vmul.f32 %v5123, 0.5
      %v5156 = vmul.f32 %v5126, 0.5
      %v5157 = vmul.f32 %v5131, 0.5
      %v5158 = vmul.f32 %v5134, 0.5
      %v5159 = vmul.f32 %v5139, 0.5
      %v5160 = vmul.f32 %v5142, 0.5
      %v5161 = vadd.f32 %v5145, %v704
      %v5162 = vadd.f32 %v5146, %v705
      %v5163 = vadd.f32 %v5147, %v706
      %v5164 = vadd.f32 %v5148, %v707
      %v5165 = vadd.f32 %v5149, %v708
      %v5166 = vadd.f32 %v5150, %v709
      %v5167 = vadd.f32 %v5151, %v710
      %v5168 = vadd.f32 %v5152, %v711
      %v5169 = vadd.f32 %v5153, %v712
      %v5170 = vadd.f32 %v5154, %v713
      %v5171 = vadd.f32 %v5155, %v714
      %v5172 = vadd.f32 %v5156, %v715
      %v5173 = vadd.f32 %v5157, %v716
      %v5174 = vadd.f32 %v5158, %v717
      %v5175 = vadd.f32 %v5159, %v718
      %v5176 = vadd.f32 %v5160, %v719
      %5177 = vmax.xlane.f32.xlu0 %v5161
      %v5178 = vpop.xlane.xlu0 %5177
      %5179 = vmax.xlane.f32.xlu0 %v5162
      %v5180 = vpop.xlane.xlu0 %5179
      %5181 = vmax.xlane.f32.xlu0 %v5163
      %v5182 = vpop.xlane.xlu0 %5181
      %5183 = vmax.xlane.f32.xlu0 %v5164
      %v5184 = vpop.xlane.xlu0 %5183
      %5185 = vmax.xlane.f32.xlu0 %v5165
      %v5186 = vpop.xlane.xlu0 %5185
      %5187 = vmax.xlane.f32.xlu0 %v5166
      %v5188 = vpop.xlane.xlu0 %5187
      %5189 = vmax.xlane.f32.xlu0 %v5167
      %v5190 = vpop.xlane.xlu0 %5189
      %5191 = vmax.xlane.f32.xlu0 %v5168
      %v5192 = vpop.xlane.xlu0 %5191
      %5193 = vmax.xlane.f32.xlu0 %v5169
      %v5194 = vpop.xlane.xlu0 %5193
      %5195 = vmax.xlane.f32.xlu0 %v5170
      %v5196 = vpop.xlane.xlu0 %5195
      %5197 = vmax.xlane.f32.xlu0 %v5171
      %v5198 = vpop.xlane.xlu0 %5197
      %5199 = vmax.xlane.f32.xlu0 %v5172
      %v5200 = vpop.xlane.xlu0 %5199
      %5201 = vmax.xlane.f32.xlu0 %v5173
      %v5202 = vpop.xlane.xlu0 %5201
      %5203 = vmax.xlane.f32.xlu0 %v5174
      %v5204 = vpop.xlane.xlu0 %5203
      %5205 = vmax.xlane.f32.xlu0 %v5175
      %v5206 = vpop.xlane.xlu0 %5205
      %5207 = vmax.xlane.f32.xlu0 %v5176
      %v5208 = vpop.xlane.xlu0 %5207
      %v5209 = vsub.f32 %v5161, %v5178
      %v5210 = vsub.f32 %v5162, %v5180
      %v5211 = vsub.f32 %v5163, %v5182
      %v5212 = vsub.f32 %v5164, %v5184
      %v5213 = vsub.f32 %v5165, %v5186
      %v5214 = vsub.f32 %v5166, %v5188
      %v5215 = vsub.f32 %v5167, %v5190
      %v5216 = vsub.f32 %v5168, %v5192
      %v5217 = vsub.f32 %v5169, %v5194
      %v5218 = vsub.f32 %v5170, %v5196
      %v5219 = vsub.f32 %v5171, %v5198
      %v5220 = vsub.f32 %v5172, %v5200
      %v5221 = vsub.f32 %v5173, %v5202
      %v5222 = vsub.f32 %v5174, %v5204
      %v5223 = vsub.f32 %v5175, %v5206
      %v5224 = vsub.f32 %v5176, %v5208
      %v5225 = vmul.f32 %v5209, 1.442695
      %v5226 = vpow.pop %v5225
      %v5227 = vmul.f32 %v5210, 1.442695
      %v5228 = vpow.pop %v5227
      %v5229 = vmul.f32 %v5211, 1.442695
      %v5230 = vpow.pop %v5229
      %v5231 = vmul.f32 %v5212, 1.442695
      %v5232 = vpow.pop %v5231
      %v5233 = vmul.f32 %v5213, 1.442695
      %v5234 = vpow.pop %v5233
      %v5235 = vmul.f32 %v5214, 1.442695
      %v5236 = vpow.pop %v5235
      %v5237 = vmul.f32 %v5215, 1.442695
      %v5238 = vpow.pop %v5237
      %v5239 = vmul.f32 %v5216, 1.442695
      %v5240 = vpow.pop %v5239
      %v5241 = vmul.f32 %v5217, 1.442695
      %v5242 = vpow.pop %v5241
      %v5243 = vmul.f32 %v5218, 1.442695
      %v5244 = vpow.pop %v5243
      %v5245 = vmul.f32 %v5219, 1.442695
      %v5246 = vpow.pop %v5245
      %v5247 = vmul.f32 %v5220, 1.442695
      %v5248 = vpow.pop %v5247
      %v5249 = vmul.f32 %v5221, 1.442695
      %v5250 = vpow.pop %v5249
      %v5251 = vmul.f32 %v5222, 1.442695
      %v5252 = vpow.pop %v5251
      %v5253 = vmul.f32 %v5223, 1.442695
      %v5254 = vpow.pop %v5253
      %v5255 = vmul.f32 %v5224, 1.442695
      %v5256 = vpow.pop %v5255
      %5257 = vadd.xlane.f32.xlu0 %v5226
      %v5258 = vpop.xlane.xlu0 %5257
      %5259 = vadd.xlane.f32.xlu0 %v5228
      %v5260 = vpop.xlane.xlu0 %5259
      %5261 = vadd.xlane.f32.xlu0 %v5230
      %v5262 = vpop.xlane.xlu0 %5261
      %5263 = vadd.xlane.f32.xlu0 %v5232
      %v5264 = vpop.xlane.xlu0 %5263
      %5265 = vadd.xlane.f32.xlu0 %v5234
      %v5266 = vpop.xlane.xlu0 %5265
      %5267 = vadd.xlane.f32.xlu0 %v5236
      %v5268 = vpop.xlane.xlu0 %5267
      %5269 = vadd.xlane.f32.xlu0 %v5238
      %v5270 = vpop.xlane.xlu0 %5269
      %5271 = vadd.xlane.f32.xlu0 %v5240
      %v5272 = vpop.xlane.xlu0 %5271
      %5273 = vadd.xlane.f32.xlu0 %v5242
      %v5274 = vpop.xlane.xlu0 %5273
      %5275 = vadd.xlane.f32.xlu0 %v5244
      %v5276 = vpop.xlane.xlu0 %5275
      %5277 = vadd.xlane.f32.xlu0 %v5246
      %v5278 = vpop.xlane.xlu0 %5277
      %5279 = vadd.xlane.f32.xlu0 %v5248
      %v5280 = vpop.xlane.xlu0 %5279
      %5281 = vadd.xlane.f32.xlu0 %v5250
      %v5282 = vpop.xlane.xlu0 %5281
      %5283 = vadd.xlane.f32.xlu0 %v5252
      %v5284 = vpop.xlane.xlu0 %5283
      %5285 = vadd.xlane.f32.xlu0 %v5254
      %v5286 = vpop.xlane.xlu0 %5285
      %5287 = vadd.xlane.f32.xlu0 %v5256
      %v5288 = vpop.xlane.xlu0 %5287
      %v5289 = vrcp.pop %v5258
      %v5290 = vmul.f32 %v5226, %v5289
      %v5291 = vrcp.pop %v5260
      %v5292 = vmul.f32 %v5228, %v5291
      %v5293 = vrcp.pop %v5262
      %v5294 = vmul.f32 %v5230, %v5293
      %v5295 = vrcp.pop %v5264
      %v5296 = vmul.f32 %v5232, %v5295
      %v5297 = vrcp.pop %v5266
      %v5298 = vmul.f32 %v5234, %v5297
      %v5299 = vrcp.pop %v5268
      %v5300 = vmul.f32 %v5236, %v5299
      %v5301 = vrcp.pop %v5270
      %v5302 = vmul.f32 %v5238, %v5301
      %v5303 = vrcp.pop %v5272
      %v5304 = vmul.f32 %v5240, %v5303
      %v5305 = vrcp.pop %v5274
      %v5306 = vmul.f32 %v5242, %v5305
      %v5307 = vrcp.pop %v5276
      %v5308 = vmul.f32 %v5244, %v5307
      %v5309 = vrcp.pop %v5278
      %v5310 = vmul.f32 %v5246, %v5309
      %v5311 = vrcp.pop %v5280
      %v5312 = vmul.f32 %v5248, %v5311
      %v5313 = vrcp.pop %v5282
      %v5314 = vmul.f32 %v5250, %v5313
      %v5315 = vrcp.pop %v5284
      %v5316 = vmul.f32 %v5252, %v5315
      %v5317 = vrcp.pop %v5286
      %v5318 = vmul.f32 %v5254, %v5317
      %v5319 = vrcp.pop %v5288
      %v5320 = vmul.f32 %v5256, %v5319
      %v5321 = vpack.c.bf16 %v5292, %v5290
      %v5322 = vpack.c.bf16 %v5296, %v5294
      %v5323 = vpack.c.bf16 %v5300, %v5298
      %v5324 = vpack.c.bf16 %v5304, %v5302
      %v5325 = vpack.c.bf16 %v5308, %v5306
      %v5326 = vpack.c.bf16 %v5312, %v5310
      %v5327 = vpack.c.bf16 %v5316, %v5314
      %v5328 = vpack.c.bf16 %v5320, %v5318
      %v5329 = vpack.c.bf16 %v4925, %v4922
      %v5330 = vpack.c.bf16 %v4933, %v4930
      %v5331 = vpack.c.bf16 %v4941, %v4938
      %v5332 = vpack.c.bf16 %v4949, %v4946
      %v5333 = vpack.c.bf16 %v4957, %v4954
      %v5334 = vpack.c.bf16 %v4965, %v4962
      %v5335 = vpack.c.bf16 %v4973, %v4970
      %v5336 = vpack.c.bf16 %v4981, %v4978
      %5337 = vmatprep.subr.bf16.mxu0 0
      %5338 = vmatpush1.bf16.msra.mxu0 %v5336
      %5339 = vmatprep.subr.bf16.mxu0 0
      %5340 = vmatpush1.bf16.msra.mxu0 %v5335
      %5341 = vmatprep.subr.bf16.mxu0 0
      %5342 = vmatpush1.bf16.msra.mxu0 %v5334
      %5343 = vmatprep.subr.bf16.mxu0 0
      %5344 = vmatpush1.bf16.msra.mxu0 %v5333
      %5345 = vmatprep.subr.bf16.mxu0 0
      %5346 = vmatpush1.bf16.msra.mxu0 %v5332
      %5347 = vmatprep.subr.bf16.mxu0 0
      %5348 = vmatpush1.bf16.msra.mxu0 %v5331
      %5349 = vmatprep.subr.bf16.mxu0 0
      %5350 = vmatpush1.bf16.msra.mxu0 %v5330
      %5351 = vmatprep.subr.bf16.mxu0 0
      %5352 = vmatpush1.bf16.msra.mxu0 %v5329
      %5353 = vmatprep.subr.bf16.mxu0 0
      %5354 = vmatpush2.bf16.msra.mxu0 0
      %5355 = vmatprep.subr.bf16.mxu0 0
      %5356 = vmatpush2.bf16.msra.mxu0 0
      %5357 = vmatprep.subr.bf16.mxu0 0
      %5358 = vmatpush2.bf16.msra.mxu0 0
      %5359 = vmatprep.subr.bf16.mxu0 0
      %5360 = vmatpush2.bf16.msra.mxu0 0
      %5361 = vmatprep.subr.bf16.mxu0 0
      %5362 = vmatpush2.bf16.msra.mxu0 0
      %5363 = vmatprep.subr.bf16.mxu0 0
      %5364 = vmatpush2.bf16.msra.mxu0 0
      %5365 = vmatprep.subr.bf16.mxu0 0
      %5366 = vmatpush2.bf16.msra.mxu0 0
      %5367 = vmatprep.subr.bf16.mxu0 0
      %5368 = vmatpush2.bf16.msra.mxu0 0
      %5369 = vmatprep.mubr.bf16.mxu0 0
      %5370 = vmatmul.mubr.bf16.gmra.mxu0 %v5321
      %v5371 = vpop.f32.mrf.mxu0
      %v5372 = vadd.f32 0.0, %v5371
      %v5373 = vpop.f32.mrf.mxu0
      %v5374 = vpop.f32.mrf.mxu0
      %v5375 = vadd.f32 0.0, %v5374
      %v5376 = vpop.f32.mrf.mxu0
      %5377 = vmatprep.mubr.bf16.mxu0 0
      %5378 = vmatmul.mubr.bf16.gmra.mxu0 %v5322
      %v5379 = vpop.f32.mrf.mxu0
      %v5380 = vadd.f32 0.0, %v5379
      %v5381 = vpop.f32.mrf.mxu0
      %v5382 = vpop.f32.mrf.mxu0
      %v5383 = vadd.f32 0.0, %v5382
      %v5384 = vpop.f32.mrf.mxu0
      %5385 = vmatprep.mubr.bf16.mxu0 0
      %5386 = vmatmul.mubr.bf16.gmra.mxu0 %v5323
      %v5387 = vpop.f32.mrf.mxu0
      %v5388 = vadd.f32 0.0, %v5387
      %v5389 = vpop.f32.mrf.mxu0
      %v5390 = vpop.f32.mrf.mxu0
      %v5391 = vadd.f32 0.0, %v5390
      %v5392 = vpop.f32.mrf.mxu0
      %5393 = vmatprep.mubr.bf16.mxu0 0
      %5394 = vmatmul.mubr.bf16.gmra.mxu0 %v5324
      %v5395 = vpop.f32.mrf.mxu0
      %v5396 = vadd.f32 0.0, %v5395
      %v5397 = vpop.f32.mrf.mxu0
      %v5398 = vpop.f32.mrf.mxu0
      %v5399 = vadd.f32 0.0, %v5398
      %v5400 = vpop.f32.mrf.mxu0
      %5401 = vmatprep.mubr.bf16.mxu0 0
      %5402 = vmatmul.mubr.bf16.gmra.mxu0 %v5325
      %v5403 = vpop.f32.mrf.mxu0
      %v5404 = vadd.f32 0.0, %v5403
      %v5405 = vpop.f32.mrf.mxu0
      %v5406 = vpop.f32.mrf.mxu0
      %v5407 = vadd.f32 0.0, %v5406
      %v5408 = vpop.f32.mrf.mxu0
      %5409 = vmatprep.mubr.bf16.mxu0 0
      %5410 = vmatmul.mubr.bf16.gmra.mxu0 %v5326
      %v5411 = vpop.f32.mrf.mxu0
      %v5412 = vadd.f32 0.0, %v5411
      %v5413 = vpop.f32.mrf.mxu0
      %v5414 = vpop.f32.mrf.mxu0
      %v5415 = vadd.f32 0.0, %v5414
      %v5416 = vpop.f32.mrf.mxu0
      %5417 = vmatprep.mubr.bf16.mxu0 0
      %5418 = vmatmul.mubr.bf16.gmra.mxu0 %v5327
      %v5419 = vpop.f32.mrf.mxu0
      %v5420 = vadd.f32 0.0, %v5419
      %v5421 = vpop.f32.mrf.mxu0
      %v5422 = vpop.f32.mrf.mxu0
      %v5423 = vadd.f32 0.0, %v5422
      %v5424 = vpop.f32.mrf.mxu0
      %5425 = vmatprep.mubr.bf16.mxu0 0
      %5426 = vmatmul.mubr.bf16.gmra.mxu0 %v5328
      %v5427 = vpop.f32.mrf.mxu0
      %v5428 = vadd.f32 0.0, %v5427
      %v5429 = vpop.f32.mrf.mxu0
      %v5430 = vpop.f32.mrf.mxu0
      %v5431 = vadd.f32 0.0, %v5430
      %v5432 = vpop.f32.mrf.mxu0
      %5433 = vdwg.mxu0
      %v5434 = vpack.c.bf16 %v5375, %v5372
      %v5435 = vpack.c.bf16 %v5383, %v5380
      %v5436 = vpack.c.bf16 %v5391, %v5388
      %v5437 = vpack.c.bf16 %v5399, %v5396
      %v5438 = vpack.c.bf16 %v5407, %v5404
      %v5439 = vpack.c.bf16 %v5415, %v5412
      %v5440 = vpack.c.bf16 %v5423, %v5420
      %v5441 = vpack.c.bf16 %v5431, %v5428
      %s5442 = scalar_lea.vmem %s10, 6
      %v5443 = vld [vmem:[%s5442] sm:$0x3]
      %v5445 = vsel %vm1303, %v5434, 0
      %v5448 = vsel %vm1303, %v5435, 0
      %v5451 = vsel %vm1303, %v5436, 0
      %v5454 = vsel %vm1303, %v5437, 0
      %v5457 = vsel %vm1303, %v5438, 0
      %v5460 = vsel %vm1303, %v5439, 0
      %v5463 = vsel %vm1303, %v5440, 0
      %v5466 = vsel %vm1303, %v5441, 0
      %v5469 = vsel %vm1771, %v5443, 0
      %5471 = vmatprep.subr.bf16.mxu0 0
      %5472 = vmatpush1.bf16.msra.mxu0 0
      %5473 = vmatprep.subr.bf16.mxu0 0
      %5474 = vmatpush1.bf16.msra.mxu0 0
      %5475 = vmatprep.subr.bf16.mxu0 0
      %5476 = vmatpush1.bf16.msra.mxu0 0
      %5477 = vmatprep.subr.bf16.mxu0 0
      %5478 = vmatpush1.bf16.msra.mxu0 0
      %5479 = vmatprep.subr.bf16.mxu0 0
      %5480 = vmatpush1.bf16.msra.mxu0 0
      %5481 = vmatprep.subr.bf16.mxu0 0
      %5482 = vmatpush1.bf16.msra.mxu0 0
      %5483 = vmatprep.subr.bf16.mxu0 0
      %5484 = vmatpush1.bf16.msra.mxu0 0
      %5485 = vmatprep.subr.bf16.mxu0 0
      %5486 = vmatpush1.bf16.msra.mxu0 %v5469
      %5487 = vmatprep.subr.bf16.mxu0 0
      %5488 = vmatpush2.bf16.msra.mxu0 0
      %5489 = vmatprep.subr.bf16.mxu0 0
      %5490 = vmatpush2.bf16.msra.mxu0 0
      %5491 = vmatprep.subr.bf16.mxu0 0
      %5492 = vmatpush2.bf16.msra.mxu0 0
      %5493 = vmatprep.subr.bf16.mxu0 0
      %5494 = vmatpush2.bf16.msra.mxu0 0
      %5495 = vmatprep.subr.bf16.mxu0 0
      %5496 = vmatpush2.bf16.msra.mxu0 0
      %5497 = vmatprep.subr.bf16.mxu0 0
      %5498 = vmatpush2.bf16.msra.mxu0 0
      %5499 = vmatprep.subr.bf16.mxu0 0
      %5500 = vmatpush2.bf16.msra.mxu0 0
      %5501 = vmatprep.subr.bf16.mxu0 0
      %5502 = vmatpush2.bf16.msra.mxu0 0
      %5503 = vmatprep.mubr.bf16.mxu0 0
      %5504 = vmatmul.mubr.bf16.gmra.mxu0 %v5445
      %v5505 = vpop.f32.mrf.mxu0
      %v5506 = vadd.f32 0.0, %v5505
      %v5507 = vpop.f32.mrf.mxu0
      %v5508 = vpop.f32.mrf.mxu0
      %v5509 = vadd.f32 0.0, %v5508
      %v5510 = vpop.f32.mrf.mxu0
      %5511 = vmatprep.mubr.bf16.mxu0 0
      %5512 = vmatmul.mubr.bf16.gmra.mxu0 %v5448
      %v5513 = vpop.f32.mrf.mxu0
      %v5514 = vadd.f32 0.0, %v5513
      %v5515 = vpop.f32.mrf.mxu0
      %v5516 = vpop.f32.mrf.mxu0
      %v5517 = vadd.f32 0.0, %v5516
      %v5518 = vpop.f32.mrf.mxu0
      %5519 = vmatprep.mubr.bf16.mxu0 0
      %5520 = vmatmul.mubr.bf16.gmra.mxu0 %v5451
      %v5521 = vpop.f32.mrf.mxu0
      %v5522 = vadd.f32 0.0, %v5521
      %v5523 = vpop.f32.mrf.mxu0
      %v5524 = vpop.f32.mrf.mxu0
      %v5525 = vadd.f32 0.0, %v5524
      %v5526 = vpop.f32.mrf.mxu0
      %5527 = vmatprep.mubr.bf16.mxu0 0
      %5528 = vmatmul.mubr.bf16.gmra.mxu0 %v5454
      %v5529 = vpop.f32.mrf.mxu0
      %v5530 = vadd.f32 0.0, %v5529
      %v5531 = vpop.f32.mrf.mxu0
      %v5532 = vpop.f32.mrf.mxu0
      %v5533 = vadd.f32 0.0, %v5532
      %v5534 = vpop.f32.mrf.mxu0
      %5535 = vmatprep.mubr.bf16.mxu0 0
      %5536 = vmatmul.mubr.bf16.gmra.mxu0 %v5457
      %v5537 = vpop.f32.mrf.mxu0
      %v5538 = vadd.f32 0.0, %v5537
      %v5539 = vpop.f32.mrf.mxu0
      %v5540 = vpop.f32.mrf.mxu0
      %v5541 = vadd.f32 0.0, %v5540
      %v5542 = vpop.f32.mrf.mxu0
      %5543 = vmatprep.mubr.bf16.mxu0 0
      %5544 = vmatmul.mubr.bf16.gmra.mxu0 %v5460
      %v5545 = vpop.f32.mrf.mxu0
      %v5546 = vadd.f32 0.0, %v5545
      %v5547 = vpop.f32.mrf.mxu0
      %v5548 = vpop.f32.mrf.mxu0
      %v5549 = vadd.f32 0.0, %v5548
      %v5550 = vpop.f32.mrf.mxu0
      %5551 = vmatprep.mubr.bf16.mxu0 0
      %5552 = vmatmul.mubr.bf16.gmra.mxu0 %v5463
      %v5553 = vpop.f32.mrf.mxu0
      %v5554 = vadd.f32 0.0, %v5553
      %v5555 = vpop.f32.mrf.mxu0
      %v5556 = vpop.f32.mrf.mxu0
      %v5557 = vadd.f32 0.0, %v5556
      %v5558 = vpop.f32.mrf.mxu0
      %5559 = vmatprep.mubr.bf16.mxu0 0
      %5560 = vmatmul.mubr.bf16.gmra.mxu0 %v5466
      %v5561 = vpop.f32.mrf.mxu0
      %v5562 = vadd.f32 0.0, %v5561
      %v5563 = vpop.f32.mrf.mxu0
      %v5564 = vpop.f32.mrf.mxu0
      %v5565 = vadd.f32 0.0, %v5564
      %v5566 = vpop.f32.mrf.mxu0
      %5567 = vdwg.mxu0
      %v5568 = vadd.f32 %v4638, %v5506
      %v5569 = vadd.f32 %v4639, %v5509
      %v5570 = vadd.f32 %v4640, %v5514
      %v5571 = vadd.f32 %v4641, %v5517
      %v5572 = vadd.f32 %v4642, %v5522
      %v5573 = vadd.f32 %v4643, %v5525
      %v5574 = vadd.f32 %v4644, %v5530
      %v5575 = vadd.f32 %v4645, %v5533
      %v5576 = vadd.f32 %v4646, %v5538
      %v5577 = vadd.f32 %v4647, %v5541
      %v5578 = vadd.f32 %v4648, %v5546
      %v5579 = vadd.f32 %v4649, %v5549
      %v5580 = vadd.f32 %v4650, %v5554
      %v5581 = vadd.f32 %v4651, %v5557
      %v5582 = vadd.f32 %v4652, %v5562
      %v5583 = vadd.f32 %v4653, %v5565
      %s5584 = scalar_lea.vmem %s12, 1
      %v5585 = vld [vmem:[%s5584] sm:$0x1]
      %s5586 = scalar_lea.vmem %s13, 1
      %v5587 = vld [vmem:[%s5586] sm:$0x1]
      %v5588 = vsel %vm945, %v5568, 0.0
      %5589 = vadd.xlane.f32.xlu0 %v5588
      %v5590 = vpop.xlane.xlu0 %5589
      %v5591 = vsel %vm945, %v5569, 0.0
      %5592 = vadd.xlane.f32.xlu0 %v5591
      %v5593 = vpop.xlane.xlu0 %5592
      %v5594 = vsel %vm945, %v5570, 0.0
      %5595 = vadd.xlane.f32.xlu0 %v5594
      %v5596 = vpop.xlane.xlu0 %5595
      %v5597 = vsel %vm945, %v5571, 0.0
      %5598 = vadd.xlane.f32.xlu0 %v5597
      %v5599 = vpop.xlane.xlu0 %5598
      %v5600 = vsel %vm945, %v5572, 0.0
      %5601 = vadd.xlane.f32.xlu0 %v5600
      %v5602 = vpop.xlane.xlu0 %5601
      %v5603 = vsel %vm945, %v5573, 0.0
      %5604 = vadd.xlane.f32.xlu0 %v5603
      %v5605 = vpop.xlane.xlu0 %5604
      %v5606 = vsel %vm945, %v5574, 0.0
      %5607 = vadd.xlane.f32.xlu0 %v5606
      %v5608 = vpop.xlane.xlu0 %5607
      %v5609 = vsel %vm945, %v5575, 0.0
      %5610 = vadd.xlane.f32.xlu0 %v5609
      %v5611 = vpop.xlane.xlu0 %5610
      %v5612 = vsel %vm945, %v5576, 0.0
      %5613 = vadd.xlane.f32.xlu0 %v5612
      %v5614 = vpop.xlane.xlu0 %5613
      %v5615 = vsel %vm945, %v5577, 0.0
      %5616 = vadd.xlane.f32.xlu0 %v5615
      %v5617 = vpop.xlane.xlu0 %5616
      %v5618 = vsel %vm945, %v5578, 0.0
      %5619 = vadd.xlane.f32.xlu0 %v5618
      %v5620 = vpop.xlane.xlu0 %5619
      %v5621 = vsel %vm945, %v5579, 0.0
      %5622 = vadd.xlane.f32.xlu0 %v5621
      %v5623 = vpop.xlane.xlu0 %5622
      %v5624 = vsel %vm945, %v5580, 0.0
      %5625 = vadd.xlane.f32.xlu0 %v5624
      %v5626 = vpop.xlane.xlu0 %5625
      %v5627 = vsel %vm945, %v5581, 0.0
      %5628 = vadd.xlane.f32.xlu0 %v5627
      %v5629 = vpop.xlane.xlu0 %5628
      %v5630 = vsel %vm945, %v5582, 0.0
      %5631 = vadd.xlane.f32.xlu0 %v5630
      %v5632 = vpop.xlane.xlu0 %5631
      %v5633 = vsel %vm945, %v5583, 0.0
      %5634 = vadd.xlane.f32.xlu0 %v5633
      %v5635 = vpop.xlane.xlu0 %5634
      %v5636 = vmul.f32 %v5590, %v2868
      %v5637 = vmul.f32 %v5593, %v2868
      %v5638 = vmul.f32 %v5596, %v2868
      %v5639 = vmul.f32 %v5599, %v2868
      %v5640 = vmul.f32 %v5602, %v2868
      %v5641 = vmul.f32 %v5605, %v2868
      %v5642 = vmul.f32 %v5608, %v2868
      %v5643 = vmul.f32 %v5611, %v2868
      %v5644 = vmul.f32 %v5614, %v2868
      %v5645 = vmul.f32 %v5617, %v2868
      %v5646 = vmul.f32 %v5620, %v2868
      %v5647 = vmul.f32 %v5623, %v2868
      %v5648 = vmul.f32 %v5626, %v2868
      %v5649 = vmul.f32 %v5629, %v2868
      %v5650 = vmul.f32 %v5632, %v2868
      %v5651 = vmul.f32 %v5635, %v2868
      %v5652 = vsub.f32 %v5568, %v5636
      %v5653 = vsub.f32 %v5569, %v5637
      %v5654 = vsub.f32 %v5570, %v5638
      %v5655 = vsub.f32 %v5571, %v5639
      %v5656 = vsub.f32 %v5572, %v5640
      %v5657 = vsub.f32 %v5573, %v5641
      %v5658 = vsub.f32 %v5574, %v5642
      %v5659 = vsub.f32 %v5575, %v5643
      %v5660 = vsub.f32 %v5576, %v5644
      %v5661 = vsub.f32 %v5577, %v5645
      %v5662 = vsub.f32 %v5578, %v5646
      %v5663 = vsub.f32 %v5579, %v5647
      %v5664 = vsub.f32 %v5580, %v5648
      %v5665 = vsub.f32 %v5581, %v5649
      %v5666 = vsub.f32 %v5582, %v5650
      %v5667 = vsub.f32 %v5583, %v5651
      %v5668 = vmul.f32 %v5652, %v5652
      %v5669 = vmul.f32 %v5653, %v5653
      %v5670 = vmul.f32 %v5654, %v5654
      %v5671 = vmul.f32 %v5655, %v5655
      %v5672 = vmul.f32 %v5656, %v5656
      %v5673 = vmul.f32 %v5657, %v5657
      %v5674 = vmul.f32 %v5658, %v5658
      %v5675 = vmul.f32 %v5659, %v5659
      %v5676 = vmul.f32 %v5660, %v5660
      %v5677 = vmul.f32 %v5661, %v5661
      %v5678 = vmul.f32 %v5662, %v5662
      %v5679 = vmul.f32 %v5663, %v5663
      %v5680 = vmul.f32 %v5664, %v5664
      %v5681 = vmul.f32 %v5665, %v5665
      %v5682 = vmul.f32 %v5666, %v5666
      %v5683 = vmul.f32 %v5667, %v5667
      %v5684 = vsel %vm945, %v5668, 0.0
      %5685 = vadd.xlane.f32.xlu0 %v5684
      %v5686 = vpop.xlane.xlu0 %5685
      %v5687 = vsel %vm945, %v5669, 0.0
      %5688 = vadd.xlane.f32.xlu0 %v5687
      %v5689 = vpop.xlane.xlu0 %5688
      %v5690 = vsel %vm945, %v5670, 0.0
      %5691 = vadd.xlane.f32.xlu0 %v5690
      %v5692 = vpop.xlane.xlu0 %5691
      %v5693 = vsel %vm945, %v5671, 0.0
      %5694 = vadd.xlane.f32.xlu0 %v5693
      %v5695 = vpop.xlane.xlu0 %5694
      %v5696 = vsel %vm945, %v5672, 0.0
      %5697 = vadd.xlane.f32.xlu0 %v5696
      %v5698 = vpop.xlane.xlu0 %5697
      %v5699 = vsel %vm945, %v5673, 0.0
      %5700 = vadd.xlane.f32.xlu0 %v5699
      %v5701 = vpop.xlane.xlu0 %5700
      %v5702 = vsel %vm945, %v5674, 0.0
      %5703 = vadd.xlane.f32.xlu0 %v5702
      %v5704 = vpop.xlane.xlu0 %5703
      %v5705 = vsel %vm945, %v5675, 0.0
      %5706 = vadd.xlane.f32.xlu0 %v5705
      %v5707 = vpop.xlane.xlu0 %5706
      %v5708 = vsel %vm945, %v5676, 0.0
      %5709 = vadd.xlane.f32.xlu0 %v5708
      %v5710 = vpop.xlane.xlu0 %5709
      %v5711 = vsel %vm945, %v5677, 0.0
      %5712 = vadd.xlane.f32.xlu0 %v5711
      %v5713 = vpop.xlane.xlu0 %5712
      %v5714 = vsel %vm945, %v5678, 0.0
      %5715 = vadd.xlane.f32.xlu0 %v5714
      %v5716 = vpop.xlane.xlu0 %5715
      %v5717 = vsel %vm945, %v5679, 0.0
      %5718 = vadd.xlane.f32.xlu0 %v5717
      %v5719 = vpop.xlane.xlu0 %5718
      %v5720 = vsel %vm945, %v5680, 0.0
      %5721 = vadd.xlane.f32.xlu0 %v5720
      %v5722 = vpop.xlane.xlu0 %5721
      %v5723 = vsel %vm945, %v5681, 0.0
      %5724 = vadd.xlane.f32.xlu0 %v5723
      %v5725 = vpop.xlane.xlu0 %5724
      %v5726 = vsel %vm945, %v5682, 0.0
      %5727 = vadd.xlane.f32.xlu0 %v5726
      %v5728 = vpop.xlane.xlu0 %5727
      %v5729 = vsel %vm945, %v5683, 0.0
      %5730 = vadd.xlane.f32.xlu0 %v5729
      %v5731 = vpop.xlane.xlu0 %5730
      %v5732 = vmul.f32 %v5686, %v2868
      %v5733 = vmul.f32 %v5689, %v2868
      %v5734 = vmul.f32 %v5692, %v2868
      %v5735 = vmul.f32 %v5695, %v2868
      %v5736 = vmul.f32 %v5698, %v2868
      %v5737 = vmul.f32 %v5701, %v2868
      %v5738 = vmul.f32 %v5704, %v2868
      %v5739 = vmul.f32 %v5707, %v2868
      %v5740 = vmul.f32 %v5710, %v2868
      %v5741 = vmul.f32 %v5713, %v2868
      %v5742 = vmul.f32 %v5716, %v2868
      %v5743 = vmul.f32 %v5719, %v2868
      %v5744 = vmul.f32 %v5722, %v2868
      %v5745 = vmul.f32 %v5725, %v2868
      %v5746 = vmul.f32 %v5728, %v2868
      %v5747 = vmul.f32 %v5731, %v2868
      %v5748 = vadd.f32 %v5732, 1e-05
      %v5749 = vadd.f32 %v5733, 1e-05
      %v5750 = vadd.f32 %v5734, 1e-05
      %v5751 = vadd.f32 %v5735, 1e-05
      %v5752 = vadd.f32 %v5736, 1e-05
      %v5753 = vadd.f32 %v5737, 1e-05
      %v5754 = vadd.f32 %v5738, 1e-05
      %v5755 = vadd.f32 %v5739, 1e-05
      %v5756 = vadd.f32 %v5740, 1e-05
      %v5757 = vadd.f32 %v5741, 1e-05
      %v5758 = vadd.f32 %v5742, 1e-05
      %v5759 = vadd.f32 %v5743, 1e-05
      %v5760 = vadd.f32 %v5744, 1e-05
      %v5761 = vadd.f32 %v5745, 1e-05
      %v5762 = vadd.f32 %v5746, 1e-05
      %v5763 = vadd.f32 %v5747, 1e-05
      %v5764 = vrsqrt.pop %v5748
      %v5765 = vrsqrt.pop %v5749
      %v5766 = vrsqrt.pop %v5750
      %v5767 = vrsqrt.pop %v5751
      %v5768 = vrsqrt.pop %v5752
      %v5769 = vrsqrt.pop %v5753
      %v5770 = vrsqrt.pop %v5754
      %v5771 = vrsqrt.pop %v5755
      %v5772 = vrsqrt.pop %v5756
      %v5773 = vrsqrt.pop %v5757
      %v5774 = vrsqrt.pop %v5758
      %v5775 = vrsqrt.pop %v5759
      %v5776 = vrsqrt.pop %v5760
      %v5777 = vrsqrt.pop %v5761
      %v5778 = vrsqrt.pop %v5762
      %v5779 = vrsqrt.pop %v5763
      %v5780 = vmul.f32 %v5652, %v5764
      %v5781 = vmul.f32 %v5653, %v5765
      %v5782 = vmul.f32 %v5654, %v5766
      %v5783 = vmul.f32 %v5655, %v5767
      %v5784 = vmul.f32 %v5656, %v5768
      %v5785 = vmul.f32 %v5657, %v5769
      %v5786 = vmul.f32 %v5658, %v5770
      %v5787 = vmul.f32 %v5659, %v5771
      %v5788 = vmul.f32 %v5660, %v5772
      %v5789 = vmul.f32 %v5661, %v5773
      %v5790 = vmul.f32 %v5662, %v5774
      %v5791 = vmul.f32 %v5663, %v5775
      %v5792 = vmul.f32 %v5664, %v5776
      %v5793 = vmul.f32 %v5665, %v5777
      %v5794 = vmul.f32 %v5666, %v5778
      %v5795 = vmul.f32 %v5667, %v5779
      %v5797 = vlaneseq
      %v5798 = vshrl.u32 %v5797, 7
      %v5799 = vsub.s32 0, %v5798
      %v5800 = vrot.slane %v5585, %v5799
      %v5802 = vmul.f32 %v5780, %v5800
      %v5803 = vmul.f32 %v5781, %v5800
      %v5804 = vmul.f32 %v5782, %v5800
      %v5805 = vmul.f32 %v5783, %v5800
      %v5806 = vmul.f32 %v5784, %v5800
      %v5807 = vmul.f32 %v5785, %v5800
      %v5808 = vmul.f32 %v5786, %v5800
      %v5809 = vmul.f32 %v5787, %v5800
      %v5810 = vmul.f32 %v5788, %v5800
      %v5811 = vmul.f32 %v5789, %v5800
      %v5812 = vmul.f32 %v5790, %v5800
      %v5813 = vmul.f32 %v5791, %v5800
      %v5814 = vmul.f32 %v5792, %v5800
      %v5815 = vmul.f32 %v5793, %v5800
      %v5816 = vmul.f32 %v5794, %v5800
      %v5817 = vmul.f32 %v5795, %v5800
      %v5819 = vlaneseq
      %v5820 = vshrl.u32 %v5819, 7
      %v5821 = vsub.s32 0, %v5820
      %v5822 = vrot.slane %v5587, %v5821
      %v5824 = vadd.f32 %v5802, %v5822
      %v5825 = vadd.f32 %v5803, %v5822
      %v5826 = vadd.f32 %v5804, %v5822
      %v5827 = vadd.f32 %v5805, %v5822
      %v5828 = vadd.f32 %v5806, %v5822
      %v5829 = vadd.f32 %v5807, %v5822
      %v5830 = vadd.f32 %v5808, %v5822
      %v5831 = vadd.f32 %v5809, %v5822
      %v5832 = vadd.f32 %v5810, %v5822
      %v5833 = vadd.f32 %v5811, %v5822
      %v5834 = vadd.f32 %v5812, %v5822
      %v5835 = vadd.f32 %v5813, %v5822
      %v5836 = vadd.f32 %v5814, %v5822
      %v5837 = vadd.f32 %v5815, %v5822
      %v5838 = vadd.f32 %v5816, %v5822
      %v5839 = vadd.f32 %v5817, %v5822
      %v5840 = vpack.c.bf16 %v5825, %v5824
      %v5841 = vpack.c.bf16 %v5827, %v5826
      %v5842 = vpack.c.bf16 %v5829, %v5828
      %v5843 = vpack.c.bf16 %v5831, %v5830
      %v5844 = vpack.c.bf16 %v5833, %v5832
      %v5845 = vpack.c.bf16 %v5835, %v5834
      %v5846 = vpack.c.bf16 %v5837, %v5836
      %v5847 = vpack.c.bf16 %v5839, %v5838
      %s5848 = scalar_lea.vmem %s14, 4
      %v5849 = vld [vmem:[%s5848] sm:$0xf]
      %s5850 = scalar_lea.vmem %s15, 1
      %v5851 = vld [vmem:[%s5850] sm:$0x1]
      %v5853 = vlaneseq
      %v5854 = vshrl.u32 %v5853, 7
      %v5855 = vsub.s32 0, %v5854
      %v5856 = vrot.slane %v5851, %v5855
      %v5859 = vsel %vm945, %v5840, 0
      %v5862 = vsel %vm945, %v5841, 0
      %v5865 = vsel %vm945, %v5842, 0
      %v5868 = vsel %vm945, %v5843, 0
      %v5871 = vsel %vm945, %v5844, 0
      %v5874 = vsel %vm945, %v5845, 0
      %v5877 = vsel %vm945, %v5846, 0
      %v5880 = vsel %vm945, %v5847, 0
      %v5883 = vsel %vm970, %v5849, 0
      %5885 = vmatprep.subr.bf16.mxu0 0
      %5886 = vmatpush1.bf16.msra.mxu0 0
      %5887 = vmatprep.subr.bf16.mxu0 0
      %5888 = vmatpush1.bf16.msra.mxu0 0
      %5889 = vmatprep.subr.bf16.mxu0 0
      %5890 = vmatpush1.bf16.msra.mxu0 0
      %5891 = vmatprep.subr.bf16.mxu0 0
      %5892 = vmatpush1.bf16.msra.mxu0 0
      %5893 = vmatprep.subr.bf16.mxu0 0
      %5894 = vmatpush1.bf16.msra.mxu0 0
      %5895 = vmatprep.subr.bf16.mxu0 0
      %5896 = vmatpush1.bf16.msra.mxu0 0
      %5897 = vmatprep.subr.bf16.mxu0 0
      %5898 = vmatpush1.bf16.msra.mxu0 0
      %5899 = vmatprep.subr.bf16.mxu0 0
      %5900 = vmatpush1.bf16.msra.mxu0 %v5883
      %5901 = vmatprep.subr.bf16.mxu0 0
      %5902 = vmatpush2.bf16.msra.mxu0 0
      %5903 = vmatprep.subr.bf16.mxu0 0
      %5904 = vmatpush2.bf16.msra.mxu0 0
      %5905 = vmatprep.subr.bf16.mxu0 0
      %5906 = vmatpush2.bf16.msra.mxu0 0
      %5907 = vmatprep.subr.bf16.mxu0 0
      %5908 = vmatpush2.bf16.msra.mxu0 0
      %5909 = vmatprep.subr.bf16.mxu0 0
      %5910 = vmatpush2.bf16.msra.mxu0 0
      %5911 = vmatprep.subr.bf16.mxu0 0
      %5912 = vmatpush2.bf16.msra.mxu0 0
      %5913 = vmatprep.subr.bf16.mxu0 0
      %5914 = vmatpush2.bf16.msra.mxu0 0
      %5915 = vmatprep.subr.bf16.mxu0 0
      %5916 = vmatpush2.bf16.msra.mxu0 0
      %5917 = vmatprep.mubr.bf16.mxu0 0
      %5918 = vmatmul.mubr.bf16.gmra.mxu0 %v5859
      %v5919 = vpop.f32.mrf.mxu0
      %v5920 = vadd.f32 %v5856, %v5919
      %v5921 = vpop.f32.mrf.mxu0
      %v5922 = vpop.f32.mrf.mxu0
      %v5923 = vadd.f32 %v5856, %v5922
      %v5924 = vpop.f32.mrf.mxu0
      %5925 = vmatprep.mubr.bf16.mxu0 0
      %5926 = vmatmul.mubr.bf16.gmra.mxu0 %v5862
      %v5927 = vpop.f32.mrf.mxu0
      %v5928 = vadd.f32 %v5856, %v5927
      %v5929 = vpop.f32.mrf.mxu0
      %v5930 = vpop.f32.mrf.mxu0
      %v5931 = vadd.f32 %v5856, %v5930
      %v5932 = vpop.f32.mrf.mxu0
      %5933 = vmatprep.mubr.bf16.mxu0 0
      %5934 = vmatmul.mubr.bf16.gmra.mxu0 %v5865
      %v5935 = vpop.f32.mrf.mxu0
      %v5936 = vadd.f32 %v5856, %v5935
      %v5937 = vpop.f32.mrf.mxu0
      %v5938 = vpop.f32.mrf.mxu0
      %v5939 = vadd.f32 %v5856, %v5938
      %v5940 = vpop.f32.mrf.mxu0
      %5941 = vmatprep.mubr.bf16.mxu0 0
      %5942 = vmatmul.mubr.bf16.gmra.mxu0 %v5868
      %v5943 = vpop.f32.mrf.mxu0
      %v5944 = vadd.f32 %v5856, %v5943
      %v5945 = vpop.f32.mrf.mxu0
      %v5946 = vpop.f32.mrf.mxu0
      %v5947 = vadd.f32 %v5856, %v5946
      %v5948 = vpop.f32.mrf.mxu0
      %5949 = vmatprep.mubr.bf16.mxu0 0
      %5950 = vmatmul.mubr.bf16.gmra.mxu0 %v5871
      %v5951 = vpop.f32.mrf.mxu0
      %v5952 = vadd.f32 %v5856, %v5951
      %v5953 = vpop.f32.mrf.mxu0
      %v5954 = vpop.f32.mrf.mxu0
      %v5955 = vadd.f32 %v5856, %v5954
      %v5956 = vpop.f32.mrf.mxu0
      %5957 = vmatprep.mubr.bf16.mxu0 0
      %5958 = vmatmul.mubr.bf16.gmra.mxu0 %v5874
      %v5959 = vpop.f32.mrf.mxu0
      %v5960 = vadd.f32 %v5856, %v5959
      %v5961 = vpop.f32.mrf.mxu0
      %v5962 = vpop.f32.mrf.mxu0
      %v5963 = vadd.f32 %v5856, %v5962
      %v5964 = vpop.f32.mrf.mxu0
      %5965 = vmatprep.mubr.bf16.mxu0 0
      %5966 = vmatmul.mubr.bf16.gmra.mxu0 %v5877
      %v5967 = vpop.f32.mrf.mxu0
      %v5968 = vadd.f32 %v5856, %v5967
      %v5969 = vpop.f32.mrf.mxu0
      %v5970 = vpop.f32.mrf.mxu0
      %v5971 = vadd.f32 %v5856, %v5970
      %v5972 = vpop.f32.mrf.mxu0
      %5973 = vmatprep.mubr.bf16.mxu0 0
      %5974 = vmatmul.mubr.bf16.gmra.mxu0 %v5880
      %v5975 = vpop.f32.mrf.mxu0
      %v5976 = vadd.f32 %v5856, %v5975
      %v5977 = vpop.f32.mrf.mxu0
      %v5978 = vpop.f32.mrf.mxu0
      %v5979 = vadd.f32 %v5856, %v5978
      %v5980 = vpop.f32.mrf.mxu0
      %5981 = vdwg.mxu0
      %v5982 = vmax.f32 %v5920, 0.0
      %v5983 = vmax.f32 %v5923, 0.0
      %v5984 = vmax.f32 %v5928, 0.0
      %v5985 = vmax.f32 %v5931, 0.0
      %v5986 = vmax.f32 %v5936, 0.0
      %v5987 = vmax.f32 %v5939, 0.0
      %v5988 = vmax.f32 %v5944, 0.0
      %v5989 = vmax.f32 %v5947, 0.0
      %v5990 = vmax.f32 %v5952, 0.0
      %v5991 = vmax.f32 %v5955, 0.0
      %v5992 = vmax.f32 %v5960, 0.0
      %v5993 = vmax.f32 %v5963, 0.0
      %v5994 = vmax.f32 %v5968, 0.0
      %v5995 = vmax.f32 %v5971, 0.0
      %v5996 = vmax.f32 %v5976, 0.0
      %v5997 = vmax.f32 %v5979, 0.0
      %v5998 = vpack.c.bf16 %v5983, %v5982
      %v5999 = vpack.c.bf16 %v5985, %v5984
      %v6000 = vpack.c.bf16 %v5987, %v5986
      %v6001 = vpack.c.bf16 %v5989, %v5988
      %v6002 = vpack.c.bf16 %v5991, %v5990
      %v6003 = vpack.c.bf16 %v5993, %v5992
      %v6004 = vpack.c.bf16 %v5995, %v5994
      %v6005 = vpack.c.bf16 %v5997, %v5996
      %s6006 = scalar_lea.vmem %s16, 16
      %v6007 = vld [vmem:[%s6006] sm:$0xf]
      %v6008 = vld [vmem:[%s6006 + $0x4] sm:$0xf]
      %v6009 = vld [vmem:[%s6006 + $0x8] sm:$0xf]
      %v6010 = vld [vmem:[%s6006 + $0xc] sm:$0xf]
      %v6015 = vunpack.c.l.b16 %v6007
      %v6016 = vunpack.c.l.b16 %v6008
      %v6017 = vunpack.c.l.b16 %v6009
      %v6018 = vunpack.c.l.b16 %v6010
      %v6019 = vpack.c.b16 %v6016, %v6015
      %v6020 = vpack.c.b16 %v6018, %v6017
      %v6024 = vsel %vm3253, %v5998, 0
      %v6027 = vsel %vm3253, %v5999, 0
      %v6030 = vsel %vm3253, %v6000, 0
      %v6033 = vsel %vm3253, %v6001, 0
      %v6036 = vsel %vm3253, %v6002, 0
      %v6039 = vsel %vm3253, %v6003, 0
      %v6042 = vsel %vm3253, %v6004, 0
      %v6045 = vsel %vm3253, %v6005, 0
      %6047 = vmatprep.subr.bf16.mxu0 0
      %6048 = vmatpush1.bf16.msra.mxu0 0
      %6049 = vmatprep.subr.bf16.mxu0 0
      %6050 = vmatpush1.bf16.msra.mxu0 0
      %6051 = vmatprep.subr.bf16.mxu0 0
      %6052 = vmatpush1.bf16.msra.mxu0 0
      %6053 = vmatprep.subr.bf16.mxu0 0
      %6054 = vmatpush1.bf16.msra.mxu0 0
      %6055 = vmatprep.subr.bf16.mxu0 0
      %6056 = vmatpush1.bf16.msra.mxu0 0
      %6057 = vmatprep.subr.bf16.mxu0 0
      %6058 = vmatpush1.bf16.msra.mxu0 0
      %6059 = vmatprep.subr.bf16.mxu0 0
      %6060 = vmatpush1.bf16.msra.mxu0 %v6020
      %6061 = vmatprep.subr.bf16.mxu0 0
      %6062 = vmatpush1.bf16.msra.mxu0 %v6019
      %6063 = vmatprep.subr.bf16.mxu0 0
      %6064 = vmatpush2.bf16.msra.mxu0 0
      %6065 = vmatprep.subr.bf16.mxu0 0
      %6066 = vmatpush2.bf16.msra.mxu0 0
      %6067 = vmatprep.subr.bf16.mxu0 0
      %6068 = vmatpush2.bf16.msra.mxu0 0
      %6069 = vmatprep.subr.bf16.mxu0 0
      %6070 = vmatpush2.bf16.msra.mxu0 0
      %6071 = vmatprep.subr.bf16.mxu0 0
      %6072 = vmatpush2.bf16.msra.mxu0 0
      %6073 = vmatprep.subr.bf16.mxu0 0
      %6074 = vmatpush2.bf16.msra.mxu0 0
      %6075 = vmatprep.subr.bf16.mxu0 0
      %6076 = vmatpush2.bf16.msra.mxu0 0
      %6077 = vmatprep.subr.bf16.mxu0 0
      %6078 = vmatpush2.bf16.msra.mxu0 0
      %6079 = vmatprep.mubr.bf16.mxu0 0
      %6080 = vmatmul.mubr.bf16.gmra.mxu0 %v6024
      %v6081 = vpop.f32.mrf.mxu0
      %v6082 = vadd.f32 0.0, %v6081
      %v6083 = vpop.f32.mrf.mxu0
      %v6084 = vpop.f32.mrf.mxu0
      %v6085 = vadd.f32 0.0, %v6084
      %v6086 = vpop.f32.mrf.mxu0
      %6087 = vmatprep.mubr.bf16.mxu0 0
      %6088 = vmatmul.mubr.bf16.gmra.mxu0 %v6027
      %v6089 = vpop.f32.mrf.mxu0
      %v6090 = vadd.f32 0.0, %v6089
      %v6091 = vpop.f32.mrf.mxu0
      %v6092 = vpop.f32.mrf.mxu0
      %v6093 = vadd.f32 0.0, %v6092
      %v6094 = vpop.f32.mrf.mxu0
      %6095 = vmatprep.mubr.bf16.mxu0 0
      %6096 = vmatmul.mubr.bf16.gmra.mxu0 %v6030
      %v6097 = vpop.f32.mrf.mxu0
      %v6098 = vadd.f32 0.0, %v6097
      %v6099 = vpop.f32.mrf.mxu0
      %v6100 = vpop.f32.mrf.mxu0
      %v6101 = vadd.f32 0.0, %v6100
      %v6102 = vpop.f32.mrf.mxu0
      %6103 = vmatprep.mubr.bf16.mxu0 0
      %6104 = vmatmul.mubr.bf16.gmra.mxu0 %v6033
      %v6105 = vpop.f32.mrf.mxu0
      %v6106 = vadd.f32 0.0, %v6105
      %v6107 = vpop.f32.mrf.mxu0
      %v6108 = vpop.f32.mrf.mxu0
      %v6109 = vadd.f32 0.0, %v6108
      %v6110 = vpop.f32.mrf.mxu0
      %6111 = vmatprep.mubr.bf16.mxu0 0
      %6112 = vmatmul.mubr.bf16.gmra.mxu0 %v6036
      %v6113 = vpop.f32.mrf.mxu0
      %v6114 = vadd.f32 0.0, %v6113
      %v6115 = vpop.f32.mrf.mxu0
      %v6116 = vpop.f32.mrf.mxu0
      %v6117 = vadd.f32 0.0, %v6116
      %v6118 = vpop.f32.mrf.mxu0
      %6119 = vmatprep.mubr.bf16.mxu0 0
      %6120 = vmatmul.mubr.bf16.gmra.mxu0 %v6039
      %v6121 = vpop.f32.mrf.mxu0
      %v6122 = vadd.f32 0.0, %v6121
      %v6123 = vpop.f32.mrf.mxu0
      %v6124 = vpop.f32.mrf.mxu0
      %v6125 = vadd.f32 0.0, %v6124
      %v6126 = vpop.f32.mrf.mxu0
      %6127 = vmatprep.mubr.bf16.mxu0 0
      %6128 = vmatmul.mubr.bf16.gmra.mxu0 %v6042
      %v6129 = vpop.f32.mrf.mxu0
      %v6130 = vadd.f32 0.0, %v6129
      %v6131 = vpop.f32.mrf.mxu0
      %v6132 = vpop.f32.mrf.mxu0
      %v6133 = vadd.f32 0.0, %v6132
      %v6134 = vpop.f32.mrf.mxu0
      %6135 = vmatprep.mubr.bf16.mxu0 0
      %6136 = vmatmul.mubr.bf16.gmra.mxu0 %v6045
      %v6137 = vpop.f32.mrf.mxu0
      %v6138 = vadd.f32 0.0, %v6137
      %v6139 = vpop.f32.mrf.mxu0
      %v6140 = vpop.f32.mrf.mxu0
      %v6141 = vadd.f32 0.0, %v6140
      %v6142 = vpop.f32.mrf.mxu0
      %6143 = vdwg.mxu0
      %v6144 = vadd.f32 %v5824, %v6082
      %v6145 = vadd.f32 %v5825, %v6085
      %v6146 = vadd.f32 %v5826, %v6090
      %v6147 = vadd.f32 %v5827, %v6093
      %v6148 = vadd.f32 %v5828, %v6098
      %v6149 = vadd.f32 %v5829, %v6101
      %v6150 = vadd.f32 %v5830, %v6106
      %v6151 = vadd.f32 %v5831, %v6109
      %v6152 = vadd.f32 %v5832, %v6114
      %v6153 = vadd.f32 %v5833, %v6117
      %v6154 = vadd.f32 %v5834, %v6122
      %v6155 = vadd.f32 %v5835, %v6125
      %v6156 = vadd.f32 %v5836, %v6130
      %v6157 = vadd.f32 %v5837, %v6133
      %v6158 = vadd.f32 %v5838, %v6138
      %v6159 = vadd.f32 %v5839, %v6141
      %s6160 = scalar_lea.vmem %s17, 1
      %v6161 = vld [vmem:[%s6160] sm:$0x1]
      %v6163 = vlaneseq
      %v6164 = vshrl.u32 %v6163, 7
      %v6165 = vsub.s32 0, %v6164
      %v6166 = vrot.slane %v6161, %v6165
      %v6168 = vadd.f32 %v6144, %v6166
      %v6169 = vadd.f32 %v6145, %v6166
      %v6170 = vadd.f32 %v6146, %v6166
      %v6171 = vadd.f32 %v6147, %v6166
      %v6172 = vadd.f32 %v6148, %v6166
      %v6173 = vadd.f32 %v6149, %v6166
      %v6174 = vadd.f32 %v6150, %v6166
      %v6175 = vadd.f32 %v6151, %v6166
      %v6176 = vadd.f32 %v6152, %v6166
      %v6177 = vadd.f32 %v6153, %v6166
      %v6178 = vadd.f32 %v6154, %v6166
      %v6179 = vadd.f32 %v6155, %v6166
      %v6180 = vadd.f32 %v6156, %v6166
      %v6181 = vadd.f32 %v6157, %v6166
      %v6182 = vadd.f32 %v6158, %v6166
      %v6183 = vadd.f32 %v6159, %v6166
      %s6184 = scalar_lea.vmem %s18, 1
      %v6185 = vld [vmem:[%s6184] sm:$0x1]
      %s6186 = scalar_lea.vmem %s19, 1
      %v6187 = vld [vmem:[%s6186] sm:$0x1]
      %v6188 = vsel %vm945, %v6168, 0.0
      %6189 = vadd.xlane.f32.xlu0 %v6188
      %v6190 = vpop.xlane.xlu0 %6189
      %v6191 = vsel %vm945, %v6169, 0.0
      %6192 = vadd.xlane.f32.xlu0 %v6191
      %v6193 = vpop.xlane.xlu0 %6192
      %v6194 = vsel %vm945, %v6170, 0.0
      %6195 = vadd.xlane.f32.xlu0 %v6194
      %v6196 = vpop.xlane.xlu0 %6195
      %v6197 = vsel %vm945, %v6171, 0.0
      %6198 = vadd.xlane.f32.xlu0 %v6197
      %v6199 = vpop.xlane.xlu0 %6198
      %v6200 = vsel %vm945, %v6172, 0.0
      %6201 = vadd.xlane.f32.xlu0 %v6200
      %v6202 = vpop.xlane.xlu0 %6201
      %v6203 = vsel %vm945, %v6173, 0.0
      %6204 = vadd.xlane.f32.xlu0 %v6203
      %v6205 = vpop.xlane.xlu0 %6204
      %v6206 = vsel %vm945, %v6174, 0.0
      %6207 = vadd.xlane.f32.xlu0 %v6206
      %v6208 = vpop.xlane.xlu0 %6207
      %v6209 = vsel %vm945, %v6175, 0.0
      %6210 = vadd.xlane.f32.xlu0 %v6209
      %v6211 = vpop.xlane.xlu0 %6210
      %v6212 = vsel %vm945, %v6176, 0.0
      %6213 = vadd.xlane.f32.xlu0 %v6212
      %v6214 = vpop.xlane.xlu0 %6213
      %v6215 = vsel %vm945, %v6177, 0.0
      %6216 = vadd.xlane.f32.xlu0 %v6215
      %v6217 = vpop.xlane.xlu0 %6216
      %v6218 = vsel %vm945, %v6178, 0.0
      %6219 = vadd.xlane.f32.xlu0 %v6218
      %v6220 = vpop.xlane.xlu0 %6219
      %v6221 = vsel %vm945, %v6179, 0.0
      %6222 = vadd.xlane.f32.xlu0 %v6221
      %v6223 = vpop.xlane.xlu0 %6222
      %v6224 = vsel %vm945, %v6180, 0.0
      %6225 = vadd.xlane.f32.xlu0 %v6224
      %v6226 = vpop.xlane.xlu0 %6225
      %v6227 = vsel %vm945, %v6181, 0.0
      %6228 = vadd.xlane.f32.xlu0 %v6227
      %v6229 = vpop.xlane.xlu0 %6228
      %v6230 = vsel %vm945, %v6182, 0.0
      %6231 = vadd.xlane.f32.xlu0 %v6230
      %v6232 = vpop.xlane.xlu0 %6231
      %v6233 = vsel %vm945, %v6183, 0.0
      %6234 = vadd.xlane.f32.xlu0 %v6233
      %v6235 = vpop.xlane.xlu0 %6234
      %v6236 = vmul.f32 %v6190, %v2868
      %v6237 = vmul.f32 %v6193, %v2868
      %v6238 = vmul.f32 %v6196, %v2868
      %v6239 = vmul.f32 %v6199, %v2868
      %v6240 = vmul.f32 %v6202, %v2868
      %v6241 = vmul.f32 %v6205, %v2868
      %v6242 = vmul.f32 %v6208, %v2868
      %v6243 = vmul.f32 %v6211, %v2868
      %v6244 = vmul.f32 %v6214, %v2868
      %v6245 = vmul.f32 %v6217, %v2868
      %v6246 = vmul.f32 %v6220, %v2868
      %v6247 = vmul.f32 %v6223, %v2868
      %v6248 = vmul.f32 %v6226, %v2868
      %v6249 = vmul.f32 %v6229, %v2868
      %v6250 = vmul.f32 %v6232, %v2868
      %v6251 = vmul.f32 %v6235, %v2868
      %v6252 = vsub.f32 %v6168, %v6236
      %v6253 = vsub.f32 %v6169, %v6237
      %v6254 = vsub.f32 %v6170, %v6238
      %v6255 = vsub.f32 %v6171, %v6239
      %v6256 = vsub.f32 %v6172, %v6240
      %v6257 = vsub.f32 %v6173, %v6241
      %v6258 = vsub.f32 %v6174, %v6242
      %v6259 = vsub.f32 %v6175, %v6243
      %v6260 = vsub.f32 %v6176, %v6244
      %v6261 = vsub.f32 %v6177, %v6245
      %v6262 = vsub.f32 %v6178, %v6246
      %v6263 = vsub.f32 %v6179, %v6247
      %v6264 = vsub.f32 %v6180, %v6248
      %v6265 = vsub.f32 %v6181, %v6249
      %v6266 = vsub.f32 %v6182, %v6250
      %v6267 = vsub.f32 %v6183, %v6251
      %v6268 = vmul.f32 %v6252, %v6252
      %v6269 = vmul.f32 %v6253, %v6253
      %v6270 = vmul.f32 %v6254, %v6254
      %v6271 = vmul.f32 %v6255, %v6255
      %v6272 = vmul.f32 %v6256, %v6256
      %v6273 = vmul.f32 %v6257, %v6257
      %v6274 = vmul.f32 %v6258, %v6258
      %v6275 = vmul.f32 %v6259, %v6259
      %v6276 = vmul.f32 %v6260, %v6260
      %v6277 = vmul.f32 %v6261, %v6261
      %v6278 = vmul.f32 %v6262, %v6262
      %v6279 = vmul.f32 %v6263, %v6263
      %v6280 = vmul.f32 %v6264, %v6264
      %v6281 = vmul.f32 %v6265, %v6265
      %v6282 = vmul.f32 %v6266, %v6266
      %v6283 = vmul.f32 %v6267, %v6267
      %v6284 = vsel %vm945, %v6268, 0.0
      %6285 = vadd.xlane.f32.xlu0 %v6284
      %v6286 = vpop.xlane.xlu0 %6285
      %v6287 = vsel %vm945, %v6269, 0.0
      %6288 = vadd.xlane.f32.xlu0 %v6287
      %v6289 = vpop.xlane.xlu0 %6288
      %v6290 = vsel %vm945, %v6270, 0.0
      %6291 = vadd.xlane.f32.xlu0 %v6290
      %v6292 = vpop.xlane.xlu0 %6291
      %v6293 = vsel %vm945, %v6271, 0.0
      %6294 = vadd.xlane.f32.xlu0 %v6293
      %v6295 = vpop.xlane.xlu0 %6294
      %v6296 = vsel %vm945, %v6272, 0.0
      %6297 = vadd.xlane.f32.xlu0 %v6296
      %v6298 = vpop.xlane.xlu0 %6297
      %v6299 = vsel %vm945, %v6273, 0.0
      %6300 = vadd.xlane.f32.xlu0 %v6299
      %v6301 = vpop.xlane.xlu0 %6300
      %v6302 = vsel %vm945, %v6274, 0.0
      %6303 = vadd.xlane.f32.xlu0 %v6302
      %v6304 = vpop.xlane.xlu0 %6303
      %v6305 = vsel %vm945, %v6275, 0.0
      %6306 = vadd.xlane.f32.xlu0 %v6305
      %v6307 = vpop.xlane.xlu0 %6306
      %v6308 = vsel %vm945, %v6276, 0.0
      %6309 = vadd.xlane.f32.xlu0 %v6308
      %v6310 = vpop.xlane.xlu0 %6309
      %v6311 = vsel %vm945, %v6277, 0.0
      %6312 = vadd.xlane.f32.xlu0 %v6311
      %v6313 = vpop.xlane.xlu0 %6312
      %v6314 = vsel %vm945, %v6278, 0.0
      %6315 = vadd.xlane.f32.xlu0 %v6314
      %v6316 = vpop.xlane.xlu0 %6315
      %v6317 = vsel %vm945, %v6279, 0.0
      %6318 = vadd.xlane.f32.xlu0 %v6317
      %v6319 = vpop.xlane.xlu0 %6318
      %v6320 = vsel %vm945, %v6280, 0.0
      %6321 = vadd.xlane.f32.xlu0 %v6320
      %v6322 = vpop.xlane.xlu0 %6321
      %v6323 = vsel %vm945, %v6281, 0.0
      %6324 = vadd.xlane.f32.xlu0 %v6323
      %v6325 = vpop.xlane.xlu0 %6324
      %v6326 = vsel %vm945, %v6282, 0.0
      %6327 = vadd.xlane.f32.xlu0 %v6326
      %v6328 = vpop.xlane.xlu0 %6327
      %v6329 = vsel %vm945, %v6283, 0.0
      %6330 = vadd.xlane.f32.xlu0 %v6329
      %v6331 = vpop.xlane.xlu0 %6330
      %v6332 = vmul.f32 %v6286, %v2868
      %v6333 = vmul.f32 %v6289, %v2868
      %v6334 = vmul.f32 %v6292, %v2868
      %v6335 = vmul.f32 %v6295, %v2868
      %v6336 = vmul.f32 %v6298, %v2868
      %v6337 = vmul.f32 %v6301, %v2868
      %v6338 = vmul.f32 %v6304, %v2868
      %v6339 = vmul.f32 %v6307, %v2868
      %v6340 = vmul.f32 %v6310, %v2868
      %v6341 = vmul.f32 %v6313, %v2868
      %v6342 = vmul.f32 %v6316, %v2868
      %v6343 = vmul.f32 %v6319, %v2868
      %v6344 = vmul.f32 %v6322, %v2868
      %v6345 = vmul.f32 %v6325, %v2868
      %v6346 = vmul.f32 %v6328, %v2868
      %v6347 = vmul.f32 %v6331, %v2868
      %v6348 = vadd.f32 %v6332, 1e-05
      %v6349 = vadd.f32 %v6333, 1e-05
      %v6350 = vadd.f32 %v6334, 1e-05
      %v6351 = vadd.f32 %v6335, 1e-05
      %v6352 = vadd.f32 %v6336, 1e-05
      %v6353 = vadd.f32 %v6337, 1e-05
      %v6354 = vadd.f32 %v6338, 1e-05
      %v6355 = vadd.f32 %v6339, 1e-05
      %v6356 = vadd.f32 %v6340, 1e-05
      %v6357 = vadd.f32 %v6341, 1e-05
      %v6358 = vadd.f32 %v6342, 1e-05
      %v6359 = vadd.f32 %v6343, 1e-05
      %v6360 = vadd.f32 %v6344, 1e-05
      %v6361 = vadd.f32 %v6345, 1e-05
      %v6362 = vadd.f32 %v6346, 1e-05
      %v6363 = vadd.f32 %v6347, 1e-05
      %v6364 = vrsqrt.pop %v6348
      %v6365 = vrsqrt.pop %v6349
      %v6366 = vrsqrt.pop %v6350
      %v6367 = vrsqrt.pop %v6351
      %v6368 = vrsqrt.pop %v6352
      %v6369 = vrsqrt.pop %v6353
      %v6370 = vrsqrt.pop %v6354
      %v6371 = vrsqrt.pop %v6355
      %v6372 = vrsqrt.pop %v6356
      %v6373 = vrsqrt.pop %v6357
      %v6374 = vrsqrt.pop %v6358
      %v6375 = vrsqrt.pop %v6359
      %v6376 = vrsqrt.pop %v6360
      %v6377 = vrsqrt.pop %v6361
      %v6378 = vrsqrt.pop %v6362
      %v6379 = vrsqrt.pop %v6363
      %v6380 = vmul.f32 %v6252, %v6364
      %v6381 = vmul.f32 %v6253, %v6365
      %v6382 = vmul.f32 %v6254, %v6366
      %v6383 = vmul.f32 %v6255, %v6367
      %v6384 = vmul.f32 %v6256, %v6368
      %v6385 = vmul.f32 %v6257, %v6369
      %v6386 = vmul.f32 %v6258, %v6370
      %v6387 = vmul.f32 %v6259, %v6371
      %v6388 = vmul.f32 %v6260, %v6372
      %v6389 = vmul.f32 %v6261, %v6373
      %v6390 = vmul.f32 %v6262, %v6374
      %v6391 = vmul.f32 %v6263, %v6375
      %v6392 = vmul.f32 %v6264, %v6376
      %v6393 = vmul.f32 %v6265, %v6377
      %v6394 = vmul.f32 %v6266, %v6378
      %v6395 = vmul.f32 %v6267, %v6379
      %v6397 = vlaneseq
      %v6398 = vshrl.u32 %v6397, 7
      %v6399 = vsub.s32 0, %v6398
      %v6400 = vrot.slane %v6185, %v6399
      %v6402 = vmul.f32 %v6380, %v6400
      %v6403 = vmul.f32 %v6381, %v6400
      %v6404 = vmul.f32 %v6382, %v6400
      %v6405 = vmul.f32 %v6383, %v6400
      %v6406 = vmul.f32 %v6384, %v6400
      %v6407 = vmul.f32 %v6385, %v6400
      %v6408 = vmul.f32 %v6386, %v6400
      %v6409 = vmul.f32 %v6387, %v6400
      %v6410 = vmul.f32 %v6388, %v6400
      %v6411 = vmul.f32 %v6389, %v6400
      %v6412 = vmul.f32 %v6390, %v6400
      %v6413 = vmul.f32 %v6391, %v6400
      %v6414 = vmul.f32 %v6392, %v6400
      %v6415 = vmul.f32 %v6393, %v6400
      %v6416 = vmul.f32 %v6394, %v6400
      %v6417 = vmul.f32 %v6395, %v6400
      %v6419 = vlaneseq
      %v6420 = vshrl.u32 %v6419, 7
      %v6421 = vsub.s32 0, %v6420
      %v6422 = vrot.slane %v6187, %v6421
      %v6424 = vadd.f32 %v6402, %v6422
      %v6425 = vadd.f32 %v6403, %v6422
      %v6426 = vadd.f32 %v6404, %v6422
      %v6427 = vadd.f32 %v6405, %v6422
      %v6428 = vadd.f32 %v6406, %v6422
      %v6429 = vadd.f32 %v6407, %v6422
      %v6430 = vadd.f32 %v6408, %v6422
      %v6431 = vadd.f32 %v6409, %v6422
      %v6432 = vadd.f32 %v6410, %v6422
      %v6433 = vadd.f32 %v6411, %v6422
      %v6434 = vadd.f32 %v6412, %v6422
      %v6435 = vadd.f32 %v6413, %v6422
      %v6436 = vadd.f32 %v6414, %v6422
      %v6437 = vadd.f32 %v6415, %v6422
      %v6438 = vadd.f32 %v6416, %v6422
      %v6439 = vadd.f32 %v6417, %v6422
      %v6440 = vpack.c.bf16 %v6425, %v6424
      %v6441 = vpack.c.bf16 %v6427, %v6426
      %v6442 = vpack.c.bf16 %v6429, %v6428
      %v6443 = vpack.c.bf16 %v6431, %v6430
      %v6444 = vpack.c.bf16 %v6433, %v6432
      %v6445 = vpack.c.bf16 %v6435, %v6434
      %v6446 = vpack.c.bf16 %v6437, %v6436
      %v6447 = vpack.c.bf16 %v6439, %v6438
      %v6448 = vld [vmem:[%s20] sm:$0xf]
      %v6449 = vld [vmem:[%s21] sm:$0x1]
      %v6451 = vlaneseq
      %v6452 = vshrl.u32 %v6451, 7
      %v6453 = vsub.s32 0, %v6452
      %v6454 = vrot.slane %v6449, %v6453
      %v6457 = vsel %vm945, %v6440, 0
      %v6460 = vsel %vm945, %v6441, 0
      %v6463 = vsel %vm945, %v6442, 0
      %v6466 = vsel %vm945, %v6443, 0
      %v6469 = vsel %vm945, %v6444, 0
      %v6472 = vsel %vm945, %v6445, 0
      %v6475 = vsel %vm945, %v6446, 0
      %v6478 = vsel %vm945, %v6447, 0
      %v6481 = vsel %vm970, %v6448, 0
      %6483 = vmatprep.subr.bf16.mxu0 0
      %6484 = vmatpush1.bf16.msra.mxu0 0
      %6485 = vmatprep.subr.bf16.mxu0 0
      %6486 = vmatpush1.bf16.msra.mxu0 0
      %6487 = vmatprep.subr.bf16.mxu0 0
      %6488 = vmatpush1.bf16.msra.mxu0 0
      %6489 = vmatprep.subr.bf16.mxu0 0
      %6490 = vmatpush1.bf16.msra.mxu0 0
      %6491 = vmatprep.subr.bf16.mxu0 0
      %6492 = vmatpush1.bf16.msra.mxu0 0
      %6493 = vmatprep.subr.bf16.mxu0 0
      %6494 = vmatpush1.bf16.msra.mxu0 0
      %6495 = vmatprep.subr.bf16.mxu0 0
      %6496 = vmatpush1.bf16.msra.mxu0 0
      %6497 = vmatprep.subr.bf16.mxu0 0
      %6498 = vmatpush1.bf16.msra.mxu0 %v6481
      %6499 = vmatprep.subr.bf16.mxu0 0
      %6500 = vmatpush2.bf16.msra.mxu0 0
      %6501 = vmatprep.subr.bf16.mxu0 0
      %6502 = vmatpush2.bf16.msra.mxu0 0
      %6503 = vmatprep.subr.bf16.mxu0 0
      %6504 = vmatpush2.bf16.msra.mxu0 0
      %6505 = vmatprep.subr.bf16.mxu0 0
      %6506 = vmatpush2.bf16.msra.mxu0 0
      %6507 = vmatprep.subr.bf16.mxu0 0
      %6508 = vmatpush2.bf16.msra.mxu0 0
      %6509 = vmatprep.subr.bf16.mxu0 0
      %6510 = vmatpush2.bf16.msra.mxu0 0
      %6511 = vmatprep.subr.bf16.mxu0 0
      %6512 = vmatpush2.bf16.msra.mxu0 0
      %6513 = vmatprep.subr.bf16.mxu0 0
      %6514 = vmatpush2.bf16.msra.mxu0 0
      %6515 = vmatprep.mubr.bf16.mxu0 0
      %6516 = vmatmul.mubr.bf16.gmra.mxu0 %v6457
      %v6517 = vpop.f32.mrf.mxu0
      %v6518 = vadd.f32 %v6454, %v6517
      %v6519 = vpop.f32.mrf.mxu0
      %v6520 = vpop.f32.mrf.mxu0
      %v6521 = vadd.f32 %v6454, %v6520
      %v6522 = vpop.f32.mrf.mxu0
      %6523 = vmatprep.mubr.bf16.mxu0 0
      %6524 = vmatmul.mubr.bf16.gmra.mxu0 %v6460
      %v6525 = vpop.f32.mrf.mxu0
      %v6526 = vadd.f32 %v6454, %v6525
      %v6527 = vpop.f32.mrf.mxu0
      %v6528 = vpop.f32.mrf.mxu0
      %v6529 = vadd.f32 %v6454, %v6528
      %v6530 = vpop.f32.mrf.mxu0
      %6531 = vmatprep.mubr.bf16.mxu0 0
      %6532 = vmatmul.mubr.bf16.gmra.mxu0 %v6463
      %v6533 = vpop.f32.mrf.mxu0
      %v6534 = vadd.f32 %v6454, %v6533
      %v6535 = vpop.f32.mrf.mxu0
      %v6536 = vpop.f32.mrf.mxu0
      %v6537 = vadd.f32 %v6454, %v6536
      %v6538 = vpop.f32.mrf.mxu0
      %6539 = vmatprep.mubr.bf16.mxu0 0
      %6540 = vmatmul.mubr.bf16.gmra.mxu0 %v6466
      %v6541 = vpop.f32.mrf.mxu0
      %v6542 = vadd.f32 %v6454, %v6541
      %v6543 = vpop.f32.mrf.mxu0
      %v6544 = vpop.f32.mrf.mxu0
      %v6545 = vadd.f32 %v6454, %v6544
      %v6546 = vpop.f32.mrf.mxu0
      %6547 = vmatprep.mubr.bf16.mxu0 0
      %6548 = vmatmul.mubr.bf16.gmra.mxu0 %v6469
      %v6549 = vpop.f32.mrf.mxu0
      %v6550 = vadd.f32 %v6454, %v6549
      %v6551 = vpop.f32.mrf.mxu0
      %v6552 = vpop.f32.mrf.mxu0
      %v6553 = vadd.f32 %v6454, %v6552
      %v6554 = vpop.f32.mrf.mxu0
      %6555 = vmatprep.mubr.bf16.mxu0 0
      %6556 = vmatmul.mubr.bf16.gmra.mxu0 %v6472
      %v6557 = vpop.f32.mrf.mxu0
      %v6558 = vadd.f32 %v6454, %v6557
      %v6559 = vpop.f32.mrf.mxu0
      %v6560 = vpop.f32.mrf.mxu0
      %v6561 = vadd.f32 %v6454, %v6560
      %v6562 = vpop.f32.mrf.mxu0
      %6563 = vmatprep.mubr.bf16.mxu0 0
      %6564 = vmatmul.mubr.bf16.gmra.mxu0 %v6475
      %v6565 = vpop.f32.mrf.mxu0
      %v6566 = vadd.f32 %v6454, %v6565
      %v6567 = vpop.f32.mrf.mxu0
      %v6568 = vpop.f32.mrf.mxu0
      %v6569 = vadd.f32 %v6454, %v6568
      %v6570 = vpop.f32.mrf.mxu0
      %6571 = vmatprep.mubr.bf16.mxu0 0
      %6572 = vmatmul.mubr.bf16.gmra.mxu0 %v6478
      %v6573 = vpop.f32.mrf.mxu0
      %v6574 = vadd.f32 %v6454, %v6573
      %v6575 = vpop.f32.mrf.mxu0
      %v6576 = vpop.f32.mrf.mxu0
      %v6577 = vadd.f32 %v6454, %v6576
      %v6578 = vpop.f32.mrf.mxu0
      %6579 = vdwg.mxu0
      %v6580 = vmax.f32 %v6518, 0.0
      %v6581 = vmax.f32 %v6521, 0.0
      %v6582 = vmax.f32 %v6526, 0.0
      %v6583 = vmax.f32 %v6529, 0.0
      %v6584 = vmax.f32 %v6534, 0.0
      %v6585 = vmax.f32 %v6537, 0.0
      %v6586 = vmax.f32 %v6542, 0.0
      %v6587 = vmax.f32 %v6545, 0.0
      %v6588 = vmax.f32 %v6550, 0.0
      %v6589 = vmax.f32 %v6553, 0.0
      %v6590 = vmax.f32 %v6558, 0.0
      %v6591 = vmax.f32 %v6561, 0.0
      %v6592 = vmax.f32 %v6566, 0.0
      %v6593 = vmax.f32 %v6569, 0.0
      %v6594 = vmax.f32 %v6574, 0.0
      %v6595 = vmax.f32 %v6577, 0.0
      %v6596 = vand.u32 2147483647, %v6518
      %v6597 = vand.u32 2147483647, %v6521
      %v6598 = vand.u32 2147483647, %v6526
      %v6599 = vand.u32 2147483647, %v6529
      %v6600 = vand.u32 2147483647, %v6534
      %v6601 = vand.u32 2147483647, %v6537
      %v6602 = vand.u32 2147483647, %v6542
      %v6603 = vand.u32 2147483647, %v6545
      %v6604 = vand.u32 2147483647, %v6550
      %v6605 = vand.u32 2147483647, %v6553
      %v6606 = vand.u32 2147483647, %v6558
      %v6607 = vand.u32 2147483647, %v6561
      %v6608 = vand.u32 2147483647, %v6566
      %v6609 = vand.u32 2147483647, %v6569
      %v6610 = vand.u32 2147483647, %v6574
      %v6611 = vand.u32 2147483647, %v6577
      %v6612 = vsub.f32 0.0, %v6596
      %v6613 = vsub.f32 0.0, %v6597
      %v6614 = vsub.f32 0.0, %v6598
      %v6615 = vsub.f32 0.0, %v6599
      %v6616 = vsub.f32 0.0, %v6600
      %v6617 = vsub.f32 0.0, %v6601
      %v6618 = vsub.f32 0.0, %v6602
      %v6619 = vsub.f32 0.0, %v6603
      %v6620 = vsub.f32 0.0, %v6604
      %v6621 = vsub.f32 0.0, %v6605
      %v6622 = vsub.f32 0.0, %v6606
      %v6623 = vsub.f32 0.0, %v6607
      %v6624 = vsub.f32 0.0, %v6608
      %v6625 = vsub.f32 0.0, %v6609
      %v6626 = vsub.f32 0.0, %v6610
      %v6627 = vsub.f32 0.0, %v6611
      %v6628 = vmul.f32 %v6612, 1.442695
      %v6629 = vpow.pop %v6628
      %v6630 = vmul.f32 %v6613, 1.442695
      %v6631 = vpow.pop %v6630
      %v6632 = vmul.f32 %v6614, 1.442695
      %v6633 = vpow.pop %v6632
      %v6634 = vmul.f32 %v6615, 1.442695
      %v6635 = vpow.pop %v6634
      %v6636 = vmul.f32 %v6616, 1.442695
      %v6637 = vpow.pop %v6636
      %v6638 = vmul.f32 %v6617, 1.442695
      %v6639 = vpow.pop %v6638
      %v6640 = vmul.f32 %v6618, 1.442695
      %v6641 = vpow.pop %v6640
      %v6642 = vmul.f32 %v6619, 1.442695
      %v6643 = vpow.pop %v6642
      %v6644 = vmul.f32 %v6620, 1.442695
      %v6645 = vpow.pop %v6644
      %v6646 = vmul.f32 %v6621, 1.442695
      %v6647 = vpow.pop %v6646
      %v6648 = vmul.f32 %v6622, 1.442695
      %v6649 = vpow.pop %v6648
      %v6650 = vmul.f32 %v6623, 1.442695
      %v6651 = vpow.pop %v6650
      %v6652 = vmul.f32 %v6624, 1.442695
      %v6653 = vpow.pop %v6652
      %v6654 = vmul.f32 %v6625, 1.442695
      %v6655 = vpow.pop %v6654
      %v6656 = vmul.f32 %v6626, 1.442695
      %v6657 = vpow.pop %v6656
      %v6658 = vmul.f32 %v6627, 1.442695
      %v6659 = vpow.pop %v6658
      %v6660 = vadd.f32 %v6629, 1.0
      %v6661 = vadd.f32 %v6631, 1.0
      %v6662 = vadd.f32 %v6633, 1.0
      %v6663 = vadd.f32 %v6635, 1.0
      %v6664 = vadd.f32 %v6637, 1.0
      %v6665 = vadd.f32 %v6639, 1.0
      %v6666 = vadd.f32 %v6641, 1.0
      %v6667 = vadd.f32 %v6643, 1.0
      %v6668 = vadd.f32 %v6645, 1.0
      %v6669 = vadd.f32 %v6647, 1.0
      %v6670 = vadd.f32 %v6649, 1.0
      %v6671 = vadd.f32 %v6651, 1.0
      %v6672 = vadd.f32 %v6653, 1.0
      %v6673 = vadd.f32 %v6655, 1.0
      %v6674 = vadd.f32 %v6657, 1.0
      %v6675 = vadd.f32 %v6659, 1.0
      %v6676 = vlog2.pop %v6660
      %v6677 = vmul.f32 %v6676, 0.6931472
      %v6678 = vlog2.pop %v6661
      %v6679 = vmul.f32 %v6678, 0.6931472
      %v6680 = vlog2.pop %v6662
      %v6681 = vmul.f32 %v6680, 0.6931472
      %v6682 = vlog2.pop %v6663
      %v6683 = vmul.f32 %v6682, 0.6931472
      %v6684 = vlog2.pop %v6664
      %v6685 = vmul.f32 %v6684, 0.6931472
      %v6686 = vlog2.pop %v6665
      %v6687 = vmul.f32 %v6686, 0.6931472
      %v6688 = vlog2.pop %v6666
      %v6689 = vmul.f32 %v6688, 0.6931472
      %v6690 = vlog2.pop %v6667
      %v6691 = vmul.f32 %v6690, 0.6931472
      %v6692 = vlog2.pop %v6668
      %v6693 = vmul.f32 %v6692, 0.6931472
      %v6694 = vlog2.pop %v6669
      %v6695 = vmul.f32 %v6694, 0.6931472
      %v6696 = vlog2.pop %v6670
      %v6697 = vmul.f32 %v6696, 0.6931472
      %v6698 = vlog2.pop %v6671
      %v6699 = vmul.f32 %v6698, 0.6931472
      %v6700 = vlog2.pop %v6672
      %v6701 = vmul.f32 %v6700, 0.6931472
      %v6702 = vlog2.pop %v6673
      %v6703 = vmul.f32 %v6702, 0.6931472
      %v6704 = vlog2.pop %v6674
      %v6705 = vmul.f32 %v6704, 0.6931472
      %v6706 = vlog2.pop %v6675
      %v6707 = vmul.f32 %v6706, 0.6931472
      %v6708 = vadd.f32 %v6580, %v6677
      %v6709 = vadd.f32 %v6581, %v6679
      %v6710 = vadd.f32 %v6582, %v6681
      %v6711 = vadd.f32 %v6583, %v6683
      %v6712 = vadd.f32 %v6584, %v6685
      %v6713 = vadd.f32 %v6585, %v6687
      %v6714 = vadd.f32 %v6586, %v6689
      %v6715 = vadd.f32 %v6587, %v6691
      %v6716 = vadd.f32 %v6588, %v6693
      %v6717 = vadd.f32 %v6589, %v6695
      %v6718 = vadd.f32 %v6590, %v6697
      %v6719 = vadd.f32 %v6591, %v6699
      %v6720 = vadd.f32 %v6592, %v6701
      %v6721 = vadd.f32 %v6593, %v6703
      %v6722 = vadd.f32 %v6594, %v6705
      %v6723 = vadd.f32 %v6595, %v6707
      %6724 = vst.msk [vmem:[%s685] sm:$0xff] %vm945, %v6708
      %6725 = vst.msk [vmem:[%s685 + $0x8] sm:$0xff] %vm945, %v6709
      %6726 = vst.msk [vmem:[%s685 + $0x10] sm:$0xff] %vm945, %v6710
      %6727 = vst.msk [vmem:[%s685 + $0x18] sm:$0xff] %vm945, %v6711
      %6728 = vst.msk [vmem:[%s685 + $0x20] sm:$0xff] %vm945, %v6712
      %6729 = vst.msk [vmem:[%s685 + $0x28] sm:$0xff] %vm945, %v6713
      %6730 = vst.msk [vmem:[%s685 + $0x30] sm:$0xff] %vm945, %v6714
      %6731 = vst.msk [vmem:[%s685 + $0x38] sm:$0xff] %vm945, %v6715
      %6732 = vst.msk [vmem:[%s685 + $0x40] sm:$0xff] %vm945, %v6716
      %6733 = vst.msk [vmem:[%s685 + $0x48] sm:$0xff] %vm945, %v6717
      %6734 = vst.msk [vmem:[%s685 + $0x50] sm:$0xff] %vm945, %v6718
      %6735 = vst.msk [vmem:[%s685 + $0x58] sm:$0xff] %vm945, %v6719
      %6736 = vst.msk [vmem:[%s685 + $0x60] sm:$0xff] %vm945, %v6720
      %6737 = vst.msk [vmem:[%s685 + $0x68] sm:$0xff] %vm945, %v6721
      %6738 = vst.msk [vmem:[%s685 + $0x70] sm:$0xff] %vm945, %v6722
      %6739 = vst.msk [vmem:[%s685 + $0x78] sm:$0xff] %vm945, %v6723
      %s6740 = smul.u32 16, %s33
      %p6741 = scmp.lt.s32.totalorder %s6740, 31
      %s6742 = scalar_select %p6741, %s6740, 31
      %s6743 = smul.addr %s6742, 8
      %s6744 = scalar_lea.vmem %s22, %s6743
      // Predicated region
      $region109: #{tpu_custom_call.1} parent=107 // pred_check
        %p6745 = pneg %p518
      $region110: #{tpu_custom_call.1} parent=107 // pred_check_branch
        %6747 = sbr.rel (%p6745) target = $region112
      $region111: #{tpu_custom_call.1} parent=107 // pred_region
        %s6748 = smul.u32 16, %s33
      $region112: #{tpu_custom_call.1} parent=107 // pred_fallthru
        _
    $region108: #{tpu_custom_call.1} parent=5 // pred_fallthru
      _
    %p6749 = scmp.le.s32.totalorder 2, %s28
    // Predicated region
    $region113: #{tpu_custom_call.1} parent=5 // pred_check
      %p6750 = pneg %p6749
    $region114: #{tpu_custom_call.1} parent=5 // pred_check_branch
      %6752 = sbr.rel (%p6750) target = $region116
    $region115: #{tpu_custom_call.1} parent=5 // pred_region
      %s6753 = ssub.s32 %s28, 2
      // Predicated region
      $region117: #{tpu_custom_call.1} parent=115 // pred_check
        %p6754 = pneg %p524
      $region118: #{tpu_custom_call.1} parent=115 // pred_check_branch
        %6756 = sbr.rel (%p6754) target = $region120
      $region119: #{tpu_custom_call.1} parent=115 // pred_region
        %s6757 = smul.u32 16, %s34
        %p6758 = scmp.lt.s32.totalorder %s6757, 31
        %s6759 = scalar_select %p6758, %s6757, 31
        %s6760 = smul.addr %s6759, 8
        %s6761 = scalar_lea.vmem %s22, %s6760
      $region120: #{tpu_custom_call.1} parent=115 // pred_fallthru
        _
    $region116: #{tpu_custom_call.1} parent=5 // pred_fallthru
      _
  $region6: #{tpu_custom_call.1} parent=0 // loop_footer
    %s32 = sadd.s32 1, %s28
  $region7: #{tpu_custom_call.1} parent=0 // loop_footer_branch
    %27 = sbr.rel target = $region3
  $region8: #{tpu_custom_call.1} parent=0 // loop_exit
    _

</llo_original>
